<compile_context>
chip_gen: v6e
topology: v6e:2x2x1
jax: 0.10.0
libtpu: 0.0.40
codegen_flags: <defaults>
</compile_context>

<pallas_src>
import jax
import jax.numpy as jnp
from jax.experimental import pallas as pl
from jax.experimental.pallas import tpu as pltpu

_BN_EPS = 1e-5   # eval BatchNorm epsilon
_AGG_EPS = 1e-6  # edge-gated aggregation epsilon


def _round_up(x, m):
    return ((x + m - 1) // m) * m


def _vmem_bytes(n_pad, h_pad, tile_e):
    """Corrected per-call VMEM footprint estimate (bytes)."""
    f32, bf16, i32 = 4, 2, 4
    resident = (n_pad * h_pad * f32                      # x (single-buffered)
                + 2 * n_pad * h_pad * f32                # node_out (output buffers)
                + 4 * h_pad * h_pad * f32                # fused node weight
                + h_pad * h_pad * f32                    # edge weight
                + 8 * (4 * h_pad + h_pad + 4 * h_pad) * f32   # biases / BN rows (sublane pad)
                + n_pad * 3 * h_pad * bf16               # proj scratch (bf16, 3H slab)
                + n_pad * 2 * h_pad * f32)               # acc scratch [num|den]
    per_tile = 2 * (tile_e * h_pad * f32                 # e in  (x2 buffers)
                    + tile_e * h_pad * f32               # e out (x2 buffers)
                    + tile_e * 128 * i32                 # [tE,2] idx block lane-padded
                    + 8 * tile_e * i32)                  # [1,tE] dst row sublane-padded
    interm = (3 * tile_e * n_pad * bf16                  # src_oh, dst_oh, dst_oh_t
              + 3 * tile_e * h_pad * f32                 # g_src [tE,2H] + g_dst [tE,H]
              + 2 * tile_e * h_pad * bf16                # msg|sigma (bf16)
              + 6 * tile_e * h_pad * f32                 # m / sigma / msg / edge_gate temps
              + 2 * n_pad * h_pad * f32)                 # scatter matmul result pre-accumulate
    return resident + per_tile + interm


def _gcao_kernel(x_ref, e_ref, idx_ref, dstrow_ref,
                 w_node_ref, b_node_ref, w_edge_ref, b_edge_ref,
                 bn_node_ref, bn_edge_ref,
                 node_out_ref, edge_out_ref,
                 proj_ref, acc_ref):
    """One edge-tile step of the edge-gated graph conv (GCAO).

    x_ref:        [N_pad, H]     node features (resident across the grid)
    e_ref:        [tE, H]        edge-feature tile
    idx_ref:      [tE, 2]        int32 (src, dst) columns; padded edges -> N_pad
    dstrow_ref:   [1, tE]        int32 dst in row layout (for transposed scatter one-hot)
    w_node_ref:   [H, 4H]        fused [src_gate | dst_update | dst_gate | src_update]
    b_node_ref:   [1, 4H]
    w_edge_ref:   [H, H], b_edge_ref: [1, H]
    bn_*_ref:     [2, H]         row 0 = BN scale, row 1 = BN shift (eval fold)
    proj_ref:     [N_pad, 3H]    bf16 scratch: gatherable projection slab
    acc_ref:      [N_pad, 2H]    f32 scratch: [num | den] scatter accumulators
    """
    k = pl.program_id(0)
    n_pad = acc_ref.shape[0]
    tile_e = e_ref.shape[0]
    h = x_ref.shape[1]

    @pl.when(k == 0)
    def _init():
        # Gatherable 3H projection in one lane-dense f32 MXU matmul, stored bf16.
        proj3 = (jnp.dot(x_ref[...], w_node_ref[:, 0:3 * h],
                         preferred_element_type=jnp.float32)
                 + b_node_ref[:, 0:3 * h])
        proj_ref[...] = proj3.astype(jnp.bfloat16)
        acc_ref[...] = jnp.zeros_like(acc_ref)

    e_tile = e_ref[...]
    src_col = idx_ref[:, 0:1]          # [tE, 1]
    dst_col = idx_ref[:, 1:2]          # [tE, 1]

    # Gather one-hots (bf16 is exact for 0/1). Padded edges use id == n_pad
    # which never matches the iota -> all-zero rows -> contribute nothing.
    lane_iota = jax.lax.broadcasted_iota(jnp.int32, (tile_e, n_pad), 1)
    src_oh = (src_col == lane_iota).astype(jnp.bfloat16)      # [tE, N_pad]
    dst_oh = (dst_col == lane_iota).astype(jnp.bfloat16)      # [tE, N_pad]

    proj = proj_ref[...]                                      # bf16 [N_pad, 3H]
    # Only the needed slabs are gathered: 2H at src, 1H at dst.
    g_src = jnp.dot(src_oh, proj[:, 0:2 * h], preferred_element_type=jnp.float32)
    g_dst = jnp.dot(dst_oh, proj[:, 2 * h:3 * h], preferred_element_type=jnp.float32)

    edge_gate = (jnp.dot(e_tile, w_edge_ref[...],
                         preferred_element_type=jnp.float32) + b_edge_ref[...])

    m = g_src[:, 0:h] + g_dst + edge_gate        # src_gate[src] + dst_gate[dst] + edge_gate
    sigma = jax.nn.sigmoid(m)
    msg = sigma * g_src[:, h:2 * h]              # dst_update(x) gathered at src

    # Scatter-add onto destinations: transposed one-hot built directly
    # (no XLU transpose), bf16 MXU matmul with f32 accumulation.
    sub_iota = jax.lax.broadcasted_iota(jnp.int32, (n_pad, tile_e), 0)
    dst_oh_t = (dstrow_ref[...] == sub_iota).astype(jnp.bfloat16)   # [N_pad, tE]
    msgsig = jnp.concatenate([msg, sigma], axis=1).astype(jnp.bfloat16)  # [tE, 2H]
    acc_ref[...] += jnp.dot(dst_oh_t, msgsig, preferred_element_type=jnp.float32)

    # Edge output for this tile (BN folded into per-channel scale/shift).
    m_bn = m * bn_edge_ref[0:1, :] + bn_edge_ref[1:2, :]
    edge_out_ref[...] = e_tile + jax.nn.silu(m_bn)

    @pl.when(k == pl.num_programs(0) - 1)
    def _finalize():
        acc = acc_ref[...]
        # src_update recomputed once here (keeps the resident scratch at 3H).
        su = (jnp.dot(x_ref[...], w_node_ref[:, 3 * h:4 * h],
                      preferred_element_type=jnp.float32)
              + b_node_ref[:, 3 * h:4 * h])
        h_agg = acc[:, 0:h] * pl.reciprocal(acc[:, h:2 * h] + _AGG_EPS, approx=True)
        u_bn = (su + h_agg) * bn_node_ref[0:1, :] + bn_node_ref[1:2, :]
        node_out_ref[...] = x_ref[...] + jax.nn.silu(u_bn)


def gcao_apply(params, node_feats, edge_index, edge_feats, *, max_edge_tile=512):
    """GCAO forward: (node_feats, edge_index, edge_feats) -> (node_out, edge_out)."""
    n_nodes, hidden = node_feats.shape
    n_edges = edge_feats.shape[0]

    h_pad = _round_up(max(hidden, 128), 128)      # lane-dense outputs / MXU N-dim
    n_pad = _round_up(max(n_nodes, 128), 128)     # lane-dense one-hot / MXU K-dim

    # ---- fold / pad parameters -------------------------------------------
    w5, b5 = params["w"], params["b"]             # [5,H,H] ([in,out]), [5,1,H]

    def pad_w(w):
        return jnp.zeros((h_pad, h_pad), jnp.float32).at[:hidden, :hidden].set(
            w.astype(jnp.float32))

    def pad_b(b):
        return jnp.zeros((1, h_pad), jnp.float32).at[:, :hidden].set(
            b.astype(jnp.float32))

    # Gatherable slabs first: [src_gate | dst_update | dst_gate | src_update].
    order = (0, 4, 1, 3)
    w_node = jnp.concatenate([pad_w(w5[i]) for i in order], axis=1)   # [H, 4H]
    b_node = jnp.concatenate([pad_b(b5[i]) for i in order], axis=1)   # [1, 4H]
    w_edge, b_edge = pad_w(w5[2]), pad_b(b5[2])

    def bn_fold(bn):
        scale = bn["gamma"] / jnp.sqrt(bn["var"] + _BN_EPS)
        shift = bn["beta"] - bn["mean"] * scale
        out = jnp.zeros((2, h_pad), jnp.float32)
        return out.at[0, :hidden].set(scale).at[1, :hidden].set(shift)

    bn_node, bn_edge = bn_fold(params["bn_node"]), bn_fold(params["bn_edge"])

    # ---- tile sizing / VMEM budget (per-generation cap) --------------------
    try:
        phys_vmem = int(pltpu.get_tpu_info().vmem_capacity_bytes)
    except Exception:
        phys_vmem = 64 * 2 ** 20                  # conservative (v7x per-core)
    cap = (phys_vmem * 3) // 4

    tile_e = max(128, min(_round_up(max_edge_tile, 128),
                          _round_up(max(n_edges, 1), 128)))
    while tile_e > 128 and 2 * _vmem_bytes(n_pad, h_pad, tile_e) > cap:
        tile_e -= 128
    e_pad = _round_up(max(n_edges, 1), tile_e)
    n_tiles = e_pad // tile_e
    vmem_limit = int(min(cap, max(2 * _vmem_bytes(n_pad, h_pad, tile_e),
                                  32 * 2 ** 20)))

    # ---- pad inputs ---------------------------------------------------------
    x = jnp.zeros((n_pad, h_pad), jnp.float32).at[:n_nodes, :hidden].set(
        node_feats.astype(jnp.float32))
    e = jnp.zeros((e_pad, h_pad), jnp.float32).at[:n_edges, :hidden].set(
        edge_feats.astype(jnp.float32))

    src = edge_index[0].astype(jnp.int32)
    dst = edge_index[1].astype(jnp.int32)
    # Padded edges point at the out-of-range node id n_pad -> zero one-hot rows.
    idx_col = jnp.full((e_pad, 2), n_pad, jnp.int32)
    idx_col = idx_col.at[:n_edges, 0].set(src).at[:n_edges, 1].set(dst)
    dst_row = jnp.full((1, e_pad), n_pad, jnp.int32).at[0, :n_edges].set(dst)

    # ---- pallas_call --------------------------------------------------------
    node_out_spec = pl.BlockSpec((n_pad, h_pad), lambda k: (0, 0))
    edge_spec = pl.BlockSpec((tile_e, h_pad), lambda k: (k, 0))

    def build(single_buffer_consts):
        const_kw = ({"pipeline_mode": pl.Buffered(1)}
                    if single_buffer_consts and hasattr(pl, "Buffered") else {})

        def cspec(shape):
            return pl.BlockSpec(shape, lambda k: (0,) * len(shape), **const_kw)

        return pl.pallas_call(
            _gcao_kernel,
            out_shape=(jax.ShapeDtypeStruct((n_pad, h_pad), jnp.float32),
                       jax.ShapeDtypeStruct((e_pad, h_pad), jnp.float32)),
            grid_spec=pltpu.PrefetchScalarGridSpec(
                num_scalar_prefetch=0,
                grid=(n_tiles,),
                in_specs=[cspec((n_pad, h_pad)),                       # x (resident)
                          edge_spec,                                    # edge tile
                          pl.BlockSpec((tile_e, 2), lambda k: (k, 0)),  # (src,dst) cols
                          pl.BlockSpec((1, tile_e), lambda k: (0, k)),  # dst row layout
                          cspec((h_pad, 4 * h_pad)),                    # fused node W
                          cspec((1, 4 * h_pad)),
                          cspec((h_pad, h_pad)),                        # edge W
                          cspec((1, h_pad)),
                          cspec((2, h_pad)),                            # BN node
                          cspec((2, h_pad))],                           # BN edge
                out_specs=(node_out_spec, edge_spec),
                scratch_shapes=[pltpu.VMEM((n_pad, 3 * h_pad), jnp.bfloat16),
                                pltpu.VMEM((n_pad, 2 * h_pad), jnp.float32)]),
            compiler_params=pltpu.CompilerParams(
                dimension_semantics=("arbitrary",),    # edge tiles reduce into nodes
                vmem_limit_bytes=vmem_limit),
        )

    args = (x, e, idx_col, dst_row, w_node, b_node, w_edge, b_edge,
            bn_node, bn_edge)
    try:
        node_out, edge_out = build(True)(*args)
    except Exception:
        # Fallback: identical kernel with default (double) buffering of constants.
        node_out, edge_out = build(False)(*args)

    return node_out[:n_nodes, :hidden], edge_out[:n_edges, :hidden]


def init_gcao(key, hidden):
    kw, kb = jax.random.split(key)
    bound = hidden ** -0.5
    bn = lambda: {"gamma": jnp.ones((hidden,), jnp.float32),
                  "beta": jnp.zeros((hidden,), jnp.float32),
                  "mean": jnp.zeros((hidden,), jnp.float32),
                  "var": jnp.ones((hidden,), jnp.float32)}
    return {
        # order: 0 src_gate, 1 dst_gate, 2 edge_gate, 3 src_update, 4 dst_update
        "w": jax.random.uniform(kw, (5, hidden, hidden), jnp.float32, -bound, bound),
        "b": jax.random.uniform(kb, (5, 1, hidden), jnp.float32, -bound, bound),
        "bn_node": bn(),
        "bn_edge": bn(),
    }


def init_gcpnet_update(key, hidden_features, dropout_rate=0.0):
    del dropout_rate  # eval mode -> identity
    k1, k2 = jax.random.split(key)
    return {
        "bondAndAngleUpdate": init_gcao(k1, hidden_features),
        "bondAndAtomUpdate": init_gcao(k2, hidden_features),
    }


def gcpnet_update_forward(params, g, atom_feats, bond_attr, triplet_feats,
                          *, max_edge_tile=512):
    """Mirrors GCPNetUpdate.forward."""
    bond, triplet_feats = gcao_apply(
        params["bondAndAngleUpdate"], bond_attr, g["angle_index"], triplet_feats,
        max_edge_tile=max_edge_tile)
    atom_feats, bond_attr = gcao_apply(
        params["bondAndAtomUpdate"], atom_feats, g["edge_index"], bond,
        max_edge_tile=max_edge_tile)
    return atom_feats, bond_attr, triplet_feats


def _gcao_ref(params, x, edge_index, e):
    """Pure-JAX reference (same math, segment_sum scatter) for sanity checking."""
    w5, b5 = params["w"], params["b"]
    lin = lambda i, v: v @ w5[i] + b5[i]

    def bn(p, v):
        scale = p["gamma"] / jnp.sqrt(p["var"] + _BN_EPS)
        return v * scale + (p["beta"] - p["mean"] * scale)

    src, dst = edge_index[0], edge_index[1]
    m = lin(0, x)[src] + lin(1, x)[dst] + lin(2, e)
    sigma = jax.nn.sigmoid(m)
    bh = lin(4, x)[src]
    num = jax.ops.segment_sum(sigma * bh, dst, num_segments=x.shape[0])
    den = jax.ops.segment_sum(sigma, dst, num_segments=x.shape[0])
    h_agg = num / (den + _AGG_EPS)
    x_out = x + jax.nn.silu(bn(params["bn_node"], lin(3, x) + h_agg))
    e_out = e + jax.nn.silu(bn(params["bn_edge"], m))
    return x_out, e_out


if __name__ == "__main__":
    hidden = 32
    n_atoms, n_bonds, n_triplets = 10, 40, 300   # exercises node/edge padding

    key = jax.random.PRNGKey(0)
    k_par, k_a, k_b, k_t, k_ei, k_ai = jax.random.split(key, 6)

    params = init_gcpnet_update(k_par, hidden_features=hidden, dropout_rate=0.1)

    atom_feats = jax.random.normal(k_a, (n_atoms, hidden), jnp.float32)
    bond_attr = jax.random.normal(k_b, (n_bonds, hidden), jnp.float32)
    triplet_feats = jax.random.normal(k_t, (n_triplets, hidden), jnp.float32)

    g = {
        "edge_index": jax.random.randint(k_ei, (2, n_bonds), 0, n_atoms, jnp.int32),
        "angle_index": jax.random.randint(k_ai, (2, n_triplets), 0, n_bonds, jnp.int32),
    }

    # max_edge_tile=128 -> the angle update runs 3 edge tiles (multi-tile accumulation).
    atom_out, bond_out, trip_out = gcpnet_update_forward(
        params, g, atom_feats, bond_attr, triplet_feats, max_edge_tile=128)
    jax.block_until_ready((atom_out, bond_out, trip_out))

    assert atom_out.shape == (n_atoms, hidden)
    assert bond_out.shape == (n_bonds, hidden)
    assert trip_out.shape == (n_triplets, hidden)

    # Sanity-check against the pure-JAX f32 reference (bf16 gather/scatter path).
    ref_bond, ref_trip = _gcao_ref(params["bondAndAngleUpdate"],
                                   bond_attr, g["angle_index"], triplet_feats)
    ref_atom, ref_bond2 = _gcao_ref(params["bondAndAtomUpdate"],
                                    atom_feats, g["edge_index"], ref_bond)
    for got, ref in ((atom_out, ref_atom), (bond_out, ref_bond2), (trip_out, ref_trip)):
        err = float(jnp.max(jnp.abs(got - ref)))
        assert err < 7.5e-2, f"mismatch vs reference: max abs err {err}"

    print("KERNEL_OK")
</pallas_src>

<mosaic_0001>
module attributes {stable_mosaic.version = 11 : i64} {
  func.func @_gcao_kernel(%arg0: i32, %arg1: memref<128x128xf32, #tpu.memory_space<vmem>>, %arg2: memref<128x128xf32, #tpu.memory_space<vmem>>, %arg3: memref<128x2xi32, #tpu.memory_space<vmem>>, %arg4: memref<1x128xi32, #tpu.memory_space<vmem>>, %arg5: memref<128x512xf32, #tpu.memory_space<vmem>>, %arg6: memref<1x512xf32, #tpu.memory_space<vmem>>, %arg7: memref<128x128xf32, #tpu.memory_space<vmem>>, %arg8: memref<1x128xf32, #tpu.memory_space<vmem>>, %arg9: memref<2x128xf32, #tpu.memory_space<vmem>>, %arg10: memref<2x128xf32, #tpu.memory_space<vmem>>, %arg11: memref<128x128xf32, #tpu.memory_space<vmem>>, %arg12: memref<128x128xf32, #tpu.memory_space<vmem>>, %arg13: memref<128x384xbf16, #tpu.memory_space<vmem>>, %arg14: memref<128x256xf32, #tpu.memory_space<vmem>>) attributes {dimension_semantics = [#tpu.dimension_semantics<arbitrary>], iteration_bounds = array<i64: 3>, scalar_prefetch = 0 : i64, scratch_operands = 2 : i64, tpu.core_type = #tpu.core_type<tc>, window_params = [{pipeline_mode = #tpu.pipeline_mode<synchronous>, transform_indices = @transform_0, window_bounds = array<i64: 128, 128>}, {transform_indices = @transform_1, window_bounds = array<i64: 128, 128>}, {transform_indices = @transform_2, window_bounds = array<i64: 128, 2>}, {transform_indices = @transform_3, window_bounds = array<i64: 1, 128>}, {pipeline_mode = #tpu.pipeline_mode<synchronous>, transform_indices = @transform_4, window_bounds = array<i64: 128, 512>}, {pipeline_mode = #tpu.pipeline_mode<synchronous>, transform_indices = @transform_5, window_bounds = array<i64: 1, 512>}, {pipeline_mode = #tpu.pipeline_mode<synchronous>, transform_indices = @transform_6, window_bounds = array<i64: 128, 128>}, {pipeline_mode = #tpu.pipeline_mode<synchronous>, transform_indices = @transform_7, window_bounds = array<i64: 1, 128>}, {pipeline_mode = #tpu.pipeline_mode<synchronous>, transform_indices = @transform_8, window_bounds = array<i64: 2, 128>}, {pipeline_mode = #tpu.pipeline_mode<synchronous>, transform_indices = @transform_9, window_bounds = array<i64: 2, 128>}, {pipeline_mode = #tpu.pipeline_mode<synchronous>, transform_indices = @transform_10, window_bounds = array<i64: 128, 128>}, {transform_indices = @transform_11, window_bounds = array<i64: 128, 128>}]} {
    %c0_i32 = arith.constant 0 : i32
    %0 = arith.cmpi eq, %arg0, %c0_i32 : i32
    %1 = arith.extui %0 : i1 to i32
    %c0_i32_0 = arith.constant 0 : i32
    %2 = arith.cmpi ne, %1, %c0_i32_0 : i32
    scf.if %2 {
      %c0_29 = arith.constant 0 : index
      %c0_30 = arith.constant 0 : index
      %67 = vector.load %arg1[%c0_29, %c0_30] : memref<128x128xf32, #tpu.memory_space<vmem>>, vector<128x128xf32>
      %c0_31 = arith.constant 0 : index
      %c0_32 = arith.constant 0 : index
      %68 = vector.load %arg5[%c0_31, %c0_32] : memref<128x512xf32, #tpu.memory_space<vmem>>, vector<128x384xf32>
      %cst_33 = arith.constant dense<0.000000e+00> : vector<128x384xf32>
      %69 = tpu.matmul %67, %68, %cst_33 {dimension_numbers = #tpu.dot_dimension_numbers<[1], [0], [0], [1], [0, 0, 1, 1], [], []>} : vector<128x128xf32>, vector<128x384xf32>, vector<128x384xf32> -> vector<128x384xf32>
      %c0_34 = arith.constant 0 : index
      %c0_35 = arith.constant 0 : index
      %70 = vector.load %arg6[%c0_34, %c0_35] : memref<1x512xf32, #tpu.memory_space<vmem>>, vector<1x384xf32>
      %71 = vector.broadcast %70 : vector<1x384xf32> to vector<128x384xf32>
      %72 = arith.addf %69, %71 : vector<128x384xf32>
      %73 = arith.truncf %72 : vector<128x384xf32> to vector<128x384xbf16>
      %c0_36 = arith.constant 0 : index
      %c0_37 = arith.constant 0 : index
      %74 = vector.load %arg13[%c0_36, %c0_37] : memref<128x384xbf16, #tpu.memory_space<vmem>>, vector<128x384xbf16>
      tpu.vector_store %arg13[%c0_36, %c0_37], %73 {strides = array<i32>} : memref<128x384xbf16, #tpu.memory_space<vmem>>, vector<128x384xbf16>,
      %cst_38 = arith.constant 0.000000e+00 : f32
      %75 = vector.broadcast %cst_38 : f32 to vector<128x256xf32>
      %c0_39 = arith.constant 0 : index
      %c0_40 = arith.constant 0 : index
      %76 = vector.load %arg14[%c0_39, %c0_40] : memref<128x256xf32, #tpu.memory_space<vmem>>, vector<128x256xf32>
      tpu.vector_store %arg14[%c0_39, %c0_40], %75 {strides = array<i32>} : memref<128x256xf32, #tpu.memory_space<vmem>>, vector<128x256xf32>,
    } else {
    }
    %c0 = arith.constant 0 : index
    %c0_1 = arith.constant 0 : index
    %3 = vector.load %arg2[%c0, %c0_1] : memref<128x128xf32, #tpu.memory_space<vmem>>, vector<128x128xf32>
    %c0_2 = arith.constant 0 : index
    %c0_3 = arith.constant 0 : index
    %4 = vector.load %arg3[%c0_2, %c0_3] : memref<128x2xi32, #tpu.memory_space<vmem>>, vector<128x1xi32>
    %c0_4 = arith.constant 0 : index
    %c1 = arith.constant 1 : index
    %5 = vector.load %arg3[%c0_4, %c1] : memref<128x2xi32, #tpu.memory_space<vmem>>, vector<128x1xi32>
    %6 = tpu.iota {dimensions = array<i32: 1>} : vector<128x128xi32>
    %7 = vector.broadcast %4 : vector<128x1xi32> to vector<128x128xi32>
    %8 = arith.cmpi eq, %7, %6 : vector<128x128xi32>
    %9 = arith.extui %8 : vector<128x128xi1> to vector<128x128xi32>
    %10 = arith.sitofp %9 : vector<128x128xi32> to vector<128x128xf32>
    %11 = arith.truncf %10 : vector<128x128xf32> to vector<128x128xbf16>
    %12 = vector.broadcast %5 : vector<128x1xi32> to vector<128x128xi32>
    %13 = arith.cmpi eq, %12, %6 : vector<128x128xi32>
    %14 = arith.extui %13 : vector<128x128xi1> to vector<128x128xi32>
    %15 = arith.sitofp %14 : vector<128x128xi32> to vector<128x128xf32>
    %16 = arith.truncf %15 : vector<128x128xf32> to vector<128x128xbf16>
    %c0_5 = arith.constant 0 : index
    %c0_6 = arith.constant 0 : index
    %17 = vector.load %arg13[%c0_5, %c0_6] : memref<128x384xbf16, #tpu.memory_space<vmem>>, vector<128x384xbf16>
    %18 = vector.extract_strided_slice %17 {offsets = [0, 0], sizes = [128, 256], strides = [1, 1]} : vector<128x384xbf16> to vector<128x256xbf16>
    %cst = arith.constant dense<0.000000e+00> : vector<128x256xf32>
    %19 = tpu.matmul %11, %18, %cst {dimension_numbers = #tpu.dot_dimension_numbers<[1], [0], [0], [1], [0, 0, 1, 1], [], []>} : vector<128x128xbf16>, vector<128x256xbf16>, vector<128x256xf32> -> vector<128x256xf32>
    %20 = vector.extract_strided_slice %17 {offsets = [0, 256], sizes = [128, 128], strides = [1, 1]} : vector<128x384xbf16> to vector<128x128xbf16>
    %cst_7 = arith.constant dense<0.000000e+00> : vector<128x128xf32>
    %21 = tpu.matmul %16, %20, %cst_7 {dimension_numbers = #tpu.dot_dimension_numbers<[1], [0], [0], [1], [0, 0, 1, 1], [], []>} : vector<128x128xbf16>, vector<128x128xbf16>, vector<128x128xf32> -> vector<128x128xf32>
    %c0_8 = arith.constant 0 : index
    %c0_9 = arith.constant 0 : index
    %22 = vector.load %arg7[%c0_8, %c0_9] : memref<128x128xf32, #tpu.memory_space<vmem>>, vector<128x128xf32>
    %cst_10 = arith.constant dense<0.000000e+00> : vector<128x128xf32>
    %23 = tpu.matmul %3, %22, %cst_10 {dimension_numbers = #tpu.dot_dimension_numbers<[1], [0], [0], [1], [0, 0, 1, 1], [], []>} : vector<128x128xf32>, vector<128x128xf32>, vector<128x128xf32> -> vector<128x128xf32>
    %c0_11 = arith.constant 0 : index
    %c0_12 = arith.constant 0 : index
    %24 = vector.load %arg8[%c0_11, %c0_12] : memref<1x128xf32, #tpu.memory_space<vmem>>, vector<1x128xf32>
    %25 = vector.broadcast %24 : vector<1x128xf32> to vector<128x128xf32>
    %26 = arith.addf %23, %25 : vector<128x128xf32>
    %27 = vector.extract_strided_slice %19 {offsets = [0, 0], sizes = [128, 128], strides = [1, 1]} : vector<128x256xf32> to vector<128x128xf32>
    %28 = arith.addf %27, %21 : vector<128x128xf32>
    %29 = arith.addf %28, %26 : vector<128x128xf32>
    %30 = arith.negf %29 : vector<128x128xf32>
    %31 = math.exp %30 : vector<128x128xf32>
    %cst_13 = arith.constant 1.000000e+00 : f32
    %32 = vector.broadcast %cst_13 : f32 to vector<128x128xf32>
    %33 = arith.addf %32, %31 : vector<128x128xf32>
    %34 = arith.divf %32, %33 : vector<128x128xf32>
    %35 = vector.extract_strided_slice %19 {offsets = [0, 128], sizes = [128, 128], strides = [1, 1]} : vector<128x256xf32> to vector<128x128xf32>
    %36 = arith.mulf %34, %35 : vector<128x128xf32>
    %37 = tpu.iota {dimensions = array<i32: 0>} : vector<128x128xi32>
    %c0_14 = arith.constant 0 : index
    %c0_15 = arith.constant 0 : index
    %38 = vector.load %arg4[%c0_14, %c0_15] : memref<1x128xi32, #tpu.memory_space<vmem>>, vector<1x128xi32>
    %39 = vector.broadcast %38 : vector<1x128xi32> to vector<128x128xi32>
    %40 = arith.cmpi eq, %39, %37 : vector<128x128xi32>
    %41 = arith.extui %40 : vector<128x128xi1> to vector<128x128xi32>
    %42 = arith.sitofp %41 : vector<128x128xi32> to vector<128x128xf32>
    %43 = arith.truncf %42 : vector<128x128xf32> to vector<128x128xbf16>
    %44 = tpu.concatenate %36, %34 in 1 : vector<128x128xf32>, vector<128x128xf32> -> vector<128x256xf32>
    %45 = arith.truncf %44 : vector<128x256xf32> to vector<128x256xbf16>
    %c0_16 = arith.constant 0 : index
    %c0_17 = arith.constant 0 : index
    %46 = vector.load %arg14[%c0_16, %c0_17] : memref<128x256xf32, #tpu.memory_space<vmem>>, vector<128x256xf32>
    %cst_18 = arith.constant dense<0.000000e+00> : vector<128x256xf32>
    %47 = tpu.matmul %43, %45, %cst_18 {dimension_numbers = #tpu.dot_dimension_numbers<[1], [0], [0], [1], [0, 0, 1, 1], [], []>} : vector<128x128xbf16>, vector<128x256xbf16>, vector<128x256xf32> -> vector<128x256xf32>
    %48 = arith.addf %46, %47 : vector<128x256xf32>
    %c0_19 = arith.constant 0 : index
    %c0_20 = arith.constant 0 : index
    %49 = vector.load %arg14[%c0_19, %c0_20] : memref<128x256xf32, #tpu.memory_space<vmem>>, vector<128x256xf32>
    tpu.vector_store %arg14[%c0_19, %c0_20], %48 {strides = array<i32>} : memref<128x256xf32, #tpu.memory_space<vmem>>, vector<128x256xf32>,
    %c0_21 = arith.constant 0 : index
    %c0_22 = arith.constant 0 : index
    %50 = vector.load %arg10[%c0_21, %c0_22] : memref<2x128xf32, #tpu.memory_space<vmem>>, vector<1x128xf32>
    %51 = vector.broadcast %50 : vector<1x128xf32> to vector<128x128xf32>
    %52 = arith.mulf %29, %51 : vector<128x128xf32>
    %c1_23 = arith.constant 1 : index
    %c0_24 = arith.constant 0 : index
    %53 = vector.load %arg10[%c1_23, %c0_24] : memref<2x128xf32, #tpu.memory_space<vmem>>, vector<1x128xf32>
    %54 = vector.broadcast %53 : vector<1x128xf32> to vector<128x128xf32>
    %55 = arith.addf %52, %54 : vector<128x128xf32>
    %56 = arith.negf %55 : vector<128x128xf32>
    %57 = math.exp %56 : vector<128x128xf32>
    %cst_25 = arith.constant 1.000000e+00 : f32
    %58 = vector.broadcast %cst_25 : f32 to vector<128x128xf32>
    %59 = arith.addf %58, %57 : vector<128x128xf32>
    %60 = arith.divf %58, %59 : vector<128x128xf32>
    %61 = arith.mulf %55, %60 : vector<128x128xf32>
    %62 = arith.addf %3, %61 : vector<128x128xf32>
    %c0_26 = arith.constant 0 : index
    %c0_27 = arith.constant 0 : index
    %63 = vector.load %arg12[%c0_26, %c0_27] : memref<128x128xf32, #tpu.memory_space<vmem>>, vector<128x128xf32>
    tpu.vector_store %arg12[%c0_26, %c0_27], %62 {strides = array<i32>} : memref<128x128xf32, #tpu.memory_space<vmem>>, vector<128x128xf32>,
    %c2_i32 = arith.constant 2 : i32
    %64 = arith.cmpi eq, %arg0, %c2_i32 : i32
    %65 = arith.extui %64 : i1 to i32
    %c0_i32_28 = arith.constant 0 : i32
    %66 = arith.cmpi ne, %65, %c0_i32_28 : i32
    scf.if %66 {
      %c0_29 = arith.constant 0 : index
      %c0_30 = arith.constant 0 : index
      %67 = vector.load %arg14[%c0_29, %c0_30] : memref<128x256xf32, #tpu.memory_space<vmem>>, vector<128x256xf32>
      %c0_31 = arith.constant 0 : index
      %c0_32 = arith.constant 0 : index
      %68 = vector.load %arg1[%c0_31, %c0_32] : memref<128x128xf32, #tpu.memory_space<vmem>>, vector<128x128xf32>
      %c0_33 = arith.constant 0 : index
      %c384 = arith.constant 384 : index
      %69 = vector.load %arg5[%c0_33, %c384] : memref<128x512xf32, #tpu.memory_space<vmem>>, vector<128x128xf32>
      %cst_34 = arith.constant dense<0.000000e+00> : vector<128x128xf32>
      %70 = tpu.matmul %68, %69, %cst_34 {dimension_numbers = #tpu.dot_dimension_numbers<[1], [0], [0], [1], [0, 0, 1, 1], [], []>} : vector<128x128xf32>, vector<128x128xf32>, vector<128x128xf32> -> vector<128x128xf32>
      %c0_35 = arith.constant 0 : index
      %c384_36 = arith.constant 384 : index
      %71 = vector.load %arg6[%c0_35, %c384_36] : memref<1x512xf32, #tpu.memory_space<vmem>>, vector<1x128xf32>
      %72 = vector.broadcast %71 : vector<1x128xf32> to vector<128x128xf32>
      %73 = arith.addf %70, %72 : vector<128x128xf32>
      %74 = vector.extract_strided_slice %67 {offsets = [0, 0], sizes = [128, 128], strides = [1, 1]} : vector<128x256xf32> to vector<128x128xf32>
      %75 = vector.extract_strided_slice %67 {offsets = [0, 128], sizes = [128, 128], strides = [1, 1]} : vector<128x256xf32> to vector<128x128xf32>
      %cst_37 = arith.constant 9.99999997E-7 : f32
      %76 = vector.broadcast %cst_37 : f32 to vector<128x128xf32>
      %77 = arith.addf %75, %76 : vector<128x128xf32>
      %78 = tpu.reciprocal %77 {approx = true} : vector<128x128xf32> -> vector<128x128xf32>
      %79 = arith.mulf %74, %78 : vector<128x128xf32>
      %80 = arith.addf %73, %79 : vector<128x128xf32>
      %c0_38 = arith.constant 0 : index
      %c0_39 = arith.constant 0 : index
      %81 = vector.load %arg9[%c0_38, %c0_39] : memref<2x128xf32, #tpu.memory_space<vmem>>, vector<1x128xf32>
      %82 = vector.broadcast %81 : vector<1x128xf32> to vector<128x128xf32>
      %83 = arith.mulf %80, %82 : vector<128x128xf32>
      %c1_40 = arith.constant 1 : index
      %c0_41 = arith.constant 0 : index
      %84 = vector.load %arg9[%c1_40, %c0_41] : memref<2x128xf32, #tpu.memory_space<vmem>>, vector<1x128xf32>
      %85 = vector.broadcast %84 : vector<1x128xf32> to vector<128x128xf32>
      %86 = arith.addf %83, %85 : vector<128x128xf32>
      %c0_42 = arith.constant 0 : index
      %c0_43 = arith.constant 0 : index
      %87 = vector.load %arg1[%c0_42, %c0_43] : memref<128x128xf32, #tpu.memory_space<vmem>>, vector<128x128xf32>
      %88 = arith.negf %86 : vector<128x128xf32>
      %89 = math.exp %88 : vector<128x128xf32>
      %cst_44 = arith.constant 1.000000e+00 : f32
      %90 = vector.broadcast %cst_44 : f32 to vector<128x128xf32>
      %91 = arith.addf %90, %89 : vector<128x128xf32>
      %92 = arith.divf %90, %91 : vector<128x128xf32>
      %93 = arith.mulf %86, %92 : vector<128x128xf32>
      %94 = arith.addf %87, %93 : vector<128x128xf32>
      %c0_45 = arith.constant 0 : index
      %c0_46 = arith.constant 0 : index
      %95 = vector.load %arg11[%c0_45, %c0_46] : memref<128x128xf32, #tpu.memory_space<vmem>>, vector<128x128xf32>
      tpu.vector_store %arg11[%c0_45, %c0_46], %94 {strides = array<i32>} : memref<128x128xf32, #tpu.memory_space<vmem>>, vector<128x128xf32>,
    } else {
    }
    return
  }
  func.func @transform_0(%arg0: i32) -> (i32, i32) {
    %c0_i32 = arith.constant 0 : i32
    %c0_i32_0 = arith.constant 0 : i32
    %c0_i32_1 = arith.constant 0 : i32
    return %c0_i32, %c0_i32_0 : i32, i32
  }
  func.func @transform_1(%arg0: i32) -> (i32, i32) {
    %c0_i32 = arith.constant 0 : i32
    %c0_i32_0 = arith.constant 0 : i32
    return %arg0, %c0_i32 : i32, i32
  }
  func.func @transform_2(%arg0: i32) -> (i32, i32) {
    %c0_i32 = arith.constant 0 : i32
    %c0_i32_0 = arith.constant 0 : i32
    return %arg0, %c0_i32 : i32, i32
  }
  func.func @transform_3(%arg0: i32) -> (i32, i32) {
    %c0_i32 = arith.constant 0 : i32
    %c0_i32_0 = arith.constant 0 : i32
    return %c0_i32, %arg0 : i32, i32
  }
  func.func @transform_4(%arg0: i32) -> (i32, i32) {
    %c0_i32 = arith.constant 0 : i32
    %c0_i32_0 = arith.constant 0 : i32
    %c0_i32_1 = arith.constant 0 : i32
    return %c0_i32, %c0_i32_0 : i32, i32
  }
  func.func @transform_5(%arg0: i32) -> (i32, i32) {
    %c0_i32 = arith.constant 0 : i32
    %c0_i32_0 = arith.constant 0 : i32
    %c0_i32_1 = arith.constant 0 : i32
    return %c0_i32, %c0_i32_0 : i32, i32
  }
  func.func @transform_6(%arg0: i32) -> (i32, i32) {
    %c0_i32 = arith.constant 0 : i32
    %c0_i32_0 = arith.constant 0 : i32
    %c0_i32_1 = arith.constant 0 : i32
    return %c0_i32, %c0_i32_0 : i32, i32
  }
  func.func @transform_7(%arg0: i32) -> (i32, i32) {
    %c0_i32 = arith.constant 0 : i32
    %c0_i32_0 = arith.constant 0 : i32
    %c0_i32_1 = arith.constant 0 : i32
    return %c0_i32, %c0_i32_0 : i32, i32
  }
  func.func @transform_8(%arg0: i32) -> (i32, i32) {
    %c0_i32 = arith.constant 0 : i32
    %c0_i32_0 = arith.constant 0 : i32
    %c0_i32_1 = arith.constant 0 : i32
    return %c0_i32, %c0_i32_0 : i32, i32
  }
  func.func @transform_9(%arg0: i32) -> (i32, i32) {
    %c0_i32 = arith.constant 0 : i32
    %c0_i32_0 = arith.constant 0 : i32
    %c0_i32_1 = arith.constant 0 : i32
    return %c0_i32, %c0_i32_0 : i32, i32
  }
  func.func @transform_10(%arg0: i32) -> (i32, i32) {
    %c0_i32 = arith.constant 0 : i32
    %c0_i32_0 = arith.constant 0 : i32
    %c0_i32_1 = arith.constant 0 : i32
    return %c0_i32, %c0_i32_0 : i32, i32
  }
  func.func @transform_11(%arg0: i32) -> (i32, i32) {
    %c0_i32 = arith.constant 0 : i32
    %c0_i32_0 = arith.constant 0 : i32
    return %arg0, %c0_i32 : i32, i32
  }
}

module attributes {stable_mosaic.version = 11 : i64} {
  func.func @_gcao_kernel(%arg0: i32, %arg1: memref<128x128xf32, #tpu.memory_space<vmem>>, %arg2: memref<128x128xf32, #tpu.memory_space<vmem>>, %arg3: memref<128x2xi32, #tpu.memory_space<vmem>>, %arg4: memref<1x128xi32, #tpu.memory_space<vmem>>, %arg5: memref<128x512xf32, #tpu.memory_space<vmem>>, %arg6: memref<1x512xf32, #tpu.memory_space<vmem>>, %arg7: memref<128x128xf32, #tpu.memory_space<vmem>>, %arg8: memref<1x128xf32, #tpu.memory_space<vmem>>, %arg9: memref<2x128xf32, #tpu.memory_space<vmem>>, %arg10: memref<2x128xf32, #tpu.memory_space<vmem>>, %arg11: memref<128x128xf32, #tpu.memory_space<vmem>>, %arg12: memref<128x128xf32, #tpu.memory_space<vmem>>, %arg13: memref<128x384xbf16, #tpu.memory_space<vmem>>, %arg14: memref<128x256xf32, #tpu.memory_space<vmem>>) attributes {dimension_semantics = [#tpu.dimension_semantics<arbitrary>], iteration_bounds = array<i64: 3>, scalar_prefetch = 0 : i64, scratch_operands = 2 : i64, tpu.core_type = #tpu.core_type<tc>, window_params = [{pipeline_mode = #tpu.pipeline_mode<synchronous>, transform_indices = @transform_0, window_bounds = array<i64: 128, 128>}, {transform_indices = @transform_1, window_bounds = array<i64: 128, 128>}, {transform_indices = @transform_2, window_bounds = array<i64: 128, 2>}, {transform_indices = @transform_3, window_bounds = array<i64: 1, 128>}, {pipeline_mode = #tpu.pipeline_mode<synchronous>, transform_indices = @transform_4, window_bounds = array<i64: 128, 512>}, {pipeline_mode = #tpu.pipeline_mode<synchronous>, transform_indices = @transform_5, window_bounds = array<i64: 1, 512>}, {pipeline_mode = #tpu.pipeline_mode<synchronous>, transform_indices = @transform_6, window_bounds = array<i64: 128, 128>}, {pipeline_mode = #tpu.pipeline_mode<synchronous>, transform_indices = @transform_7, window_bounds = array<i64: 1, 128>}, {pipeline_mode = #tpu.pipeline_mode<synchronous>, transform_indices = @transform_8, window_bounds = array<i64: 2, 128>}, {pipeline_mode = #tpu.pipeline_mode<synchronous>, transform_indices = @transform_9, window_bounds = array<i64: 2, 128>}, {pipeline_mode = #tpu.pipeline_mode<synchronous>, transform_indices = @transform_10, window_bounds = array<i64: 128, 128>}, {transform_indices = @transform_11, window_bounds = array<i64: 128, 128>}]} {
    %c0_i32 = arith.constant 0 : i32
    %0 = arith.cmpi eq, %arg0, %c0_i32 : i32
    %1 = arith.extui %0 : i1 to i32
    %c0_i32_0 = arith.constant 0 : i32
    %2 = arith.cmpi ne, %1, %c0_i32_0 : i32
    scf.if %2 {
      %c0_29 = arith.constant 0 : index
      %c0_30 = arith.constant 0 : index
      %67 = vector.load %arg1[%c0_29, %c0_30] : memref<128x128xf32, #tpu.memory_space<vmem>>, vector<128x128xf32>
      %c0_31 = arith.constant 0 : index
      %c0_32 = arith.constant 0 : index
      %68 = vector.load %arg5[%c0_31, %c0_32] : memref<128x512xf32, #tpu.memory_space<vmem>>, vector<128x384xf32>
      %cst_33 = arith.constant dense<0.000000e+00> : vector<128x384xf32>
      %69 = tpu.matmul %67, %68, %cst_33 {dimension_numbers = #tpu.dot_dimension_numbers<[1], [0], [0], [1], [0, 0, 1, 1], [], []>} : vector<128x128xf32>, vector<128x384xf32>, vector<128x384xf32> -> vector<128x384xf32>
      %c0_34 = arith.constant 0 : index
      %c0_35 = arith.constant 0 : index
      %70 = vector.load %arg6[%c0_34, %c0_35] : memref<1x512xf32, #tpu.memory_space<vmem>>, vector<1x384xf32>
      %71 = vector.broadcast %70 : vector<1x384xf32> to vector<128x384xf32>
      %72 = arith.addf %69, %71 : vector<128x384xf32>
      %73 = arith.truncf %72 : vector<128x384xf32> to vector<128x384xbf16>
      %c0_36 = arith.constant 0 : index
      %c0_37 = arith.constant 0 : index
      %74 = vector.load %arg13[%c0_36, %c0_37] : memref<128x384xbf16, #tpu.memory_space<vmem>>, vector<128x384xbf16>
      tpu.vector_store %arg13[%c0_36, %c0_37], %73 {strides = array<i32>} : memref<128x384xbf16, #tpu.memory_space<vmem>>, vector<128x384xbf16>,
      %cst_38 = arith.constant 0.000000e+00 : f32
      %75 = vector.broadcast %cst_38 : f32 to vector<128x256xf32>
      %c0_39 = arith.constant 0 : index
      %c0_40 = arith.constant 0 : index
      %76 = vector.load %arg14[%c0_39, %c0_40] : memref<128x256xf32, #tpu.memory_space<vmem>>, vector<128x256xf32>
      tpu.vector_store %arg14[%c0_39, %c0_40], %75 {strides = array<i32>} : memref<128x256xf32, #tpu.memory_space<vmem>>, vector<128x256xf32>,
    } else {
    }
    %c0 = arith.constant 0 : index
    %c0_1 = arith.constant 0 : index
    %3 = vector.load %arg2[%c0, %c0_1] : memref<128x128xf32, #tpu.memory_space<vmem>>, vector<128x128xf32>
    %c0_2 = arith.constant 0 : index
    %c0_3 = arith.constant 0 : index
    %4 = vector.load %arg3[%c0_2, %c0_3] : memref<128x2xi32, #tpu.memory_space<vmem>>, vector<128x1xi32>
    %c0_4 = arith.constant 0 : index
    %c1 = arith.constant 1 : index
    %5 = vector.load %arg3[%c0_4, %c1] : memref<128x2xi32, #tpu.memory_space<vmem>>, vector<128x1xi32>
    %6 = tpu.iota {dimensions = array<i32: 1>} : vector<128x128xi32>
    %7 = vector.broadcast %4 : vector<128x1xi32> to vector<128x128xi32>
    %8 = arith.cmpi eq, %7, %6 : vector<128x128xi32>
    %9 = arith.extui %8 : vector<128x128xi1> to vector<128x128xi32>
    %10 = arith.sitofp %9 : vector<128x128xi32> to vector<128x128xf32>
    %11 = arith.truncf %10 : vector<128x128xf32> to vector<128x128xbf16>
    %12 = vector.broadcast %5 : vector<128x1xi32> to vector<128x128xi32>
    %13 = arith.cmpi eq, %12, %6 : vector<128x128xi32>
    %14 = arith.extui %13 : vector<128x128xi1> to vector<128x128xi32>
    %15 = arith.sitofp %14 : vector<128x128xi32> to vector<128x128xf32>
    %16 = arith.truncf %15 : vector<128x128xf32> to vector<128x128xbf16>
    %c0_5 = arith.constant 0 : index
    %c0_6 = arith.constant 0 : index
    %17 = vector.load %arg13[%c0_5, %c0_6] : memref<128x384xbf16, #tpu.memory_space<vmem>>, vector<128x384xbf16>
    %18 = vector.extract_strided_slice %17 {offsets = [0, 0], sizes = [128, 256], strides = [1, 1]} : vector<128x384xbf16> to vector<128x256xbf16>
    %cst = arith.constant dense<0.000000e+00> : vector<128x256xf32>
    %19 = tpu.matmul %11, %18, %cst {dimension_numbers = #tpu.dot_dimension_numbers<[1], [0], [0], [1], [0, 0, 1, 1], [], []>} : vector<128x128xbf16>, vector<128x256xbf16>, vector<128x256xf32> -> vector<128x256xf32>
    %20 = vector.extract_strided_slice %17 {offsets = [0, 256], sizes = [128, 128], strides = [1, 1]} : vector<128x384xbf16> to vector<128x128xbf16>
    %cst_7 = arith.constant dense<0.000000e+00> : vector<128x128xf32>
    %21 = tpu.matmul %16, %20, %cst_7 {dimension_numbers = #tpu.dot_dimension_numbers<[1], [0], [0], [1], [0, 0, 1, 1], [], []>} : vector<128x128xbf16>, vector<128x128xbf16>, vector<128x128xf32> -> vector<128x128xf32>
    %c0_8 = arith.constant 0 : index
    %c0_9 = arith.constant 0 : index
    %22 = vector.load %arg7[%c0_8, %c0_9] : memref<128x128xf32, #tpu.memory_space<vmem>>, vector<128x128xf32>
    %cst_10 = arith.constant dense<0.000000e+00> : vector<128x128xf32>
    %23 = tpu.matmul %3, %22, %cst_10 {dimension_numbers = #tpu.dot_dimension_numbers<[1], [0], [0], [1], [0, 0, 1, 1], [], []>} : vector<128x128xf32>, vector<128x128xf32>, vector<128x128xf32> -> vector<128x128xf32>
    %c0_11 = arith.constant 0 : index
    %c0_12 = arith.constant 0 : index
    %24 = vector.load %arg8[%c0_11, %c0_12] : memref<1x128xf32, #tpu.memory_space<vmem>>, vector<1x128xf32>
    %25 = vector.broadcast %24 : vector<1x128xf32> to vector<128x128xf32>
    %26 = arith.addf %23, %25 : vector<128x128xf32>
    %27 = vector.extract_strided_slice %19 {offsets = [0, 0], sizes = [128, 128], strides = [1, 1]} : vector<128x256xf32> to vector<128x128xf32>
    %28 = arith.addf %27, %21 : vector<128x128xf32>
    %29 = arith.addf %28, %26 : vector<128x128xf32>
    %30 = arith.negf %29 : vector<128x128xf32>
    %31 = math.exp %30 : vector<128x128xf32>
    %cst_13 = arith.constant 1.000000e+00 : f32
    %32 = vector.broadcast %cst_13 : f32 to vector<128x128xf32>
    %33 = arith.addf %32, %31 : vector<128x128xf32>
    %34 = arith.divf %32, %33 : vector<128x128xf32>
    %35 = vector.extract_strided_slice %19 {offsets = [0, 128], sizes = [128, 128], strides = [1, 1]} : vector<128x256xf32> to vector<128x128xf32>
    %36 = arith.mulf %34, %35 : vector<128x128xf32>
    %37 = tpu.iota {dimensions = array<i32: 0>} : vector<128x128xi32>
    %c0_14 = arith.constant 0 : index
    %c0_15 = arith.constant 0 : index
    %38 = vector.load %arg4[%c0_14, %c0_15] : memref<1x128xi32, #tpu.memory_space<vmem>>, vector<1x128xi32>
    %39 = vector.broadcast %38 : vector<1x128xi32> to vector<128x128xi32>
    %40 = arith.cmpi eq, %39, %37 : vector<128x128xi32>
    %41 = arith.extui %40 : vector<128x128xi1> to vector<128x128xi32>
    %42 = arith.sitofp %41 : vector<128x128xi32> to vector<128x128xf32>
    %43 = arith.truncf %42 : vector<128x128xf32> to vector<128x128xbf16>
    %44 = tpu.concatenate %36, %34 in 1 : vector<128x128xf32>, vector<128x128xf32> -> vector<128x256xf32>
    %45 = arith.truncf %44 : vector<128x256xf32> to vector<128x256xbf16>
    %c0_16 = arith.constant 0 : index
    %c0_17 = arith.constant 0 : index
    %46 = vector.load %arg14[%c0_16, %c0_17] : memref<128x256xf32, #tpu.memory_space<vmem>>, vector<128x256xf32>
    %cst_18 = arith.constant dense<0.000000e+00> : vector<128x256xf32>
    %47 = tpu.matmul %43, %45, %cst_18 {dimension_numbers = #tpu.dot_dimension_numbers<[1], [0], [0], [1], [0, 0, 1, 1], [], []>} : vector<128x128xbf16>, vector<128x256xbf16>, vector<128x256xf32> -> vector<128x256xf32>
    %48 = arith.addf %46, %47 : vector<128x256xf32>
    %c0_19 = arith.constant 0 : index
    %c0_20 = arith.constant 0 : index
    %49 = vector.load %arg14[%c0_19, %c0_20] : memref<128x256xf32, #tpu.memory_space<vmem>>, vector<128x256xf32>
    tpu.vector_store %arg14[%c0_19, %c0_20], %48 {strides = array<i32>} : memref<128x256xf32, #tpu.memory_space<vmem>>, vector<128x256xf32>,
    %c0_21 = arith.constant 0 : index
    %c0_22 = arith.constant 0 : index
    %50 = vector.load %arg10[%c0_21, %c0_22] : memref<2x128xf32, #tpu.memory_space<vmem>>, vector<1x128xf32>
    %51 = vector.broadcast %50 : vector<1x128xf32> to vector<128x128xf32>
    %52 = arith.mulf %29, %51 : vector<128x128xf32>
    %c1_23 = arith.constant 1 : index
    %c0_24 = arith.constant 0 : index
    %53 = vector.load %arg10[%c1_23, %c0_24] : memref<2x128xf32, #tpu.memory_space<vmem>>, vector<1x128xf32>
    %54 = vector.broadcast %53 : vector<1x128xf32> to vector<128x128xf32>
    %55 = arith.addf %52, %54 : vector<128x128xf32>
    %56 = arith.negf %55 : vector<128x128xf32>
    %57 = math.exp %56 : vector<128x128xf32>
    %cst_25 = arith.constant 1.000000e+00 : f32
    %58 = vector.broadcast %cst_25 : f32 to vector<128x128xf32>
    %59 = arith.addf %58, %57 : vector<128x128xf32>
    %60 = arith.divf %58, %59 : vector<128x128xf32>
    %61 = arith.mulf %55, %60 : vector<128x128xf32>
    %62 = arith.addf %3, %61 : vector<128x128xf32>
    %c0_26 = arith.constant 0 : index
    %c0_27 = arith.constant 0 : index
    %63 = vector.load %arg12[%c0_26, %c0_27] : memref<128x128xf32, #tpu.memory_space<vmem>>, vector<128x128xf32>
    tpu.vector_store %arg12[%c0_26, %c0_27], %62 {strides = array<i32>} : memref<128x128xf32, #tpu.memory_space<vmem>>, vector<128x128xf32>,
    %c2_i32 = arith.constant 2 : i32
    %64 = arith.cmpi eq, %arg0, %c2_i32 : i32
    %65 = arith.extui %64 : i1 to i32
    %c0_i32_28 = arith.constant 0 : i32
    %66 = arith.cmpi ne, %65, %c0_i32_28 : i32
    scf.if %66 {
      %c0_29 = arith.constant 0 : index
      %c0_30 = arith.constant 0 : index
      %67 = vector.load %arg14[%c0_29, %c0_30] : memref<128x256xf32, #tpu.memory_space<vmem>>, vector<128x256xf32>
      %c0_31 = arith.constant 0 : index
      %c0_32 = arith.constant 0 : index
      %68 = vector.load %arg1[%c0_31, %c0_32] : memref<128x128xf32, #tpu.memory_space<vmem>>, vector<128x128xf32>
      %c0_33 = arith.constant 0 : index
      %c384 = arith.constant 384 : index
      %69 = vector.load %arg5[%c0_33, %c384] : memref<128x512xf32, #tpu.memory_space<vmem>>, vector<128x128xf32>
      %cst_34 = arith.constant dense<0.000000e+00> : vector<128x128xf32>
      %70 = tpu.matmul %68, %69, %cst_34 {dimension_numbers = #tpu.dot_dimension_numbers<[1], [0], [0], [1], [0, 0, 1, 1], [], []>} : vector<128x128xf32>, vector<128x128xf32>, vector<128x128xf32> -> vector<128x128xf32>
      %c0_35 = arith.constant 0 : index
      %c384_36 = arith.constant 384 : index
      %71 = vector.load %arg6[%c0_35, %c384_36] : memref<1x512xf32, #tpu.memory_space<vmem>>, vector<1x128xf32>
      %72 = vector.broadcast %71 : vector<1x128xf32> to vector<128x128xf32>
      %73 = arith.addf %70, %72 : vector<128x128xf32>
      %74 = vector.extract_strided_slice %67 {offsets = [0, 0], sizes = [128, 128], strides = [1, 1]} : vector<128x256xf32> to vector<128x128xf32>
      %75 = vector.extract_strided_slice %67 {offsets = [0, 128], sizes = [128, 128], strides = [1, 1]} : vector<128x256xf32> to vector<128x128xf32>
      %cst_37 = arith.constant 9.99999997E-7 : f32
      %76 = vector.broadcast %cst_37 : f32 to vector<128x128xf32>
      %77 = arith.addf %75, %76 : vector<128x128xf32>
      %78 = tpu.reciprocal %77 {approx = true} : vector<128x128xf32> -> vector<128x128xf32>
      %79 = arith.mulf %74, %78 : vector<128x128xf32>
      %80 = arith.addf %73, %79 : vector<128x128xf32>
      %c0_38 = arith.constant 0 : index
      %c0_39 = arith.constant 0 : index
      %81 = vector.load %arg9[%c0_38, %c0_39] : memref<2x128xf32, #tpu.memory_space<vmem>>, vector<1x128xf32>
      %82 = vector.broadcast %81 : vector<1x128xf32> to vector<128x128xf32>
      %83 = arith.mulf %80, %82 : vector<128x128xf32>
      %c1_40 = arith.constant 1 : index
      %c0_41 = arith.constant 0 : index
      %84 = vector.load %arg9[%c1_40, %c0_41] : memref<2x128xf32, #tpu.memory_space<vmem>>, vector<1x128xf32>
      %85 = vector.broadcast %84 : vector<1x128xf32> to vector<128x128xf32>
      %86 = arith.addf %83, %85 : vector<128x128xf32>
      %c0_42 = arith.constant 0 : index
      %c0_43 = arith.constant 0 : index
      %87 = vector.load %arg1[%c0_42, %c0_43] : memref<128x128xf32, #tpu.memory_space<vmem>>, vector<128x128xf32>
      %88 = arith.negf %86 : vector<128x128xf32>
      %89 = math.exp %88 : vector<128x128xf32>
      %cst_44 = arith.constant 1.000000e+00 : f32
      %90 = vector.broadcast %cst_44 : f32 to vector<128x128xf32>
      %91 = arith.addf %90, %89 : vector<128x128xf32>
      %92 = arith.divf %90, %91 : vector<128x128xf32>
      %93 = arith.mulf %86, %92 : vector<128x128xf32>
      %94 = arith.addf %87, %93 : vector<128x128xf32>
      %c0_45 = arith.constant 0 : index
      %c0_46 = arith.constant 0 : index
      %95 = vector.load %arg11[%c0_45, %c0_46] : memref<128x128xf32, #tpu.memory_space<vmem>>, vector<128x128xf32>
      tpu.vector_store %arg11[%c0_45, %c0_46], %94 {strides = array<i32>} : memref<128x128xf32, #tpu.memory_space<vmem>>, vector<128x128xf32>,
    } else {
    }
    return
  }
  func.func @transform_0(%arg0: i32) -> (i32, i32) {
    %c0_i32 = arith.constant 0 : i32
    %c0_i32_0 = arith.constant 0 : i32
    %c0_i32_1 = arith.constant 0 : i32
    return %c0_i32, %c0_i32_0 : i32, i32
  }
  func.func @transform_1(%arg0: i32) -> (i32, i32) {
    %c0_i32 = arith.constant 0 : i32
    %c0_i32_0 = arith.constant 0 : i32
    return %arg0, %c0_i32 : i32, i32
  }
  func.func @transform_2(%arg0: i32) -> (i32, i32) {
    %c0_i32 = arith.constant 0 : i32
    %c0_i32_0 = arith.constant 0 : i32
    return %arg0, %c0_i32 : i32, i32
  }
  func.func @transform_3(%arg0: i32) -> (i32, i32) {
    %c0_i32 = arith.constant 0 : i32
    %c0_i32_0 = arith.constant 0 : i32
    return %c0_i32, %arg0 : i32, i32
  }
  func.func @transform_4(%arg0: i32) -> (i32, i32) {
    %c0_i32 = arith.constant 0 : i32
    %c0_i32_0 = arith.constant 0 : i32
    %c0_i32_1 = arith.constant 0 : i32
    return %c0_i32, %c0_i32_0 : i32, i32
  }
  func.func @transform_5(%arg0: i32) -> (i32, i32) {
    %c0_i32 = arith.constant 0 : i32
    %c0_i32_0 = arith.constant 0 : i32
    %c0_i32_1 = arith.constant 0 : i32
    return %c0_i32, %c0_i32_0 : i32, i32
  }
  func.func @transform_6(%arg0: i32) -> (i32, i32) {
    %c0_i32 = arith.constant 0 : i32
    %c0_i32_0 = arith.constant 0 : i32
    %c0_i32_1 = arith.constant 0 : i32
    return %c0_i32, %c0_i32_0 : i32, i32
  }
  func.func @transform_7(%arg0: i32) -> (i32, i32) {
    %c0_i32 = arith.constant 0 : i32
    %c0_i32_0 = arith.constant 0 : i32
    %c0_i32_1 = arith.constant 0 : i32
    return %c0_i32, %c0_i32_0 : i32, i32
  }
  func.func @transform_8(%arg0: i32) -> (i32, i32) {
    %c0_i32 = arith.constant 0 : i32
    %c0_i32_0 = arith.constant 0 : i32
    %c0_i32_1 = arith.constant 0 : i32
    return %c0_i32, %c0_i32_0 : i32, i32
  }
  func.func @transform_9(%arg0: i32) -> (i32, i32) {
    %c0_i32 = arith.constant 0 : i32
    %c0_i32_0 = arith.constant 0 : i32
    %c0_i32_1 = arith.constant 0 : i32
    return %c0_i32, %c0_i32_0 : i32, i32
  }
  func.func @transform_10(%arg0: i32) -> (i32, i32) {
    %c0_i32 = arith.constant 0 : i32
    %c0_i32_0 = arith.constant 0 : i32
    %c0_i32_1 = arith.constant 0 : i32
    return %c0_i32, %c0_i32_0 : i32, i32
  }
  func.func @transform_11(%arg0: i32) -> (i32, i32) {
    %c0_i32 = arith.constant 0 : i32
    %c0_i32_0 = arith.constant 0 : i32
    return %arg0, %c0_i32 : i32, i32
  }
}

</mosaic_0001>

<llo_original>
// kernel: tpu_custom_call.1
$region0: #{tpu_custom_call.1}
  #allocation0 [shape = 'u32[]', space=smem, size = 0x4, offset = 0x4, fixed_abs, tag = 'smem constant byte address 0x4 - core index']
  #allocation1 [shape = 'u32[144,128]{1,0:T(1,128)}', space=vmem, size = 0x12000, scoped, tag = 'internal scratch']
  #allocation2 [shape = 'bf16[128,384]{1,0:T(8,128)(2,1)}', space=vmem, size = 0x18000, scoped, tag = 'scratch operand']
  #allocation3 [shape = 'f32[128,256]{1,0:T(8,128)}', space=vmem, size = 0x20000, scoped, tag = 'scratch operand']
  %s0 = inlined_call_operand.hbm [shape: f32[128,128], index: 0, kind: input, shape index: {}]
  %s1 = inlined_call_operand.vmem [shape: f32[384,128], index: 1, kind: input, shape index: {}]
  %s2 = inlined_call_operand.vmem [shape: s32[384,2], index: 2, kind: input, shape index: {}]
  %s3 = inlined_call_operand.vmem [shape: s32[1,384], index: 3, kind: input, shape index: {}]
  %s4 = inlined_call_operand.hbm [shape: f32[128,512], index: 4, kind: input, shape index: {}]
  %s5 = inlined_call_operand.vmem [shape: f32[1,512], index: 5, kind: input, shape index: {}]
  %s6 = inlined_call_operand.hbm [shape: f32[128,128], index: 6, kind: input, shape index: {}]
  %s7 = inlined_call_operand.vmem [shape: f32[1,128], index: 7, kind: input, shape index: {}]
  %s8 = inlined_call_operand.vmem [shape: f32[2,128], index: 8, kind: input, shape index: {}]
  %s9 = inlined_call_operand.vmem [shape: f32[2,128], index: 9, kind: input, shape index: {}]
  %s10 = inlined_call_operand.hbm [shape: f32[128,128], index: 10, kind: output, shape index: {0}]
  %s11 = inlined_call_operand.hbm [shape: f32[384,128], index: 11, kind: output, shape index: {1}]
  %12 = xla_tuple %s10, %s11
  %s13 = sld [smem:[#allocation0]]
  $region101: #{tpu_custom_call.1} parent=0
    _
  %s15 = ssub.s32 1, %s13
  %s16 = scalar_select 0, %s15, %s13
  $region1: #{tpu_custom_call.1} parent=0
    #allocation4 [shape = 'u8[65536]{0}', space=vmem, size = 0x10000, scoped, tag = 'input window, operand 0, single buffered']
    #allocation5 [shape = 's32[2]{0}', space=sflag, size = 0x8, scoped, tag = 'scoped memory for tpu_custom_call.1']
    #allocation6 [shape = 's32[2]{0}', space=sflag, size = 0x8, scoped, tag = 'scoped memory for tpu_custom_call.1']
    #allocation7 [shape = 'u8[262144]{0}', space=vmem, size = 0x40000, scoped, tag = 'input window, operand 4, single buffered']
    #allocation8 [shape = 's32[1]{0}', space=sflag, size = 0x4, scoped, tag = 'scoped memory for tpu_custom_call.1']
    #allocation9 [shape = 'u8[65536]{0}', space=vmem, size = 0x10000, scoped, tag = 'input window, operand 6, single buffered']
    #allocation10 [shape = 'u8[65536]{0}', space=vmem, size = 0x10000, scoped, tag = 'output window, operand 0, single buffered']
    #allocation11 [shape = 'u8[131072]{0}', space=vmem, size = 0x20000, scoped, tag = 'output window, operand 1']
    #allocation12 [shape = 's32[2]{0}', space=sflag, size = 0x8, scoped, tag = 'scoped memory for tpu_custom_call.1']
    %17 = vsyncpa [#allocation5], 0
    %18 = vsyncpa [#allocation8], 0
    %19 = vsyncpa [#allocation6], 0
    %20 = vsyncpa [#allocation12], 0
    %s21 = scalar_lea.sflag [#allocation12], 1
    %22 = vsyncpa %s21, 0
    loop: start=0, step=1, limit=5
    $region2: #{tpu_custom_call.1} parent=1 // loop_pre_header
      _
    $region3: #{tpu_custom_call.1} parent=1 // loop_header
      %s24 = sphi 0, %s28
      %p25 = scmp.ge.s32.totalorder %s24, 5
      %s32 = sphi 0, %s32
      %s34 = sphi 0, %s32
      %s35 = sphi 0, %s34
      %s49 = sphi 0, %s35
      %s55 = sphi 0, %s57
      %s58 = sphi 0, %s55
      %s59 = sphi 0, %s58
      %s75 = sphi 0, %s59
      %s81 = sphi 0, %s83
      %s84 = sphi 0, %s81
      %s85 = sphi 0, %s84
      %s101 = sphi 0, %s85
      %s107 = sphi 0, %s109
      %s110 = sphi 0, %s107
      %s111 = sphi 0, %s110
      %s127 = sphi 0, %s111
      %s131 = sphi 0, %s131
      %s133 = sphi 0, %s131
      %s134 = sphi 0, %s133
      %s148 = sphi 0, %s134
      %s152 = sphi 0, %s152
      %s154 = sphi 0, %s152
      %s155 = sphi 0, %s154
      %s169 = sphi 0, %s155
      %s173 = sphi 0, %s173
      %s175 = sphi 0, %s173
      %s176 = sphi 0, %s175
      %s190 = sphi 0, %s176
      %s194 = sphi 0, %s194
      %s196 = sphi 0, %s194
      %s197 = sphi 0, %s196
      %s211 = sphi 0, %s197
      %s215 = sphi 0, %s215
      %s217 = sphi 0, %s215
      %s218 = sphi 0, %s217
      %s232 = sphi 0, %s218
      %s236 = sphi 0, %s236
      %s238 = sphi 0, %s236
      %s239 = sphi 0, %s238
      %s253 = sphi 0, %s239
      %s257 = sphi 0, %s257
      %s259 = sphi 0, %s257
      %s260 = sphi 0, %s259
      %s274 = sphi 0, %s260
      %s280 = sphi 0, %s282
      %s283 = sphi 0, %s280
      %s284 = sphi 0, %s283
      %s300 = sphi 0, %s284
    $region4: #{tpu_custom_call.1} parent=1 // loop_header_branch
      %27 = sbr.rel (%p25) target = $region8
    $region5: #{tpu_custom_call.1} parent=1 // loop_body
      %s29 = ssub.s32 %s24, 1
      %s30 = ssub.s32 %s24, 2
      %s31 = sadd.s32 %s24, 1
      %s33 = sadd.s32 %s32, 1
      %p36 = scmp.eq.s32.totalorder %s24, 2
      %p37 = scmp.ne.s32.totalorder %s32, %s34
      %p38 = scmp.eq.s32.totalorder %s24, 0
      %p39 = por %p37, %p38
      %p40 = scmp.ne.s32.totalorder %s32, %s34
      %p41 = scmp.eq.s32.totalorder %s29, 2
      %p42 = por %p40, %p41
      %p43 = scmp.ne.s32.totalorder %s34, %s35
      %p44 = scmp.eq.s32.totalorder %s29, 0
      %p45 = por %p43, %p44
      %p46 = scmp.ne.s32.totalorder %s34, %s35
      %p47 = scmp.eq.s32.totalorder %s30, 2
      %p48 = por %p46, %p47
      %p50 = scmp.ne.s32.totalorder %s35, %s49
      %p51 = scmp.eq.s32.totalorder %s30, 0
      %p52 = por %p50, %p51
      %s53 = ssub.s32 %s24, %s31
      %p54 = scmp.eq.s32.totalorder %s53, 0
      %s56 = sadd.s32 %s55, 1
      %s57 = scalar_select %p54, %s55, %s56
      %p60 = pneg %p54
      %p61 = scmp.eq.s32.totalorder %s24, 2
      %p62 = por %p60, %p61
      %p63 = scmp.ne.s32.totalorder %s55, %s58
      %p64 = scmp.eq.s32.totalorder %s24, 0
      %p65 = por %p63, %p64
      %p66 = scmp.ne.s32.totalorder %s55, %s58
      %p67 = scmp.eq.s32.totalorder %s29, 2
      %p68 = por %p66, %p67
      %p69 = scmp.ne.s32.totalorder %s58, %s59
      %p70 = scmp.eq.s32.totalorder %s29, 0
      %p71 = por %p69, %p70
      %p72 = scmp.ne.s32.totalorder %s58, %s59
      %p73 = scmp.eq.s32.totalorder %s30, 2
      %p74 = por %p72, %p73
      %p76 = scmp.ne.s32.totalorder %s59, %s75
      %p77 = scmp.eq.s32.totalorder %s30, 0
      %p78 = por %p76, %p77
      %s79 = ssub.s32 %s24, %s31
      %p80 = scmp.eq.s32.totalorder %s79, 0
      %s82 = sadd.s32 %s81, 1
      %s83 = scalar_select %p80, %s81, %s82
      %p86 = pneg %p80
      %p87 = scmp.eq.s32.totalorder %s24, 2
      %p88 = por %p86, %p87
      %p89 = scmp.ne.s32.totalorder %s81, %s84
      %p90 = scmp.eq.s32.totalorder %s24, 0
      %p91 = por %p89, %p90
      %p92 = scmp.ne.s32.totalorder %s81, %s84
      %p93 = scmp.eq.s32.totalorder %s29, 2
      %p94 = por %p92, %p93
      %p95 = scmp.ne.s32.totalorder %s84, %s85
      %p96 = scmp.eq.s32.totalorder %s29, 0
      %p97 = por %p95, %p96
      %p98 = scmp.ne.s32.totalorder %s84, %s85
      %p99 = scmp.eq.s32.totalorder %s30, 2
      %p100 = por %p98, %p99
      %p102 = scmp.ne.s32.totalorder %s85, %s101
      %p103 = scmp.eq.s32.totalorder %s30, 0
      %p104 = por %p102, %p103
      %s105 = ssub.s32 %s24, %s31
      %p106 = scmp.eq.s32.totalorder %s105, 0
      %s108 = sadd.s32 %s107, 1
      %s109 = scalar_select %p106, %s107, %s108
      %p112 = pneg %p106
      %p113 = scmp.eq.s32.totalorder %s24, 2
      %p114 = por %p112, %p113
      %p115 = scmp.ne.s32.totalorder %s107, %s110
      %p116 = scmp.eq.s32.totalorder %s24, 0
      %p117 = por %p115, %p116
      %p118 = scmp.ne.s32.totalorder %s107, %s110
      %p119 = scmp.eq.s32.totalorder %s29, 2
      %p120 = por %p118, %p119
      %p121 = scmp.ne.s32.totalorder %s110, %s111
      %p122 = scmp.eq.s32.totalorder %s29, 0
      %p123 = por %p121, %p122
      %p124 = scmp.ne.s32.totalorder %s110, %s111
      %p125 = scmp.eq.s32.totalorder %s30, 2
      %p126 = por %p124, %p125
      %p128 = scmp.ne.s32.totalorder %s111, %s127
      %p129 = scmp.eq.s32.totalorder %s30, 0
      %p130 = por %p128, %p129
      %s132 = sadd.s32 %s131, 1
      %p135 = scmp.eq.s32.totalorder %s24, 2
      %p136 = scmp.ne.s32.totalorder %s131, %s133
      %p137 = scmp.eq.s32.totalorder %s24, 0
      %p138 = por %p136, %p137
      %p139 = scmp.ne.s32.totalorder %s131, %s133
      %p140 = scmp.eq.s32.totalorder %s29, 2
      %p141 = por %p139, %p140
      %p142 = scmp.ne.s32.totalorder %s133, %s134
      %p143 = scmp.eq.s32.totalorder %s29, 0
      %p144 = por %p142, %p143
      %p145 = scmp.ne.s32.totalorder %s133, %s134
      %p146 = scmp.eq.s32.totalorder %s30, 2
      %p147 = por %p145, %p146
      %p149 = scmp.ne.s32.totalorder %s134, %s148
      %p150 = scmp.eq.s32.totalorder %s30, 0
      %p151 = por %p149, %p150
      %s153 = sadd.s32 %s152, 1
      %p156 = scmp.eq.s32.totalorder %s24, 2
      %p157 = scmp.ne.s32.totalorder %s152, %s154
      %p158 = scmp.eq.s32.totalorder %s24, 0
      %p159 = por %p157, %p158
      %p160 = scmp.ne.s32.totalorder %s152, %s154
      %p161 = scmp.eq.s32.totalorder %s29, 2
      %p162 = por %p160, %p161
      %p163 = scmp.ne.s32.totalorder %s154, %s155
      %p164 = scmp.eq.s32.totalorder %s29, 0
      %p165 = por %p163, %p164
      %p166 = scmp.ne.s32.totalorder %s154, %s155
      %p167 = scmp.eq.s32.totalorder %s30, 2
      %p168 = por %p166, %p167
      %p170 = scmp.ne.s32.totalorder %s155, %s169
      %p171 = scmp.eq.s32.totalorder %s30, 0
      %p172 = por %p170, %p171
      %s174 = sadd.s32 %s173, 1
      %p177 = scmp.eq.s32.totalorder %s24, 2
      %p178 = scmp.ne.s32.totalorder %s173, %s175
      %p179 = scmp.eq.s32.totalorder %s24, 0
      %p180 = por %p178, %p179
      %p181 = scmp.ne.s32.totalorder %s173, %s175
      %p182 = scmp.eq.s32.totalorder %s29, 2
      %p183 = por %p181, %p182
      %p184 = scmp.ne.s32.totalorder %s175, %s176
      %p185 = scmp.eq.s32.totalorder %s29, 0
      %p186 = por %p184, %p185
      %p187 = scmp.ne.s32.totalorder %s175, %s176
      %p188 = scmp.eq.s32.totalorder %s30, 2
      %p189 = por %p187, %p188
      %p191 = scmp.ne.s32.totalorder %s176, %s190
      %p192 = scmp.eq.s32.totalorder %s30, 0
      %p193 = por %p191, %p192
      %s195 = sadd.s32 %s194, 1
      %p198 = scmp.eq.s32.totalorder %s24, 2
      %p199 = scmp.ne.s32.totalorder %s194, %s196
      %p200 = scmp.eq.s32.totalorder %s24, 0
      %p201 = por %p199, %p200
      %p202 = scmp.ne.s32.totalorder %s194, %s196
      %p203 = scmp.eq.s32.totalorder %s29, 2
      %p204 = por %p202, %p203
      %p205 = scmp.ne.s32.totalorder %s196, %s197
      %p206 = scmp.eq.s32.totalorder %s29, 0
      %p207 = por %p205, %p206
      %p208 = scmp.ne.s32.totalorder %s196, %s197
      %p209 = scmp.eq.s32.totalorder %s30, 2
      %p210 = por %p208, %p209
      %p212 = scmp.ne.s32.totalorder %s197, %s211
      %p213 = scmp.eq.s32.totalorder %s30, 0
      %p214 = por %p212, %p213
      %s216 = sadd.s32 %s215, 1
      %p219 = scmp.eq.s32.totalorder %s24, 2
      %p220 = scmp.ne.s32.totalorder %s215, %s217
      %p221 = scmp.eq.s32.totalorder %s24, 0
      %p222 = por %p220, %p221
      %p223 = scmp.ne.s32.totalorder %s215, %s217
      %p224 = scmp.eq.s32.totalorder %s29, 2
      %p225 = por %p223, %p224
      %p226 = scmp.ne.s32.totalorder %s217, %s218
      %p227 = scmp.eq.s32.totalorder %s29, 0
      %p228 = por %p226, %p227
      %p229 = scmp.ne.s32.totalorder %s217, %s218
      %p230 = scmp.eq.s32.totalorder %s30, 2
      %p231 = por %p229, %p230
      %p233 = scmp.ne.s32.totalorder %s218, %s232
      %p234 = scmp.eq.s32.totalorder %s30, 0
      %p235 = por %p233, %p234
      %s237 = sadd.s32 %s236, 1
      %p240 = scmp.eq.s32.totalorder %s24, 2
      %p241 = scmp.ne.s32.totalorder %s236, %s238
      %p242 = scmp.eq.s32.totalorder %s24, 0
      %p243 = por %p241, %p242
      %p244 = scmp.ne.s32.totalorder %s236, %s238
      %p245 = scmp.eq.s32.totalorder %s29, 2
      %p246 = por %p244, %p245
      %p247 = scmp.ne.s32.totalorder %s238, %s239
      %p248 = scmp.eq.s32.totalorder %s29, 0
      %p249 = por %p247, %p248
      %p250 = scmp.ne.s32.totalorder %s238, %s239
      %p251 = scmp.eq.s32.totalorder %s30, 2
      %p252 = por %p250, %p251
      %p254 = scmp.ne.s32.totalorder %s239, %s253
      %p255 = scmp.eq.s32.totalorder %s30, 0
      %p256 = por %p254, %p255
      %s258 = sadd.s32 %s257, 1
      %p261 = scmp.eq.s32.totalorder %s24, 2
      %p262 = scmp.ne.s32.totalorder %s257, %s259
      %p263 = scmp.eq.s32.totalorder %s24, 0
      %p264 = por %p262, %p263
      %p265 = scmp.ne.s32.totalorder %s257, %s259
      %p266 = scmp.eq.s32.totalorder %s29, 2
      %p267 = por %p265, %p266
      %p268 = scmp.ne.s32.totalorder %s259, %s260
      %p269 = scmp.eq.s32.totalorder %s29, 0
      %p270 = por %p268, %p269
      %p271 = scmp.ne.s32.totalorder %s259, %s260
      %p272 = scmp.eq.s32.totalorder %s30, 2
      %p273 = por %p271, %p272
      %p275 = scmp.ne.s32.totalorder %s260, %s274
      %p276 = scmp.eq.s32.totalorder %s30, 0
      %p277 = por %p275, %p276
      %s278 = ssub.s32 %s24, %s31
      %p279 = scmp.eq.s32.totalorder %s278, 0
      %s281 = sadd.s32 %s280, 1
      %s282 = scalar_select %p279, %s280, %s281
      %p285 = pneg %p279
      %p286 = scmp.eq.s32.totalorder %s24, 2
      %p287 = por %p285, %p286
      %p288 = scmp.ne.s32.totalorder %s280, %s283
      %p289 = scmp.eq.s32.totalorder %s24, 0
      %p290 = por %p288, %p289
      %p291 = scmp.ne.s32.totalorder %s280, %s283
      %p292 = scmp.eq.s32.totalorder %s29, 2
      %p293 = por %p291, %p292
      %p294 = scmp.ne.s32.totalorder %s283, %s284
      %p295 = scmp.eq.s32.totalorder %s29, 0
      %p296 = por %p294, %p295
      %p297 = scmp.ne.s32.totalorder %s283, %s284
      %p298 = scmp.eq.s32.totalorder %s30, 2
      %p299 = por %p297, %p298
      %p301 = scmp.ne.s32.totalorder %s284, %s300
      %p302 = scmp.eq.s32.totalorder %s30, 0
      %p303 = por %p301, %p302
      %p304 = scmp.le.s32.totalorder 1, %s24
      %p305 = scmp.lt.s32.totalorder %s24, 4
      %p306 = pnand %p304, %p305
      %p307 = pneg %p306
      // Predicated region
      $region9: #{tpu_custom_call.1} parent=5 // pred_check
        _
      $region10: #{tpu_custom_call.1} parent=5 // pred_check_branch
        %309 = sbr.rel (%p306) target = $region12
      $region11: #{tpu_custom_call.1} parent=5 // pred_region
        %s310 = ssub.s32 %s24, 1
        // Predicated region
        $region13: #{tpu_custom_call.1} parent=11 // pred_check
          %p311 = pneg %p45
        $region14: #{tpu_custom_call.1} parent=11 // pred_check_branch
          %313 = sbr.rel (%p311) target = $region16
        $region15: #{tpu_custom_call.1} parent=11 // pred_region
          %s315 = ssub.s32 2048, 2048
          %316 = vsyncadd [#allocation5], %s315
          %s317 = sshll.u32 [#allocation4], 4
          %s318 = int_to_ptr.vmem [resolvable:$true] %s317
          %323 = dma.hbm_to_vmem [thread:$0]  %s0, 2048, %s318, [#allocation5], 128, 128, 8
        $region16: #{tpu_custom_call.1} parent=11 // pred_fallthru
          _
        // Predicated region
        $region17: #{tpu_custom_call.1} parent=11 // pred_check
          %p324 = pneg %p144
        $region18: #{tpu_custom_call.1} parent=11 // pred_check_branch
          %326 = sbr.rel (%p324) target = $region20
        $region19: #{tpu_custom_call.1} parent=11 // pred_region
          %s328 = ssub.s32 8192, 8192
          %329 = vsyncadd [#allocation8], %s328
          %s330 = sshll.u32 [#allocation7], 4
          %s331 = int_to_ptr.vmem [resolvable:$true] %s330
          %336 = dma.hbm_to_vmem [thread:$0]  %s4, 8192, %s331, [#allocation8], 512, 512, 32
        $region20: #{tpu_custom_call.1} parent=11 // pred_fallthru
          _
        // Predicated region
        $region21: #{tpu_custom_call.1} parent=11 // pred_check
          %p337 = pneg %p165
        $region22: #{tpu_custom_call.1} parent=11 // pred_check_branch
          %339 = sbr.rel (%p337) target = $region24
        $region23: #{tpu_custom_call.1} parent=11 // pred_region
          _
        $region24: #{tpu_custom_call.1} parent=11 // pred_fallthru
          _
        // Predicated region
        $region25: #{tpu_custom_call.1} parent=11 // pred_check
          %p340 = pneg %p186
        $region26: #{tpu_custom_call.1} parent=11 // pred_check_branch
          %342 = sbr.rel (%p340) target = $region28
        $region27: #{tpu_custom_call.1} parent=11 // pred_region
          %s344 = ssub.s32 2048, 2048
          %345 = vsyncadd [#allocation8], %s344
          %s346 = sshll.u32 [#allocation9], 4
          %s347 = int_to_ptr.vmem [resolvable:$true] %s346
          %352 = dma.hbm_to_vmem [thread:$0]  %s6, 2048, %s347, [#allocation8], 128, 128, 8
        $region28: #{tpu_custom_call.1} parent=11 // pred_fallthru
          _
        // Predicated region
        $region29: #{tpu_custom_call.1} parent=11 // pred_check
          %p353 = pneg %p207
        $region30: #{tpu_custom_call.1} parent=11 // pred_check_branch
          %355 = sbr.rel (%p353) target = $region32
        $region31: #{tpu_custom_call.1} parent=11 // pred_region
          _
        $region32: #{tpu_custom_call.1} parent=11 // pred_fallthru
          _
        // Predicated region
        $region33: #{tpu_custom_call.1} parent=11 // pred_check
          %p356 = pneg %p228
        $region34: #{tpu_custom_call.1} parent=11 // pred_check_branch
          %358 = sbr.rel (%p356) target = $region36
        $region35: #{tpu_custom_call.1} parent=11 // pred_region
          _
        $region36: #{tpu_custom_call.1} parent=11 // pred_fallthru
          _
        // Predicated region
        $region37: #{tpu_custom_call.1} parent=11 // pred_check
          %p359 = pneg %p249
        $region38: #{tpu_custom_call.1} parent=11 // pred_check_branch
          %361 = sbr.rel (%p359) target = $region40
        $region39: #{tpu_custom_call.1} parent=11 // pred_region
          _
        $region40: #{tpu_custom_call.1} parent=11 // pred_fallthru
          _
      $region12: #{tpu_custom_call.1} parent=5 // pred_fallthru
        _
      %p362 = scmp.lt.s32.totalorder %s24, 3
      // Predicated region
      $region41: #{tpu_custom_call.1} parent=5 // pred_check
        %p363 = pneg %p362
      $region42: #{tpu_custom_call.1} parent=5 // pred_check_branch
        %365 = sbr.rel (%p363) target = $region44
      $region43: #{tpu_custom_call.1} parent=5 // pred_region
        // Predicated region
        $region45: #{tpu_custom_call.1} parent=43 // pred_check
          %p366 = pneg %p65
        $region46: #{tpu_custom_call.1} parent=43 // pred_check_branch
          %368 = sbr.rel (%p366) target = $region48
        $region47: #{tpu_custom_call.1} parent=43 // pred_region
          %s369 = smul.u32 16, %s24
          %p370 = scmp.lt.s32.totalorder %s369, 47
          %s371 = scalar_select %p370, %s369, 47
          %s372 = smul.addr %s371, 8
          %s373 = scalar_lea.vmem %s1, %s372
          %s374 = smul.u32 16, %s24
        $region48: #{tpu_custom_call.1} parent=43 // pred_fallthru
          _
        // Predicated region
        $region49: #{tpu_custom_call.1} parent=43 // pred_check
          %p375 = pneg %p91
        $region50: #{tpu_custom_call.1} parent=43 // pred_check_branch
          %377 = sbr.rel (%p375) target = $region52
        $region51: #{tpu_custom_call.1} parent=43 // pred_region
          %s378 = smul.u32 16, %s24
          %p379 = scmp.lt.s32.totalorder %s378, 47
          %s380 = scalar_select %p379, %s378, 47
          %s381 = smul.addr %s380, 8
          %s382 = scalar_lea.vmem %s2, %s381
          %s383 = smul.u32 16, %s24
        $region52: #{tpu_custom_call.1} parent=43 // pred_fallthru
          _
        // Predicated region
        $region53: #{tpu_custom_call.1} parent=43 // pred_check
          %p384 = pneg %p117
        $region54: #{tpu_custom_call.1} parent=43 // pred_check_branch
          %386 = sbr.rel (%p384) target = $region56
        $region55: #{tpu_custom_call.1} parent=43 // pred_region
          %p387 = scmp.lt.s32.totalorder %s24, 2
          %s388 = scalar_select %p387, %s24, 2
          %s389 = scalar_lea.vmem %s3, %s388
        $region56: #{tpu_custom_call.1} parent=43 // pred_fallthru
          _
      $region44: #{tpu_custom_call.1} parent=5 // pred_fallthru
        _
      %p390 = scmp.le.s32.totalorder 1, %s24
      %p391 = scmp.lt.s32.totalorder %s24, 4
      %p392 = pnand %p390, %p391
      %p393 = pneg %p392
      // Predicated region
      $region57: #{tpu_custom_call.1} parent=5 // pred_check
        _
      $region58: #{tpu_custom_call.1} parent=5 // pred_check_branch
        %395 = sbr.rel (%p392) target = $region60
      $region59: #{tpu_custom_call.1} parent=5 // pred_region
        %s396 = ssub.s32 %s24, 1
        // Predicated region
        $region61: #{tpu_custom_call.1} parent=59 // pred_check
          %p397 = pneg %p45
        $region62: #{tpu_custom_call.1} parent=59 // pred_check_branch
          %399 = sbr.rel (%p397) target = $region64
        $region63: #{tpu_custom_call.1} parent=59 // pred_region
          %400 = dma.done [#allocation5], 2048
        $region64: #{tpu_custom_call.1} parent=59 // pred_fallthru
          _
        // Predicated region
        $region65: #{tpu_custom_call.1} parent=59 // pred_check
          %p401 = pneg %p144
        $region66: #{tpu_custom_call.1} parent=59 // pred_check_branch
          %403 = sbr.rel (%p401) target = $region68
        $region67: #{tpu_custom_call.1} parent=59 // pred_region
          %404 = dma.done [#allocation8], 8192
        $region68: #{tpu_custom_call.1} parent=59 // pred_fallthru
          _
        // Predicated region
        $region69: #{tpu_custom_call.1} parent=59 // pred_check
          %p405 = pneg %p186
        $region70: #{tpu_custom_call.1} parent=59 // pred_check_branch
          %407 = sbr.rel (%p405) target = $region72
        $region71: #{tpu_custom_call.1} parent=59 // pred_region
          %408 = dma.done [#allocation8], 2048
        $region72: #{tpu_custom_call.1} parent=59 // pred_fallthru
          _
        %p409 = pneg %p45
        %p410 = pneg %p42
        %s411 = smul.u32 16, %s29
        %p412 = scmp.lt.s32.totalorder %s411, 47
        %s413 = scalar_select %p412, %s411, 47
        %s414 = smul.addr %s413, 8
        %s415 = scalar_lea.vmem %s1, %s414
        %p416 = pneg %p71
        %p417 = pneg %p68
        %s418 = smul.u32 16, %s29
        %p419 = scmp.lt.s32.totalorder %s418, 47
        %s420 = scalar_select %p419, %s418, 47
        %s421 = smul.addr %s420, 8
        %s422 = scalar_lea.vmem %s2, %s421
        %p423 = pneg %p97
        %p424 = pneg %p94
        %p425 = scmp.lt.s32.totalorder %s29, 2
        %s426 = scalar_select %p425, %s29, 2
        %s427 = scalar_lea.vmem %s3, %s426
        %p428 = pneg %p123
        %p429 = pneg %p120
        %p430 = pneg %p144
        %p431 = pneg %p141
        %p432 = pneg %p165
        %p433 = pneg %p162
        %p434 = pneg %p186
        %p435 = pneg %p183
        %p436 = pneg %p207
        %p437 = pneg %p204
        %p438 = pneg %p228
        %p439 = pneg %p225
        %p440 = pneg %p249
        %p441 = pneg %p246
        %p442 = pneg %p270
        %p443 = pneg %p267
        %p444 = pneg %p296
        %p445 = pneg %p293
        %s446 = sand.u32 %s283, 1
        %s447 = scalar_lea.sflag [#allocation12], %s446
        %s448 = sand.u32 %s283, 1
        %s449 = smul.addr %s448, 128
        %s450 = scalar_lea.vmem [#allocation11], %s449
        %s451 = smul.u32 16, %s29
        %p452 = scmp.lt.s32.totalorder %s451, 47
        %s453 = scalar_select %p452, %s451, 47
        %s454 = smul.addr %s453, 8
        %s455 = scalar_lea.vmem %s1, %s454
        %s456 = smul.u32 16, %s29
        %s457 = smul.u32 16, %s29
        %p458 = scmp.lt.s32.totalorder %s457, 47
        %s459 = scalar_select %p458, %s457, 47
        %s460 = smul.addr %s459, 8
        %s461 = scalar_lea.vmem %s2, %s460
        %s462 = smul.u32 16, %s29
        %p463 = scmp.lt.s32.totalorder %s29, 2
        %s464 = scalar_select %p463, %s29, 2
        %s465 = scalar_lea.vmem %s3, %s464
        %s466 = smul.u32 16, %s29
        %p468 = scmp.eq.s32.totalorder %s29, 0
        // Predicated region
        $region73: #{tpu_custom_call.1} parent=59 // pred_check
          %p469 = pneg %p468
        $region74: #{tpu_custom_call.1} parent=59 // pred_check_branch
          %471 = sbr.rel (%p469) target = $region76
        $region75: #{tpu_custom_call.1} parent=59 // pred_region
          %v472 = vld [vmem:[#allocation4] sm:$0xff]
          %v473 = vld [vmem:[#allocation4 + $0x8] sm:$0xff]
          %v474 = vld [vmem:[#allocation4 + $0x10] sm:$0xff]
          %v475 = vld [vmem:[#allocation4 + $0x18] sm:$0xff]
          %v476 = vld [vmem:[#allocation4 + $0x20] sm:$0xff]
          %v477 = vld [vmem:[#allocation4 + $0x28] sm:$0xff]
          %v478 = vld [vmem:[#allocation4 + $0x30] sm:$0xff]
          %v479 = vld [vmem:[#allocation4 + $0x38] sm:$0xff]
          %v480 = vld [vmem:[#allocation4 + $0x40] sm:$0xff]
          %v481 = vld [vmem:[#allocation4 + $0x48] sm:$0xff]
          %v482 = vld [vmem:[#allocation4 + $0x50] sm:$0xff]
          %v483 = vld [vmem:[#allocation4 + $0x58] sm:$0xff]
          %v484 = vld [vmem:[#allocation4 + $0x60] sm:$0xff]
          %v485 = vld [vmem:[#allocation4 + $0x68] sm:$0xff]
          %v486 = vld [vmem:[#allocation4 + $0x70] sm:$0xff]
          %v487 = vld [vmem:[#allocation4 + $0x78] sm:$0xff]
          %v488 = vld [vmem:[#allocation7] sm:$0xff]
          %v489 = vld [vmem:[#allocation7 + $0x8] sm:$0xff]
          %v490 = vld [vmem:[#allocation7 + $0x10] sm:$0xff]
          %v491 = vld [vmem:[#allocation7 + $0x20] sm:$0xff]
          %v492 = vld [vmem:[#allocation7 + $0x28] sm:$0xff]
          %v493 = vld [vmem:[#allocation7 + $0x30] sm:$0xff]
          %v494 = vld [vmem:[#allocation7 + $0x40] sm:$0xff]
          %v495 = vld [vmem:[#allocation7 + $0x48] sm:$0xff]
          %v496 = vld [vmem:[#allocation7 + $0x50] sm:$0xff]
          %v497 = vld [vmem:[#allocation7 + $0x60] sm:$0xff]
          %v498 = vld [vmem:[#allocation7 + $0x68] sm:$0xff]
          %v499 = vld [vmem:[#allocation7 + $0x70] sm:$0xff]
          %v500 = vld [vmem:[#allocation7 + $0x80] sm:$0xff]
          %v501 = vld [vmem:[#allocation7 + $0x88] sm:$0xff]
          %v502 = vld [vmem:[#allocation7 + $0x90] sm:$0xff]
          %v503 = vld [vmem:[#allocation7 + $0xa0] sm:$0xff]
          %v504 = vld [vmem:[#allocation7 + $0xa8] sm:$0xff]
          %v505 = vld [vmem:[#allocation7 + $0xb0] sm:$0xff]
          %v506 = vld [vmem:[#allocation7 + $0xc0] sm:$0xff]
          %v507 = vld [vmem:[#allocation7 + $0xc8] sm:$0xff]
          %v508 = vld [vmem:[#allocation7 + $0xd0] sm:$0xff]
          %v509 = vld [vmem:[#allocation7 + $0xe0] sm:$0xff]
          %v510 = vld [vmem:[#allocation7 + $0xe8] sm:$0xff]
          %v511 = vld [vmem:[#allocation7 + $0xf0] sm:$0xff]
          %v512 = vld [vmem:[#allocation7 + $0x100] sm:$0xff]
          %v513 = vld [vmem:[#allocation7 + $0x108] sm:$0xff]
          %v514 = vld [vmem:[#allocation7 + $0x110] sm:$0xff]
          %v515 = vld [vmem:[#allocation7 + $0x120] sm:$0xff]
          %v516 = vld [vmem:[#allocation7 + $0x128] sm:$0xff]
          %v517 = vld [vmem:[#allocation7 + $0x130] sm:$0xff]
          %v518 = vld [vmem:[#allocation7 + $0x140] sm:$0xff]
          %v519 = vld [vmem:[#allocation7 + $0x148] sm:$0xff]
          %v520 = vld [vmem:[#allocation7 + $0x150] sm:$0xff]
          %v521 = vld [vmem:[#allocation7 + $0x160] sm:$0xff]
          %v522 = vld [vmem:[#allocation7 + $0x168] sm:$0xff]
          %v523 = vld [vmem:[#allocation7 + $0x170] sm:$0xff]
          %v524 = vld [vmem:[#allocation7 + $0x180] sm:$0xff]
          %v525 = vld [vmem:[#allocation7 + $0x188] sm:$0xff]
          %v526 = vld [vmem:[#allocation7 + $0x190] sm:$0xff]
          %v527 = vld [vmem:[#allocation7 + $0x1a0] sm:$0xff]
          %v528 = vld [vmem:[#allocation7 + $0x1a8] sm:$0xff]
          %v529 = vld [vmem:[#allocation7 + $0x1b0] sm:$0xff]
          %v530 = vld [vmem:[#allocation7 + $0x1c0] sm:$0xff]
          %v531 = vld [vmem:[#allocation7 + $0x1c8] sm:$0xff]
          %v532 = vld [vmem:[#allocation7 + $0x1d0] sm:$0xff]
          %v533 = vld [vmem:[#allocation7 + $0x1e0] sm:$0xff]
          %v534 = vld [vmem:[#allocation7 + $0x1e8] sm:$0xff]
          %v535 = vld [vmem:[#allocation7 + $0x1f0] sm:$0xff]
          %v536 = vld [vmem:[%s5] sm:$0x7]
          %v538 = vlaneseq
          %v539 = vshrl.u32 %v538, 7
          %v540 = vsub.s32 0, %v539
          %v541 = vrot.slane %v536, %v540
          %v542 = vlaneseq
          %v543 = vshrl.u32 %v542, 7
          %v544 = vsub.s32 1, %v543
          %v545 = vrot.slane %v536, %v544
          %v546 = vlaneseq
          %v547 = vshrl.u32 %v546, 7
          %v548 = vsub.s32 2, %v547
          %v549 = vrot.slane %v536, %v548
          %553 = vmatprep.subr.mxu0 %v534
          %554 = vmatpush1.msra.mxu0 %v533
          %555 = vmatprep.subr.mxu0 %v531
          %556 = vmatpush1.msra.mxu0 %v530
          %557 = vmatprep.subr.mxu0 %v528
          %558 = vmatpush1.msra.mxu0 %v527
          %559 = vmatprep.subr.mxu0 %v525
          %560 = vmatpush1.msra.mxu0 %v524
          %561 = vmatprep.subr.mxu0 %v522
          %562 = vmatpush1.msra.mxu0 %v521
          %563 = vmatprep.subr.mxu0 %v519
          %564 = vmatpush1.msra.mxu0 %v518
          %565 = vmatprep.subr.mxu0 %v516
          %566 = vmatpush1.msra.mxu0 %v515
          %567 = vmatprep.subr.mxu0 %v513
          %568 = vmatpush1.msra.mxu0 %v512
          %569 = vmatprep.subr.mxu0 %v510
          %570 = vmatpush1.msra.mxu0 %v509
          %571 = vmatprep.subr.mxu0 %v507
          %572 = vmatpush1.msra.mxu0 %v506
          %573 = vmatprep.subr.mxu0 %v504
          %574 = vmatpush1.msra.mxu0 %v503
          %575 = vmatprep.subr.mxu0 %v501
          %576 = vmatpush1.msra.mxu0 %v500
          %577 = vmatprep.subr.mxu0 %v498
          %578 = vmatpush1.msra.mxu0 %v497
          %579 = vmatprep.subr.mxu0 %v495
          %580 = vmatpush1.msra.mxu0 %v494
          %581 = vmatprep.subr.mxu0 %v492
          %582 = vmatpush1.msra.mxu0 %v491
          %583 = vmatprep.subr.mxu0 %v489
          %584 = vmatpush1.msra.mxu0 %v488
          %585 = vmatprep.subr.mxu0 0.0
          %586 = vmatpush2.msra.mxu0 0.0
          %587 = vmatprep.subr.mxu0 0.0
          %588 = vmatpush2.msra.mxu0 0.0
          %589 = vmatprep.subr.mxu0 0.0
          %590 = vmatpush2.msra.mxu0 0.0
          %591 = vmatprep.subr.mxu0 0.0
          %592 = vmatpush2.msra.mxu0 0.0
          %593 = vmatprep.subr.mxu0 0.0
          %594 = vmatpush2.msra.mxu0 0.0
          %595 = vmatprep.subr.mxu0 0.0
          %596 = vmatpush2.msra.mxu0 0.0
          %597 = vmatprep.subr.mxu0 0.0
          %598 = vmatpush2.msra.mxu0 0.0
          %599 = vmatprep.subr.mxu0 0.0
          %600 = vmatpush2.msra.mxu0 0.0
          %601 = vmatprep.subr.mxu0 0.0
          %602 = vmatpush2.msra.mxu0 0.0
          %603 = vmatprep.subr.mxu0 0.0
          %604 = vmatpush2.msra.mxu0 0.0
          %605 = vmatprep.subr.mxu0 0.0
          %606 = vmatpush2.msra.mxu0 0.0
          %607 = vmatprep.subr.mxu0 0.0
          %608 = vmatpush2.msra.mxu0 0.0
          %609 = vmatprep.subr.mxu0 0.0
          %610 = vmatpush2.msra.mxu0 0.0
          %611 = vmatprep.subr.mxu0 0.0
          %612 = vmatpush2.msra.mxu0 0.0
          %613 = vmatprep.subr.mxu0 0.0
          %614 = vmatpush2.msra.mxu0 0.0
          %615 = vmatprep.subr.mxu0 0.0
          %616 = vmatpush2.msra.mxu0 0.0
          %617 = vmatprep.mubr.f32.mxu0 0.0
          %618 = vmatmul.mubr.f32.gmra.mxu0 %v472
          %v619 = vpop.f32.mrf.mxu0
          %v620 = vadd.f32 %v541, %v619
          %v621 = vpop.f32.mrf.mxu0
          %v622 = vadd.f32 %v545, %v621
          %623 = vmatprep.mubr.f32.mxu0 0.0
          %624 = vmatmul.mubr.f32.gmra.mxu0 %v473
          %v625 = vpop.f32.mrf.mxu0
          %v626 = vadd.f32 %v541, %v625
          %v627 = vpop.f32.mrf.mxu0
          %v628 = vadd.f32 %v545, %v627
          %629 = vmatprep.mubr.f32.mxu0 0.0
          %630 = vmatmul.mubr.f32.gmra.mxu0 %v474
          %v631 = vpop.f32.mrf.mxu0
          %v632 = vadd.f32 %v541, %v631
          %v633 = vpop.f32.mrf.mxu0
          %v634 = vadd.f32 %v545, %v633
          %635 = vmatprep.mubr.f32.mxu0 0.0
          %636 = vmatmul.mubr.f32.gmra.mxu0 %v475
          %v637 = vpop.f32.mrf.mxu0
          %v638 = vadd.f32 %v541, %v637
          %v639 = vpop.f32.mrf.mxu0
          %v640 = vadd.f32 %v545, %v639
          %641 = vmatprep.mubr.f32.mxu0 0.0
          %642 = vmatmul.mubr.f32.gmra.mxu0 %v476
          %v643 = vpop.f32.mrf.mxu0
          %v644 = vadd.f32 %v541, %v643
          %v645 = vpop.f32.mrf.mxu0
          %v646 = vadd.f32 %v545, %v645
          %647 = vmatprep.mubr.f32.mxu0 0.0
          %648 = vmatmul.mubr.f32.gmra.mxu0 %v477
          %v649 = vpop.f32.mrf.mxu0
          %v650 = vadd.f32 %v541, %v649
          %v651 = vpop.f32.mrf.mxu0
          %v652 = vadd.f32 %v545, %v651
          %653 = vmatprep.mubr.f32.mxu0 0.0
          %654 = vmatmul.mubr.f32.gmra.mxu0 %v478
          %v655 = vpop.f32.mrf.mxu0
          %v656 = vadd.f32 %v541, %v655
          %v657 = vpop.f32.mrf.mxu0
          %v658 = vadd.f32 %v545, %v657
          %659 = vmatprep.mubr.f32.mxu0 0.0
          %660 = vmatmul.mubr.f32.gmra.mxu0 %v479
          %v661 = vpop.f32.mrf.mxu0
          %v662 = vadd.f32 %v541, %v661
          %v663 = vpop.f32.mrf.mxu0
          %v664 = vadd.f32 %v545, %v663
          %665 = vmatprep.mubr.f32.mxu0 0.0
          %666 = vmatmul.mubr.f32.gmra.mxu0 %v480
          %v667 = vpop.f32.mrf.mxu0
          %v668 = vadd.f32 %v541, %v667
          %v669 = vpop.f32.mrf.mxu0
          %v670 = vadd.f32 %v545, %v669
          %671 = vmatprep.mubr.f32.mxu0 0.0
          %672 = vmatmul.mubr.f32.gmra.mxu0 %v481
          %v673 = vpop.f32.mrf.mxu0
          %v674 = vadd.f32 %v541, %v673
          %v675 = vpop.f32.mrf.mxu0
          %v676 = vadd.f32 %v545, %v675
          %677 = vmatprep.mubr.f32.mxu0 0.0
          %678 = vmatmul.mubr.f32.gmra.mxu0 %v482
          %v679 = vpop.f32.mrf.mxu0
          %v680 = vadd.f32 %v541, %v679
          %v681 = vpop.f32.mrf.mxu0
          %v682 = vadd.f32 %v545, %v681
          %683 = vmatprep.mubr.f32.mxu0 0.0
          %684 = vmatmul.mubr.f32.gmra.mxu0 %v483
          %v685 = vpop.f32.mrf.mxu0
          %v686 = vadd.f32 %v541, %v685
          %v687 = vpop.f32.mrf.mxu0
          %v688 = vadd.f32 %v545, %v687
          %689 = vmatprep.mubr.f32.mxu0 0.0
          %690 = vmatmul.mubr.f32.gmra.mxu0 %v484
          %v691 = vpop.f32.mrf.mxu0
          %v692 = vadd.f32 %v541, %v691
          %v693 = vpop.f32.mrf.mxu0
          %v694 = vadd.f32 %v545, %v693
          %695 = vmatprep.mubr.f32.mxu0 0.0
          %696 = vmatmul.mubr.f32.gmra.mxu0 %v485
          %v697 = vpop.f32.mrf.mxu0
          %v698 = vadd.f32 %v541, %v697
          %v699 = vpop.f32.mrf.mxu0
          %v700 = vadd.f32 %v545, %v699
          %701 = vmatprep.mubr.f32.mxu0 0.0
          %702 = vmatmul.mubr.f32.gmra.mxu0 %v486
          %v703 = vpop.f32.mrf.mxu0
          %v704 = vadd.f32 %v541, %v703
          %v705 = vpop.f32.mrf.mxu0
          %v706 = vadd.f32 %v545, %v705
          %707 = vmatprep.mubr.f32.mxu0 0.0
          %708 = vmatmul.mubr.f32.gmra.mxu0 %v487
          %v709 = vpop.f32.mrf.mxu0
          %v710 = vadd.f32 %v541, %v709
          %v711 = vpop.f32.mrf.mxu0
          %v712 = vadd.f32 %v545, %v711
          %713 = vdwg.mxu0
          %714 = vmatprep.subr.mxu0 0.0
          %715 = vmatpush1.msra.mxu0 %v535
          %716 = vmatprep.subr.mxu0 0.0
          %717 = vmatpush1.msra.mxu0 %v532
          %718 = vmatprep.subr.mxu0 0.0
          %719 = vmatpush1.msra.mxu0 %v529
          %720 = vmatprep.subr.mxu0 0.0
          %721 = vmatpush1.msra.mxu0 %v526
          %722 = vmatprep.subr.mxu0 0.0
          %723 = vmatpush1.msra.mxu0 %v523
          %724 = vmatprep.subr.mxu0 0.0
          %725 = vmatpush1.msra.mxu0 %v520
          %726 = vmatprep.subr.mxu0 0.0
          %727 = vmatpush1.msra.mxu0 %v517
          %728 = vmatprep.subr.mxu0 0.0
          %729 = vmatpush1.msra.mxu0 %v514
          %730 = vmatprep.subr.mxu0 0.0
          %731 = vmatpush1.msra.mxu0 %v511
          %732 = vmatprep.subr.mxu0 0.0
          %733 = vmatpush1.msra.mxu0 %v508
          %734 = vmatprep.subr.mxu0 0.0
          %735 = vmatpush1.msra.mxu0 %v505
          %736 = vmatprep.subr.mxu0 0.0
          %737 = vmatpush1.msra.mxu0 %v502
          %738 = vmatprep.subr.mxu0 0.0
          %739 = vmatpush1.msra.mxu0 %v499
          %740 = vmatprep.subr.mxu0 0.0
          %741 = vmatpush1.msra.mxu0 %v496
          %742 = vmatprep.subr.mxu0 0.0
          %743 = vmatpush1.msra.mxu0 %v493
          %744 = vmatprep.subr.mxu0 0.0
          %745 = vmatpush1.msra.mxu0 %v490
          %746 = vmatprep.subr.mxu0 0.0
          %747 = vmatpush2.msra.mxu0 0.0
          %748 = vmatprep.subr.mxu0 0.0
          %749 = vmatpush2.msra.mxu0 0.0
          %750 = vmatprep.subr.mxu0 0.0
          %751 = vmatpush2.msra.mxu0 0.0
          %752 = vmatprep.subr.mxu0 0.0
          %753 = vmatpush2.msra.mxu0 0.0
          %754 = vmatprep.subr.mxu0 0.0
          %755 = vmatpush2.msra.mxu0 0.0
          %756 = vmatprep.subr.mxu0 0.0
          %757 = vmatpush2.msra.mxu0 0.0
          %758 = vmatprep.subr.mxu0 0.0
          %759 = vmatpush2.msra.mxu0 0.0
          %760 = vmatprep.subr.mxu0 0.0
          %761 = vmatpush2.msra.mxu0 0.0
          %762 = vmatprep.subr.mxu0 0.0
          %763 = vmatpush2.msra.mxu0 0.0
          %764 = vmatprep.subr.mxu0 0.0
          %765 = vmatpush2.msra.mxu0 0.0
          %766 = vmatprep.subr.mxu0 0.0
          %767 = vmatpush2.msra.mxu0 0.0
          %768 = vmatprep.subr.mxu0 0.0
          %769 = vmatpush2.msra.mxu0 0.0
          %770 = vmatprep.subr.mxu0 0.0
          %771 = vmatpush2.msra.mxu0 0.0
          %772 = vmatprep.subr.mxu0 0.0
          %773 = vmatpush2.msra.mxu0 0.0
          %774 = vmatprep.subr.mxu0 0.0
          %775 = vmatpush2.msra.mxu0 0.0
          %776 = vmatprep.subr.mxu0 0.0
          %777 = vmatpush2.msra.mxu0 0.0
          %778 = vmatprep.mubr.f32.mxu0 0.0
          %779 = vmatmul.mubr.f32.gmra.mxu0 %v472
          %v780 = vpop.f32.mrf.mxu0
          %v781 = vadd.f32 %v549, %v780
          %v782 = vpop.f32.mrf.mxu0
          %783 = vmatprep.mubr.f32.mxu0 0.0
          %784 = vmatmul.mubr.f32.gmra.mxu0 %v473
          %v785 = vpop.f32.mrf.mxu0
          %v786 = vadd.f32 %v549, %v785
          %v787 = vpop.f32.mrf.mxu0
          %788 = vmatprep.mubr.f32.mxu0 0.0
          %789 = vmatmul.mubr.f32.gmra.mxu0 %v474
          %v790 = vpop.f32.mrf.mxu0
          %v791 = vadd.f32 %v549, %v790
          %v792 = vpop.f32.mrf.mxu0
          %793 = vmatprep.mubr.f32.mxu0 0.0
          %794 = vmatmul.mubr.f32.gmra.mxu0 %v475
          %v795 = vpop.f32.mrf.mxu0
          %v796 = vadd.f32 %v549, %v795
          %v797 = vpop.f32.mrf.mxu0
          %798 = vmatprep.mubr.f32.mxu0 0.0
          %799 = vmatmul.mubr.f32.gmra.mxu0 %v476
          %v800 = vpop.f32.mrf.mxu0
          %v801 = vadd.f32 %v549, %v800
          %v802 = vpop.f32.mrf.mxu0
          %803 = vmatprep.mubr.f32.mxu0 0.0
          %804 = vmatmul.mubr.f32.gmra.mxu0 %v477
          %v805 = vpop.f32.mrf.mxu0
          %v806 = vadd.f32 %v549, %v805
          %v807 = vpop.f32.mrf.mxu0
          %808 = vmatprep.mubr.f32.mxu0 0.0
          %809 = vmatmul.mubr.f32.gmra.mxu0 %v478
          %v810 = vpop.f32.mrf.mxu0
          %v811 = vadd.f32 %v549, %v810
          %v812 = vpop.f32.mrf.mxu0
          %813 = vmatprep.mubr.f32.mxu0 0.0
          %814 = vmatmul.mubr.f32.gmra.mxu0 %v479
          %v815 = vpop.f32.mrf.mxu0
          %v816 = vadd.f32 %v549, %v815
          %v817 = vpop.f32.mrf.mxu0
          %818 = vmatprep.mubr.f32.mxu0 0.0
          %819 = vmatmul.mubr.f32.gmra.mxu0 %v480
          %v820 = vpop.f32.mrf.mxu0
          %v821 = vadd.f32 %v549, %v820
          %v822 = vpop.f32.mrf.mxu0
          %823 = vmatprep.mubr.f32.mxu0 0.0
          %824 = vmatmul.mubr.f32.gmra.mxu0 %v481
          %v825 = vpop.f32.mrf.mxu0
          %v826 = vadd.f32 %v549, %v825
          %v827 = vpop.f32.mrf.mxu0
          %828 = vmatprep.mubr.f32.mxu0 0.0
          %829 = vmatmul.mubr.f32.gmra.mxu0 %v482
          %v830 = vpop.f32.mrf.mxu0
          %v831 = vadd.f32 %v549, %v830
          %v832 = vpop.f32.mrf.mxu0
          %833 = vmatprep.mubr.f32.mxu0 0.0
          %834 = vmatmul.mubr.f32.gmra.mxu0 %v483
          %v835 = vpop.f32.mrf.mxu0
          %v836 = vadd.f32 %v549, %v835
          %v837 = vpop.f32.mrf.mxu0
          %838 = vmatprep.mubr.f32.mxu0 0.0
          %839 = vmatmul.mubr.f32.gmra.mxu0 %v484
          %v840 = vpop.f32.mrf.mxu0
          %v841 = vadd.f32 %v549, %v840
          %v842 = vpop.f32.mrf.mxu0
          %843 = vmatprep.mubr.f32.mxu0 0.0
          %844 = vmatmul.mubr.f32.gmra.mxu0 %v485
          %v845 = vpop.f32.mrf.mxu0
          %v846 = vadd.f32 %v549, %v845
          %v847 = vpop.f32.mrf.mxu0
          %848 = vmatprep.mubr.f32.mxu0 0.0
          %849 = vmatmul.mubr.f32.gmra.mxu0 %v486
          %v850 = vpop.f32.mrf.mxu0
          %v851 = vadd.f32 %v549, %v850
          %v852 = vpop.f32.mrf.mxu0
          %853 = vmatprep.mubr.f32.mxu0 0.0
          %854 = vmatmul.mubr.f32.gmra.mxu0 %v487
          %v855 = vpop.f32.mrf.mxu0
          %v856 = vadd.f32 %v549, %v855
          %v857 = vpop.f32.mrf.mxu0
          %858 = vdwg.mxu0
          %v859 = vpack.c.bf16 %v626, %v620
          %v860 = vpack.c.bf16 %v628, %v622
          %v861 = vpack.c.bf16 %v786, %v781
          %v862 = vpack.c.bf16 %v638, %v632
          %v863 = vpack.c.bf16 %v640, %v634
          %v864 = vpack.c.bf16 %v796, %v791
          %v865 = vpack.c.bf16 %v650, %v644
          %v866 = vpack.c.bf16 %v652, %v646
          %v867 = vpack.c.bf16 %v806, %v801
          %v868 = vpack.c.bf16 %v662, %v656
          %v869 = vpack.c.bf16 %v664, %v658
          %v870 = vpack.c.bf16 %v816, %v811
          %v871 = vpack.c.bf16 %v674, %v668
          %v872 = vpack.c.bf16 %v676, %v670
          %v873 = vpack.c.bf16 %v826, %v821
          %v874 = vpack.c.bf16 %v686, %v680
          %v875 = vpack.c.bf16 %v688, %v682
          %v876 = vpack.c.bf16 %v836, %v831
          %v877 = vpack.c.bf16 %v698, %v692
          %v878 = vpack.c.bf16 %v700, %v694
          %v879 = vpack.c.bf16 %v846, %v841
          %v880 = vpack.c.bf16 %v710, %v704
          %v881 = vpack.c.bf16 %v712, %v706
          %v882 = vpack.c.bf16 %v856, %v851
          %v907 = vunpack.c.l.b16 %v859
          %v908 = vunpack.c.l.b16 %v860
          %v909 = vunpack.c.l.b16 %v861
          %v910 = vunpack.c.h.b16 %v859
          %v911 = vunpack.c.h.b16 %v860
          %v912 = vunpack.c.h.b16 %v861
          %v913 = vunpack.c.l.b16 %v862
          %v914 = vunpack.c.l.b16 %v863
          %v915 = vunpack.c.l.b16 %v864
          %v916 = vunpack.c.h.b16 %v862
          %v917 = vunpack.c.h.b16 %v863
          %v918 = vunpack.c.h.b16 %v864
          %v919 = vunpack.c.l.b16 %v865
          %v920 = vunpack.c.l.b16 %v866
          %v921 = vunpack.c.l.b16 %v867
          %v922 = vunpack.c.h.b16 %v865
          %v923 = vunpack.c.h.b16 %v866
          %v924 = vunpack.c.h.b16 %v867
          %v925 = vunpack.c.l.b16 %v868
          %v926 = vunpack.c.l.b16 %v869
          %v927 = vunpack.c.l.b16 %v870
          %v928 = vunpack.c.h.b16 %v868
          %v929 = vunpack.c.h.b16 %v869
          %v930 = vunpack.c.h.b16 %v870
          %v931 = vunpack.c.l.b16 %v871
          %v932 = vunpack.c.l.b16 %v872
          %v933 = vunpack.c.l.b16 %v873
          %v934 = vunpack.c.h.b16 %v871
          %v935 = vunpack.c.h.b16 %v872
          %v936 = vunpack.c.h.b16 %v873
          %v937 = vunpack.c.l.b16 %v874
          %v938 = vunpack.c.l.b16 %v875
          %v939 = vunpack.c.l.b16 %v876
          %v940 = vunpack.c.h.b16 %v874
          %v941 = vunpack.c.h.b16 %v875
          %v942 = vunpack.c.h.b16 %v876
          %v943 = vunpack.c.l.b16 %v877
          %v944 = vunpack.c.l.b16 %v878
          %v945 = vunpack.c.l.b16 %v879
          %v946 = vunpack.c.h.b16 %v877
          %v947 = vunpack.c.h.b16 %v878
          %v948 = vunpack.c.h.b16 %v879
          %v949 = vunpack.c.l.b16 %v880
          %v950 = vunpack.c.l.b16 %v881
          %v951 = vunpack.c.l.b16 %v882
          %v952 = vunpack.c.h.b16 %v880
          %v953 = vunpack.c.h.b16 %v881
          %v954 = vunpack.c.h.b16 %v882
          %v955 = vpack.c.b16 %v908, %v907
          %v956 = vpack.c.b16 %v909, %v909
          %v957 = vpack.c.b16 %v911, %v910
          %v958 = vpack.c.b16 %v912, %v912
          %v959 = vpack.c.b16 %v914, %v913
          %v960 = vpack.c.b16 %v915, %v915
          %v961 = vpack.c.b16 %v917, %v916
          %v962 = vpack.c.b16 %v918, %v918
          %v963 = vpack.c.b16 %v920, %v919
          %v964 = vpack.c.b16 %v921, %v921
          %v965 = vpack.c.b16 %v923, %v922
          %v966 = vpack.c.b16 %v924, %v924
          %v967 = vpack.c.b16 %v926, %v925
          %v968 = vpack.c.b16 %v927, %v927
          %v969 = vpack.c.b16 %v929, %v928
          %v970 = vpack.c.b16 %v930, %v930
          %v971 = vpack.c.b16 %v932, %v931
          %v972 = vpack.c.b16 %v933, %v933
          %v973 = vpack.c.b16 %v935, %v934
          %v974 = vpack.c.b16 %v936, %v936
          %v975 = vpack.c.b16 %v938, %v937
          %v976 = vpack.c.b16 %v939, %v939
          %v977 = vpack.c.b16 %v941, %v940
          %v978 = vpack.c.b16 %v942, %v942
          %v979 = vpack.c.b16 %v944, %v943
          %v980 = vpack.c.b16 %v945, %v945
          %v981 = vpack.c.b16 %v947, %v946
          %v982 = vpack.c.b16 %v948, %v948
          %v983 = vpack.c.b16 %v950, %v949
          %v984 = vpack.c.b16 %v951, %v951
          %v985 = vpack.c.b16 %v953, %v952
          %v986 = vpack.c.b16 %v954, %v954
          %1019 = vst [vmem:[#allocation2] sm:$0xff] %v955
          %1020 = vst [vmem:[#allocation2 + $0x8] sm:$0xf] %v956
          %1021 = vst [vmem:[#allocation2 + $0xc] sm:$0xff] %v957
          %1022 = vst [vmem:[#allocation2 + $0x14] sm:$0xf] %v958
          %1023 = vst [vmem:[#allocation2 + $0x18] sm:$0xff] %v959
          %1024 = vst [vmem:[#allocation2 + $0x20] sm:$0xf] %v960
          %1025 = vst [vmem:[#allocation2 + $0x24] sm:$0xff] %v961
          %1026 = vst [vmem:[#allocation2 + $0x2c] sm:$0xf] %v962
          %1027 = vst [vmem:[#allocation2 + $0x30] sm:$0xff] %v963
          %1028 = vst [vmem:[#allocation2 + $0x38] sm:$0xf] %v964
          %1029 = vst [vmem:[#allocation2 + $0x3c] sm:$0xff] %v965
          %1030 = vst [vmem:[#allocation2 + $0x44] sm:$0xf] %v966
          %1031 = vst [vmem:[#allocation2 + $0x48] sm:$0xff] %v967
          %1032 = vst [vmem:[#allocation2 + $0x50] sm:$0xf] %v968
          %1033 = vst [vmem:[#allocation2 + $0x54] sm:$0xff] %v969
          %1034 = vst [vmem:[#allocation2 + $0x5c] sm:$0xf] %v970
          %1035 = vst [vmem:[#allocation2 + $0x60] sm:$0xff] %v971
          %1036 = vst [vmem:[#allocation2 + $0x68] sm:$0xf] %v972
          %1037 = vst [vmem:[#allocation2 + $0x6c] sm:$0xff] %v973
          %1038 = vst [vmem:[#allocation2 + $0x74] sm:$0xf] %v974
          %1039 = vst [vmem:[#allocation2 + $0x78] sm:$0xff] %v975
          %1040 = vst [vmem:[#allocation2 + $0x80] sm:$0xf] %v976
          %1041 = vst [vmem:[#allocation2 + $0x84] sm:$0xff] %v977
          %1042 = vst [vmem:[#allocation2 + $0x8c] sm:$0xf] %v978
          %1043 = vst [vmem:[#allocation2 + $0x90] sm:$0xff] %v979
          %1044 = vst [vmem:[#allocation2 + $0x98] sm:$0xf] %v980
          %1045 = vst [vmem:[#allocation2 + $0x9c] sm:$0xff] %v981
          %1046 = vst [vmem:[#allocation2 + $0xa4] sm:$0xf] %v982
          %1047 = vst [vmem:[#allocation2 + $0xa8] sm:$0xff] %v983
          %1048 = vst [vmem:[#allocation2 + $0xb0] sm:$0xf] %v984
          %1049 = vst [vmem:[#allocation2 + $0xb4] sm:$0xff] %v985
          %1050 = vst [vmem:[#allocation2 + $0xbc] sm:$0xf] %v986
          %1051 = vst [vmem:[#allocation3] sm:$0xff] 0.0
          %1052 = vst [vmem:[#allocation3 + $0x8] sm:$0xff] 0.0
          %1053 = vst [vmem:[#allocation3 + $0x10] sm:$0xff] 0.0
          %1054 = vst [vmem:[#allocation3 + $0x18] sm:$0xff] 0.0
          %1055 = vst [vmem:[#allocation3 + $0x20] sm:$0xff] 0.0
          %1056 = vst [vmem:[#allocation3 + $0x28] sm:$0xff] 0.0
          %1057 = vst [vmem:[#allocation3 + $0x30] sm:$0xff] 0.0
          %1058 = vst [vmem:[#allocation3 + $0x38] sm:$0xff] 0.0
          %1059 = vst [vmem:[#allocation3 + $0x40] sm:$0xff] 0.0
          %1060 = vst [vmem:[#allocation3 + $0x48] sm:$0xff] 0.0
          %1061 = vst [vmem:[#allocation3 + $0x50] sm:$0xff] 0.0
          %1062 = vst [vmem:[#allocation3 + $0x58] sm:$0xff] 0.0
          %1063 = vst [vmem:[#allocation3 + $0x60] sm:$0xff] 0.0
          %1064 = vst [vmem:[#allocation3 + $0x68] sm:$0xff] 0.0
          %1065 = vst [vmem:[#allocation3 + $0x70] sm:$0xff] 0.0
          %1066 = vst [vmem:[#allocation3 + $0x78] sm:$0xff] 0.0
          %1067 = vst [vmem:[#allocation3 + $0x80] sm:$0xff] 0.0
          %1068 = vst [vmem:[#allocation3 + $0x88] sm:$0xff] 0.0
          %1069 = vst [vmem:[#allocation3 + $0x90] sm:$0xff] 0.0
          %1070 = vst [vmem:[#allocation3 + $0x98] sm:$0xff] 0.0
          %1071 = vst [vmem:[#allocation3 + $0xa0] sm:$0xff] 0.0
          %1072 = vst [vmem:[#allocation3 + $0xa8] sm:$0xff] 0.0
          %1073 = vst [vmem:[#allocation3 + $0xb0] sm:$0xff] 0.0
          %1074 = vst [vmem:[#allocation3 + $0xb8] sm:$0xff] 0.0
          %1075 = vst [vmem:[#allocation3 + $0xc0] sm:$0xff] 0.0
          %1076 = vst [vmem:[#allocation3 + $0xc8] sm:$0xff] 0.0
          %1077 = vst [vmem:[#allocation3 + $0xd0] sm:$0xff] 0.0
          %1078 = vst [vmem:[#allocation3 + $0xd8] sm:$0xff] 0.0
          %1079 = vst [vmem:[#allocation3 + $0xe0] sm:$0xff] 0.0
          %1080 = vst [vmem:[#allocation3 + $0xe8] sm:$0xff] 0.0
          %1081 = vst [vmem:[#allocation3 + $0xf0] sm:$0xff] 0.0
          %1082 = vst [vmem:[#allocation3 + $0xf8] sm:$0xff] 0.0
        $region76: #{tpu_custom_call.1} parent=59 // pred_fallthru
          _
        %v1083 = vld [vmem:[%s455] sm:$0xff]
        %v1084 = vld [vmem:[%s455 + $0x8] sm:$0xff]
        %v1085 = vld [vmem:[%s455 + $0x10] sm:$0xff]
        %v1086 = vld [vmem:[%s455 + $0x18] sm:$0xff]
        %v1087 = vld [vmem:[%s455 + $0x20] sm:$0xff]
        %v1088 = vld [vmem:[%s455 + $0x28] sm:$0xff]
        %v1089 = vld [vmem:[%s455 + $0x30] sm:$0xff]
        %v1090 = vld [vmem:[%s455 + $0x38] sm:$0xff]
        %v1091 = vld [vmem:[%s455 + $0x40] sm:$0xff]
        %v1092 = vld [vmem:[%s455 + $0x48] sm:$0xff]
        %v1093 = vld [vmem:[%s455 + $0x50] sm:$0xff]
        %v1094 = vld [vmem:[%s455 + $0x58] sm:$0xff]
        %v1095 = vld [vmem:[%s455 + $0x60] sm:$0xff]
        %v1096 = vld [vmem:[%s455 + $0x68] sm:$0xff]
        %v1097 = vld [vmem:[%s455 + $0x70] sm:$0xff]
        %v1098 = vld [vmem:[%s455 + $0x78] sm:$0xff]
        %v1099 = vld [vmem:[%s461] sm:$0xff]
        %v1100 = vld [vmem:[%s461 + $0x8] sm:$0xff]
        %v1101 = vld [vmem:[%s461 + $0x10] sm:$0xff]
        %v1102 = vld [vmem:[%s461 + $0x18] sm:$0xff]
        %v1103 = vld [vmem:[%s461 + $0x20] sm:$0xff]
        %v1104 = vld [vmem:[%s461 + $0x28] sm:$0xff]
        %v1105 = vld [vmem:[%s461 + $0x30] sm:$0xff]
        %v1106 = vld [vmem:[%s461 + $0x38] sm:$0xff]
        %v1107 = vld [vmem:[%s461 + $0x40] sm:$0xff]
        %v1108 = vld [vmem:[%s461 + $0x48] sm:$0xff]
        %v1109 = vld [vmem:[%s461 + $0x50] sm:$0xff]
        %v1110 = vld [vmem:[%s461 + $0x58] sm:$0xff]
        %v1111 = vld [vmem:[%s461 + $0x60] sm:$0xff]
        %v1112 = vld [vmem:[%s461 + $0x68] sm:$0xff]
        %v1113 = vld [vmem:[%s461 + $0x70] sm:$0xff]
        %v1114 = vld [vmem:[%s461 + $0x78] sm:$0xff]
        %v1115 = vlaneseq
        %v1116 = vand.u32 %v1115, 127
        %1117 = vset.pattern.permute.xlu0 0
        %1118 = vperm.xlu0 %1117, %v1099
        %v1119 = vpop.permute.xlu0 %1118
        %1120 = vset.pattern.permute.xlu0 0
        %1121 = vperm.xlu0 %1120, %v1100
        %v1122 = vpop.permute.xlu0 %1121
        %1123 = vset.pattern.permute.xlu0 0
        %1124 = vperm.xlu0 %1123, %v1101
        %v1125 = vpop.permute.xlu0 %1124
        %1126 = vset.pattern.permute.xlu0 0
        %1127 = vperm.xlu0 %1126, %v1102
        %v1128 = vpop.permute.xlu0 %1127
        %1129 = vset.pattern.permute.xlu0 0
        %1130 = vperm.xlu0 %1129, %v1103
        %v1131 = vpop.permute.xlu0 %1130
        %1132 = vset.pattern.permute.xlu0 0
        %1133 = vperm.xlu0 %1132, %v1104
        %v1134 = vpop.permute.xlu0 %1133
        %1135 = vset.pattern.permute.xlu0 0
        %1136 = vperm.xlu0 %1135, %v1105
        %v1137 = vpop.permute.xlu0 %1136
        %1138 = vset.pattern.permute.xlu0 0
        %1139 = vperm.xlu0 %1138, %v1106
        %v1140 = vpop.permute.xlu0 %1139
        %1141 = vset.pattern.permute.xlu0 0
        %1142 = vperm.xlu0 %1141, %v1107
        %v1143 = vpop.permute.xlu0 %1142
        %1144 = vset.pattern.permute.xlu0 0
        %1145 = vperm.xlu0 %1144, %v1108
        %v1146 = vpop.permute.xlu0 %1145
        %1147 = vset.pattern.permute.xlu0 0
        %1148 = vperm.xlu0 %1147, %v1109
        %v1149 = vpop.permute.xlu0 %1148
        %1150 = vset.pattern.permute.xlu0 0
        %1151 = vperm.xlu0 %1150, %v1110
        %v1152 = vpop.permute.xlu0 %1151
        %1153 = vset.pattern.permute.xlu0 0
        %1154 = vperm.xlu0 %1153, %v1111
        %v1155 = vpop.permute.xlu0 %1154
        %1156 = vset.pattern.permute.xlu0 0
        %1157 = vperm.xlu0 %1156, %v1112
        %v1158 = vpop.permute.xlu0 %1157
        %1159 = vset.pattern.permute.xlu0 0
        %1160 = vperm.xlu0 %1159, %v1113
        %v1161 = vpop.permute.xlu0 %1160
        %1162 = vset.pattern.permute.xlu0 0
        %1163 = vperm.xlu0 %1162, %v1114
        %v1164 = vpop.permute.xlu0 %1163
        %vm1165 = vcmp.eq.s32.totalorder %v1119, %v1116
        %vm1166 = vcmp.eq.s32.totalorder %v1122, %v1116
        %vm1167 = vcmp.eq.s32.totalorder %v1125, %v1116
        %vm1168 = vcmp.eq.s32.totalorder %v1128, %v1116
        %vm1169 = vcmp.eq.s32.totalorder %v1131, %v1116
        %vm1170 = vcmp.eq.s32.totalorder %v1134, %v1116
        %vm1171 = vcmp.eq.s32.totalorder %v1137, %v1116
        %vm1172 = vcmp.eq.s32.totalorder %v1140, %v1116
        %vm1173 = vcmp.eq.s32.totalorder %v1143, %v1116
        %vm1174 = vcmp.eq.s32.totalorder %v1146, %v1116
        %vm1175 = vcmp.eq.s32.totalorder %v1149, %v1116
        %vm1176 = vcmp.eq.s32.totalorder %v1152, %v1116
        %vm1177 = vcmp.eq.s32.totalorder %v1155, %v1116
        %vm1178 = vcmp.eq.s32.totalorder %v1158, %v1116
        %vm1179 = vcmp.eq.s32.totalorder %v1161, %v1116
        %vm1180 = vcmp.eq.s32.totalorder %v1164, %v1116
        %v1181 = vsel %vm1165, 1, 0
        %v1182 = vsel %vm1166, 1, 0
        %v1183 = vsel %vm1167, 1, 0
        %v1184 = vsel %vm1168, 1, 0
        %v1185 = vsel %vm1169, 1, 0
        %v1186 = vsel %vm1170, 1, 0
        %v1187 = vsel %vm1171, 1, 0
        %v1188 = vsel %vm1172, 1, 0
        %v1189 = vsel %vm1173, 1, 0
        %v1190 = vsel %vm1174, 1, 0
        %v1191 = vsel %vm1175, 1, 0
        %v1192 = vsel %vm1176, 1, 0
        %v1193 = vsel %vm1177, 1, 0
        %v1194 = vsel %vm1178, 1, 0
        %v1195 = vsel %vm1179, 1, 0
        %v1196 = vsel %vm1180, 1, 0
        %v1197 = vcvt.s32.f32 %v1181
        %v1198 = vcvt.s32.f32 %v1182
        %v1199 = vcvt.s32.f32 %v1183
        %v1200 = vcvt.s32.f32 %v1184
        %v1201 = vcvt.s32.f32 %v1185
        %v1202 = vcvt.s32.f32 %v1186
        %v1203 = vcvt.s32.f32 %v1187
        %v1204 = vcvt.s32.f32 %v1188
        %v1205 = vcvt.s32.f32 %v1189
        %v1206 = vcvt.s32.f32 %v1190
        %v1207 = vcvt.s32.f32 %v1191
        %v1208 = vcvt.s32.f32 %v1192
        %v1209 = vcvt.s32.f32 %v1193
        %v1210 = vcvt.s32.f32 %v1194
        %v1211 = vcvt.s32.f32 %v1195
        %v1212 = vcvt.s32.f32 %v1196
        %v1213 = vpack.c.bf16 %v1198, %v1197
        %v1214 = vpack.c.bf16 %v1200, %v1199
        %v1215 = vpack.c.bf16 %v1202, %v1201
        %v1216 = vpack.c.bf16 %v1204, %v1203
        %v1217 = vpack.c.bf16 %v1206, %v1205
        %v1218 = vpack.c.bf16 %v1208, %v1207
        %v1219 = vpack.c.bf16 %v1210, %v1209
        %v1220 = vpack.c.bf16 %v1212, %v1211
        %1221 = vset.pattern.permute.xlu0 1
        %1222 = vperm.xlu0 %1221, %v1099
        %v1223 = vpop.permute.xlu0 %1222
        %1224 = vset.pattern.permute.xlu0 1
        %1225 = vperm.xlu0 %1224, %v1100
        %v1226 = vpop.permute.xlu0 %1225
        %1227 = vset.pattern.permute.xlu0 1
        %1228 = vperm.xlu0 %1227, %v1101
        %v1229 = vpop.permute.xlu0 %1228
        %1230 = vset.pattern.permute.xlu0 1
        %1231 = vperm.xlu0 %1230, %v1102
        %v1232 = vpop.permute.xlu0 %1231
        %1233 = vset.pattern.permute.xlu0 1
        %1234 = vperm.xlu0 %1233, %v1103
        %v1235 = vpop.permute.xlu0 %1234
        %1236 = vset.pattern.permute.xlu0 1
        %1237 = vperm.xlu0 %1236, %v1104
        %v1238 = vpop.permute.xlu0 %1237
        %1239 = vset.pattern.permute.xlu0 1
        %1240 = vperm.xlu0 %1239, %v1105
        %v1241 = vpop.permute.xlu0 %1240
        %1242 = vset.pattern.permute.xlu0 1
        %1243 = vperm.xlu0 %1242, %v1106
        %v1244 = vpop.permute.xlu0 %1243
        %1245 = vset.pattern.permute.xlu0 1
        %1246 = vperm.xlu0 %1245, %v1107
        %v1247 = vpop.permute.xlu0 %1246
        %1248 = vset.pattern.permute.xlu0 1
        %1249 = vperm.xlu0 %1248, %v1108
        %v1250 = vpop.permute.xlu0 %1249
        %1251 = vset.pattern.permute.xlu0 1
        %1252 = vperm.xlu0 %1251, %v1109
        %v1253 = vpop.permute.xlu0 %1252
        %1254 = vset.pattern.permute.xlu0 1
        %1255 = vperm.xlu0 %1254, %v1110
        %v1256 = vpop.permute.xlu0 %1255
        %1257 = vset.pattern.permute.xlu0 1
        %1258 = vperm.xlu0 %1257, %v1111
        %v1259 = vpop.permute.xlu0 %1258
        %1260 = vset.pattern.permute.xlu0 1
        %1261 = vperm.xlu0 %1260, %v1112
        %v1262 = vpop.permute.xlu0 %1261
        %1263 = vset.pattern.permute.xlu0 1
        %1264 = vperm.xlu0 %1263, %v1113
        %v1265 = vpop.permute.xlu0 %1264
        %1266 = vset.pattern.permute.xlu0 1
        %1267 = vperm.xlu0 %1266, %v1114
        %v1268 = vpop.permute.xlu0 %1267
        %vm1269 = vcmp.eq.s32.totalorder %v1223, %v1116
        %vm1270 = vcmp.eq.s32.totalorder %v1226, %v1116
        %vm1271 = vcmp.eq.s32.totalorder %v1229, %v1116
        %vm1272 = vcmp.eq.s32.totalorder %v1232, %v1116
        %vm1273 = vcmp.eq.s32.totalorder %v1235, %v1116
        %vm1274 = vcmp.eq.s32.totalorder %v1238, %v1116
        %vm1275 = vcmp.eq.s32.totalorder %v1241, %v1116
        %vm1276 = vcmp.eq.s32.totalorder %v1244, %v1116
        %vm1277 = vcmp.eq.s32.totalorder %v1247, %v1116
        %vm1278 = vcmp.eq.s32.totalorder %v1250, %v1116
        %vm1279 = vcmp.eq.s32.totalorder %v1253, %v1116
        %vm1280 = vcmp.eq.s32.totalorder %v1256, %v1116
        %vm1281 = vcmp.eq.s32.totalorder %v1259, %v1116
        %vm1282 = vcmp.eq.s32.totalorder %v1262, %v1116
        %vm1283 = vcmp.eq.s32.totalorder %v1265, %v1116
        %vm1284 = vcmp.eq.s32.totalorder %v1268, %v1116
        %v1285 = vsel %vm1269, 1, 0
        %v1286 = vsel %vm1270, 1, 0
        %v1287 = vsel %vm1271, 1, 0
        %v1288 = vsel %vm1272, 1, 0
        %v1289 = vsel %vm1273, 1, 0
        %v1290 = vsel %vm1274, 1, 0
        %v1291 = vsel %vm1275, 1, 0
        %v1292 = vsel %vm1276, 1, 0
        %v1293 = vsel %vm1277, 1, 0
        %v1294 = vsel %vm1278, 1, 0
        %v1295 = vsel %vm1279, 1, 0
        %v1296 = vsel %vm1280, 1, 0
        %v1297 = vsel %vm1281, 1, 0
        %v1298 = vsel %vm1282, 1, 0
        %v1299 = vsel %vm1283, 1, 0
        %v1300 = vsel %vm1284, 1, 0
        %v1301 = vcvt.s32.f32 %v1285
        %v1302 = vcvt.s32.f32 %v1286
        %v1303 = vcvt.s32.f32 %v1287
        %v1304 = vcvt.s32.f32 %v1288
        %v1305 = vcvt.s32.f32 %v1289
        %v1306 = vcvt.s32.f32 %v1290
        %v1307 = vcvt.s32.f32 %v1291
        %v1308 = vcvt.s32.f32 %v1292
        %v1309 = vcvt.s32.f32 %v1293
        %v1310 = vcvt.s32.f32 %v1294
        %v1311 = vcvt.s32.f32 %v1295
        %v1312 = vcvt.s32.f32 %v1296
        %v1313 = vcvt.s32.f32 %v1297
        %v1314 = vcvt.s32.f32 %v1298
        %v1315 = vcvt.s32.f32 %v1299
        %v1316 = vcvt.s32.f32 %v1300
        %v1317 = vpack.c.bf16 %v1302, %v1301
        %v1318 = vpack.c.bf16 %v1304, %v1303
        %v1319 = vpack.c.bf16 %v1306, %v1305
        %v1320 = vpack.c.bf16 %v1308, %v1307
        %v1321 = vpack.c.bf16 %v1310, %v1309
        %v1322 = vpack.c.bf16 %v1312, %v1311
        %v1323 = vpack.c.bf16 %v1314, %v1313
        %v1324 = vpack.c.bf16 %v1316, %v1315
        %v1325 = vld [vmem:[#allocation2] sm:$0xff]
        %v1326 = vld [vmem:[#allocation2 + $0x8] sm:$0xf]
        %v1327 = vld [vmem:[#allocation2 + $0xc] sm:$0xff]
        %v1328 = vld [vmem:[#allocation2 + $0x14] sm:$0xf]
        %v1329 = vld [vmem:[#allocation2 + $0x18] sm:$0xff]
        %v1330 = vld [vmem:[#allocation2 + $0x20] sm:$0xf]
        %v1331 = vld [vmem:[#allocation2 + $0x24] sm:$0xff]
        %v1332 = vld [vmem:[#allocation2 + $0x2c] sm:$0xf]
        %v1333 = vld [vmem:[#allocation2 + $0x30] sm:$0xff]
        %v1334 = vld [vmem:[#allocation2 + $0x38] sm:$0xf]
        %v1335 = vld [vmem:[#allocation2 + $0x3c] sm:$0xff]
        %v1336 = vld [vmem:[#allocation2 + $0x44] sm:$0xf]
        %v1337 = vld [vmem:[#allocation2 + $0x48] sm:$0xff]
        %v1338 = vld [vmem:[#allocation2 + $0x50] sm:$0xf]
        %v1339 = vld [vmem:[#allocation2 + $0x54] sm:$0xff]
        %v1340 = vld [vmem:[#allocation2 + $0x5c] sm:$0xf]
        %v1341 = vld [vmem:[#allocation2 + $0x60] sm:$0xff]
        %v1342 = vld [vmem:[#allocation2 + $0x68] sm:$0xf]
        %v1343 = vld [vmem:[#allocation2 + $0x6c] sm:$0xff]
        %v1344 = vld [vmem:[#allocation2 + $0x74] sm:$0xf]
        %v1345 = vld [vmem:[#allocation2 + $0x78] sm:$0xff]
        %v1346 = vld [vmem:[#allocation2 + $0x80] sm:$0xf]
        %v1347 = vld [vmem:[#allocation2 + $0x84] sm:$0xff]
        %v1348 = vld [vmem:[#allocation2 + $0x8c] sm:$0xf]
        %v1349 = vld [vmem:[#allocation2 + $0x90] sm:$0xff]
        %v1350 = vld [vmem:[#allocation2 + $0x98] sm:$0xf]
        %v1351 = vld [vmem:[#allocation2 + $0x9c] sm:$0xff]
        %v1352 = vld [vmem:[#allocation2 + $0xa4] sm:$0xf]
        %v1353 = vld [vmem:[#allocation2 + $0xa8] sm:$0xff]
        %v1354 = vld [vmem:[#allocation2 + $0xb0] sm:$0xf]
        %v1355 = vld [vmem:[#allocation2 + $0xb4] sm:$0xff]
        %v1356 = vld [vmem:[#allocation2 + $0xbc] sm:$0xf]
        %v1373 = vunpack.c.l.b16 %v1325
        %v1374 = vunpack.c.h.b16 %v1325
        %v1375 = vunpack.c.l.b16 %v1327
        %v1376 = vunpack.c.h.b16 %v1327
        %v1377 = vunpack.c.l.b16 %v1329
        %v1378 = vunpack.c.h.b16 %v1329
        %v1379 = vunpack.c.l.b16 %v1331
        %v1380 = vunpack.c.h.b16 %v1331
        %v1381 = vunpack.c.l.b16 %v1333
        %v1382 = vunpack.c.h.b16 %v1333
        %v1383 = vunpack.c.l.b16 %v1335
        %v1384 = vunpack.c.h.b16 %v1335
        %v1385 = vunpack.c.l.b16 %v1337
        %v1386 = vunpack.c.h.b16 %v1337
        %v1387 = vunpack.c.l.b16 %v1339
        %v1388 = vunpack.c.h.b16 %v1339
        %v1389 = vunpack.c.l.b16 %v1341
        %v1390 = vunpack.c.h.b16 %v1341
        %v1391 = vunpack.c.l.b16 %v1343
        %v1392 = vunpack.c.h.b16 %v1343
        %v1393 = vunpack.c.l.b16 %v1345
        %v1394 = vunpack.c.h.b16 %v1345
        %v1395 = vunpack.c.l.b16 %v1347
        %v1396 = vunpack.c.h.b16 %v1347
        %v1397 = vunpack.c.l.b16 %v1349
        %v1398 = vunpack.c.h.b16 %v1349
        %v1399 = vunpack.c.l.b16 %v1351
        %v1400 = vunpack.c.h.b16 %v1351
        %v1401 = vunpack.c.l.b16 %v1353
        %v1402 = vunpack.c.h.b16 %v1353
        %v1403 = vunpack.c.l.b16 %v1355
        %v1404 = vunpack.c.h.b16 %v1355
        %v1405 = vpack.c.b16 %v1375, %v1373
        %v1406 = vpack.c.b16 %v1376, %v1374
        %v1407 = vpack.c.b16 %v1379, %v1377
        %v1408 = vpack.c.b16 %v1380, %v1378
        %v1409 = vpack.c.b16 %v1383, %v1381
        %v1410 = vpack.c.b16 %v1384, %v1382
        %v1411 = vpack.c.b16 %v1387, %v1385
        %v1412 = vpack.c.b16 %v1388, %v1386
        %v1413 = vpack.c.b16 %v1391, %v1389
        %v1414 = vpack.c.b16 %v1392, %v1390
        %v1415 = vpack.c.b16 %v1395, %v1393
        %v1416 = vpack.c.b16 %v1396, %v1394
        %v1417 = vpack.c.b16 %v1399, %v1397
        %v1418 = vpack.c.b16 %v1400, %v1398
        %v1419 = vpack.c.b16 %v1403, %v1401
        %v1420 = vpack.c.b16 %v1404, %v1402
        %1437 = vmatprep.subr.bf16.mxu0 %v1420
        %1438 = vmatpush1.bf16.msra.mxu0 %v1419
        %1439 = vmatprep.subr.bf16.mxu0 %v1418
        %1440 = vmatpush1.bf16.msra.mxu0 %v1417
        %1441 = vmatprep.subr.bf16.mxu0 %v1416
        %1442 = vmatpush1.bf16.msra.mxu0 %v1415
        %1443 = vmatprep.subr.bf16.mxu0 %v1414
        %1444 = vmatpush1.bf16.msra.mxu0 %v1413
        %1445 = vmatprep.subr.bf16.mxu0 %v1412
        %1446 = vmatpush1.bf16.msra.mxu0 %v1411
        %1447 = vmatprep.subr.bf16.mxu0 %v1410
        %1448 = vmatpush1.bf16.msra.mxu0 %v1409
        %1449 = vmatprep.subr.bf16.mxu0 %v1408
        %1450 = vmatpush1.bf16.msra.mxu0 %v1407
        %1451 = vmatprep.subr.bf16.mxu0 %v1406
        %1452 = vmatpush1.bf16.msra.mxu0 %v1405
        %1453 = vmatprep.subr.bf16.mxu0 0
        %1454 = vmatpush2.bf16.msra.mxu0 0
        %1455 = vmatprep.subr.bf16.mxu0 0
        %1456 = vmatpush2.bf16.msra.mxu0 0
        %1457 = vmatprep.subr.bf16.mxu0 0
        %1458 = vmatpush2.bf16.msra.mxu0 0
        %1459 = vmatprep.subr.bf16.mxu0 0
        %1460 = vmatpush2.bf16.msra.mxu0 0
        %1461 = vmatprep.subr.bf16.mxu0 0
        %1462 = vmatpush2.bf16.msra.mxu0 0
        %1463 = vmatprep.subr.bf16.mxu0 0
        %1464 = vmatpush2.bf16.msra.mxu0 0
        %1465 = vmatprep.subr.bf16.mxu0 0
        %1466 = vmatpush2.bf16.msra.mxu0 0
        %1467 = vmatprep.subr.bf16.mxu0 0
        %1468 = vmatpush2.bf16.msra.mxu0 0
        %1469 = vmatprep.mubr.bf16.mxu0 0
        %1470 = vmatmul.mubr.bf16.gmra.mxu0 %v1213
        %v1471 = vpop.f32.mrf.mxu0
        %v1472 = vadd.f32 0.0, %v1471
        %v1473 = vpop.f32.mrf.mxu0
        %v1474 = vadd.f32 0.0, %v1473
        %v1475 = vpop.f32.mrf.mxu0
        %v1476 = vadd.f32 0.0, %v1475
        %v1477 = vpop.f32.mrf.mxu0
        %v1478 = vadd.f32 0.0, %v1477
        %1479 = vmatprep.mubr.bf16.mxu0 0
        %1480 = vmatmul.mubr.bf16.gmra.mxu0 %v1214
        %v1481 = vpop.f32.mrf.mxu0
        %v1482 = vadd.f32 0.0, %v1481
        %v1483 = vpop.f32.mrf.mxu0
        %v1484 = vadd.f32 0.0, %v1483
        %v1485 = vpop.f32.mrf.mxu0
        %v1486 = vadd.f32 0.0, %v1485
        %v1487 = vpop.f32.mrf.mxu0
        %v1488 = vadd.f32 0.0, %v1487
        %1489 = vmatprep.mubr.bf16.mxu0 0
        %1490 = vmatmul.mubr.bf16.gmra.mxu0 %v1215
        %v1491 = vpop.f32.mrf.mxu0
        %v1492 = vadd.f32 0.0, %v1491
        %v1493 = vpop.f32.mrf.mxu0
        %v1494 = vadd.f32 0.0, %v1493
        %v1495 = vpop.f32.mrf.mxu0
        %v1496 = vadd.f32 0.0, %v1495
        %v1497 = vpop.f32.mrf.mxu0
        %v1498 = vadd.f32 0.0, %v1497
        %1499 = vmatprep.mubr.bf16.mxu0 0
        %1500 = vmatmul.mubr.bf16.gmra.mxu0 %v1216
        %v1501 = vpop.f32.mrf.mxu0
        %v1502 = vadd.f32 0.0, %v1501
        %v1503 = vpop.f32.mrf.mxu0
        %v1504 = vadd.f32 0.0, %v1503
        %v1505 = vpop.f32.mrf.mxu0
        %v1506 = vadd.f32 0.0, %v1505
        %v1507 = vpop.f32.mrf.mxu0
        %v1508 = vadd.f32 0.0, %v1507
        %1509 = vmatprep.mubr.bf16.mxu0 0
        %1510 = vmatmul.mubr.bf16.gmra.mxu0 %v1217
        %v1511 = vpop.f32.mrf.mxu0
        %v1512 = vadd.f32 0.0, %v1511
        %v1513 = vpop.f32.mrf.mxu0
        %v1514 = vadd.f32 0.0, %v1513
        %v1515 = vpop.f32.mrf.mxu0
        %v1516 = vadd.f32 0.0, %v1515
        %v1517 = vpop.f32.mrf.mxu0
        %v1518 = vadd.f32 0.0, %v1517
        %1519 = vmatprep.mubr.bf16.mxu0 0
        %1520 = vmatmul.mubr.bf16.gmra.mxu0 %v1218
        %v1521 = vpop.f32.mrf.mxu0
        %v1522 = vadd.f32 0.0, %v1521
        %v1523 = vpop.f32.mrf.mxu0
        %v1524 = vadd.f32 0.0, %v1523
        %v1525 = vpop.f32.mrf.mxu0
        %v1526 = vadd.f32 0.0, %v1525
        %v1527 = vpop.f32.mrf.mxu0
        %v1528 = vadd.f32 0.0, %v1527
        %1529 = vmatprep.mubr.bf16.mxu0 0
        %1530 = vmatmul.mubr.bf16.gmra.mxu0 %v1219
        %v1531 = vpop.f32.mrf.mxu0
        %v1532 = vadd.f32 0.0, %v1531
        %v1533 = vpop.f32.mrf.mxu0
        %v1534 = vadd.f32 0.0, %v1533
        %v1535 = vpop.f32.mrf.mxu0
        %v1536 = vadd.f32 0.0, %v1535
        %v1537 = vpop.f32.mrf.mxu0
        %v1538 = vadd.f32 0.0, %v1537
        %1539 = vmatprep.mubr.bf16.mxu0 0
        %1540 = vmatmul.mubr.bf16.gmra.mxu0 %v1220
        %v1541 = vpop.f32.mrf.mxu0
        %v1542 = vadd.f32 0.0, %v1541
        %v1543 = vpop.f32.mrf.mxu0
        %v1544 = vadd.f32 0.0, %v1543
        %v1545 = vpop.f32.mrf.mxu0
        %v1546 = vadd.f32 0.0, %v1545
        %v1547 = vpop.f32.mrf.mxu0
        %v1548 = vadd.f32 0.0, %v1547
        %1549 = vdwg.mxu0
        %v1566 = vunpack.c.l.b16 %v1326
        %v1567 = vunpack.c.l.b16 %v1328
        %v1568 = vunpack.c.l.b16 %v1330
        %v1569 = vunpack.c.l.b16 %v1332
        %v1570 = vunpack.c.l.b16 %v1334
        %v1571 = vunpack.c.l.b16 %v1336
        %v1572 = vunpack.c.l.b16 %v1338
        %v1573 = vunpack.c.l.b16 %v1340
        %v1574 = vunpack.c.l.b16 %v1342
        %v1575 = vunpack.c.l.b16 %v1344
        %v1576 = vunpack.c.l.b16 %v1346
        %v1577 = vunpack.c.l.b16 %v1348
        %v1578 = vunpack.c.l.b16 %v1350
        %v1579 = vunpack.c.l.b16 %v1352
        %v1580 = vunpack.c.l.b16 %v1354
        %v1581 = vunpack.c.l.b16 %v1356
        %v1582 = vpack.c.b16 %v1567, %v1566
        %v1583 = vpack.c.b16 %v1569, %v1568
        %v1584 = vpack.c.b16 %v1571, %v1570
        %v1585 = vpack.c.b16 %v1573, %v1572
        %v1586 = vpack.c.b16 %v1575, %v1574
        %v1587 = vpack.c.b16 %v1577, %v1576
        %v1588 = vpack.c.b16 %v1579, %v1578
        %v1589 = vpack.c.b16 %v1581, %v1580
        %1598 = vmatprep.subr.bf16.mxu0 0
        %1599 = vmatpush1.bf16.msra.mxu0 %v1589
        %1600 = vmatprep.subr.bf16.mxu0 0
        %1601 = vmatpush1.bf16.msra.mxu0 %v1588
        %1602 = vmatprep.subr.bf16.mxu0 0
        %1603 = vmatpush1.bf16.msra.mxu0 %v1587
        %1604 = vmatprep.subr.bf16.mxu0 0
        %1605 = vmatpush1.bf16.msra.mxu0 %v1586
        %1606 = vmatprep.subr.bf16.mxu0 0
        %1607 = vmatpush1.bf16.msra.mxu0 %v1585
        %1608 = vmatprep.subr.bf16.mxu0 0
        %1609 = vmatpush1.bf16.msra.mxu0 %v1584
        %1610 = vmatprep.subr.bf16.mxu0 0
        %1611 = vmatpush1.bf16.msra.mxu0 %v1583
        %1612 = vmatprep.subr.bf16.mxu0 0
        %1613 = vmatpush1.bf16.msra.mxu0 %v1582
        %1614 = vmatprep.subr.bf16.mxu0 0
        %1615 = vmatpush2.bf16.msra.mxu0 0
        %1616 = vmatprep.subr.bf16.mxu0 0
        %1617 = vmatpush2.bf16.msra.mxu0 0
        %1618 = vmatprep.subr.bf16.mxu0 0
        %1619 = vmatpush2.bf16.msra.mxu0 0
        %1620 = vmatprep.subr.bf16.mxu0 0
        %1621 = vmatpush2.bf16.msra.mxu0 0
        %1622 = vmatprep.subr.bf16.mxu0 0
        %1623 = vmatpush2.bf16.msra.mxu0 0
        %1624 = vmatprep.subr.bf16.mxu0 0
        %1625 = vmatpush2.bf16.msra.mxu0 0
        %1626 = vmatprep.subr.bf16.mxu0 0
        %1627 = vmatpush2.bf16.msra.mxu0 0
        %1628 = vmatprep.subr.bf16.mxu0 0
        %1629 = vmatpush2.bf16.msra.mxu0 0
        %1630 = vmatprep.mubr.bf16.mxu0 0
        %1631 = vmatmul.mubr.bf16.gmra.mxu0 %v1317
        %v1632 = vpop.f32.mrf.mxu0
        %v1633 = vadd.f32 0.0, %v1632
        %v1634 = vpop.f32.mrf.mxu0
        %v1635 = vpop.f32.mrf.mxu0
        %v1636 = vadd.f32 0.0, %v1635
        %v1637 = vpop.f32.mrf.mxu0
        %1638 = vmatprep.mubr.bf16.mxu0 0
        %1639 = vmatmul.mubr.bf16.gmra.mxu0 %v1318
        %v1640 = vpop.f32.mrf.mxu0
        %v1641 = vadd.f32 0.0, %v1640
        %v1642 = vpop.f32.mrf.mxu0
        %v1643 = vpop.f32.mrf.mxu0
        %v1644 = vadd.f32 0.0, %v1643
        %v1645 = vpop.f32.mrf.mxu0
        %1646 = vmatprep.mubr.bf16.mxu0 0
        %1647 = vmatmul.mubr.bf16.gmra.mxu0 %v1319
        %v1648 = vpop.f32.mrf.mxu0
        %v1649 = vadd.f32 0.0, %v1648
        %v1650 = vpop.f32.mrf.mxu0
        %v1651 = vpop.f32.mrf.mxu0
        %v1652 = vadd.f32 0.0, %v1651
        %v1653 = vpop.f32.mrf.mxu0
        %1654 = vmatprep.mubr.bf16.mxu0 0
        %1655 = vmatmul.mubr.bf16.gmra.mxu0 %v1320
        %v1656 = vpop.f32.mrf.mxu0
        %v1657 = vadd.f32 0.0, %v1656
        %v1658 = vpop.f32.mrf.mxu0
        %v1659 = vpop.f32.mrf.mxu0
        %v1660 = vadd.f32 0.0, %v1659
        %v1661 = vpop.f32.mrf.mxu0
        %1662 = vmatprep.mubr.bf16.mxu0 0
        %1663 = vmatmul.mubr.bf16.gmra.mxu0 %v1321
        %v1664 = vpop.f32.mrf.mxu0
        %v1665 = vadd.f32 0.0, %v1664
        %v1666 = vpop.f32.mrf.mxu0
        %v1667 = vpop.f32.mrf.mxu0
        %v1668 = vadd.f32 0.0, %v1667
        %v1669 = vpop.f32.mrf.mxu0
        %1670 = vmatprep.mubr.bf16.mxu0 0
        %1671 = vmatmul.mubr.bf16.gmra.mxu0 %v1322
        %v1672 = vpop.f32.mrf.mxu0
        %v1673 = vadd.f32 0.0, %v1672
        %v1674 = vpop.f32.mrf.mxu0
        %v1675 = vpop.f32.mrf.mxu0
        %v1676 = vadd.f32 0.0, %v1675
        %v1677 = vpop.f32.mrf.mxu0
        %1678 = vmatprep.mubr.bf16.mxu0 0
        %1679 = vmatmul.mubr.bf16.gmra.mxu0 %v1323
        %v1680 = vpop.f32.mrf.mxu0
        %v1681 = vadd.f32 0.0, %v1680
        %v1682 = vpop.f32.mrf.mxu0
        %v1683 = vpop.f32.mrf.mxu0
        %v1684 = vadd.f32 0.0, %v1683
        %v1685 = vpop.f32.mrf.mxu0
        %1686 = vmatprep.mubr.bf16.mxu0 0
        %1687 = vmatmul.mubr.bf16.gmra.mxu0 %v1324
        %v1688 = vpop.f32.mrf.mxu0
        %v1689 = vadd.f32 0.0, %v1688
        %v1690 = vpop.f32.mrf.mxu0
        %v1691 = vpop.f32.mrf.mxu0
        %v1692 = vadd.f32 0.0, %v1691
        %v1693 = vpop.f32.mrf.mxu0
        %1694 = vdwg.mxu0
        %v1695 = vld [vmem:[#allocation9] sm:$0xff]
        %v1696 = vld [vmem:[#allocation9 + $0x8] sm:$0xff]
        %v1697 = vld [vmem:[#allocation9 + $0x10] sm:$0xff]
        %v1698 = vld [vmem:[#allocation9 + $0x18] sm:$0xff]
        %v1699 = vld [vmem:[#allocation9 + $0x20] sm:$0xff]
        %v1700 = vld [vmem:[#allocation9 + $0x28] sm:$0xff]
        %v1701 = vld [vmem:[#allocation9 + $0x30] sm:$0xff]
        %v1702 = vld [vmem:[#allocation9 + $0x38] sm:$0xff]
        %v1703 = vld [vmem:[#allocation9 + $0x40] sm:$0xff]
        %v1704 = vld [vmem:[#allocation9 + $0x48] sm:$0xff]
        %v1705 = vld [vmem:[#allocation9 + $0x50] sm:$0xff]
        %v1706 = vld [vmem:[#allocation9 + $0x58] sm:$0xff]
        %v1707 = vld [vmem:[#allocation9 + $0x60] sm:$0xff]
        %v1708 = vld [vmem:[#allocation9 + $0x68] sm:$0xff]
        %v1709 = vld [vmem:[#allocation9 + $0x70] sm:$0xff]
        %v1710 = vld [vmem:[#allocation9 + $0x78] sm:$0xff]
        %v1711 = vld [vmem:[%s7] sm:$0x1]
        %v1713 = vlaneseq
        %v1714 = vshrl.u32 %v1713, 7
        %v1715 = vsub.s32 0, %v1714
        %v1716 = vrot.slane %v1711, %v1715
        %1718 = vmatprep.subr.mxu0 0.0
        %1719 = vmatpush1.msra.mxu0 %v1710
        %1720 = vmatprep.subr.mxu0 0.0
        %1721 = vmatpush1.msra.mxu0 %v1709
        %1722 = vmatprep.subr.mxu0 0.0
        %1723 = vmatpush1.msra.mxu0 %v1708
        %1724 = vmatprep.subr.mxu0 0.0
        %1725 = vmatpush1.msra.mxu0 %v1707
        %1726 = vmatprep.subr.mxu0 0.0
        %1727 = vmatpush1.msra.mxu0 %v1706
        %1728 = vmatprep.subr.mxu0 0.0
        %1729 = vmatpush1.msra.mxu0 %v1705
        %1730 = vmatprep.subr.mxu0 0.0
        %1731 = vmatpush1.msra.mxu0 %v1704
        %1732 = vmatprep.subr.mxu0 0.0
        %1733 = vmatpush1.msra.mxu0 %v1703
        %1734 = vmatprep.subr.mxu0 0.0
        %1735 = vmatpush1.msra.mxu0 %v1702
        %1736 = vmatprep.subr.mxu0 0.0
        %1737 = vmatpush1.msra.mxu0 %v1701
        %1738 = vmatprep.subr.mxu0 0.0
        %1739 = vmatpush1.msra.mxu0 %v1700
        %1740 = vmatprep.subr.mxu0 0.0
        %1741 = vmatpush1.msra.mxu0 %v1699
        %1742 = vmatprep.subr.mxu0 0.0
        %1743 = vmatpush1.msra.mxu0 %v1698
        %1744 = vmatprep.subr.mxu0 0.0
        %1745 = vmatpush1.msra.mxu0 %v1697
        %1746 = vmatprep.subr.mxu0 0.0
        %1747 = vmatpush1.msra.mxu0 %v1696
        %1748 = vmatprep.subr.mxu0 0.0
        %1749 = vmatpush1.msra.mxu0 %v1695
        %1750 = vmatprep.subr.mxu0 0.0
        %1751 = vmatpush2.msra.mxu0 0.0
        %1752 = vmatprep.subr.mxu0 0.0
        %1753 = vmatpush2.msra.mxu0 0.0
        %1754 = vmatprep.subr.mxu0 0.0
        %1755 = vmatpush2.msra.mxu0 0.0
        %1756 = vmatprep.subr.mxu0 0.0
        %1757 = vmatpush2.msra.mxu0 0.0
        %1758 = vmatprep.subr.mxu0 0.0
        %1759 = vmatpush2.msra.mxu0 0.0
        %1760 = vmatprep.subr.mxu0 0.0
        %1761 = vmatpush2.msra.mxu0 0.0
        %1762 = vmatprep.subr.mxu0 0.0
        %1763 = vmatpush2.msra.mxu0 0.0
        %1764 = vmatprep.subr.mxu0 0.0
        %1765 = vmatpush2.msra.mxu0 0.0
        %1766 = vmatprep.subr.mxu0 0.0
        %1767 = vmatpush2.msra.mxu0 0.0
        %1768 = vmatprep.subr.mxu0 0.0
        %1769 = vmatpush2.msra.mxu0 0.0
        %1770 = vmatprep.subr.mxu0 0.0
        %1771 = vmatpush2.msra.mxu0 0.0
        %1772 = vmatprep.subr.mxu0 0.0
        %1773 = vmatpush2.msra.mxu0 0.0
        %1774 = vmatprep.subr.mxu0 0.0
        %1775 = vmatpush2.msra.mxu0 0.0
        %1776 = vmatprep.subr.mxu0 0.0
        %1777 = vmatpush2.msra.mxu0 0.0
        %1778 = vmatprep.subr.mxu0 0.0
        %1779 = vmatpush2.msra.mxu0 0.0
        %1780 = vmatprep.subr.mxu0 0.0
        %1781 = vmatpush2.msra.mxu0 0.0
        %1782 = vmatprep.mubr.f32.mxu0 0.0
        %1783 = vmatmul.mubr.f32.gmra.mxu0 %v1083
        %v1784 = vpop.f32.mrf.mxu0
        %v1785 = vadd.f32 %v1716, %v1784
        %v1786 = vpop.f32.mrf.mxu0
        %1787 = vmatprep.mubr.f32.mxu0 0.0
        %1788 = vmatmul.mubr.f32.gmra.mxu0 %v1084
        %v1789 = vpop.f32.mrf.mxu0
        %v1790 = vadd.f32 %v1716, %v1789
        %v1791 = vpop.f32.mrf.mxu0
        %1792 = vmatprep.mubr.f32.mxu0 0.0
        %1793 = vmatmul.mubr.f32.gmra.mxu0 %v1085
        %v1794 = vpop.f32.mrf.mxu0
        %v1795 = vadd.f32 %v1716, %v1794
        %v1796 = vpop.f32.mrf.mxu0
        %1797 = vmatprep.mubr.f32.mxu0 0.0
        %1798 = vmatmul.mubr.f32.gmra.mxu0 %v1086
        %v1799 = vpop.f32.mrf.mxu0
        %v1800 = vadd.f32 %v1716, %v1799
        %v1801 = vpop.f32.mrf.mxu0
        %1802 = vmatprep.mubr.f32.mxu0 0.0
        %1803 = vmatmul.mubr.f32.gmra.mxu0 %v1087
        %v1804 = vpop.f32.mrf.mxu0
        %v1805 = vadd.f32 %v1716, %v1804
        %v1806 = vpop.f32.mrf.mxu0
        %1807 = vmatprep.mubr.f32.mxu0 0.0
        %1808 = vmatmul.mubr.f32.gmra.mxu0 %v1088
        %v1809 = vpop.f32.mrf.mxu0
        %v1810 = vadd.f32 %v1716, %v1809
        %v1811 = vpop.f32.mrf.mxu0
        %1812 = vmatprep.mubr.f32.mxu0 0.0
        %1813 = vmatmul.mubr.f32.gmra.mxu0 %v1089
        %v1814 = vpop.f32.mrf.mxu0
        %v1815 = vadd.f32 %v1716, %v1814
        %v1816 = vpop.f32.mrf.mxu0
        %1817 = vmatprep.mubr.f32.mxu0 0.0
        %1818 = vmatmul.mubr.f32.gmra.mxu0 %v1090
        %v1819 = vpop.f32.mrf.mxu0
        %v1820 = vadd.f32 %v1716, %v1819
        %v1821 = vpop.f32.mrf.mxu0
        %1822 = vmatprep.mubr.f32.mxu0 0.0
        %1823 = vmatmul.mubr.f32.gmra.mxu0 %v1091
        %v1824 = vpop.f32.mrf.mxu0
        %v1825 = vadd.f32 %v1716, %v1824
        %v1826 = vpop.f32.mrf.mxu0
        %1827 = vmatprep.mubr.f32.mxu0 0.0
        %1828 = vmatmul.mubr.f32.gmra.mxu0 %v1092
        %v1829 = vpop.f32.mrf.mxu0
        %v1830 = vadd.f32 %v1716, %v1829
        %v1831 = vpop.f32.mrf.mxu0
        %1832 = vmatprep.mubr.f32.mxu0 0.0
        %1833 = vmatmul.mubr.f32.gmra.mxu0 %v1093
        %v1834 = vpop.f32.mrf.mxu0
        %v1835 = vadd.f32 %v1716, %v1834
        %v1836 = vpop.f32.mrf.mxu0
        %1837 = vmatprep.mubr.f32.mxu0 0.0
        %1838 = vmatmul.mubr.f32.gmra.mxu0 %v1094
        %v1839 = vpop.f32.mrf.mxu0
        %v1840 = vadd.f32 %v1716, %v1839
        %v1841 = vpop.f32.mrf.mxu0
        %1842 = vmatprep.mubr.f32.mxu0 0.0
        %1843 = vmatmul.mubr.f32.gmra.mxu0 %v1095
        %v1844 = vpop.f32.mrf.mxu0
        %v1845 = vadd.f32 %v1716, %v1844
        %v1846 = vpop.f32.mrf.mxu0
        %1847 = vmatprep.mubr.f32.mxu0 0.0
        %1848 = vmatmul.mubr.f32.gmra.mxu0 %v1096
        %v1849 = vpop.f32.mrf.mxu0
        %v1850 = vadd.f32 %v1716, %v1849
        %v1851 = vpop.f32.mrf.mxu0
        %1852 = vmatprep.mubr.f32.mxu0 0.0
        %1853 = vmatmul.mubr.f32.gmra.mxu0 %v1097
        %v1854 = vpop.f32.mrf.mxu0
        %v1855 = vadd.f32 %v1716, %v1854
        %v1856 = vpop.f32.mrf.mxu0
        %1857 = vmatprep.mubr.f32.mxu0 0.0
        %1858 = vmatmul.mubr.f32.gmra.mxu0 %v1098
        %v1859 = vpop.f32.mrf.mxu0
        %v1860 = vadd.f32 %v1716, %v1859
        %v1861 = vpop.f32.mrf.mxu0
        %1862 = vdwg.mxu0
        %v1863 = vadd.f32 %v1472, %v1633
        %v1864 = vadd.f32 %v1476, %v1636
        %v1865 = vadd.f32 %v1482, %v1641
        %v1866 = vadd.f32 %v1486, %v1644
        %v1867 = vadd.f32 %v1492, %v1649
        %v1868 = vadd.f32 %v1496, %v1652
        %v1869 = vadd.f32 %v1502, %v1657
        %v1870 = vadd.f32 %v1506, %v1660
        %v1871 = vadd.f32 %v1512, %v1665
        %v1872 = vadd.f32 %v1516, %v1668
        %v1873 = vadd.f32 %v1522, %v1673
        %v1874 = vadd.f32 %v1526, %v1676
        %v1875 = vadd.f32 %v1532, %v1681
        %v1876 = vadd.f32 %v1536, %v1684
        %v1877 = vadd.f32 %v1542, %v1689
        %v1878 = vadd.f32 %v1546, %v1692
        %v1879 = vadd.f32 %v1863, %v1785
        %v1880 = vadd.f32 %v1864, %v1790
        %v1881 = vadd.f32 %v1865, %v1795
        %v1882 = vadd.f32 %v1866, %v1800
        %v1883 = vadd.f32 %v1867, %v1805
        %v1884 = vadd.f32 %v1868, %v1810
        %v1885 = vadd.f32 %v1869, %v1815
        %v1886 = vadd.f32 %v1870, %v1820
        %v1887 = vadd.f32 %v1871, %v1825
        %v1888 = vadd.f32 %v1872, %v1830
        %v1889 = vadd.f32 %v1873, %v1835
        %v1890 = vadd.f32 %v1874, %v1840
        %v1891 = vadd.f32 %v1875, %v1845
        %v1892 = vadd.f32 %v1876, %v1850
        %v1893 = vadd.f32 %v1877, %v1855
        %v1894 = vadd.f32 %v1878, %v1860
        %v1895 = vxor.u32 %v1879, 2147483648
        %v1896 = vxor.u32 %v1880, 2147483648
        %v1897 = vxor.u32 %v1881, 2147483648
        %v1898 = vxor.u32 %v1882, 2147483648
        %v1899 = vxor.u32 %v1883, 2147483648
        %v1900 = vxor.u32 %v1884, 2147483648
        %v1901 = vxor.u32 %v1885, 2147483648
        %v1902 = vxor.u32 %v1886, 2147483648
        %v1903 = vxor.u32 %v1887, 2147483648
        %v1904 = vxor.u32 %v1888, 2147483648
        %v1905 = vxor.u32 %v1889, 2147483648
        %v1906 = vxor.u32 %v1890, 2147483648
        %v1907 = vxor.u32 %v1891, 2147483648
        %v1908 = vxor.u32 %v1892, 2147483648
        %v1909 = vxor.u32 %v1893, 2147483648
        %v1910 = vxor.u32 %v1894, 2147483648
        %v1911 = vmul.f32 %v1895, 1.442695
        %v1912 = vpow.pop %v1911
        %v1913 = vmul.f32 %v1896, 1.442695
        %v1914 = vpow.pop %v1913
        %v1915 = vmul.f32 %v1897, 1.442695
        %v1916 = vpow.pop %v1915
        %v1917 = vmul.f32 %v1898, 1.442695
        %v1918 = vpow.pop %v1917
        %v1919 = vmul.f32 %v1899, 1.442695
        %v1920 = vpow.pop %v1919
        %v1921 = vmul.f32 %v1900, 1.442695
        %v1922 = vpow.pop %v1921
        %v1923 = vmul.f32 %v1901, 1.442695
        %v1924 = vpow.pop %v1923
        %v1925 = vmul.f32 %v1902, 1.442695
        %v1926 = vpow.pop %v1925
        %v1927 = vmul.f32 %v1903, 1.442695
        %v1928 = vpow.pop %v1927
        %v1929 = vmul.f32 %v1904, 1.442695
        %v1930 = vpow.pop %v1929
        %v1931 = vmul.f32 %v1905, 1.442695
        %v1932 = vpow.pop %v1931
        %v1933 = vmul.f32 %v1906, 1.442695
        %v1934 = vpow.pop %v1933
        %v1935 = vmul.f32 %v1907, 1.442695
        %v1936 = vpow.pop %v1935
        %v1937 = vmul.f32 %v1908, 1.442695
        %v1938 = vpow.pop %v1937
        %v1939 = vmul.f32 %v1909, 1.442695
        %v1940 = vpow.pop %v1939
        %v1941 = vmul.f32 %v1910, 1.442695
        %v1942 = vpow.pop %v1941
        %v1943 = vadd.f32 %v1912, 1.0
        %v1944 = vadd.f32 %v1914, 1.0
        %v1945 = vadd.f32 %v1916, 1.0
        %v1946 = vadd.f32 %v1918, 1.0
        %v1947 = vadd.f32 %v1920, 1.0
        %v1948 = vadd.f32 %v1922, 1.0
        %v1949 = vadd.f32 %v1924, 1.0
        %v1950 = vadd.f32 %v1926, 1.0
        %v1951 = vadd.f32 %v1928, 1.0
        %v1952 = vadd.f32 %v1930, 1.0
        %v1953 = vadd.f32 %v1932, 1.0
        %v1954 = vadd.f32 %v1934, 1.0
        %v1955 = vadd.f32 %v1936, 1.0
        %v1956 = vadd.f32 %v1938, 1.0
        %v1957 = vadd.f32 %v1940, 1.0
        %v1958 = vadd.f32 %v1942, 1.0
        %v1959 = vrcp.pop %v1943
        %v1960 = vmul.f32 1.0, %v1959
        %v1961 = vrcp.pop %v1944
        %v1962 = vmul.f32 1.0, %v1961
        %v1963 = vrcp.pop %v1945
        %v1964 = vmul.f32 1.0, %v1963
        %v1965 = vrcp.pop %v1946
        %v1966 = vmul.f32 1.0, %v1965
        %v1967 = vrcp.pop %v1947
        %v1968 = vmul.f32 1.0, %v1967
        %v1969 = vrcp.pop %v1948
        %v1970 = vmul.f32 1.0, %v1969
        %v1971 = vrcp.pop %v1949
        %v1972 = vmul.f32 1.0, %v1971
        %v1973 = vrcp.pop %v1950
        %v1974 = vmul.f32 1.0, %v1973
        %v1975 = vrcp.pop %v1951
        %v1976 = vmul.f32 1.0, %v1975
        %v1977 = vrcp.pop %v1952
        %v1978 = vmul.f32 1.0, %v1977
        %v1979 = vrcp.pop %v1953
        %v1980 = vmul.f32 1.0, %v1979
        %v1981 = vrcp.pop %v1954
        %v1982 = vmul.f32 1.0, %v1981
        %v1983 = vrcp.pop %v1955
        %v1984 = vmul.f32 1.0, %v1983
        %v1985 = vrcp.pop %v1956
        %v1986 = vmul.f32 1.0, %v1985
        %v1987 = vrcp.pop %v1957
        %v1988 = vmul.f32 1.0, %v1987
        %v1989 = vrcp.pop %v1958
        %v1990 = vmul.f32 1.0, %v1989
        %v1991 = vmul.f32 %v1960, %v1474
        %v1992 = vmul.f32 %v1962, %v1478
        %v1993 = vmul.f32 %v1964, %v1484
        %v1994 = vmul.f32 %v1966, %v1488
        %v1995 = vmul.f32 %v1968, %v1494
        %v1996 = vmul.f32 %v1970, %v1498
        %v1997 = vmul.f32 %v1972, %v1504
        %v1998 = vmul.f32 %v1974, %v1508
        %v1999 = vmul.f32 %v1976, %v1514
        %v2000 = vmul.f32 %v1978, %v1518
        %v2001 = vmul.f32 %v1980, %v1524
        %v2002 = vmul.f32 %v1982, %v1528
        %v2003 = vmul.f32 %v1984, %v1534
        %v2004 = vmul.f32 %v1986, %v1538
        %v2005 = vmul.f32 %v1988, %v1544
        %v2006 = vmul.f32 %v1990, %v1548
        %v2007 = vlaneseq
        %v2008 = vshrl.u32 %v2007, 7
        %v2009 = vadd.s32 %v2008, 8
        %v2010 = vadd.s32 %v2008, 16
        %v2011 = vadd.s32 %v2008, 24
        %v2012 = vadd.s32 %v2008, 32
        %v2013 = vadd.s32 %v2008, 40
        %v2014 = vadd.s32 %v2008, 48
        %v2015 = vadd.s32 %v2008, 56
        %v2016 = vadd.s32 %v2008, 64
        %v2017 = vadd.s32 %v2008, 72
        %v2018 = vadd.s32 %v2008, 80
        %v2019 = vadd.s32 %v2008, 88
        %v2020 = vadd.s32 %v2008, 96
        %v2021 = vadd.s32 %v2008, 104
        %v2022 = vadd.s32 %v2008, 112
        %v2023 = vadd.s32 %v2008, 120
        %v2024 = vld [vmem:[%s465] sm:$0x1]
        %v2025 = vlaneseq
        %v2026 = vshrl.u32 %v2025, 7
        %v2027 = vsub.s32 0, %v2026
        %v2028 = vrot.slane %v2024, %v2027
        %vm2029 = vcmp.eq.s32.totalorder %v2028, %v2008
        %vm2030 = vcmp.eq.s32.totalorder %v2028, %v2009
        %vm2031 = vcmp.eq.s32.totalorder %v2028, %v2010
        %vm2032 = vcmp.eq.s32.totalorder %v2028, %v2011
        %vm2033 = vcmp.eq.s32.totalorder %v2028, %v2012
        %vm2034 = vcmp.eq.s32.totalorder %v2028, %v2013
        %vm2035 = vcmp.eq.s32.totalorder %v2028, %v2014
        %vm2036 = vcmp.eq.s32.totalorder %v2028, %v2015
        %vm2037 = vcmp.eq.s32.totalorder %v2028, %v2016
        %vm2038 = vcmp.eq.s32.totalorder %v2028, %v2017
        %vm2039 = vcmp.eq.s32.totalorder %v2028, %v2018
        %vm2040 = vcmp.eq.s32.totalorder %v2028, %v2019
        %vm2041 = vcmp.eq.s32.totalorder %v2028, %v2020
        %vm2042 = vcmp.eq.s32.totalorder %v2028, %v2021
        %vm2043 = vcmp.eq.s32.totalorder %v2028, %v2022
        %vm2044 = vcmp.eq.s32.totalorder %v2028, %v2023
        %v2045 = vsel %vm2029, 1, 0
        %v2046 = vsel %vm2030, 1, 0
        %v2047 = vsel %vm2031, 1, 0
        %v2048 = vsel %vm2032, 1, 0
        %v2049 = vsel %vm2033, 1, 0
        %v2050 = vsel %vm2034, 1, 0
        %v2051 = vsel %vm2035, 1, 0
        %v2052 = vsel %vm2036, 1, 0
        %v2053 = vsel %vm2037, 1, 0
        %v2054 = vsel %vm2038, 1, 0
        %v2055 = vsel %vm2039, 1, 0
        %v2056 = vsel %vm2040, 1, 0
        %v2057 = vsel %vm2041, 1, 0
        %v2058 = vsel %vm2042, 1, 0
        %v2059 = vsel %vm2043, 1, 0
        %v2060 = vsel %vm2044, 1, 0
        %v2061 = vcvt.s32.f32 %v2045
        %v2062 = vcvt.s32.f32 %v2046
        %v2063 = vcvt.s32.f32 %v2047
        %v2064 = vcvt.s32.f32 %v2048
        %v2065 = vcvt.s32.f32 %v2049
        %v2066 = vcvt.s32.f32 %v2050
        %v2067 = vcvt.s32.f32 %v2051
        %v2068 = vcvt.s32.f32 %v2052
        %v2069 = vcvt.s32.f32 %v2053
        %v2070 = vcvt.s32.f32 %v2054
        %v2071 = vcvt.s32.f32 %v2055
        %v2072 = vcvt.s32.f32 %v2056
        %v2073 = vcvt.s32.f32 %v2057
        %v2074 = vcvt.s32.f32 %v2058
        %v2075 = vcvt.s32.f32 %v2059
        %v2076 = vcvt.s32.f32 %v2060
        %v2077 = vpack.c.bf16 %v2062, %v2061
        %v2078 = vpack.c.bf16 %v2064, %v2063
        %v2079 = vpack.c.bf16 %v2066, %v2065
        %v2080 = vpack.c.bf16 %v2068, %v2067
        %v2081 = vpack.c.bf16 %v2070, %v2069
        %v2082 = vpack.c.bf16 %v2072, %v2071
        %v2083 = vpack.c.bf16 %v2074, %v2073
        %v2084 = vpack.c.bf16 %v2076, %v2075
        %v2085 = vpack.c.bf16 %v1992, %v1991
        %v2086 = vpack.c.bf16 %v1962, %v1960
        %v2087 = vpack.c.bf16 %v1994, %v1993
        %v2088 = vpack.c.bf16 %v1966, %v1964
        %v2089 = vpack.c.bf16 %v1996, %v1995
        %v2090 = vpack.c.bf16 %v1970, %v1968
        %v2091 = vpack.c.bf16 %v1998, %v1997
        %v2092 = vpack.c.bf16 %v1974, %v1972
        %v2093 = vpack.c.bf16 %v2000, %v1999
        %v2094 = vpack.c.bf16 %v1978, %v1976
        %v2095 = vpack.c.bf16 %v2002, %v2001
        %v2096 = vpack.c.bf16 %v1982, %v1980
        %v2097 = vpack.c.bf16 %v2004, %v2003
        %v2098 = vpack.c.bf16 %v1986, %v1984
        %v2099 = vpack.c.bf16 %v2006, %v2005
        %v2100 = vpack.c.bf16 %v1990, %v1988
        %v2101 = vld [vmem:[#allocation3] sm:$0xff]
        %v2102 = vld [vmem:[#allocation3 + $0x8] sm:$0xff]
        %v2103 = vld [vmem:[#allocation3 + $0x10] sm:$0xff]
        %v2104 = vld [vmem:[#allocation3 + $0x18] sm:$0xff]
        %v2105 = vld [vmem:[#allocation3 + $0x20] sm:$0xff]
        %v2106 = vld [vmem:[#allocation3 + $0x28] sm:$0xff]
        %v2107 = vld [vmem:[#allocation3 + $0x30] sm:$0xff]
        %v2108 = vld [vmem:[#allocation3 + $0x38] sm:$0xff]
        %v2109 = vld [vmem:[#allocation3 + $0x40] sm:$0xff]
        %v2110 = vld [vmem:[#allocation3 + $0x48] sm:$0xff]
        %v2111 = vld [vmem:[#allocation3 + $0x50] sm:$0xff]
        %v2112 = vld [vmem:[#allocation3 + $0x58] sm:$0xff]
        %v2113 = vld [vmem:[#allocation3 + $0x60] sm:$0xff]
        %v2114 = vld [vmem:[#allocation3 + $0x68] sm:$0xff]
        %v2115 = vld [vmem:[#allocation3 + $0x70] sm:$0xff]
        %v2116 = vld [vmem:[#allocation3 + $0x78] sm:$0xff]
        %v2117 = vld [vmem:[#allocation3 + $0x80] sm:$0xff]
        %v2118 = vld [vmem:[#allocation3 + $0x88] sm:$0xff]
        %v2119 = vld [vmem:[#allocation3 + $0x90] sm:$0xff]
        %v2120 = vld [vmem:[#allocation3 + $0x98] sm:$0xff]
        %v2121 = vld [vmem:[#allocation3 + $0xa0] sm:$0xff]
        %v2122 = vld [vmem:[#allocation3 + $0xa8] sm:$0xff]
        %v2123 = vld [vmem:[#allocation3 + $0xb0] sm:$0xff]
        %v2124 = vld [vmem:[#allocation3 + $0xb8] sm:$0xff]
        %v2125 = vld [vmem:[#allocation3 + $0xc0] sm:$0xff]
        %v2126 = vld [vmem:[#allocation3 + $0xc8] sm:$0xff]
        %v2127 = vld [vmem:[#allocation3 + $0xd0] sm:$0xff]
        %v2128 = vld [vmem:[#allocation3 + $0xd8] sm:$0xff]
        %v2129 = vld [vmem:[#allocation3 + $0xe0] sm:$0xff]
        %v2130 = vld [vmem:[#allocation3 + $0xe8] sm:$0xff]
        %v2131 = vld [vmem:[#allocation3 + $0xf0] sm:$0xff]
        %v2132 = vld [vmem:[#allocation3 + $0xf8] sm:$0xff]
        %2133 = vmatprep.subr.bf16.mxu0 %v2100
        %2134 = vmatpush1.bf16.msra.mxu0 %v2099
        %2135 = vmatprep.subr.bf16.mxu0 %v2098
        %2136 = vmatpush1.bf16.msra.mxu0 %v2097
        %2137 = vmatprep.subr.bf16.mxu0 %v2096
        %2138 = vmatpush1.bf16.msra.mxu0 %v2095
        %2139 = vmatprep.subr.bf16.mxu0 %v2094
        %2140 = vmatpush1.bf16.msra.mxu0 %v2093
        %2141 = vmatprep.subr.bf16.mxu0 %v2092
        %2142 = vmatpush1.bf16.msra.mxu0 %v2091
        %2143 = vmatprep.subr.bf16.mxu0 %v2090
        %2144 = vmatpush1.bf16.msra.mxu0 %v2089
        %2145 = vmatprep.subr.bf16.mxu0 %v2088
        %2146 = vmatpush1.bf16.msra.mxu0 %v2087
        %2147 = vmatprep.subr.bf16.mxu0 %v2086
        %2148 = vmatpush1.bf16.msra.mxu0 %v2085
        %2149 = vmatprep.subr.bf16.mxu0 0
        %2150 = vmatpush2.bf16.msra.mxu0 0
        %2151 = vmatprep.subr.bf16.mxu0 0
        %2152 = vmatpush2.bf16.msra.mxu0 0
        %2153 = vmatprep.subr.bf16.mxu0 0
        %2154 = vmatpush2.bf16.msra.mxu0 0
        %2155 = vmatprep.subr.bf16.mxu0 0
        %2156 = vmatpush2.bf16.msra.mxu0 0
        %2157 = vmatprep.subr.bf16.mxu0 0
        %2158 = vmatpush2.bf16.msra.mxu0 0
        %2159 = vmatprep.subr.bf16.mxu0 0
        %2160 = vmatpush2.bf16.msra.mxu0 0
        %2161 = vmatprep.subr.bf16.mxu0 0
        %2162 = vmatpush2.bf16.msra.mxu0 0
        %2163 = vmatprep.subr.bf16.mxu0 0
        %2164 = vmatpush2.bf16.msra.mxu0 0
        %2165 = vmatprep.mubr.bf16.mxu0 0
        %2166 = vmatmul.mubr.bf16.gmra.mxu0 %v2077
        %v2167 = vpop.f32.mrf.mxu0
        %v2168 = vadd.f32 0.0, %v2167
        %v2169 = vpop.f32.mrf.mxu0
        %v2170 = vadd.f32 0.0, %v2169
        %v2171 = vpop.f32.mrf.mxu0
        %v2172 = vadd.f32 0.0, %v2171
        %v2173 = vpop.f32.mrf.mxu0
        %v2174 = vadd.f32 0.0, %v2173
        %2175 = vmatprep.mubr.bf16.mxu0 0
        %2176 = vmatmul.mubr.bf16.gmra.mxu0 %v2078
        %v2177 = vpop.f32.mrf.mxu0
        %v2178 = vadd.f32 0.0, %v2177
        %v2179 = vpop.f32.mrf.mxu0
        %v2180 = vadd.f32 0.0, %v2179
        %v2181 = vpop.f32.mrf.mxu0
        %v2182 = vadd.f32 0.0, %v2181
        %v2183 = vpop.f32.mrf.mxu0
        %v2184 = vadd.f32 0.0, %v2183
        %2185 = vmatprep.mubr.bf16.mxu0 0
        %2186 = vmatmul.mubr.bf16.gmra.mxu0 %v2079
        %v2187 = vpop.f32.mrf.mxu0
        %v2188 = vadd.f32 0.0, %v2187
        %v2189 = vpop.f32.mrf.mxu0
        %v2190 = vadd.f32 0.0, %v2189
        %v2191 = vpop.f32.mrf.mxu0
        %v2192 = vadd.f32 0.0, %v2191
        %v2193 = vpop.f32.mrf.mxu0
        %v2194 = vadd.f32 0.0, %v2193
        %2195 = vmatprep.mubr.bf16.mxu0 0
        %2196 = vmatmul.mubr.bf16.gmra.mxu0 %v2080
        %v2197 = vpop.f32.mrf.mxu0
        %v2198 = vadd.f32 0.0, %v2197
        %v2199 = vpop.f32.mrf.mxu0
        %v2200 = vadd.f32 0.0, %v2199
        %v2201 = vpop.f32.mrf.mxu0
        %v2202 = vadd.f32 0.0, %v2201
        %v2203 = vpop.f32.mrf.mxu0
        %v2204 = vadd.f32 0.0, %v2203
        %2205 = vmatprep.mubr.bf16.mxu0 0
        %2206 = vmatmul.mubr.bf16.gmra.mxu0 %v2081
        %v2207 = vpop.f32.mrf.mxu0
        %v2208 = vadd.f32 0.0, %v2207
        %v2209 = vpop.f32.mrf.mxu0
        %v2210 = vadd.f32 0.0, %v2209
        %v2211 = vpop.f32.mrf.mxu0
        %v2212 = vadd.f32 0.0, %v2211
        %v2213 = vpop.f32.mrf.mxu0
        %v2214 = vadd.f32 0.0, %v2213
        %2215 = vmatprep.mubr.bf16.mxu0 0
        %2216 = vmatmul.mubr.bf16.gmra.mxu0 %v2082
        %v2217 = vpop.f32.mrf.mxu0
        %v2218 = vadd.f32 0.0, %v2217
        %v2219 = vpop.f32.mrf.mxu0
        %v2220 = vadd.f32 0.0, %v2219
        %v2221 = vpop.f32.mrf.mxu0
        %v2222 = vadd.f32 0.0, %v2221
        %v2223 = vpop.f32.mrf.mxu0
        %v2224 = vadd.f32 0.0, %v2223
        %2225 = vmatprep.mubr.bf16.mxu0 0
        %2226 = vmatmul.mubr.bf16.gmra.mxu0 %v2083
        %v2227 = vpop.f32.mrf.mxu0
        %v2228 = vadd.f32 0.0, %v2227
        %v2229 = vpop.f32.mrf.mxu0
        %v2230 = vadd.f32 0.0, %v2229
        %v2231 = vpop.f32.mrf.mxu0
        %v2232 = vadd.f32 0.0, %v2231
        %v2233 = vpop.f32.mrf.mxu0
        %v2234 = vadd.f32 0.0, %v2233
        %2235 = vmatprep.mubr.bf16.mxu0 0
        %2236 = vmatmul.mubr.bf16.gmra.mxu0 %v2084
        %v2237 = vpop.f32.mrf.mxu0
        %v2238 = vadd.f32 0.0, %v2237
        %v2239 = vpop.f32.mrf.mxu0
        %v2240 = vadd.f32 0.0, %v2239
        %v2241 = vpop.f32.mrf.mxu0
        %v2242 = vadd.f32 0.0, %v2241
        %v2243 = vpop.f32.mrf.mxu0
        %v2244 = vadd.f32 0.0, %v2243
        %2245 = vdwg.mxu0
        %v2246 = vadd.f32 %v2101, %v2168
        %v2247 = vadd.f32 %v2102, %v2170
        %v2248 = vadd.f32 %v2103, %v2172
        %v2249 = vadd.f32 %v2104, %v2174
        %v2250 = vadd.f32 %v2105, %v2178
        %v2251 = vadd.f32 %v2106, %v2180
        %v2252 = vadd.f32 %v2107, %v2182
        %v2253 = vadd.f32 %v2108, %v2184
        %v2254 = vadd.f32 %v2109, %v2188
        %v2255 = vadd.f32 %v2110, %v2190
        %v2256 = vadd.f32 %v2111, %v2192
        %v2257 = vadd.f32 %v2112, %v2194
        %v2258 = vadd.f32 %v2113, %v2198
        %v2259 = vadd.f32 %v2114, %v2200
        %v2260 = vadd.f32 %v2115, %v2202
        %v2261 = vadd.f32 %v2116, %v2204
        %v2262 = vadd.f32 %v2117, %v2208
        %v2263 = vadd.f32 %v2118, %v2210
        %v2264 = vadd.f32 %v2119, %v2212
        %v2265 = vadd.f32 %v2120, %v2214
        %v2266 = vadd.f32 %v2121, %v2218
        %v2267 = vadd.f32 %v2122, %v2220
        %v2268 = vadd.f32 %v2123, %v2222
        %v2269 = vadd.f32 %v2124, %v2224
        %v2270 = vadd.f32 %v2125, %v2228
        %v2271 = vadd.f32 %v2126, %v2230
        %v2272 = vadd.f32 %v2127, %v2232
        %v2273 = vadd.f32 %v2128, %v2234
        %v2274 = vadd.f32 %v2129, %v2238
        %v2275 = vadd.f32 %v2130, %v2240
        %v2276 = vadd.f32 %v2131, %v2242
        %v2277 = vadd.f32 %v2132, %v2244
        %2278 = vst [vmem:[#allocation3] sm:$0xff] %v2246
        %2279 = vst [vmem:[#allocation3 + $0x8] sm:$0xff] %v2247
        %2280 = vst [vmem:[#allocation3 + $0x10] sm:$0xff] %v2248
        %2281 = vst [vmem:[#allocation3 + $0x18] sm:$0xff] %v2249
        %2282 = vst [vmem:[#allocation3 + $0x20] sm:$0xff] %v2250
        %2283 = vst [vmem:[#allocation3 + $0x28] sm:$0xff] %v2251
        %2284 = vst [vmem:[#allocation3 + $0x30] sm:$0xff] %v2252
        %2285 = vst [vmem:[#allocation3 + $0x38] sm:$0xff] %v2253
        %2286 = vst [vmem:[#allocation3 + $0x40] sm:$0xff] %v2254
        %2287 = vst [vmem:[#allocation3 + $0x48] sm:$0xff] %v2255
        %2288 = vst [vmem:[#allocation3 + $0x50] sm:$0xff] %v2256
        %2289 = vst [vmem:[#allocation3 + $0x58] sm:$0xff] %v2257
        %2290 = vst [vmem:[#allocation3 + $0x60] sm:$0xff] %v2258
        %2291 = vst [vmem:[#allocation3 + $0x68] sm:$0xff] %v2259
        %2292 = vst [vmem:[#allocation3 + $0x70] sm:$0xff] %v2260
        %2293 = vst [vmem:[#allocation3 + $0x78] sm:$0xff] %v2261
        %2294 = vst [vmem:[#allocation3 + $0x80] sm:$0xff] %v2262
        %2295 = vst [vmem:[#allocation3 + $0x88] sm:$0xff] %v2263
        %2296 = vst [vmem:[#allocation3 + $0x90] sm:$0xff] %v2264
        %2297 = vst [vmem:[#allocation3 + $0x98] sm:$0xff] %v2265
        %2298 = vst [vmem:[#allocation3 + $0xa0] sm:$0xff] %v2266
        %2299 = vst [vmem:[#allocation3 + $0xa8] sm:$0xff] %v2267
        %2300 = vst [vmem:[#allocation3 + $0xb0] sm:$0xff] %v2268
        %2301 = vst [vmem:[#allocation3 + $0xb8] sm:$0xff] %v2269
        %2302 = vst [vmem:[#allocation3 + $0xc0] sm:$0xff] %v2270
        %2303 = vst [vmem:[#allocation3 + $0xc8] sm:$0xff] %v2271
        %2304 = vst [vmem:[#allocation3 + $0xd0] sm:$0xff] %v2272
        %2305 = vst [vmem:[#allocation3 + $0xd8] sm:$0xff] %v2273
        %2306 = vst [vmem:[#allocation3 + $0xe0] sm:$0xff] %v2274
        %2307 = vst [vmem:[#allocation3 + $0xe8] sm:$0xff] %v2275
        %2308 = vst [vmem:[#allocation3 + $0xf0] sm:$0xff] %v2276
        %2309 = vst [vmem:[#allocation3 + $0xf8] sm:$0xff] %v2277
        %v2310 = vld [vmem:[%s9] sm:$0x1]
        %v2311 = vlaneseq
        %v2312 = vshrl.u32 %v2311, 7
        %v2313 = vsub.s32 0, %v2312
        %v2314 = vrot.slane %v2310, %v2313
        %v2315 = vmul.f32 %v1879, %v2314
        %v2316 = vmul.f32 %v1880, %v2314
        %v2317 = vmul.f32 %v1881, %v2314
        %v2318 = vmul.f32 %v1882, %v2314
        %v2319 = vmul.f32 %v1883, %v2314
        %v2320 = vmul.f32 %v1884, %v2314
        %v2321 = vmul.f32 %v1885, %v2314
        %v2322 = vmul.f32 %v1886, %v2314
        %v2323 = vmul.f32 %v1887, %v2314
        %v2324 = vmul.f32 %v1888, %v2314
        %v2325 = vmul.f32 %v1889, %v2314
        %v2326 = vmul.f32 %v1890, %v2314
        %v2327 = vmul.f32 %v1891, %v2314
        %v2328 = vmul.f32 %v1892, %v2314
        %v2329 = vmul.f32 %v1893, %v2314
        %v2330 = vmul.f32 %v1894, %v2314
        %v2331 = vld [vmem:[%s9 + $0x1] sm:$0x1]
        %v2332 = vlaneseq
        %v2333 = vshrl.u32 %v2332, 7
        %v2334 = vsub.s32 0, %v2333
        %v2335 = vrot.slane %v2331, %v2334
        %v2336 = vadd.f32 %v2315, %v2335
        %v2337 = vadd.f32 %v2316, %v2335
        %v2338 = vadd.f32 %v2317, %v2335
        %v2339 = vadd.f32 %v2318, %v2335
        %v2340 = vadd.f32 %v2319, %v2335
        %v2341 = vadd.f32 %v2320, %v2335
        %v2342 = vadd.f32 %v2321, %v2335
        %v2343 = vadd.f32 %v2322, %v2335
        %v2344 = vadd.f32 %v2323, %v2335
        %v2345 = vadd.f32 %v2324, %v2335
        %v2346 = vadd.f32 %v2325, %v2335
        %v2347 = vadd.f32 %v2326, %v2335
        %v2348 = vadd.f32 %v2327, %v2335
        %v2349 = vadd.f32 %v2328, %v2335
        %v2350 = vadd.f32 %v2329, %v2335
        %v2351 = vadd.f32 %v2330, %v2335
        %v2352 = vxor.u32 %v2336, 2147483648
        %v2353 = vxor.u32 %v2337, 2147483648
        %v2354 = vxor.u32 %v2338, 2147483648
        %v2355 = vxor.u32 %v2339, 2147483648
        %v2356 = vxor.u32 %v2340, 2147483648
        %v2357 = vxor.u32 %v2341, 2147483648
        %v2358 = vxor.u32 %v2342, 2147483648
        %v2359 = vxor.u32 %v2343, 2147483648
        %v2360 = vxor.u32 %v2344, 2147483648
        %v2361 = vxor.u32 %v2345, 2147483648
        %v2362 = vxor.u32 %v2346, 2147483648
        %v2363 = vxor.u32 %v2347, 2147483648
        %v2364 = vxor.u32 %v2348, 2147483648
        %v2365 = vxor.u32 %v2349, 2147483648
        %v2366 = vxor.u32 %v2350, 2147483648
        %v2367 = vxor.u32 %v2351, 2147483648
        %v2368 = vmul.f32 %v2352, 1.442695
        %v2369 = vpow.pop %v2368
        %v2370 = vmul.f32 %v2353, 1.442695
        %v2371 = vpow.pop %v2370
        %v2372 = vmul.f32 %v2354, 1.442695
        %v2373 = vpow.pop %v2372
        %v2374 = vmul.f32 %v2355, 1.442695
        %v2375 = vpow.pop %v2374
        %v2376 = vmul.f32 %v2356, 1.442695
        %v2377 = vpow.pop %v2376
        %v2378 = vmul.f32 %v2357, 1.442695
        %v2379 = vpow.pop %v2378
        %v2380 = vmul.f32 %v2358, 1.442695
        %v2381 = vpow.pop %v2380
        %v2382 = vmul.f32 %v2359, 1.442695
        %v2383 = vpow.pop %v2382
        %v2384 = vmul.f32 %v2360, 1.442695
        %v2385 = vpow.pop %v2384
        %v2386 = vmul.f32 %v2361, 1.442695
        %v2387 = vpow.pop %v2386
        %v2388 = vmul.f32 %v2362, 1.442695
        %v2389 = vpow.pop %v2388
        %v2390 = vmul.f32 %v2363, 1.442695
        %v2391 = vpow.pop %v2390
        %v2392 = vmul.f32 %v2364, 1.442695
        %v2393 = vpow.pop %v2392
        %v2394 = vmul.f32 %v2365, 1.442695
        %v2395 = vpow.pop %v2394
        %v2396 = vmul.f32 %v2366, 1.442695
        %v2397 = vpow.pop %v2396
        %v2398 = vmul.f32 %v2367, 1.442695
        %v2399 = vpow.pop %v2398
        %v2400 = vadd.f32 %v2369, 1.0
        %v2401 = vadd.f32 %v2371, 1.0
        %v2402 = vadd.f32 %v2373, 1.0
        %v2403 = vadd.f32 %v2375, 1.0
        %v2404 = vadd.f32 %v2377, 1.0
        %v2405 = vadd.f32 %v2379, 1.0
        %v2406 = vadd.f32 %v2381, 1.0
        %v2407 = vadd.f32 %v2383, 1.0
        %v2408 = vadd.f32 %v2385, 1.0
        %v2409 = vadd.f32 %v2387, 1.0
        %v2410 = vadd.f32 %v2389, 1.0
        %v2411 = vadd.f32 %v2391, 1.0
        %v2412 = vadd.f32 %v2393, 1.0
        %v2413 = vadd.f32 %v2395, 1.0
        %v2414 = vadd.f32 %v2397, 1.0
        %v2415 = vadd.f32 %v2399, 1.0
        %v2416 = vrcp.pop %v2400
        %v2417 = vmul.f32 1.0, %v2416
        %v2418 = vrcp.pop %v2401
        %v2419 = vmul.f32 1.0, %v2418
        %v2420 = vrcp.pop %v2402
        %v2421 = vmul.f32 1.0, %v2420
        %v2422 = vrcp.pop %v2403
        %v2423 = vmul.f32 1.0, %v2422
        %v2424 = vrcp.pop %v2404
        %v2425 = vmul.f32 1.0, %v2424
        %v2426 = vrcp.pop %v2405
        %v2427 = vmul.f32 1.0, %v2426
        %v2428 = vrcp.pop %v2406
        %v2429 = vmul.f32 1.0, %v2428
        %v2430 = vrcp.pop %v2407
        %v2431 = vmul.f32 1.0, %v2430
        %v2432 = vrcp.pop %v2408
        %v2433 = vmul.f32 1.0, %v2432
        %v2434 = vrcp.pop %v2409
        %v2435 = vmul.f32 1.0, %v2434
        %v2436 = vrcp.pop %v2410
        %v2437 = vmul.f32 1.0, %v2436
        %v2438 = vrcp.pop %v2411
        %v2439 = vmul.f32 1.0, %v2438
        %v2440 = vrcp.pop %v2412
        %v2441 = vmul.f32 1.0, %v2440
        %v2442 = vrcp.pop %v2413
        %v2443 = vmul.f32 1.0, %v2442
        %v2444 = vrcp.pop %v2414
        %v2445 = vmul.f32 1.0, %v2444
        %v2446 = vrcp.pop %v2415
        %v2447 = vmul.f32 1.0, %v2446
        %v2448 = vmul.f32 %v2336, %v2417
        %v2449 = vmul.f32 %v2337, %v2419
        %v2450 = vmul.f32 %v2338, %v2421
        %v2451 = vmul.f32 %v2339, %v2423
        %v2452 = vmul.f32 %v2340, %v2425
        %v2453 = vmul.f32 %v2341, %v2427
        %v2454 = vmul.f32 %v2342, %v2429
        %v2455 = vmul.f32 %v2343, %v2431
        %v2456 = vmul.f32 %v2344, %v2433
        %v2457 = vmul.f32 %v2345, %v2435
        %v2458 = vmul.f32 %v2346, %v2437
        %v2459 = vmul.f32 %v2347, %v2439
        %v2460 = vmul.f32 %v2348, %v2441
        %v2461 = vmul.f32 %v2349, %v2443
        %v2462 = vmul.f32 %v2350, %v2445
        %v2463 = vmul.f32 %v2351, %v2447
        %v2464 = vadd.f32 %v1083, %v2448
        %v2465 = vadd.f32 %v1084, %v2449
        %v2466 = vadd.f32 %v1085, %v2450
        %v2467 = vadd.f32 %v1086, %v2451
        %v2468 = vadd.f32 %v1087, %v2452
        %v2469 = vadd.f32 %v1088, %v2453
        %v2470 = vadd.f32 %v1089, %v2454
        %v2471 = vadd.f32 %v1090, %v2455
        %v2472 = vadd.f32 %v1091, %v2456
        %v2473 = vadd.f32 %v1092, %v2457
        %v2474 = vadd.f32 %v1093, %v2458
        %v2475 = vadd.f32 %v1094, %v2459
        %v2476 = vadd.f32 %v1095, %v2460
        %v2477 = vadd.f32 %v1096, %v2461
        %v2478 = vadd.f32 %v1097, %v2462
        %v2479 = vadd.f32 %v1098, %v2463
        %2480 = vst [vmem:[%s450] sm:$0xff] %v2464
        %2481 = vst [vmem:[%s450 + $0x8] sm:$0xff] %v2465
        %2482 = vst [vmem:[%s450 + $0x10] sm:$0xff] %v2466
        %2483 = vst [vmem:[%s450 + $0x18] sm:$0xff] %v2467
        %2484 = vst [vmem:[%s450 + $0x20] sm:$0xff] %v2468
        %2485 = vst [vmem:[%s450 + $0x28] sm:$0xff] %v2469
        %2486 = vst [vmem:[%s450 + $0x30] sm:$0xff] %v2470
        %2487 = vst [vmem:[%s450 + $0x38] sm:$0xff] %v2471
        %2488 = vst [vmem:[%s450 + $0x40] sm:$0xff] %v2472
        %2489 = vst [vmem:[%s450 + $0x48] sm:$0xff] %v2473
        %2490 = vst [vmem:[%s450 + $0x50] sm:$0xff] %v2474
        %2491 = vst [vmem:[%s450 + $0x58] sm:$0xff] %v2475
        %2492 = vst [vmem:[%s450 + $0x60] sm:$0xff] %v2476
        %2493 = vst [vmem:[%s450 + $0x68] sm:$0xff] %v2477
        %2494 = vst [vmem:[%s450 + $0x70] sm:$0xff] %v2478
        %2495 = vst [vmem:[%s450 + $0x78] sm:$0xff] %v2479
        %p2496 = scmp.eq.s32.totalorder %s29, 2
        // Predicated region
        $region77: #{tpu_custom_call.1} parent=59 // pred_check
          %p2497 = pneg %p2496
        $region78: #{tpu_custom_call.1} parent=59 // pred_check_branch
          %2499 = sbr.rel (%p2497) target = $region80
        $region79: #{tpu_custom_call.1} parent=59 // pred_region
          %v2500 = vld [vmem:[#allocation3] sm:$0xff]
          %v2501 = vld [vmem:[#allocation3 + $0x8] sm:$0xff]
          %v2502 = vld [vmem:[#allocation3 + $0x10] sm:$0xff]
          %v2503 = vld [vmem:[#allocation3 + $0x18] sm:$0xff]
          %v2504 = vld [vmem:[#allocation3 + $0x20] sm:$0xff]
          %v2505 = vld [vmem:[#allocation3 + $0x28] sm:$0xff]
          %v2506 = vld [vmem:[#allocation3 + $0x30] sm:$0xff]
          %v2507 = vld [vmem:[#allocation3 + $0x38] sm:$0xff]
          %v2508 = vld [vmem:[#allocation3 + $0x40] sm:$0xff]
          %v2509 = vld [vmem:[#allocation3 + $0x48] sm:$0xff]
          %v2510 = vld [vmem:[#allocation3 + $0x50] sm:$0xff]
          %v2511 = vld [vmem:[#allocation3 + $0x58] sm:$0xff]
          %v2512 = vld [vmem:[#allocation3 + $0x60] sm:$0xff]
          %v2513 = vld [vmem:[#allocation3 + $0x68] sm:$0xff]
          %v2514 = vld [vmem:[#allocation3 + $0x70] sm:$0xff]
          %v2515 = vld [vmem:[#allocation3 + $0x78] sm:$0xff]
          %v2516 = vld [vmem:[#allocation3 + $0x80] sm:$0xff]
          %v2517 = vld [vmem:[#allocation3 + $0x88] sm:$0xff]
          %v2518 = vld [vmem:[#allocation3 + $0x90] sm:$0xff]
          %v2519 = vld [vmem:[#allocation3 + $0x98] sm:$0xff]
          %v2520 = vld [vmem:[#allocation3 + $0xa0] sm:$0xff]
          %v2521 = vld [vmem:[#allocation3 + $0xa8] sm:$0xff]
          %v2522 = vld [vmem:[#allocation3 + $0xb0] sm:$0xff]
          %v2523 = vld [vmem:[#allocation3 + $0xb8] sm:$0xff]
          %v2524 = vld [vmem:[#allocation3 + $0xc0] sm:$0xff]
          %v2525 = vld [vmem:[#allocation3 + $0xc8] sm:$0xff]
          %v2526 = vld [vmem:[#allocation3 + $0xd0] sm:$0xff]
          %v2527 = vld [vmem:[#allocation3 + $0xd8] sm:$0xff]
          %v2528 = vld [vmem:[#allocation3 + $0xe0] sm:$0xff]
          %v2529 = vld [vmem:[#allocation3 + $0xe8] sm:$0xff]
          %v2530 = vld [vmem:[#allocation3 + $0xf0] sm:$0xff]
          %v2531 = vld [vmem:[#allocation3 + $0xf8] sm:$0xff]
          %v2532 = vld [vmem:[#allocation4] sm:$0xff]
          %v2533 = vld [vmem:[#allocation4 + $0x8] sm:$0xff]
          %v2534 = vld [vmem:[#allocation4 + $0x10] sm:$0xff]
          %v2535 = vld [vmem:[#allocation4 + $0x18] sm:$0xff]
          %v2536 = vld [vmem:[#allocation4 + $0x20] sm:$0xff]
          %v2537 = vld [vmem:[#allocation4 + $0x28] sm:$0xff]
          %v2538 = vld [vmem:[#allocation4 + $0x30] sm:$0xff]
          %v2539 = vld [vmem:[#allocation4 + $0x38] sm:$0xff]
          %v2540 = vld [vmem:[#allocation4 + $0x40] sm:$0xff]
          %v2541 = vld [vmem:[#allocation4 + $0x48] sm:$0xff]
          %v2542 = vld [vmem:[#allocation4 + $0x50] sm:$0xff]
          %v2543 = vld [vmem:[#allocation4 + $0x58] sm:$0xff]
          %v2544 = vld [vmem:[#allocation4 + $0x60] sm:$0xff]
          %v2545 = vld [vmem:[#allocation4 + $0x68] sm:$0xff]
          %v2546 = vld [vmem:[#allocation4 + $0x70] sm:$0xff]
          %v2547 = vld [vmem:[#allocation4 + $0x78] sm:$0xff]
          %v2548 = vld [vmem:[#allocation7 + $0x18] sm:$0xff]
          %v2549 = vld [vmem:[#allocation7 + $0x38] sm:$0xff]
          %v2550 = vld [vmem:[#allocation7 + $0x58] sm:$0xff]
          %v2551 = vld [vmem:[#allocation7 + $0x78] sm:$0xff]
          %v2552 = vld [vmem:[#allocation7 + $0x98] sm:$0xff]
          %v2553 = vld [vmem:[#allocation7 + $0xb8] sm:$0xff]
          %v2554 = vld [vmem:[#allocation7 + $0xd8] sm:$0xff]
          %v2555 = vld [vmem:[#allocation7 + $0xf8] sm:$0xff]
          %v2556 = vld [vmem:[#allocation7 + $0x118] sm:$0xff]
          %v2557 = vld [vmem:[#allocation7 + $0x138] sm:$0xff]
          %v2558 = vld [vmem:[#allocation7 + $0x158] sm:$0xff]
          %v2559 = vld [vmem:[#allocation7 + $0x178] sm:$0xff]
          %v2560 = vld [vmem:[#allocation7 + $0x198] sm:$0xff]
          %v2561 = vld [vmem:[#allocation7 + $0x1b8] sm:$0xff]
          %v2562 = vld [vmem:[#allocation7 + $0x1d8] sm:$0xff]
          %v2563 = vld [vmem:[#allocation7 + $0x1f8] sm:$0xff]
          %v2564 = vld [vmem:[%s5 + $0x3] sm:$0x1]
          %v2566 = vlaneseq
          %v2567 = vshrl.u32 %v2566, 7
          %v2568 = vsub.s32 0, %v2567
          %v2569 = vrot.slane %v2564, %v2568
          %2571 = vmatprep.subr.mxu0 0.0
          %2572 = vmatpush1.msra.mxu0 %v2563
          %2573 = vmatprep.subr.mxu0 0.0
          %2574 = vmatpush1.msra.mxu0 %v2562
          %2575 = vmatprep.subr.mxu0 0.0
          %2576 = vmatpush1.msra.mxu0 %v2561
          %2577 = vmatprep.subr.mxu0 0.0
          %2578 = vmatpush1.msra.mxu0 %v2560
          %2579 = vmatprep.subr.mxu0 0.0
          %2580 = vmatpush1.msra.mxu0 %v2559
          %2581 = vmatprep.subr.mxu0 0.0
          %2582 = vmatpush1.msra.mxu0 %v2558
          %2583 = vmatprep.subr.mxu0 0.0
          %2584 = vmatpush1.msra.mxu0 %v2557
          %2585 = vmatprep.subr.mxu0 0.0
          %2586 = vmatpush1.msra.mxu0 %v2556
          %2587 = vmatprep.subr.mxu0 0.0
          %2588 = vmatpush1.msra.mxu0 %v2555
          %2589 = vmatprep.subr.mxu0 0.0
          %2590 = vmatpush1.msra.mxu0 %v2554
          %2591 = vmatprep.subr.mxu0 0.0
          %2592 = vmatpush1.msra.mxu0 %v2553
          %2593 = vmatprep.subr.mxu0 0.0
          %2594 = vmatpush1.msra.mxu0 %v2552
          %2595 = vmatprep.subr.mxu0 0.0
          %2596 = vmatpush1.msra.mxu0 %v2551
          %2597 = vmatprep.subr.mxu0 0.0
          %2598 = vmatpush1.msra.mxu0 %v2550
          %2599 = vmatprep.subr.mxu0 0.0
          %2600 = vmatpush1.msra.mxu0 %v2549
          %2601 = vmatprep.subr.mxu0 0.0
          %2602 = vmatpush1.msra.mxu0 %v2548
          %2603 = vmatprep.subr.mxu0 0.0
          %2604 = vmatpush2.msra.mxu0 0.0
          %2605 = vmatprep.subr.mxu0 0.0
          %2606 = vmatpush2.msra.mxu0 0.0
          %2607 = vmatprep.subr.mxu0 0.0
          %2608 = vmatpush2.msra.mxu0 0.0
          %2609 = vmatprep.subr.mxu0 0.0
          %2610 = vmatpush2.msra.mxu0 0.0
          %2611 = vmatprep.subr.mxu0 0.0
          %2612 = vmatpush2.msra.mxu0 0.0
          %2613 = vmatprep.subr.mxu0 0.0
          %2614 = vmatpush2.msra.mxu0 0.0
          %2615 = vmatprep.subr.mxu0 0.0
          %2616 = vmatpush2.msra.mxu0 0.0
          %2617 = vmatprep.subr.mxu0 0.0
          %2618 = vmatpush2.msra.mxu0 0.0
          %2619 = vmatprep.subr.mxu0 0.0
          %2620 = vmatpush2.msra.mxu0 0.0
          %2621 = vmatprep.subr.mxu0 0.0
          %2622 = vmatpush2.msra.mxu0 0.0
          %2623 = vmatprep.subr.mxu0 0.0
          %2624 = vmatpush2.msra.mxu0 0.0
          %2625 = vmatprep.subr.mxu0 0.0
          %2626 = vmatpush2.msra.mxu0 0.0
          %2627 = vmatprep.subr.mxu0 0.0
          %2628 = vmatpush2.msra.mxu0 0.0
          %2629 = vmatprep.subr.mxu0 0.0
          %2630 = vmatpush2.msra.mxu0 0.0
          %2631 = vmatprep.subr.mxu0 0.0
          %2632 = vmatpush2.msra.mxu0 0.0
          %2633 = vmatprep.subr.mxu0 0.0
          %2634 = vmatpush2.msra.mxu0 0.0
          %2635 = vmatprep.mubr.f32.mxu0 0.0
          %2636 = vmatmul.mubr.f32.gmra.mxu0 %v2532
          %v2637 = vpop.f32.mrf.mxu0
          %v2638 = vadd.f32 %v2569, %v2637
          %v2639 = vpop.f32.mrf.mxu0
          %2640 = vmatprep.mubr.f32.mxu0 0.0
          %2641 = vmatmul.mubr.f32.gmra.mxu0 %v2533
          %v2642 = vpop.f32.mrf.mxu0
          %v2643 = vadd.f32 %v2569, %v2642
          %v2644 = vpop.f32.mrf.mxu0
          %2645 = vmatprep.mubr.f32.mxu0 0.0
          %2646 = vmatmul.mubr.f32.gmra.mxu0 %v2534
          %v2647 = vpop.f32.mrf.mxu0
          %v2648 = vadd.f32 %v2569, %v2647
          %v2649 = vpop.f32.mrf.mxu0
          %2650 = vmatprep.mubr.f32.mxu0 0.0
          %2651 = vmatmul.mubr.f32.gmra.mxu0 %v2535
          %v2652 = vpop.f32.mrf.mxu0
          %v2653 = vadd.f32 %v2569, %v2652
          %v2654 = vpop.f32.mrf.mxu0
          %2655 = vmatprep.mubr.f32.mxu0 0.0
          %2656 = vmatmul.mubr.f32.gmra.mxu0 %v2536
          %v2657 = vpop.f32.mrf.mxu0
          %v2658 = vadd.f32 %v2569, %v2657
          %v2659 = vpop.f32.mrf.mxu0
          %2660 = vmatprep.mubr.f32.mxu0 0.0
          %2661 = vmatmul.mubr.f32.gmra.mxu0 %v2537
          %v2662 = vpop.f32.mrf.mxu0
          %v2663 = vadd.f32 %v2569, %v2662
          %v2664 = vpop.f32.mrf.mxu0
          %2665 = vmatprep.mubr.f32.mxu0 0.0
          %2666 = vmatmul.mubr.f32.gmra.mxu0 %v2538
          %v2667 = vpop.f32.mrf.mxu0
          %v2668 = vadd.f32 %v2569, %v2667
          %v2669 = vpop.f32.mrf.mxu0
          %2670 = vmatprep.mubr.f32.mxu0 0.0
          %2671 = vmatmul.mubr.f32.gmra.mxu0 %v2539
          %v2672 = vpop.f32.mrf.mxu0
          %v2673 = vadd.f32 %v2569, %v2672
          %v2674 = vpop.f32.mrf.mxu0
          %2675 = vmatprep.mubr.f32.mxu0 0.0
          %2676 = vmatmul.mubr.f32.gmra.mxu0 %v2540
          %v2677 = vpop.f32.mrf.mxu0
          %v2678 = vadd.f32 %v2569, %v2677
          %v2679 = vpop.f32.mrf.mxu0
          %2680 = vmatprep.mubr.f32.mxu0 0.0
          %2681 = vmatmul.mubr.f32.gmra.mxu0 %v2541
          %v2682 = vpop.f32.mrf.mxu0
          %v2683 = vadd.f32 %v2569, %v2682
          %v2684 = vpop.f32.mrf.mxu0
          %2685 = vmatprep.mubr.f32.mxu0 0.0
          %2686 = vmatmul.mubr.f32.gmra.mxu0 %v2542
          %v2687 = vpop.f32.mrf.mxu0
          %v2688 = vadd.f32 %v2569, %v2687
          %v2689 = vpop.f32.mrf.mxu0
          %2690 = vmatprep.mubr.f32.mxu0 0.0
          %2691 = vmatmul.mubr.f32.gmra.mxu0 %v2543
          %v2692 = vpop.f32.mrf.mxu0
          %v2693 = vadd.f32 %v2569, %v2692
          %v2694 = vpop.f32.mrf.mxu0
          %2695 = vmatprep.mubr.f32.mxu0 0.0
          %2696 = vmatmul.mubr.f32.gmra.mxu0 %v2544
          %v2697 = vpop.f32.mrf.mxu0
          %v2698 = vadd.f32 %v2569, %v2697
          %v2699 = vpop.f32.mrf.mxu0
          %2700 = vmatprep.mubr.f32.mxu0 0.0
          %2701 = vmatmul.mubr.f32.gmra.mxu0 %v2545
          %v2702 = vpop.f32.mrf.mxu0
          %v2703 = vadd.f32 %v2569, %v2702
          %v2704 = vpop.f32.mrf.mxu0
          %2705 = vmatprep.mubr.f32.mxu0 0.0
          %2706 = vmatmul.mubr.f32.gmra.mxu0 %v2546
          %v2707 = vpop.f32.mrf.mxu0
          %v2708 = vadd.f32 %v2569, %v2707
          %v2709 = vpop.f32.mrf.mxu0
          %2710 = vmatprep.mubr.f32.mxu0 0.0
          %2711 = vmatmul.mubr.f32.gmra.mxu0 %v2547
          %v2712 = vpop.f32.mrf.mxu0
          %v2713 = vadd.f32 %v2569, %v2712
          %v2714 = vpop.f32.mrf.mxu0
          %2715 = vdwg.mxu0
          %v2716 = vadd.f32 %v2501, 1e-06
          %v2717 = vadd.f32 %v2503, 1e-06
          %v2718 = vadd.f32 %v2505, 1e-06
          %v2719 = vadd.f32 %v2507, 1e-06
          %v2720 = vadd.f32 %v2509, 1e-06
          %v2721 = vadd.f32 %v2511, 1e-06
          %v2722 = vadd.f32 %v2513, 1e-06
          %v2723 = vadd.f32 %v2515, 1e-06
          %v2724 = vadd.f32 %v2517, 1e-06
          %v2725 = vadd.f32 %v2519, 1e-06
          %v2726 = vadd.f32 %v2521, 1e-06
          %v2727 = vadd.f32 %v2523, 1e-06
          %v2728 = vadd.f32 %v2525, 1e-06
          %v2729 = vadd.f32 %v2527, 1e-06
          %v2730 = vadd.f32 %v2529, 1e-06
          %v2731 = vadd.f32 %v2531, 1e-06
          %v2732 = vrcp.pop %v2716
          %v2733 = vrcp.pop %v2717
          %v2734 = vrcp.pop %v2718
          %v2735 = vrcp.pop %v2719
          %v2736 = vrcp.pop %v2720
          %v2737 = vrcp.pop %v2721
          %v2738 = vrcp.pop %v2722
          %v2739 = vrcp.pop %v2723
          %v2740 = vrcp.pop %v2724
          %v2741 = vrcp.pop %v2725
          %v2742 = vrcp.pop %v2726
          %v2743 = vrcp.pop %v2727
          %v2744 = vrcp.pop %v2728
          %v2745 = vrcp.pop %v2729
          %v2746 = vrcp.pop %v2730
          %v2747 = vrcp.pop %v2731
          %v2748 = vmul.f32 %v2500, %v2732
          %v2749 = vmul.f32 %v2502, %v2733
          %v2750 = vmul.f32 %v2504, %v2734
          %v2751 = vmul.f32 %v2506, %v2735
          %v2752 = vmul.f32 %v2508, %v2736
          %v2753 = vmul.f32 %v2510, %v2737
          %v2754 = vmul.f32 %v2512, %v2738
          %v2755 = vmul.f32 %v2514, %v2739
          %v2756 = vmul.f32 %v2516, %v2740
          %v2757 = vmul.f32 %v2518, %v2741
          %v2758 = vmul.f32 %v2520, %v2742
          %v2759 = vmul.f32 %v2522, %v2743
          %v2760 = vmul.f32 %v2524, %v2744
          %v2761 = vmul.f32 %v2526, %v2745
          %v2762 = vmul.f32 %v2528, %v2746
          %v2763 = vmul.f32 %v2530, %v2747
          %v2764 = vadd.f32 %v2638, %v2748
          %v2765 = vadd.f32 %v2643, %v2749
          %v2766 = vadd.f32 %v2648, %v2750
          %v2767 = vadd.f32 %v2653, %v2751
          %v2768 = vadd.f32 %v2658, %v2752
          %v2769 = vadd.f32 %v2663, %v2753
          %v2770 = vadd.f32 %v2668, %v2754
          %v2771 = vadd.f32 %v2673, %v2755
          %v2772 = vadd.f32 %v2678, %v2756
          %v2773 = vadd.f32 %v2683, %v2757
          %v2774 = vadd.f32 %v2688, %v2758
          %v2775 = vadd.f32 %v2693, %v2759
          %v2776 = vadd.f32 %v2698, %v2760
          %v2777 = vadd.f32 %v2703, %v2761
          %v2778 = vadd.f32 %v2708, %v2762
          %v2779 = vadd.f32 %v2713, %v2763
          %v2780 = vld [vmem:[%s8] sm:$0x1]
          %v2781 = vlaneseq
          %v2782 = vshrl.u32 %v2781, 7
          %v2783 = vsub.s32 0, %v2782
          %v2784 = vrot.slane %v2780, %v2783
          %v2785 = vmul.f32 %v2764, %v2784
          %v2786 = vmul.f32 %v2765, %v2784
          %v2787 = vmul.f32 %v2766, %v2784
          %v2788 = vmul.f32 %v2767, %v2784
          %v2789 = vmul.f32 %v2768, %v2784
          %v2790 = vmul.f32 %v2769, %v2784
          %v2791 = vmul.f32 %v2770, %v2784
          %v2792 = vmul.f32 %v2771, %v2784
          %v2793 = vmul.f32 %v2772, %v2784
          %v2794 = vmul.f32 %v2773, %v2784
          %v2795 = vmul.f32 %v2774, %v2784
          %v2796 = vmul.f32 %v2775, %v2784
          %v2797 = vmul.f32 %v2776, %v2784
          %v2798 = vmul.f32 %v2777, %v2784
          %v2799 = vmul.f32 %v2778, %v2784
          %v2800 = vmul.f32 %v2779, %v2784
          %v2801 = vld [vmem:[%s8 + $0x1] sm:$0x1]
          %v2802 = vlaneseq
          %v2803 = vshrl.u32 %v2802, 7
          %v2804 = vsub.s32 0, %v2803
          %v2805 = vrot.slane %v2801, %v2804
          %v2806 = vadd.f32 %v2785, %v2805
          %v2807 = vadd.f32 %v2786, %v2805
          %v2808 = vadd.f32 %v2787, %v2805
          %v2809 = vadd.f32 %v2788, %v2805
          %v2810 = vadd.f32 %v2789, %v2805
          %v2811 = vadd.f32 %v2790, %v2805
          %v2812 = vadd.f32 %v2791, %v2805
          %v2813 = vadd.f32 %v2792, %v2805
          %v2814 = vadd.f32 %v2793, %v2805
          %v2815 = vadd.f32 %v2794, %v2805
          %v2816 = vadd.f32 %v2795, %v2805
          %v2817 = vadd.f32 %v2796, %v2805
          %v2818 = vadd.f32 %v2797, %v2805
          %v2819 = vadd.f32 %v2798, %v2805
          %v2820 = vadd.f32 %v2799, %v2805
          %v2821 = vadd.f32 %v2800, %v2805
          %v2822 = vxor.u32 %v2806, 2147483648
          %v2823 = vxor.u32 %v2807, 2147483648
          %v2824 = vxor.u32 %v2808, 2147483648
          %v2825 = vxor.u32 %v2809, 2147483648
          %v2826 = vxor.u32 %v2810, 2147483648
          %v2827 = vxor.u32 %v2811, 2147483648
          %v2828 = vxor.u32 %v2812, 2147483648
          %v2829 = vxor.u32 %v2813, 2147483648
          %v2830 = vxor.u32 %v2814, 2147483648
          %v2831 = vxor.u32 %v2815, 2147483648
          %v2832 = vxor.u32 %v2816, 2147483648
          %v2833 = vxor.u32 %v2817, 2147483648
          %v2834 = vxor.u32 %v2818, 2147483648
          %v2835 = vxor.u32 %v2819, 2147483648
          %v2836 = vxor.u32 %v2820, 2147483648
          %v2837 = vxor.u32 %v2821, 2147483648
          %v2838 = vmul.f32 %v2822, 1.442695
          %v2839 = vpow.pop %v2838
          %v2840 = vmul.f32 %v2823, 1.442695
          %v2841 = vpow.pop %v2840
          %v2842 = vmul.f32 %v2824, 1.442695
          %v2843 = vpow.pop %v2842
          %v2844 = vmul.f32 %v2825, 1.442695
          %v2845 = vpow.pop %v2844
          %v2846 = vmul.f32 %v2826, 1.442695
          %v2847 = vpow.pop %v2846
          %v2848 = vmul.f32 %v2827, 1.442695
          %v2849 = vpow.pop %v2848
          %v2850 = vmul.f32 %v2828, 1.442695
          %v2851 = vpow.pop %v2850
          %v2852 = vmul.f32 %v2829, 1.442695
          %v2853 = vpow.pop %v2852
          %v2854 = vmul.f32 %v2830, 1.442695
          %v2855 = vpow.pop %v2854
          %v2856 = vmul.f32 %v2831, 1.442695
          %v2857 = vpow.pop %v2856
          %v2858 = vmul.f32 %v2832, 1.442695
          %v2859 = vpow.pop %v2858
          %v2860 = vmul.f32 %v2833, 1.442695
          %v2861 = vpow.pop %v2860
          %v2862 = vmul.f32 %v2834, 1.442695
          %v2863 = vpow.pop %v2862
          %v2864 = vmul.f32 %v2835, 1.442695
          %v2865 = vpow.pop %v2864
          %v2866 = vmul.f32 %v2836, 1.442695
          %v2867 = vpow.pop %v2866
          %v2868 = vmul.f32 %v2837, 1.442695
          %v2869 = vpow.pop %v2868
          %v2870 = vadd.f32 %v2839, 1.0
          %v2871 = vadd.f32 %v2841, 1.0
          %v2872 = vadd.f32 %v2843, 1.0
          %v2873 = vadd.f32 %v2845, 1.0
          %v2874 = vadd.f32 %v2847, 1.0
          %v2875 = vadd.f32 %v2849, 1.0
          %v2876 = vadd.f32 %v2851, 1.0
          %v2877 = vadd.f32 %v2853, 1.0
          %v2878 = vadd.f32 %v2855, 1.0
          %v2879 = vadd.f32 %v2857, 1.0
          %v2880 = vadd.f32 %v2859, 1.0
          %v2881 = vadd.f32 %v2861, 1.0
          %v2882 = vadd.f32 %v2863, 1.0
          %v2883 = vadd.f32 %v2865, 1.0
          %v2884 = vadd.f32 %v2867, 1.0
          %v2885 = vadd.f32 %v2869, 1.0
          %v2886 = vrcp.pop %v2870
          %v2887 = vmul.f32 1.0, %v2886
          %v2888 = vrcp.pop %v2871
          %v2889 = vmul.f32 1.0, %v2888
          %v2890 = vrcp.pop %v2872
          %v2891 = vmul.f32 1.0, %v2890
          %v2892 = vrcp.pop %v2873
          %v2893 = vmul.f32 1.0, %v2892
          %v2894 = vrcp.pop %v2874
          %v2895 = vmul.f32 1.0, %v2894
          %v2896 = vrcp.pop %v2875
          %v2897 = vmul.f32 1.0, %v2896
          %v2898 = vrcp.pop %v2876
          %v2899 = vmul.f32 1.0, %v2898
          %v2900 = vrcp.pop %v2877
          %v2901 = vmul.f32 1.0, %v2900
          %v2902 = vrcp.pop %v2878
          %v2903 = vmul.f32 1.0, %v2902
          %v2904 = vrcp.pop %v2879
          %v2905 = vmul.f32 1.0, %v2904
          %v2906 = vrcp.pop %v2880
          %v2907 = vmul.f32 1.0, %v2906
          %v2908 = vrcp.pop %v2881
          %v2909 = vmul.f32 1.0, %v2908
          %v2910 = vrcp.pop %v2882
          %v2911 = vmul.f32 1.0, %v2910
          %v2912 = vrcp.pop %v2883
          %v2913 = vmul.f32 1.0, %v2912
          %v2914 = vrcp.pop %v2884
          %v2915 = vmul.f32 1.0, %v2914
          %v2916 = vrcp.pop %v2885
          %v2917 = vmul.f32 1.0, %v2916
          %v2918 = vmul.f32 %v2806, %v2887
          %v2919 = vmul.f32 %v2807, %v2889
          %v2920 = vmul.f32 %v2808, %v2891
          %v2921 = vmul.f32 %v2809, %v2893
          %v2922 = vmul.f32 %v2810, %v2895
          %v2923 = vmul.f32 %v2811, %v2897
          %v2924 = vmul.f32 %v2812, %v2899
          %v2925 = vmul.f32 %v2813, %v2901
          %v2926 = vmul.f32 %v2814, %v2903
          %v2927 = vmul.f32 %v2815, %v2905
          %v2928 = vmul.f32 %v2816, %v2907
          %v2929 = vmul.f32 %v2817, %v2909
          %v2930 = vmul.f32 %v2818, %v2911
          %v2931 = vmul.f32 %v2819, %v2913
          %v2932 = vmul.f32 %v2820, %v2915
          %v2933 = vmul.f32 %v2821, %v2917
          %v2934 = vadd.f32 %v2532, %v2918
          %v2935 = vadd.f32 %v2533, %v2919
          %v2936 = vadd.f32 %v2534, %v2920
          %v2937 = vadd.f32 %v2535, %v2921
          %v2938 = vadd.f32 %v2536, %v2922
          %v2939 = vadd.f32 %v2537, %v2923
          %v2940 = vadd.f32 %v2538, %v2924
          %v2941 = vadd.f32 %v2539, %v2925
          %v2942 = vadd.f32 %v2540, %v2926
          %v2943 = vadd.f32 %v2541, %v2927
          %v2944 = vadd.f32 %v2542, %v2928
          %v2945 = vadd.f32 %v2543, %v2929
          %v2946 = vadd.f32 %v2544, %v2930
          %v2947 = vadd.f32 %v2545, %v2931
          %v2948 = vadd.f32 %v2546, %v2932
          %v2949 = vadd.f32 %v2547, %v2933
          %2950 = vst [vmem:[#allocation10] sm:$0xff] %v2934
          %2951 = vst [vmem:[#allocation10 + $0x8] sm:$0xff] %v2935
          %2952 = vst [vmem:[#allocation10 + $0x10] sm:$0xff] %v2936
          %2953 = vst [vmem:[#allocation10 + $0x18] sm:$0xff] %v2937
          %2954 = vst [vmem:[#allocation10 + $0x20] sm:$0xff] %v2938
          %2955 = vst [vmem:[#allocation10 + $0x28] sm:$0xff] %v2939
          %2956 = vst [vmem:[#allocation10 + $0x30] sm:$0xff] %v2940
          %2957 = vst [vmem:[#allocation10 + $0x38] sm:$0xff] %v2941
          %2958 = vst [vmem:[#allocation10 + $0x40] sm:$0xff] %v2942
          %2959 = vst [vmem:[#allocation10 + $0x48] sm:$0xff] %v2943
          %2960 = vst [vmem:[#allocation10 + $0x50] sm:$0xff] %v2944
          %2961 = vst [vmem:[#allocation10 + $0x58] sm:$0xff] %v2945
          %2962 = vst [vmem:[#allocation10 + $0x60] sm:$0xff] %v2946
          %2963 = vst [vmem:[#allocation10 + $0x68] sm:$0xff] %v2947
          %2964 = vst [vmem:[#allocation10 + $0x70] sm:$0xff] %v2948
          %2965 = vst [vmem:[#allocation10 + $0x78] sm:$0xff] %v2949
        $region80: #{tpu_custom_call.1} parent=59 // pred_fallthru
          _
        %s2966 = sand.u32 %s283, 1
        %s2967 = scalar_lea.sflag [#allocation12], %s2966
        %s2968 = sand.u32 %s283, 1
        %s2969 = smul.addr %s2968, 128
        %s2970 = scalar_lea.vmem [#allocation11], %s2969
        // Predicated region
        $region81: #{tpu_custom_call.1} parent=59 // pred_check
          %p2971 = pneg %p267
        $region82: #{tpu_custom_call.1} parent=59 // pred_check_branch
          %2973 = sbr.rel (%p2971) target = $region84
        $region83: #{tpu_custom_call.1} parent=59 // pred_region
          %s2975 = ssub.s32 2048, 2048
          %2976 = vsyncadd [#allocation6], %s2975
          %s2977 = sshll.u32 [#allocation10], 4
          %s2978 = int_to_ptr.vmem [resolvable:$true] %s2977
          %2983 = dma.vmem_to_hbm [thread:$0]  %s2978, 2048, %s10, [#allocation6], 128, 128, 8
        $region84: #{tpu_custom_call.1} parent=59 // pred_fallthru
          _
        // Predicated region
        $region85: #{tpu_custom_call.1} parent=59 // pred_check
          %p2984 = pneg %p293
        $region86: #{tpu_custom_call.1} parent=59 // pred_check_branch
          %2986 = sbr.rel (%p2984) target = $region88
        $region87: #{tpu_custom_call.1} parent=59 // pred_region
          %s2987 = smul.u32 16, %s29
          %s2989 = ssub.s32 2048, 2048
          %2990 = vsyncadd %s2967, %s2989
          %s2991 = smul.addr %s2987, 128
          %s2992 = scalar_lea.hbm %s11, %s2991
          %s2993 = sshll.u32 %s2970, 4
          %s2994 = int_to_ptr.vmem [resolvable:$true] %s2993
          %2999 = dma.vmem_to_hbm [thread:$0]  %s2994, 2048, %s2992, %s2967, 128, 128, 8
        $region88: #{tpu_custom_call.1} parent=59 // pred_fallthru
          _
        // Predicated region
        $region89: #{tpu_custom_call.1} parent=59 // pred_check
          %p3000 = pneg %p267
        $region90: #{tpu_custom_call.1} parent=59 // pred_check_branch
          %3002 = sbr.rel (%p3000) target = $region92
        $region91: #{tpu_custom_call.1} parent=59 // pred_region
          %3003 = dma.done [#allocation6], 2048
        $region92: #{tpu_custom_call.1} parent=59 // pred_fallthru
          _
      $region60: #{tpu_custom_call.1} parent=5 // pred_fallthru
        _
      %p3004 = scmp.le.s32.totalorder 2, %s24
      // Predicated region
      $region93: #{tpu_custom_call.1} parent=5 // pred_check
        %p3005 = pneg %p3004
      $region94: #{tpu_custom_call.1} parent=5 // pred_check_branch
        %3007 = sbr.rel (%p3005) target = $region96
      $region95: #{tpu_custom_call.1} parent=5 // pred_region
        %s3008 = ssub.s32 %s24, 2
        // Predicated region
        $region97: #{tpu_custom_call.1} parent=95 // pred_check
          %p3009 = pneg %p299
        $region98: #{tpu_custom_call.1} parent=95 // pred_check_branch
          %3011 = sbr.rel (%p3009) target = $region100
        $region99: #{tpu_custom_call.1} parent=95 // pred_region
          %s3012 = sand.u32 %s284, 1
          %s3013 = scalar_lea.sflag [#allocation12], %s3012
          %s3014 = sand.u32 %s284, 1
          %s3015 = smul.addr %s3014, 128
          %s3016 = scalar_lea.vmem [#allocation11], %s3015
          %3017 = dma.done %s3013, 2048
        $region100: #{tpu_custom_call.1} parent=95 // pred_fallthru
          _
      $region96: #{tpu_custom_call.1} parent=5 // pred_fallthru
        _
    $region6: #{tpu_custom_call.1} parent=1 // loop_footer
      %s28 = sadd.s32 1, %s24
    $region7: #{tpu_custom_call.1} parent=1 // loop_footer_branch
      %23 = sbr.rel target = $region3
    $region8: #{tpu_custom_call.1} parent=1 // loop_exit
      _
    %3018 = vsyncpa [#allocation5], 1
    %s3019 = scalar_lea.sflag [#allocation5], 1
    %3020 = vsyncpa %s3019, 1
    %3021 = vsyncpa [#allocation8], 1
    %3022 = vsyncpa [#allocation6], 1
    %s3023 = scalar_lea.sflag [#allocation6], 1
    %3024 = vsyncpa %s3023, 1
    %3025 = vsyncpa [#allocation12], 1
    %s3026 = scalar_lea.sflag [#allocation12], 1
    %3027 = vsyncpa %s3026, 1

// kernel: tpu_custom_call.1
$region0: #{tpu_custom_call.1}
  #allocation0 [shape = 'u32[]', space=smem, size = 0x4, offset = 0x4, fixed_abs, tag = 'smem constant byte address 0x4 - core index']
  #allocation1 [shape = 'u32[144,128]{1,0:T(1,128)}', space=vmem, size = 0x12000, scoped, tag = 'internal scratch']
  #allocation2 [shape = 'bf16[128,384]{1,0:T(8,128)(2,1)}', space=vmem, size = 0x18000, scoped, tag = 'scratch operand']
  #allocation3 [shape = 'f32[128,256]{1,0:T(8,128)}', space=vmem, size = 0x20000, scoped, tag = 'scratch operand']
  %s0 = inlined_call_operand.hbm [shape: f32[128,128], index: 0, kind: input, shape index: {}]
  %s1 = inlined_call_operand.vmem [shape: f32[384,128], index: 1, kind: input, shape index: {}]
  %s2 = inlined_call_operand.vmem [shape: s32[384,2], index: 2, kind: input, shape index: {}]
  %s3 = inlined_call_operand.vmem [shape: s32[1,384], index: 3, kind: input, shape index: {}]
  %s4 = inlined_call_operand.hbm [shape: f32[128,512], index: 4, kind: input, shape index: {}]
  %s5 = inlined_call_operand.vmem [shape: f32[1,512], index: 5, kind: input, shape index: {}]
  %s6 = inlined_call_operand.hbm [shape: f32[128,128], index: 6, kind: input, shape index: {}]
  %s7 = inlined_call_operand.vmem [shape: f32[1,128], index: 7, kind: input, shape index: {}]
  %s8 = inlined_call_operand.vmem [shape: f32[2,128], index: 8, kind: input, shape index: {}]
  %s9 = inlined_call_operand.vmem [shape: f32[2,128], index: 9, kind: input, shape index: {}]
  %s10 = inlined_call_operand.hbm [shape: f32[128,128], index: 10, kind: output, shape index: {0}]
  %s11 = inlined_call_operand.hbm [shape: f32[384,128], index: 11, kind: output, shape index: {1}]
  %12 = xla_tuple %s10, %s11
  %s13 = sld [smem:[#allocation0]]
  $region101: #{tpu_custom_call.1} parent=0
    _
  %s15 = ssub.s32 1, %s13
  %s16 = scalar_select 0, %s15, %s13
  $region1: #{tpu_custom_call.1} parent=0
    #allocation4 [shape = 'u8[65536]{0}', space=vmem, size = 0x10000, scoped, tag = 'input window, operand 0, single buffered']
    #allocation5 [shape = 's32[2]{0}', space=sflag, size = 0x8, scoped, tag = 'scoped memory for tpu_custom_call.1']
    #allocation6 [shape = 's32[2]{0}', space=sflag, size = 0x8, scoped, tag = 'scoped memory for tpu_custom_call.1']
    #allocation7 [shape = 'u8[262144]{0}', space=vmem, size = 0x40000, scoped, tag = 'input window, operand 4, single buffered']
    #allocation8 [shape = 's32[1]{0}', space=sflag, size = 0x4, scoped, tag = 'scoped memory for tpu_custom_call.1']
    #allocation9 [shape = 'u8[65536]{0}', space=vmem, size = 0x10000, scoped, tag = 'input window, operand 6, single buffered']
    #allocation10 [shape = 'u8[65536]{0}', space=vmem, size = 0x10000, scoped, tag = 'output window, operand 0, single buffered']
    #allocation11 [shape = 'u8[131072]{0}', space=vmem, size = 0x20000, scoped, tag = 'output window, operand 1']
    #allocation12 [shape = 's32[2]{0}', space=sflag, size = 0x8, scoped, tag = 'scoped memory for tpu_custom_call.1']
    %17 = vsyncpa [#allocation5], 0
    %18 = vsyncpa [#allocation8], 0
    %19 = vsyncpa [#allocation6], 0
    %20 = vsyncpa [#allocation12], 0
    %s21 = scalar_lea.sflag [#allocation12], 1
    %22 = vsyncpa %s21, 0
    loop: start=0, step=1, limit=5
    $region2: #{tpu_custom_call.1} parent=1 // loop_pre_header
      _
    $region3: #{tpu_custom_call.1} parent=1 // loop_header
      %s24 = sphi 0, %s28
      %p25 = scmp.ge.s32.totalorder %s24, 5
      %s32 = sphi 0, %s32
      %s34 = sphi 0, %s32
      %s35 = sphi 0, %s34
      %s49 = sphi 0, %s35
      %s55 = sphi 0, %s57
      %s58 = sphi 0, %s55
      %s59 = sphi 0, %s58
      %s75 = sphi 0, %s59
      %s81 = sphi 0, %s83
      %s84 = sphi 0, %s81
      %s85 = sphi 0, %s84
      %s101 = sphi 0, %s85
      %s107 = sphi 0, %s109
      %s110 = sphi 0, %s107
      %s111 = sphi 0, %s110
      %s127 = sphi 0, %s111
      %s131 = sphi 0, %s131
      %s133 = sphi 0, %s131
      %s134 = sphi 0, %s133
      %s148 = sphi 0, %s134
      %s152 = sphi 0, %s152
      %s154 = sphi 0, %s152
      %s155 = sphi 0, %s154
      %s169 = sphi 0, %s155
      %s173 = sphi 0, %s173
      %s175 = sphi 0, %s173
      %s176 = sphi 0, %s175
      %s190 = sphi 0, %s176
      %s194 = sphi 0, %s194
      %s196 = sphi 0, %s194
      %s197 = sphi 0, %s196
      %s211 = sphi 0, %s197
      %s215 = sphi 0, %s215
      %s217 = sphi 0, %s215
      %s218 = sphi 0, %s217
      %s232 = sphi 0, %s218
      %s236 = sphi 0, %s236
      %s238 = sphi 0, %s236
      %s239 = sphi 0, %s238
      %s253 = sphi 0, %s239
      %s257 = sphi 0, %s257
      %s259 = sphi 0, %s257
      %s260 = sphi 0, %s259
      %s274 = sphi 0, %s260
      %s280 = sphi 0, %s282
      %s283 = sphi 0, %s280
      %s284 = sphi 0, %s283
      %s300 = sphi 0, %s284
    $region4: #{tpu_custom_call.1} parent=1 // loop_header_branch
      %27 = sbr.rel (%p25) target = $region8
    $region5: #{tpu_custom_call.1} parent=1 // loop_body
      %s29 = ssub.s32 %s24, 1
      %s30 = ssub.s32 %s24, 2
      %s31 = sadd.s32 %s24, 1
      %s33 = sadd.s32 %s32, 1
      %p36 = scmp.eq.s32.totalorder %s24, 2
      %p37 = scmp.ne.s32.totalorder %s32, %s34
      %p38 = scmp.eq.s32.totalorder %s24, 0
      %p39 = por %p37, %p38
      %p40 = scmp.ne.s32.totalorder %s32, %s34
      %p41 = scmp.eq.s32.totalorder %s29, 2
      %p42 = por %p40, %p41
      %p43 = scmp.ne.s32.totalorder %s34, %s35
      %p44 = scmp.eq.s32.totalorder %s29, 0
      %p45 = por %p43, %p44
      %p46 = scmp.ne.s32.totalorder %s34, %s35
      %p47 = scmp.eq.s32.totalorder %s30, 2
      %p48 = por %p46, %p47
      %p50 = scmp.ne.s32.totalorder %s35, %s49
      %p51 = scmp.eq.s32.totalorder %s30, 0
      %p52 = por %p50, %p51
      %s53 = ssub.s32 %s24, %s31
      %p54 = scmp.eq.s32.totalorder %s53, 0
      %s56 = sadd.s32 %s55, 1
      %s57 = scalar_select %p54, %s55, %s56
      %p60 = pneg %p54
      %p61 = scmp.eq.s32.totalorder %s24, 2
      %p62 = por %p60, %p61
      %p63 = scmp.ne.s32.totalorder %s55, %s58
      %p64 = scmp.eq.s32.totalorder %s24, 0
      %p65 = por %p63, %p64
      %p66 = scmp.ne.s32.totalorder %s55, %s58
      %p67 = scmp.eq.s32.totalorder %s29, 2
      %p68 = por %p66, %p67
      %p69 = scmp.ne.s32.totalorder %s58, %s59
      %p70 = scmp.eq.s32.totalorder %s29, 0
      %p71 = por %p69, %p70
      %p72 = scmp.ne.s32.totalorder %s58, %s59
      %p73 = scmp.eq.s32.totalorder %s30, 2
      %p74 = por %p72, %p73
      %p76 = scmp.ne.s32.totalorder %s59, %s75
      %p77 = scmp.eq.s32.totalorder %s30, 0
      %p78 = por %p76, %p77
      %s79 = ssub.s32 %s24, %s31
      %p80 = scmp.eq.s32.totalorder %s79, 0
      %s82 = sadd.s32 %s81, 1
      %s83 = scalar_select %p80, %s81, %s82
      %p86 = pneg %p80
      %p87 = scmp.eq.s32.totalorder %s24, 2
      %p88 = por %p86, %p87
      %p89 = scmp.ne.s32.totalorder %s81, %s84
      %p90 = scmp.eq.s32.totalorder %s24, 0
      %p91 = por %p89, %p90
      %p92 = scmp.ne.s32.totalorder %s81, %s84
      %p93 = scmp.eq.s32.totalorder %s29, 2
      %p94 = por %p92, %p93
      %p95 = scmp.ne.s32.totalorder %s84, %s85
      %p96 = scmp.eq.s32.totalorder %s29, 0
      %p97 = por %p95, %p96
      %p98 = scmp.ne.s32.totalorder %s84, %s85
      %p99 = scmp.eq.s32.totalorder %s30, 2
      %p100 = por %p98, %p99
      %p102 = scmp.ne.s32.totalorder %s85, %s101
      %p103 = scmp.eq.s32.totalorder %s30, 0
      %p104 = por %p102, %p103
      %s105 = ssub.s32 %s24, %s31
      %p106 = scmp.eq.s32.totalorder %s105, 0
      %s108 = sadd.s32 %s107, 1
      %s109 = scalar_select %p106, %s107, %s108
      %p112 = pneg %p106
      %p113 = scmp.eq.s32.totalorder %s24, 2
      %p114 = por %p112, %p113
      %p115 = scmp.ne.s32.totalorder %s107, %s110
      %p116 = scmp.eq.s32.totalorder %s24, 0
      %p117 = por %p115, %p116
      %p118 = scmp.ne.s32.totalorder %s107, %s110
      %p119 = scmp.eq.s32.totalorder %s29, 2
      %p120 = por %p118, %p119
      %p121 = scmp.ne.s32.totalorder %s110, %s111
      %p122 = scmp.eq.s32.totalorder %s29, 0
      %p123 = por %p121, %p122
      %p124 = scmp.ne.s32.totalorder %s110, %s111
      %p125 = scmp.eq.s32.totalorder %s30, 2
      %p126 = por %p124, %p125
      %p128 = scmp.ne.s32.totalorder %s111, %s127
      %p129 = scmp.eq.s32.totalorder %s30, 0
      %p130 = por %p128, %p129
      %s132 = sadd.s32 %s131, 1
      %p135 = scmp.eq.s32.totalorder %s24, 2
      %p136 = scmp.ne.s32.totalorder %s131, %s133
      %p137 = scmp.eq.s32.totalorder %s24, 0
      %p138 = por %p136, %p137
      %p139 = scmp.ne.s32.totalorder %s131, %s133
      %p140 = scmp.eq.s32.totalorder %s29, 2
      %p141 = por %p139, %p140
      %p142 = scmp.ne.s32.totalorder %s133, %s134
      %p143 = scmp.eq.s32.totalorder %s29, 0
      %p144 = por %p142, %p143
      %p145 = scmp.ne.s32.totalorder %s133, %s134
      %p146 = scmp.eq.s32.totalorder %s30, 2
      %p147 = por %p145, %p146
      %p149 = scmp.ne.s32.totalorder %s134, %s148
      %p150 = scmp.eq.s32.totalorder %s30, 0
      %p151 = por %p149, %p150
      %s153 = sadd.s32 %s152, 1
      %p156 = scmp.eq.s32.totalorder %s24, 2
      %p157 = scmp.ne.s32.totalorder %s152, %s154
      %p158 = scmp.eq.s32.totalorder %s24, 0
      %p159 = por %p157, %p158
      %p160 = scmp.ne.s32.totalorder %s152, %s154
      %p161 = scmp.eq.s32.totalorder %s29, 2
      %p162 = por %p160, %p161
      %p163 = scmp.ne.s32.totalorder %s154, %s155
      %p164 = scmp.eq.s32.totalorder %s29, 0
      %p165 = por %p163, %p164
      %p166 = scmp.ne.s32.totalorder %s154, %s155
      %p167 = scmp.eq.s32.totalorder %s30, 2
      %p168 = por %p166, %p167
      %p170 = scmp.ne.s32.totalorder %s155, %s169
      %p171 = scmp.eq.s32.totalorder %s30, 0
      %p172 = por %p170, %p171
      %s174 = sadd.s32 %s173, 1
      %p177 = scmp.eq.s32.totalorder %s24, 2
      %p178 = scmp.ne.s32.totalorder %s173, %s175
      %p179 = scmp.eq.s32.totalorder %s24, 0
      %p180 = por %p178, %p179
      %p181 = scmp.ne.s32.totalorder %s173, %s175
      %p182 = scmp.eq.s32.totalorder %s29, 2
      %p183 = por %p181, %p182
      %p184 = scmp.ne.s32.totalorder %s175, %s176
      %p185 = scmp.eq.s32.totalorder %s29, 0
      %p186 = por %p184, %p185
      %p187 = scmp.ne.s32.totalorder %s175, %s176
      %p188 = scmp.eq.s32.totalorder %s30, 2
      %p189 = por %p187, %p188
      %p191 = scmp.ne.s32.totalorder %s176, %s190
      %p192 = scmp.eq.s32.totalorder %s30, 0
      %p193 = por %p191, %p192
      %s195 = sadd.s32 %s194, 1
      %p198 = scmp.eq.s32.totalorder %s24, 2
      %p199 = scmp.ne.s32.totalorder %s194, %s196
      %p200 = scmp.eq.s32.totalorder %s24, 0
      %p201 = por %p199, %p200
      %p202 = scmp.ne.s32.totalorder %s194, %s196
      %p203 = scmp.eq.s32.totalorder %s29, 2
      %p204 = por %p202, %p203
      %p205 = scmp.ne.s32.totalorder %s196, %s197
      %p206 = scmp.eq.s32.totalorder %s29, 0
      %p207 = por %p205, %p206
      %p208 = scmp.ne.s32.totalorder %s196, %s197
      %p209 = scmp.eq.s32.totalorder %s30, 2
      %p210 = por %p208, %p209
      %p212 = scmp.ne.s32.totalorder %s197, %s211
      %p213 = scmp.eq.s32.totalorder %s30, 0
      %p214 = por %p212, %p213
      %s216 = sadd.s32 %s215, 1
      %p219 = scmp.eq.s32.totalorder %s24, 2
      %p220 = scmp.ne.s32.totalorder %s215, %s217
      %p221 = scmp.eq.s32.totalorder %s24, 0
      %p222 = por %p220, %p221
      %p223 = scmp.ne.s32.totalorder %s215, %s217
      %p224 = scmp.eq.s32.totalorder %s29, 2
      %p225 = por %p223, %p224
      %p226 = scmp.ne.s32.totalorder %s217, %s218
      %p227 = scmp.eq.s32.totalorder %s29, 0
      %p228 = por %p226, %p227
      %p229 = scmp.ne.s32.totalorder %s217, %s218
      %p230 = scmp.eq.s32.totalorder %s30, 2
      %p231 = por %p229, %p230
      %p233 = scmp.ne.s32.totalorder %s218, %s232
      %p234 = scmp.eq.s32.totalorder %s30, 0
      %p235 = por %p233, %p234
      %s237 = sadd.s32 %s236, 1
      %p240 = scmp.eq.s32.totalorder %s24, 2
      %p241 = scmp.ne.s32.totalorder %s236, %s238
      %p242 = scmp.eq.s32.totalorder %s24, 0
      %p243 = por %p241, %p242
      %p244 = scmp.ne.s32.totalorder %s236, %s238
      %p245 = scmp.eq.s32.totalorder %s29, 2
      %p246 = por %p244, %p245
      %p247 = scmp.ne.s32.totalorder %s238, %s239
      %p248 = scmp.eq.s32.totalorder %s29, 0
      %p249 = por %p247, %p248
      %p250 = scmp.ne.s32.totalorder %s238, %s239
      %p251 = scmp.eq.s32.totalorder %s30, 2
      %p252 = por %p250, %p251
      %p254 = scmp.ne.s32.totalorder %s239, %s253
      %p255 = scmp.eq.s32.totalorder %s30, 0
      %p256 = por %p254, %p255
      %s258 = sadd.s32 %s257, 1
      %p261 = scmp.eq.s32.totalorder %s24, 2
      %p262 = scmp.ne.s32.totalorder %s257, %s259
      %p263 = scmp.eq.s32.totalorder %s24, 0
      %p264 = por %p262, %p263
      %p265 = scmp.ne.s32.totalorder %s257, %s259
      %p266 = scmp.eq.s32.totalorder %s29, 2
      %p267 = por %p265, %p266
      %p268 = scmp.ne.s32.totalorder %s259, %s260
      %p269 = scmp.eq.s32.totalorder %s29, 0
      %p270 = por %p268, %p269
      %p271 = scmp.ne.s32.totalorder %s259, %s260
      %p272 = scmp.eq.s32.totalorder %s30, 2
      %p273 = por %p271, %p272
      %p275 = scmp.ne.s32.totalorder %s260, %s274
      %p276 = scmp.eq.s32.totalorder %s30, 0
      %p277 = por %p275, %p276
      %s278 = ssub.s32 %s24, %s31
      %p279 = scmp.eq.s32.totalorder %s278, 0
      %s281 = sadd.s32 %s280, 1
      %s282 = scalar_select %p279, %s280, %s281
      %p285 = pneg %p279
      %p286 = scmp.eq.s32.totalorder %s24, 2
      %p287 = por %p285, %p286
      %p288 = scmp.ne.s32.totalorder %s280, %s283
      %p289 = scmp.eq.s32.totalorder %s24, 0
      %p290 = por %p288, %p289
      %p291 = scmp.ne.s32.totalorder %s280, %s283
      %p292 = scmp.eq.s32.totalorder %s29, 2
      %p293 = por %p291, %p292
      %p294 = scmp.ne.s32.totalorder %s283, %s284
      %p295 = scmp.eq.s32.totalorder %s29, 0
      %p296 = por %p294, %p295
      %p297 = scmp.ne.s32.totalorder %s283, %s284
      %p298 = scmp.eq.s32.totalorder %s30, 2
      %p299 = por %p297, %p298
      %p301 = scmp.ne.s32.totalorder %s284, %s300
      %p302 = scmp.eq.s32.totalorder %s30, 0
      %p303 = por %p301, %p302
      %p304 = scmp.le.s32.totalorder 1, %s24
      %p305 = scmp.lt.s32.totalorder %s24, 4
      %p306 = pnand %p304, %p305
      %p307 = pneg %p306
      // Predicated region
      $region9: #{tpu_custom_call.1} parent=5 // pred_check
        _
      $region10: #{tpu_custom_call.1} parent=5 // pred_check_branch
        %309 = sbr.rel (%p306) target = $region12
      $region11: #{tpu_custom_call.1} parent=5 // pred_region
        %s310 = ssub.s32 %s24, 1
        // Predicated region
        $region13: #{tpu_custom_call.1} parent=11 // pred_check
          %p311 = pneg %p45
        $region14: #{tpu_custom_call.1} parent=11 // pred_check_branch
          %313 = sbr.rel (%p311) target = $region16
        $region15: #{tpu_custom_call.1} parent=11 // pred_region
          %s315 = ssub.s32 2048, 2048
          %316 = vsyncadd [#allocation5], %s315
          %s317 = sshll.u32 [#allocation4], 4
          %s318 = int_to_ptr.vmem [resolvable:$true] %s317
          %323 = dma.hbm_to_vmem [thread:$0]  %s0, 2048, %s318, [#allocation5], 128, 128, 8
        $region16: #{tpu_custom_call.1} parent=11 // pred_fallthru
          _
        // Predicated region
        $region17: #{tpu_custom_call.1} parent=11 // pred_check
          %p324 = pneg %p144
        $region18: #{tpu_custom_call.1} parent=11 // pred_check_branch
          %326 = sbr.rel (%p324) target = $region20
        $region19: #{tpu_custom_call.1} parent=11 // pred_region
          %s328 = ssub.s32 8192, 8192
          %329 = vsyncadd [#allocation8], %s328
          %s330 = sshll.u32 [#allocation7], 4
          %s331 = int_to_ptr.vmem [resolvable:$true] %s330
          %336 = dma.hbm_to_vmem [thread:$0]  %s4, 8192, %s331, [#allocation8], 512, 512, 32
        $region20: #{tpu_custom_call.1} parent=11 // pred_fallthru
          _
        // Predicated region
        $region21: #{tpu_custom_call.1} parent=11 // pred_check
          %p337 = pneg %p165
        $region22: #{tpu_custom_call.1} parent=11 // pred_check_branch
          %339 = sbr.rel (%p337) target = $region24
        $region23: #{tpu_custom_call.1} parent=11 // pred_region
          _
        $region24: #{tpu_custom_call.1} parent=11 // pred_fallthru
          _
        // Predicated region
        $region25: #{tpu_custom_call.1} parent=11 // pred_check
          %p340 = pneg %p186
        $region26: #{tpu_custom_call.1} parent=11 // pred_check_branch
          %342 = sbr.rel (%p340) target = $region28
        $region27: #{tpu_custom_call.1} parent=11 // pred_region
          %s344 = ssub.s32 2048, 2048
          %345 = vsyncadd [#allocation8], %s344
          %s346 = sshll.u32 [#allocation9], 4
          %s347 = int_to_ptr.vmem [resolvable:$true] %s346
          %352 = dma.hbm_to_vmem [thread:$0]  %s6, 2048, %s347, [#allocation8], 128, 128, 8
        $region28: #{tpu_custom_call.1} parent=11 // pred_fallthru
          _
        // Predicated region
        $region29: #{tpu_custom_call.1} parent=11 // pred_check
          %p353 = pneg %p207
        $region30: #{tpu_custom_call.1} parent=11 // pred_check_branch
          %355 = sbr.rel (%p353) target = $region32
        $region31: #{tpu_custom_call.1} parent=11 // pred_region
          _
        $region32: #{tpu_custom_call.1} parent=11 // pred_fallthru
          _
        // Predicated region
        $region33: #{tpu_custom_call.1} parent=11 // pred_check
          %p356 = pneg %p228
        $region34: #{tpu_custom_call.1} parent=11 // pred_check_branch
          %358 = sbr.rel (%p356) target = $region36
        $region35: #{tpu_custom_call.1} parent=11 // pred_region
          _
        $region36: #{tpu_custom_call.1} parent=11 // pred_fallthru
          _
        // Predicated region
        $region37: #{tpu_custom_call.1} parent=11 // pred_check
          %p359 = pneg %p249
        $region38: #{tpu_custom_call.1} parent=11 // pred_check_branch
          %361 = sbr.rel (%p359) target = $region40
        $region39: #{tpu_custom_call.1} parent=11 // pred_region
          _
        $region40: #{tpu_custom_call.1} parent=11 // pred_fallthru
          _
      $region12: #{tpu_custom_call.1} parent=5 // pred_fallthru
        _
      %p362 = scmp.lt.s32.totalorder %s24, 3
      // Predicated region
      $region41: #{tpu_custom_call.1} parent=5 // pred_check
        %p363 = pneg %p362
      $region42: #{tpu_custom_call.1} parent=5 // pred_check_branch
        %365 = sbr.rel (%p363) target = $region44
      $region43: #{tpu_custom_call.1} parent=5 // pred_region
        // Predicated region
        $region45: #{tpu_custom_call.1} parent=43 // pred_check
          %p366 = pneg %p65
        $region46: #{tpu_custom_call.1} parent=43 // pred_check_branch
          %368 = sbr.rel (%p366) target = $region48
        $region47: #{tpu_custom_call.1} parent=43 // pred_region
          %s369 = smul.u32 16, %s24
          %p370 = scmp.lt.s32.totalorder %s369, 47
          %s371 = scalar_select %p370, %s369, 47
          %s372 = smul.addr %s371, 8
          %s373 = scalar_lea.vmem %s1, %s372
          %s374 = smul.u32 16, %s24
        $region48: #{tpu_custom_call.1} parent=43 // pred_fallthru
          _
        // Predicated region
        $region49: #{tpu_custom_call.1} parent=43 // pred_check
          %p375 = pneg %p91
        $region50: #{tpu_custom_call.1} parent=43 // pred_check_branch
          %377 = sbr.rel (%p375) target = $region52
        $region51: #{tpu_custom_call.1} parent=43 // pred_region
          %s378 = smul.u32 16, %s24
          %p379 = scmp.lt.s32.totalorder %s378, 47
          %s380 = scalar_select %p379, %s378, 47
          %s381 = smul.addr %s380, 8
          %s382 = scalar_lea.vmem %s2, %s381
          %s383 = smul.u32 16, %s24
        $region52: #{tpu_custom_call.1} parent=43 // pred_fallthru
          _
        // Predicated region
        $region53: #{tpu_custom_call.1} parent=43 // pred_check
          %p384 = pneg %p117
        $region54: #{tpu_custom_call.1} parent=43 // pred_check_branch
          %386 = sbr.rel (%p384) target = $region56
        $region55: #{tpu_custom_call.1} parent=43 // pred_region
          %p387 = scmp.lt.s32.totalorder %s24, 2
          %s388 = scalar_select %p387, %s24, 2
          %s389 = scalar_lea.vmem %s3, %s388
        $region56: #{tpu_custom_call.1} parent=43 // pred_fallthru
          _
      $region44: #{tpu_custom_call.1} parent=5 // pred_fallthru
        _
      %p390 = scmp.le.s32.totalorder 1, %s24
      %p391 = scmp.lt.s32.totalorder %s24, 4
      %p392 = pnand %p390, %p391
      %p393 = pneg %p392
      // Predicated region
      $region57: #{tpu_custom_call.1} parent=5 // pred_check
        _
      $region58: #{tpu_custom_call.1} parent=5 // pred_check_branch
        %395 = sbr.rel (%p392) target = $region60
      $region59: #{tpu_custom_call.1} parent=5 // pred_region
        %s396 = ssub.s32 %s24, 1
        // Predicated region
        $region61: #{tpu_custom_call.1} parent=59 // pred_check
          %p397 = pneg %p45
        $region62: #{tpu_custom_call.1} parent=59 // pred_check_branch
          %399 = sbr.rel (%p397) target = $region64
        $region63: #{tpu_custom_call.1} parent=59 // pred_region
          %400 = dma.done [#allocation5], 2048
        $region64: #{tpu_custom_call.1} parent=59 // pred_fallthru
          _
        // Predicated region
        $region65: #{tpu_custom_call.1} parent=59 // pred_check
          %p401 = pneg %p144
        $region66: #{tpu_custom_call.1} parent=59 // pred_check_branch
          %403 = sbr.rel (%p401) target = $region68
        $region67: #{tpu_custom_call.1} parent=59 // pred_region
          %404 = dma.done [#allocation8], 8192
        $region68: #{tpu_custom_call.1} parent=59 // pred_fallthru
          _
        // Predicated region
        $region69: #{tpu_custom_call.1} parent=59 // pred_check
          %p405 = pneg %p186
        $region70: #{tpu_custom_call.1} parent=59 // pred_check_branch
          %407 = sbr.rel (%p405) target = $region72
        $region71: #{tpu_custom_call.1} parent=59 // pred_region
          %408 = dma.done [#allocation8], 2048
        $region72: #{tpu_custom_call.1} parent=59 // pred_fallthru
          _
        %p409 = pneg %p45
        %p410 = pneg %p42
        %s411 = smul.u32 16, %s29
        %p412 = scmp.lt.s32.totalorder %s411, 47
        %s413 = scalar_select %p412, %s411, 47
        %s414 = smul.addr %s413, 8
        %s415 = scalar_lea.vmem %s1, %s414
        %p416 = pneg %p71
        %p417 = pneg %p68
        %s418 = smul.u32 16, %s29
        %p419 = scmp.lt.s32.totalorder %s418, 47
        %s420 = scalar_select %p419, %s418, 47
        %s421 = smul.addr %s420, 8
        %s422 = scalar_lea.vmem %s2, %s421
        %p423 = pneg %p97
        %p424 = pneg %p94
        %p425 = scmp.lt.s32.totalorder %s29, 2
        %s426 = scalar_select %p425, %s29, 2
        %s427 = scalar_lea.vmem %s3, %s426
        %p428 = pneg %p123
        %p429 = pneg %p120
        %p430 = pneg %p144
        %p431 = pneg %p141
        %p432 = pneg %p165
        %p433 = pneg %p162
        %p434 = pneg %p186
        %p435 = pneg %p183
        %p436 = pneg %p207
        %p437 = pneg %p204
        %p438 = pneg %p228
        %p439 = pneg %p225
        %p440 = pneg %p249
        %p441 = pneg %p246
        %p442 = pneg %p270
        %p443 = pneg %p267
        %p444 = pneg %p296
        %p445 = pneg %p293
        %s446 = sand.u32 %s283, 1
        %s447 = scalar_lea.sflag [#allocation12], %s446
        %s448 = sand.u32 %s283, 1
        %s449 = smul.addr %s448, 128
        %s450 = scalar_lea.vmem [#allocation11], %s449
        %s451 = smul.u32 16, %s29
        %p452 = scmp.lt.s32.totalorder %s451, 47
        %s453 = scalar_select %p452, %s451, 47
        %s454 = smul.addr %s453, 8
        %s455 = scalar_lea.vmem %s1, %s454
        %s456 = smul.u32 16, %s29
        %s457 = smul.u32 16, %s29
        %p458 = scmp.lt.s32.totalorder %s457, 47
        %s459 = scalar_select %p458, %s457, 47
        %s460 = smul.addr %s459, 8
        %s461 = scalar_lea.vmem %s2, %s460
        %s462 = smul.u32 16, %s29
        %p463 = scmp.lt.s32.totalorder %s29, 2
        %s464 = scalar_select %p463, %s29, 2
        %s465 = scalar_lea.vmem %s3, %s464
        %s466 = smul.u32 16, %s29
        %p468 = scmp.eq.s32.totalorder %s29, 0
        // Predicated region
        $region73: #{tpu_custom_call.1} parent=59 // pred_check
          %p469 = pneg %p468
        $region74: #{tpu_custom_call.1} parent=59 // pred_check_branch
          %471 = sbr.rel (%p469) target = $region76
        $region75: #{tpu_custom_call.1} parent=59 // pred_region
          %v472 = vld [vmem:[#allocation4] sm:$0xff]
          %v473 = vld [vmem:[#allocation4 + $0x8] sm:$0xff]
          %v474 = vld [vmem:[#allocation4 + $0x10] sm:$0xff]
          %v475 = vld [vmem:[#allocation4 + $0x18] sm:$0xff]
          %v476 = vld [vmem:[#allocation4 + $0x20] sm:$0xff]
          %v477 = vld [vmem:[#allocation4 + $0x28] sm:$0xff]
          %v478 = vld [vmem:[#allocation4 + $0x30] sm:$0xff]
          %v479 = vld [vmem:[#allocation4 + $0x38] sm:$0xff]
          %v480 = vld [vmem:[#allocation4 + $0x40] sm:$0xff]
          %v481 = vld [vmem:[#allocation4 + $0x48] sm:$0xff]
          %v482 = vld [vmem:[#allocation4 + $0x50] sm:$0xff]
          %v483 = vld [vmem:[#allocation4 + $0x58] sm:$0xff]
          %v484 = vld [vmem:[#allocation4 + $0x60] sm:$0xff]
          %v485 = vld [vmem:[#allocation4 + $0x68] sm:$0xff]
          %v486 = vld [vmem:[#allocation4 + $0x70] sm:$0xff]
          %v487 = vld [vmem:[#allocation4 + $0x78] sm:$0xff]
          %v488 = vld [vmem:[#allocation7] sm:$0xff]
          %v489 = vld [vmem:[#allocation7 + $0x8] sm:$0xff]
          %v490 = vld [vmem:[#allocation7 + $0x10] sm:$0xff]
          %v491 = vld [vmem:[#allocation7 + $0x20] sm:$0xff]
          %v492 = vld [vmem:[#allocation7 + $0x28] sm:$0xff]
          %v493 = vld [vmem:[#allocation7 + $0x30] sm:$0xff]
          %v494 = vld [vmem:[#allocation7 + $0x40] sm:$0xff]
          %v495 = vld [vmem:[#allocation7 + $0x48] sm:$0xff]
          %v496 = vld [vmem:[#allocation7 + $0x50] sm:$0xff]
          %v497 = vld [vmem:[#allocation7 + $0x60] sm:$0xff]
          %v498 = vld [vmem:[#allocation7 + $0x68] sm:$0xff]
          %v499 = vld [vmem:[#allocation7 + $0x70] sm:$0xff]
          %v500 = vld [vmem:[#allocation7 + $0x80] sm:$0xff]
          %v501 = vld [vmem:[#allocation7 + $0x88] sm:$0xff]
          %v502 = vld [vmem:[#allocation7 + $0x90] sm:$0xff]
          %v503 = vld [vmem:[#allocation7 + $0xa0] sm:$0xff]
          %v504 = vld [vmem:[#allocation7 + $0xa8] sm:$0xff]
          %v505 = vld [vmem:[#allocation7 + $0xb0] sm:$0xff]
          %v506 = vld [vmem:[#allocation7 + $0xc0] sm:$0xff]
          %v507 = vld [vmem:[#allocation7 + $0xc8] sm:$0xff]
          %v508 = vld [vmem:[#allocation7 + $0xd0] sm:$0xff]
          %v509 = vld [vmem:[#allocation7 + $0xe0] sm:$0xff]
          %v510 = vld [vmem:[#allocation7 + $0xe8] sm:$0xff]
          %v511 = vld [vmem:[#allocation7 + $0xf0] sm:$0xff]
          %v512 = vld [vmem:[#allocation7 + $0x100] sm:$0xff]
          %v513 = vld [vmem:[#allocation7 + $0x108] sm:$0xff]
          %v514 = vld [vmem:[#allocation7 + $0x110] sm:$0xff]
          %v515 = vld [vmem:[#allocation7 + $0x120] sm:$0xff]
          %v516 = vld [vmem:[#allocation7 + $0x128] sm:$0xff]
          %v517 = vld [vmem:[#allocation7 + $0x130] sm:$0xff]
          %v518 = vld [vmem:[#allocation7 + $0x140] sm:$0xff]
          %v519 = vld [vmem:[#allocation7 + $0x148] sm:$0xff]
          %v520 = vld [vmem:[#allocation7 + $0x150] sm:$0xff]
          %v521 = vld [vmem:[#allocation7 + $0x160] sm:$0xff]
          %v522 = vld [vmem:[#allocation7 + $0x168] sm:$0xff]
          %v523 = vld [vmem:[#allocation7 + $0x170] sm:$0xff]
          %v524 = vld [vmem:[#allocation7 + $0x180] sm:$0xff]
          %v525 = vld [vmem:[#allocation7 + $0x188] sm:$0xff]
          %v526 = vld [vmem:[#allocation7 + $0x190] sm:$0xff]
          %v527 = vld [vmem:[#allocation7 + $0x1a0] sm:$0xff]
          %v528 = vld [vmem:[#allocation7 + $0x1a8] sm:$0xff]
          %v529 = vld [vmem:[#allocation7 + $0x1b0] sm:$0xff]
          %v530 = vld [vmem:[#allocation7 + $0x1c0] sm:$0xff]
          %v531 = vld [vmem:[#allocation7 + $0x1c8] sm:$0xff]
          %v532 = vld [vmem:[#allocation7 + $0x1d0] sm:$0xff]
          %v533 = vld [vmem:[#allocation7 + $0x1e0] sm:$0xff]
          %v534 = vld [vmem:[#allocation7 + $0x1e8] sm:$0xff]
          %v535 = vld [vmem:[#allocation7 + $0x1f0] sm:$0xff]
          %v536 = vld [vmem:[%s5] sm:$0x7]
          %v538 = vlaneseq
          %v539 = vshrl.u32 %v538, 7
          %v540 = vsub.s32 0, %v539
          %v541 = vrot.slane %v536, %v540
          %v542 = vlaneseq
          %v543 = vshrl.u32 %v542, 7
          %v544 = vsub.s32 1, %v543
          %v545 = vrot.slane %v536, %v544
          %v546 = vlaneseq
          %v547 = vshrl.u32 %v546, 7
          %v548 = vsub.s32 2, %v547
          %v549 = vrot.slane %v536, %v548
          %553 = vmatprep.subr.mxu0 %v534
          %554 = vmatpush1.msra.mxu0 %v533
          %555 = vmatprep.subr.mxu0 %v531
          %556 = vmatpush1.msra.mxu0 %v530
          %557 = vmatprep.subr.mxu0 %v528
          %558 = vmatpush1.msra.mxu0 %v527
          %559 = vmatprep.subr.mxu0 %v525
          %560 = vmatpush1.msra.mxu0 %v524
          %561 = vmatprep.subr.mxu0 %v522
          %562 = vmatpush1.msra.mxu0 %v521
          %563 = vmatprep.subr.mxu0 %v519
          %564 = vmatpush1.msra.mxu0 %v518
          %565 = vmatprep.subr.mxu0 %v516
          %566 = vmatpush1.msra.mxu0 %v515
          %567 = vmatprep.subr.mxu0 %v513
          %568 = vmatpush1.msra.mxu0 %v512
          %569 = vmatprep.subr.mxu0 %v510
          %570 = vmatpush1.msra.mxu0 %v509
          %571 = vmatprep.subr.mxu0 %v507
          %572 = vmatpush1.msra.mxu0 %v506
          %573 = vmatprep.subr.mxu0 %v504
          %574 = vmatpush1.msra.mxu0 %v503
          %575 = vmatprep.subr.mxu0 %v501
          %576 = vmatpush1.msra.mxu0 %v500
          %577 = vmatprep.subr.mxu0 %v498
          %578 = vmatpush1.msra.mxu0 %v497
          %579 = vmatprep.subr.mxu0 %v495
          %580 = vmatpush1.msra.mxu0 %v494
          %581 = vmatprep.subr.mxu0 %v492
          %582 = vmatpush1.msra.mxu0 %v491
          %583 = vmatprep.subr.mxu0 %v489
          %584 = vmatpush1.msra.mxu0 %v488
          %585 = vmatprep.subr.mxu0 0.0
          %586 = vmatpush2.msra.mxu0 0.0
          %587 = vmatprep.subr.mxu0 0.0
          %588 = vmatpush2.msra.mxu0 0.0
          %589 = vmatprep.subr.mxu0 0.0
          %590 = vmatpush2.msra.mxu0 0.0
          %591 = vmatprep.subr.mxu0 0.0
          %592 = vmatpush2.msra.mxu0 0.0
          %593 = vmatprep.subr.mxu0 0.0
          %594 = vmatpush2.msra.mxu0 0.0
          %595 = vmatprep.subr.mxu0 0.0
          %596 = vmatpush2.msra.mxu0 0.0
          %597 = vmatprep.subr.mxu0 0.0
          %598 = vmatpush2.msra.mxu0 0.0
          %599 = vmatprep.subr.mxu0 0.0
          %600 = vmatpush2.msra.mxu0 0.0
          %601 = vmatprep.subr.mxu0 0.0
          %602 = vmatpush2.msra.mxu0 0.0
          %603 = vmatprep.subr.mxu0 0.0
          %604 = vmatpush2.msra.mxu0 0.0
          %605 = vmatprep.subr.mxu0 0.0
          %606 = vmatpush2.msra.mxu0 0.0
          %607 = vmatprep.subr.mxu0 0.0
          %608 = vmatpush2.msra.mxu0 0.0
          %609 = vmatprep.subr.mxu0 0.0
          %610 = vmatpush2.msra.mxu0 0.0
          %611 = vmatprep.subr.mxu0 0.0
          %612 = vmatpush2.msra.mxu0 0.0
          %613 = vmatprep.subr.mxu0 0.0
          %614 = vmatpush2.msra.mxu0 0.0
          %615 = vmatprep.subr.mxu0 0.0
          %616 = vmatpush2.msra.mxu0 0.0
          %617 = vmatprep.mubr.f32.mxu0 0.0
          %618 = vmatmul.mubr.f32.gmra.mxu0 %v472
          %v619 = vpop.f32.mrf.mxu0
          %v620 = vadd.f32 %v541, %v619
          %v621 = vpop.f32.mrf.mxu0
          %v622 = vadd.f32 %v545, %v621
          %623 = vmatprep.mubr.f32.mxu0 0.0
          %624 = vmatmul.mubr.f32.gmra.mxu0 %v473
          %v625 = vpop.f32.mrf.mxu0
          %v626 = vadd.f32 %v541, %v625
          %v627 = vpop.f32.mrf.mxu0
          %v628 = vadd.f32 %v545, %v627
          %629 = vmatprep.mubr.f32.mxu0 0.0
          %630 = vmatmul.mubr.f32.gmra.mxu0 %v474
          %v631 = vpop.f32.mrf.mxu0
          %v632 = vadd.f32 %v541, %v631
          %v633 = vpop.f32.mrf.mxu0
          %v634 = vadd.f32 %v545, %v633
          %635 = vmatprep.mubr.f32.mxu0 0.0
          %636 = vmatmul.mubr.f32.gmra.mxu0 %v475
          %v637 = vpop.f32.mrf.mxu0
          %v638 = vadd.f32 %v541, %v637
          %v639 = vpop.f32.mrf.mxu0
          %v640 = vadd.f32 %v545, %v639
          %641 = vmatprep.mubr.f32.mxu0 0.0
          %642 = vmatmul.mubr.f32.gmra.mxu0 %v476
          %v643 = vpop.f32.mrf.mxu0
          %v644 = vadd.f32 %v541, %v643
          %v645 = vpop.f32.mrf.mxu0
          %v646 = vadd.f32 %v545, %v645
          %647 = vmatprep.mubr.f32.mxu0 0.0
          %648 = vmatmul.mubr.f32.gmra.mxu0 %v477
          %v649 = vpop.f32.mrf.mxu0
          %v650 = vadd.f32 %v541, %v649
          %v651 = vpop.f32.mrf.mxu0
          %v652 = vadd.f32 %v545, %v651
          %653 = vmatprep.mubr.f32.mxu0 0.0
          %654 = vmatmul.mubr.f32.gmra.mxu0 %v478
          %v655 = vpop.f32.mrf.mxu0
          %v656 = vadd.f32 %v541, %v655
          %v657 = vpop.f32.mrf.mxu0
          %v658 = vadd.f32 %v545, %v657
          %659 = vmatprep.mubr.f32.mxu0 0.0
          %660 = vmatmul.mubr.f32.gmra.mxu0 %v479
          %v661 = vpop.f32.mrf.mxu0
          %v662 = vadd.f32 %v541, %v661
          %v663 = vpop.f32.mrf.mxu0
          %v664 = vadd.f32 %v545, %v663
          %665 = vmatprep.mubr.f32.mxu0 0.0
          %666 = vmatmul.mubr.f32.gmra.mxu0 %v480
          %v667 = vpop.f32.mrf.mxu0
          %v668 = vadd.f32 %v541, %v667
          %v669 = vpop.f32.mrf.mxu0
          %v670 = vadd.f32 %v545, %v669
          %671 = vmatprep.mubr.f32.mxu0 0.0
          %672 = vmatmul.mubr.f32.gmra.mxu0 %v481
          %v673 = vpop.f32.mrf.mxu0
          %v674 = vadd.f32 %v541, %v673
          %v675 = vpop.f32.mrf.mxu0
          %v676 = vadd.f32 %v545, %v675
          %677 = vmatprep.mubr.f32.mxu0 0.0
          %678 = vmatmul.mubr.f32.gmra.mxu0 %v482
          %v679 = vpop.f32.mrf.mxu0
          %v680 = vadd.f32 %v541, %v679
          %v681 = vpop.f32.mrf.mxu0
          %v682 = vadd.f32 %v545, %v681
          %683 = vmatprep.mubr.f32.mxu0 0.0
          %684 = vmatmul.mubr.f32.gmra.mxu0 %v483
          %v685 = vpop.f32.mrf.mxu0
          %v686 = vadd.f32 %v541, %v685
          %v687 = vpop.f32.mrf.mxu0
          %v688 = vadd.f32 %v545, %v687
          %689 = vmatprep.mubr.f32.mxu0 0.0
          %690 = vmatmul.mubr.f32.gmra.mxu0 %v484
          %v691 = vpop.f32.mrf.mxu0
          %v692 = vadd.f32 %v541, %v691
          %v693 = vpop.f32.mrf.mxu0
          %v694 = vadd.f32 %v545, %v693
          %695 = vmatprep.mubr.f32.mxu0 0.0
          %696 = vmatmul.mubr.f32.gmra.mxu0 %v485
          %v697 = vpop.f32.mrf.mxu0
          %v698 = vadd.f32 %v541, %v697
          %v699 = vpop.f32.mrf.mxu0
          %v700 = vadd.f32 %v545, %v699
          %701 = vmatprep.mubr.f32.mxu0 0.0
          %702 = vmatmul.mubr.f32.gmra.mxu0 %v486
          %v703 = vpop.f32.mrf.mxu0
          %v704 = vadd.f32 %v541, %v703
          %v705 = vpop.f32.mrf.mxu0
          %v706 = vadd.f32 %v545, %v705
          %707 = vmatprep.mubr.f32.mxu0 0.0
          %708 = vmatmul.mubr.f32.gmra.mxu0 %v487
          %v709 = vpop.f32.mrf.mxu0
          %v710 = vadd.f32 %v541, %v709
          %v711 = vpop.f32.mrf.mxu0
          %v712 = vadd.f32 %v545, %v711
          %713 = vdwg.mxu0
          %714 = vmatprep.subr.mxu0 0.0
          %715 = vmatpush1.msra.mxu0 %v535
          %716 = vmatprep.subr.mxu0 0.0
          %717 = vmatpush1.msra.mxu0 %v532
          %718 = vmatprep.subr.mxu0 0.0
          %719 = vmatpush1.msra.mxu0 %v529
          %720 = vmatprep.subr.mxu0 0.0
          %721 = vmatpush1.msra.mxu0 %v526
          %722 = vmatprep.subr.mxu0 0.0
          %723 = vmatpush1.msra.mxu0 %v523
          %724 = vmatprep.subr.mxu0 0.0
          %725 = vmatpush1.msra.mxu0 %v520
          %726 = vmatprep.subr.mxu0 0.0
          %727 = vmatpush1.msra.mxu0 %v517
          %728 = vmatprep.subr.mxu0 0.0
          %729 = vmatpush1.msra.mxu0 %v514
          %730 = vmatprep.subr.mxu0 0.0
          %731 = vmatpush1.msra.mxu0 %v511
          %732 = vmatprep.subr.mxu0 0.0
          %733 = vmatpush1.msra.mxu0 %v508
          %734 = vmatprep.subr.mxu0 0.0
          %735 = vmatpush1.msra.mxu0 %v505
          %736 = vmatprep.subr.mxu0 0.0
          %737 = vmatpush1.msra.mxu0 %v502
          %738 = vmatprep.subr.mxu0 0.0
          %739 = vmatpush1.msra.mxu0 %v499
          %740 = vmatprep.subr.mxu0 0.0
          %741 = vmatpush1.msra.mxu0 %v496
          %742 = vmatprep.subr.mxu0 0.0
          %743 = vmatpush1.msra.mxu0 %v493
          %744 = vmatprep.subr.mxu0 0.0
          %745 = vmatpush1.msra.mxu0 %v490
          %746 = vmatprep.subr.mxu0 0.0
          %747 = vmatpush2.msra.mxu0 0.0
          %748 = vmatprep.subr.mxu0 0.0
          %749 = vmatpush2.msra.mxu0 0.0
          %750 = vmatprep.subr.mxu0 0.0
          %751 = vmatpush2.msra.mxu0 0.0
          %752 = vmatprep.subr.mxu0 0.0
          %753 = vmatpush2.msra.mxu0 0.0
          %754 = vmatprep.subr.mxu0 0.0
          %755 = vmatpush2.msra.mxu0 0.0
          %756 = vmatprep.subr.mxu0 0.0
          %757 = vmatpush2.msra.mxu0 0.0
          %758 = vmatprep.subr.mxu0 0.0
          %759 = vmatpush2.msra.mxu0 0.0
          %760 = vmatprep.subr.mxu0 0.0
          %761 = vmatpush2.msra.mxu0 0.0
          %762 = vmatprep.subr.mxu0 0.0
          %763 = vmatpush2.msra.mxu0 0.0
          %764 = vmatprep.subr.mxu0 0.0
          %765 = vmatpush2.msra.mxu0 0.0
          %766 = vmatprep.subr.mxu0 0.0
          %767 = vmatpush2.msra.mxu0 0.0
          %768 = vmatprep.subr.mxu0 0.0
          %769 = vmatpush2.msra.mxu0 0.0
          %770 = vmatprep.subr.mxu0 0.0
          %771 = vmatpush2.msra.mxu0 0.0
          %772 = vmatprep.subr.mxu0 0.0
          %773 = vmatpush2.msra.mxu0 0.0
          %774 = vmatprep.subr.mxu0 0.0
          %775 = vmatpush2.msra.mxu0 0.0
          %776 = vmatprep.subr.mxu0 0.0
          %777 = vmatpush2.msra.mxu0 0.0
          %778 = vmatprep.mubr.f32.mxu0 0.0
          %779 = vmatmul.mubr.f32.gmra.mxu0 %v472
          %v780 = vpop.f32.mrf.mxu0
          %v781 = vadd.f32 %v549, %v780
          %v782 = vpop.f32.mrf.mxu0
          %783 = vmatprep.mubr.f32.mxu0 0.0
          %784 = vmatmul.mubr.f32.gmra.mxu0 %v473
          %v785 = vpop.f32.mrf.mxu0
          %v786 = vadd.f32 %v549, %v785
          %v787 = vpop.f32.mrf.mxu0
          %788 = vmatprep.mubr.f32.mxu0 0.0
          %789 = vmatmul.mubr.f32.gmra.mxu0 %v474
          %v790 = vpop.f32.mrf.mxu0
          %v791 = vadd.f32 %v549, %v790
          %v792 = vpop.f32.mrf.mxu0
          %793 = vmatprep.mubr.f32.mxu0 0.0
          %794 = vmatmul.mubr.f32.gmra.mxu0 %v475
          %v795 = vpop.f32.mrf.mxu0
          %v796 = vadd.f32 %v549, %v795
          %v797 = vpop.f32.mrf.mxu0
          %798 = vmatprep.mubr.f32.mxu0 0.0
          %799 = vmatmul.mubr.f32.gmra.mxu0 %v476
          %v800 = vpop.f32.mrf.mxu0
          %v801 = vadd.f32 %v549, %v800
          %v802 = vpop.f32.mrf.mxu0
          %803 = vmatprep.mubr.f32.mxu0 0.0
          %804 = vmatmul.mubr.f32.gmra.mxu0 %v477
          %v805 = vpop.f32.mrf.mxu0
          %v806 = vadd.f32 %v549, %v805
          %v807 = vpop.f32.mrf.mxu0
          %808 = vmatprep.mubr.f32.mxu0 0.0
          %809 = vmatmul.mubr.f32.gmra.mxu0 %v478
          %v810 = vpop.f32.mrf.mxu0
          %v811 = vadd.f32 %v549, %v810
          %v812 = vpop.f32.mrf.mxu0
          %813 = vmatprep.mubr.f32.mxu0 0.0
          %814 = vmatmul.mubr.f32.gmra.mxu0 %v479
          %v815 = vpop.f32.mrf.mxu0
          %v816 = vadd.f32 %v549, %v815
          %v817 = vpop.f32.mrf.mxu0
          %818 = vmatprep.mubr.f32.mxu0 0.0
          %819 = vmatmul.mubr.f32.gmra.mxu0 %v480
          %v820 = vpop.f32.mrf.mxu0
          %v821 = vadd.f32 %v549, %v820
          %v822 = vpop.f32.mrf.mxu0
          %823 = vmatprep.mubr.f32.mxu0 0.0
          %824 = vmatmul.mubr.f32.gmra.mxu0 %v481
          %v825 = vpop.f32.mrf.mxu0
          %v826 = vadd.f32 %v549, %v825
          %v827 = vpop.f32.mrf.mxu0
          %828 = vmatprep.mubr.f32.mxu0 0.0
          %829 = vmatmul.mubr.f32.gmra.mxu0 %v482
          %v830 = vpop.f32.mrf.mxu0
          %v831 = vadd.f32 %v549, %v830
          %v832 = vpop.f32.mrf.mxu0
          %833 = vmatprep.mubr.f32.mxu0 0.0
          %834 = vmatmul.mubr.f32.gmra.mxu0 %v483
          %v835 = vpop.f32.mrf.mxu0
          %v836 = vadd.f32 %v549, %v835
          %v837 = vpop.f32.mrf.mxu0
          %838 = vmatprep.mubr.f32.mxu0 0.0
          %839 = vmatmul.mubr.f32.gmra.mxu0 %v484
          %v840 = vpop.f32.mrf.mxu0
          %v841 = vadd.f32 %v549, %v840
          %v842 = vpop.f32.mrf.mxu0
          %843 = vmatprep.mubr.f32.mxu0 0.0
          %844 = vmatmul.mubr.f32.gmra.mxu0 %v485
          %v845 = vpop.f32.mrf.mxu0
          %v846 = vadd.f32 %v549, %v845
          %v847 = vpop.f32.mrf.mxu0
          %848 = vmatprep.mubr.f32.mxu0 0.0
          %849 = vmatmul.mubr.f32.gmra.mxu0 %v486
          %v850 = vpop.f32.mrf.mxu0
          %v851 = vadd.f32 %v549, %v850
          %v852 = vpop.f32.mrf.mxu0
          %853 = vmatprep.mubr.f32.mxu0 0.0
          %854 = vmatmul.mubr.f32.gmra.mxu0 %v487
          %v855 = vpop.f32.mrf.mxu0
          %v856 = vadd.f32 %v549, %v855
          %v857 = vpop.f32.mrf.mxu0
          %858 = vdwg.mxu0
          %v859 = vpack.c.bf16 %v626, %v620
          %v860 = vpack.c.bf16 %v628, %v622
          %v861 = vpack.c.bf16 %v786, %v781
          %v862 = vpack.c.bf16 %v638, %v632
          %v863 = vpack.c.bf16 %v640, %v634
          %v864 = vpack.c.bf16 %v796, %v791
          %v865 = vpack.c.bf16 %v650, %v644
          %v866 = vpack.c.bf16 %v652, %v646
          %v867 = vpack.c.bf16 %v806, %v801
          %v868 = vpack.c.bf16 %v662, %v656
          %v869 = vpack.c.bf16 %v664, %v658
          %v870 = vpack.c.bf16 %v816, %v811
          %v871 = vpack.c.bf16 %v674, %v668
          %v872 = vpack.c.bf16 %v676, %v670
          %v873 = vpack.c.bf16 %v826, %v821
          %v874 = vpack.c.bf16 %v686, %v680
          %v875 = vpack.c.bf16 %v688, %v682
          %v876 = vpack.c.bf16 %v836, %v831
          %v877 = vpack.c.bf16 %v698, %v692
          %v878 = vpack.c.bf16 %v700, %v694
          %v879 = vpack.c.bf16 %v846, %v841
          %v880 = vpack.c.bf16 %v710, %v704
          %v881 = vpack.c.bf16 %v712, %v706
          %v882 = vpack.c.bf16 %v856, %v851
          %v907 = vunpack.c.l.b16 %v859
          %v908 = vunpack.c.l.b16 %v860
          %v909 = vunpack.c.l.b16 %v861
          %v910 = vunpack.c.h.b16 %v859
          %v911 = vunpack.c.h.b16 %v860
          %v912 = vunpack.c.h.b16 %v861
          %v913 = vunpack.c.l.b16 %v862
          %v914 = vunpack.c.l.b16 %v863
          %v915 = vunpack.c.l.b16 %v864
          %v916 = vunpack.c.h.b16 %v862
          %v917 = vunpack.c.h.b16 %v863
          %v918 = vunpack.c.h.b16 %v864
          %v919 = vunpack.c.l.b16 %v865
          %v920 = vunpack.c.l.b16 %v866
          %v921 = vunpack.c.l.b16 %v867
          %v922 = vunpack.c.h.b16 %v865
          %v923 = vunpack.c.h.b16 %v866
          %v924 = vunpack.c.h.b16 %v867
          %v925 = vunpack.c.l.b16 %v868
          %v926 = vunpack.c.l.b16 %v869
          %v927 = vunpack.c.l.b16 %v870
          %v928 = vunpack.c.h.b16 %v868
          %v929 = vunpack.c.h.b16 %v869
          %v930 = vunpack.c.h.b16 %v870
          %v931 = vunpack.c.l.b16 %v871
          %v932 = vunpack.c.l.b16 %v872
          %v933 = vunpack.c.l.b16 %v873
          %v934 = vunpack.c.h.b16 %v871
          %v935 = vunpack.c.h.b16 %v872
          %v936 = vunpack.c.h.b16 %v873
          %v937 = vunpack.c.l.b16 %v874
          %v938 = vunpack.c.l.b16 %v875
          %v939 = vunpack.c.l.b16 %v876
          %v940 = vunpack.c.h.b16 %v874
          %v941 = vunpack.c.h.b16 %v875
          %v942 = vunpack.c.h.b16 %v876
          %v943 = vunpack.c.l.b16 %v877
          %v944 = vunpack.c.l.b16 %v878
          %v945 = vunpack.c.l.b16 %v879
          %v946 = vunpack.c.h.b16 %v877
          %v947 = vunpack.c.h.b16 %v878
          %v948 = vunpack.c.h.b16 %v879
          %v949 = vunpack.c.l.b16 %v880
          %v950 = vunpack.c.l.b16 %v881
          %v951 = vunpack.c.l.b16 %v882
          %v952 = vunpack.c.h.b16 %v880
          %v953 = vunpack.c.h.b16 %v881
          %v954 = vunpack.c.h.b16 %v882
          %v955 = vpack.c.b16 %v908, %v907
          %v956 = vpack.c.b16 %v909, %v909
          %v957 = vpack.c.b16 %v911, %v910
          %v958 = vpack.c.b16 %v912, %v912
          %v959 = vpack.c.b16 %v914, %v913
          %v960 = vpack.c.b16 %v915, %v915
          %v961 = vpack.c.b16 %v917, %v916
          %v962 = vpack.c.b16 %v918, %v918
          %v963 = vpack.c.b16 %v920, %v919
          %v964 = vpack.c.b16 %v921, %v921
          %v965 = vpack.c.b16 %v923, %v922
          %v966 = vpack.c.b16 %v924, %v924
          %v967 = vpack.c.b16 %v926, %v925
          %v968 = vpack.c.b16 %v927, %v927
          %v969 = vpack.c.b16 %v929, %v928
          %v970 = vpack.c.b16 %v930, %v930
          %v971 = vpack.c.b16 %v932, %v931
          %v972 = vpack.c.b16 %v933, %v933
          %v973 = vpack.c.b16 %v935, %v934
          %v974 = vpack.c.b16 %v936, %v936
          %v975 = vpack.c.b16 %v938, %v937
          %v976 = vpack.c.b16 %v939, %v939
          %v977 = vpack.c.b16 %v941, %v940
          %v978 = vpack.c.b16 %v942, %v942
          %v979 = vpack.c.b16 %v944, %v943
          %v980 = vpack.c.b16 %v945, %v945
          %v981 = vpack.c.b16 %v947, %v946
          %v982 = vpack.c.b16 %v948, %v948
          %v983 = vpack.c.b16 %v950, %v949
          %v984 = vpack.c.b16 %v951, %v951
          %v985 = vpack.c.b16 %v953, %v952
          %v986 = vpack.c.b16 %v954, %v954
          %1019 = vst [vmem:[#allocation2] sm:$0xff] %v955
          %1020 = vst [vmem:[#allocation2 + $0x8] sm:$0xf] %v956
          %1021 = vst [vmem:[#allocation2 + $0xc] sm:$0xff] %v957
          %1022 = vst [vmem:[#allocation2 + $0x14] sm:$0xf] %v958
          %1023 = vst [vmem:[#allocation2 + $0x18] sm:$0xff] %v959
          %1024 = vst [vmem:[#allocation2 + $0x20] sm:$0xf] %v960
          %1025 = vst [vmem:[#allocation2 + $0x24] sm:$0xff] %v961
          %1026 = vst [vmem:[#allocation2 + $0x2c] sm:$0xf] %v962
          %1027 = vst [vmem:[#allocation2 + $0x30] sm:$0xff] %v963
          %1028 = vst [vmem:[#allocation2 + $0x38] sm:$0xf] %v964
          %1029 = vst [vmem:[#allocation2 + $0x3c] sm:$0xff] %v965
          %1030 = vst [vmem:[#allocation2 + $0x44] sm:$0xf] %v966
          %1031 = vst [vmem:[#allocation2 + $0x48] sm:$0xff] %v967
          %1032 = vst [vmem:[#allocation2 + $0x50] sm:$0xf] %v968
          %1033 = vst [vmem:[#allocation2 + $0x54] sm:$0xff] %v969
          %1034 = vst [vmem:[#allocation2 + $0x5c] sm:$0xf] %v970
          %1035 = vst [vmem:[#allocation2 + $0x60] sm:$0xff] %v971
          %1036 = vst [vmem:[#allocation2 + $0x68] sm:$0xf] %v972
          %1037 = vst [vmem:[#allocation2 + $0x6c] sm:$0xff] %v973
          %1038 = vst [vmem:[#allocation2 + $0x74] sm:$0xf] %v974
          %1039 = vst [vmem:[#allocation2 + $0x78] sm:$0xff] %v975
          %1040 = vst [vmem:[#allocation2 + $0x80] sm:$0xf] %v976
          %1041 = vst [vmem:[#allocation2 + $0x84] sm:$0xff] %v977
          %1042 = vst [vmem:[#allocation2 + $0x8c] sm:$0xf] %v978
          %1043 = vst [vmem:[#allocation2 + $0x90] sm:$0xff] %v979
          %1044 = vst [vmem:[#allocation2 + $0x98] sm:$0xf] %v980
          %1045 = vst [vmem:[#allocation2 + $0x9c] sm:$0xff] %v981
          %1046 = vst [vmem:[#allocation2 + $0xa4] sm:$0xf] %v982
          %1047 = vst [vmem:[#allocation2 + $0xa8] sm:$0xff] %v983
          %1048 = vst [vmem:[#allocation2 + $0xb0] sm:$0xf] %v984
          %1049 = vst [vmem:[#allocation2 + $0xb4] sm:$0xff] %v985
          %1050 = vst [vmem:[#allocation2 + $0xbc] sm:$0xf] %v986
          %1051 = vst [vmem:[#allocation3] sm:$0xff] 0.0
          %1052 = vst [vmem:[#allocation3 + $0x8] sm:$0xff] 0.0
          %1053 = vst [vmem:[#allocation3 + $0x10] sm:$0xff] 0.0
          %1054 = vst [vmem:[#allocation3 + $0x18] sm:$0xff] 0.0
          %1055 = vst [vmem:[#allocation3 + $0x20] sm:$0xff] 0.0
          %1056 = vst [vmem:[#allocation3 + $0x28] sm:$0xff] 0.0
          %1057 = vst [vmem:[#allocation3 + $0x30] sm:$0xff] 0.0
          %1058 = vst [vmem:[#allocation3 + $0x38] sm:$0xff] 0.0
          %1059 = vst [vmem:[#allocation3 + $0x40] sm:$0xff] 0.0
          %1060 = vst [vmem:[#allocation3 + $0x48] sm:$0xff] 0.0
          %1061 = vst [vmem:[#allocation3 + $0x50] sm:$0xff] 0.0
          %1062 = vst [vmem:[#allocation3 + $0x58] sm:$0xff] 0.0
          %1063 = vst [vmem:[#allocation3 + $0x60] sm:$0xff] 0.0
          %1064 = vst [vmem:[#allocation3 + $0x68] sm:$0xff] 0.0
          %1065 = vst [vmem:[#allocation3 + $0x70] sm:$0xff] 0.0
          %1066 = vst [vmem:[#allocation3 + $0x78] sm:$0xff] 0.0
          %1067 = vst [vmem:[#allocation3 + $0x80] sm:$0xff] 0.0
          %1068 = vst [vmem:[#allocation3 + $0x88] sm:$0xff] 0.0
          %1069 = vst [vmem:[#allocation3 + $0x90] sm:$0xff] 0.0
          %1070 = vst [vmem:[#allocation3 + $0x98] sm:$0xff] 0.0
          %1071 = vst [vmem:[#allocation3 + $0xa0] sm:$0xff] 0.0
          %1072 = vst [vmem:[#allocation3 + $0xa8] sm:$0xff] 0.0
          %1073 = vst [vmem:[#allocation3 + $0xb0] sm:$0xff] 0.0
          %1074 = vst [vmem:[#allocation3 + $0xb8] sm:$0xff] 0.0
          %1075 = vst [vmem:[#allocation3 + $0xc0] sm:$0xff] 0.0
          %1076 = vst [vmem:[#allocation3 + $0xc8] sm:$0xff] 0.0
          %1077 = vst [vmem:[#allocation3 + $0xd0] sm:$0xff] 0.0
          %1078 = vst [vmem:[#allocation3 + $0xd8] sm:$0xff] 0.0
          %1079 = vst [vmem:[#allocation3 + $0xe0] sm:$0xff] 0.0
          %1080 = vst [vmem:[#allocation3 + $0xe8] sm:$0xff] 0.0
          %1081 = vst [vmem:[#allocation3 + $0xf0] sm:$0xff] 0.0
          %1082 = vst [vmem:[#allocation3 + $0xf8] sm:$0xff] 0.0
        $region76: #{tpu_custom_call.1} parent=59 // pred_fallthru
          _
        %v1083 = vld [vmem:[%s455] sm:$0xff]
        %v1084 = vld [vmem:[%s455 + $0x8] sm:$0xff]
        %v1085 = vld [vmem:[%s455 + $0x10] sm:$0xff]
        %v1086 = vld [vmem:[%s455 + $0x18] sm:$0xff]
        %v1087 = vld [vmem:[%s455 + $0x20] sm:$0xff]
        %v1088 = vld [vmem:[%s455 + $0x28] sm:$0xff]
        %v1089 = vld [vmem:[%s455 + $0x30] sm:$0xff]
        %v1090 = vld [vmem:[%s455 + $0x38] sm:$0xff]
        %v1091 = vld [vmem:[%s455 + $0x40] sm:$0xff]
        %v1092 = vld [vmem:[%s455 + $0x48] sm:$0xff]
        %v1093 = vld [vmem:[%s455 + $0x50] sm:$0xff]
        %v1094 = vld [vmem:[%s455 + $0x58] sm:$0xff]
        %v1095 = vld [vmem:[%s455 + $0x60] sm:$0xff]
        %v1096 = vld [vmem:[%s455 + $0x68] sm:$0xff]
        %v1097 = vld [vmem:[%s455 + $0x70] sm:$0xff]
        %v1098 = vld [vmem:[%s455 + $0x78] sm:$0xff]
        %v1099 = vld [vmem:[%s461] sm:$0xff]
        %v1100 = vld [vmem:[%s461 + $0x8] sm:$0xff]
        %v1101 = vld [vmem:[%s461 + $0x10] sm:$0xff]
        %v1102 = vld [vmem:[%s461 + $0x18] sm:$0xff]
        %v1103 = vld [vmem:[%s461 + $0x20] sm:$0xff]
        %v1104 = vld [vmem:[%s461 + $0x28] sm:$0xff]
        %v1105 = vld [vmem:[%s461 + $0x30] sm:$0xff]
        %v1106 = vld [vmem:[%s461 + $0x38] sm:$0xff]
        %v1107 = vld [vmem:[%s461 + $0x40] sm:$0xff]
        %v1108 = vld [vmem:[%s461 + $0x48] sm:$0xff]
        %v1109 = vld [vmem:[%s461 + $0x50] sm:$0xff]
        %v1110 = vld [vmem:[%s461 + $0x58] sm:$0xff]
        %v1111 = vld [vmem:[%s461 + $0x60] sm:$0xff]
        %v1112 = vld [vmem:[%s461 + $0x68] sm:$0xff]
        %v1113 = vld [vmem:[%s461 + $0x70] sm:$0xff]
        %v1114 = vld [vmem:[%s461 + $0x78] sm:$0xff]
        %v1115 = vlaneseq
        %v1116 = vand.u32 %v1115, 127
        %1117 = vset.pattern.permute.xlu0 0
        %1118 = vperm.xlu0 %1117, %v1099
        %v1119 = vpop.permute.xlu0 %1118
        %1120 = vset.pattern.permute.xlu0 0
        %1121 = vperm.xlu0 %1120, %v1100
        %v1122 = vpop.permute.xlu0 %1121
        %1123 = vset.pattern.permute.xlu0 0
        %1124 = vperm.xlu0 %1123, %v1101
        %v1125 = vpop.permute.xlu0 %1124
        %1126 = vset.pattern.permute.xlu0 0
        %1127 = vperm.xlu0 %1126, %v1102
        %v1128 = vpop.permute.xlu0 %1127
        %1129 = vset.pattern.permute.xlu0 0
        %1130 = vperm.xlu0 %1129, %v1103
        %v1131 = vpop.permute.xlu0 %1130
        %1132 = vset.pattern.permute.xlu0 0
        %1133 = vperm.xlu0 %1132, %v1104
        %v1134 = vpop.permute.xlu0 %1133
        %1135 = vset.pattern.permute.xlu0 0
        %1136 = vperm.xlu0 %1135, %v1105
        %v1137 = vpop.permute.xlu0 %1136
        %1138 = vset.pattern.permute.xlu0 0
        %1139 = vperm.xlu0 %1138, %v1106
        %v1140 = vpop.permute.xlu0 %1139
        %1141 = vset.pattern.permute.xlu0 0
        %1142 = vperm.xlu0 %1141, %v1107
        %v1143 = vpop.permute.xlu0 %1142
        %1144 = vset.pattern.permute.xlu0 0
        %1145 = vperm.xlu0 %1144, %v1108
        %v1146 = vpop.permute.xlu0 %1145
        %1147 = vset.pattern.permute.xlu0 0
        %1148 = vperm.xlu0 %1147, %v1109
        %v1149 = vpop.permute.xlu0 %1148
        %1150 = vset.pattern.permute.xlu0 0
        %1151 = vperm.xlu0 %1150, %v1110
        %v1152 = vpop.permute.xlu0 %1151
        %1153 = vset.pattern.permute.xlu0 0
        %1154 = vperm.xlu0 %1153, %v1111
        %v1155 = vpop.permute.xlu0 %1154
        %1156 = vset.pattern.permute.xlu0 0
        %1157 = vperm.xlu0 %1156, %v1112
        %v1158 = vpop.permute.xlu0 %1157
        %1159 = vset.pattern.permute.xlu0 0
        %1160 = vperm.xlu0 %1159, %v1113
        %v1161 = vpop.permute.xlu0 %1160
        %1162 = vset.pattern.permute.xlu0 0
        %1163 = vperm.xlu0 %1162, %v1114
        %v1164 = vpop.permute.xlu0 %1163
        %vm1165 = vcmp.eq.s32.totalorder %v1119, %v1116
        %vm1166 = vcmp.eq.s32.totalorder %v1122, %v1116
        %vm1167 = vcmp.eq.s32.totalorder %v1125, %v1116
        %vm1168 = vcmp.eq.s32.totalorder %v1128, %v1116
        %vm1169 = vcmp.eq.s32.totalorder %v1131, %v1116
        %vm1170 = vcmp.eq.s32.totalorder %v1134, %v1116
        %vm1171 = vcmp.eq.s32.totalorder %v1137, %v1116
        %vm1172 = vcmp.eq.s32.totalorder %v1140, %v1116
        %vm1173 = vcmp.eq.s32.totalorder %v1143, %v1116
        %vm1174 = vcmp.eq.s32.totalorder %v1146, %v1116
        %vm1175 = vcmp.eq.s32.totalorder %v1149, %v1116
        %vm1176 = vcmp.eq.s32.totalorder %v1152, %v1116
        %vm1177 = vcmp.eq.s32.totalorder %v1155, %v1116
        %vm1178 = vcmp.eq.s32.totalorder %v1158, %v1116
        %vm1179 = vcmp.eq.s32.totalorder %v1161, %v1116
        %vm1180 = vcmp.eq.s32.totalorder %v1164, %v1116
        %v1181 = vsel %vm1165, 1, 0
        %v1182 = vsel %vm1166, 1, 0
        %v1183 = vsel %vm1167, 1, 0
        %v1184 = vsel %vm1168, 1, 0
        %v1185 = vsel %vm1169, 1, 0
        %v1186 = vsel %vm1170, 1, 0
        %v1187 = vsel %vm1171, 1, 0
        %v1188 = vsel %vm1172, 1, 0
        %v1189 = vsel %vm1173, 1, 0
        %v1190 = vsel %vm1174, 1, 0
        %v1191 = vsel %vm1175, 1, 0
        %v1192 = vsel %vm1176, 1, 0
        %v1193 = vsel %vm1177, 1, 0
        %v1194 = vsel %vm1178, 1, 0
        %v1195 = vsel %vm1179, 1, 0
        %v1196 = vsel %vm1180, 1, 0
        %v1197 = vcvt.s32.f32 %v1181
        %v1198 = vcvt.s32.f32 %v1182
        %v1199 = vcvt.s32.f32 %v1183
        %v1200 = vcvt.s32.f32 %v1184
        %v1201 = vcvt.s32.f32 %v1185
        %v1202 = vcvt.s32.f32 %v1186
        %v1203 = vcvt.s32.f32 %v1187
        %v1204 = vcvt.s32.f32 %v1188
        %v1205 = vcvt.s32.f32 %v1189
        %v1206 = vcvt.s32.f32 %v1190
        %v1207 = vcvt.s32.f32 %v1191
        %v1208 = vcvt.s32.f32 %v1192
        %v1209 = vcvt.s32.f32 %v1193
        %v1210 = vcvt.s32.f32 %v1194
        %v1211 = vcvt.s32.f32 %v1195
        %v1212 = vcvt.s32.f32 %v1196
        %v1213 = vpack.c.bf16 %v1198, %v1197
        %v1214 = vpack.c.bf16 %v1200, %v1199
        %v1215 = vpack.c.bf16 %v1202, %v1201
        %v1216 = vpack.c.bf16 %v1204, %v1203
        %v1217 = vpack.c.bf16 %v1206, %v1205
        %v1218 = vpack.c.bf16 %v1208, %v1207
        %v1219 = vpack.c.bf16 %v1210, %v1209
        %v1220 = vpack.c.bf16 %v1212, %v1211
        %1221 = vset.pattern.permute.xlu0 1
        %1222 = vperm.xlu0 %1221, %v1099
        %v1223 = vpop.permute.xlu0 %1222
        %1224 = vset.pattern.permute.xlu0 1
        %1225 = vperm.xlu0 %1224, %v1100
        %v1226 = vpop.permute.xlu0 %1225
        %1227 = vset.pattern.permute.xlu0 1
        %1228 = vperm.xlu0 %1227, %v1101
        %v1229 = vpop.permute.xlu0 %1228
        %1230 = vset.pattern.permute.xlu0 1
        %1231 = vperm.xlu0 %1230, %v1102
        %v1232 = vpop.permute.xlu0 %1231
        %1233 = vset.pattern.permute.xlu0 1
        %1234 = vperm.xlu0 %1233, %v1103
        %v1235 = vpop.permute.xlu0 %1234
        %1236 = vset.pattern.permute.xlu0 1
        %1237 = vperm.xlu0 %1236, %v1104
        %v1238 = vpop.permute.xlu0 %1237
        %1239 = vset.pattern.permute.xlu0 1
        %1240 = vperm.xlu0 %1239, %v1105
        %v1241 = vpop.permute.xlu0 %1240
        %1242 = vset.pattern.permute.xlu0 1
        %1243 = vperm.xlu0 %1242, %v1106
        %v1244 = vpop.permute.xlu0 %1243
        %1245 = vset.pattern.permute.xlu0 1
        %1246 = vperm.xlu0 %1245, %v1107
        %v1247 = vpop.permute.xlu0 %1246
        %1248 = vset.pattern.permute.xlu0 1
        %1249 = vperm.xlu0 %1248, %v1108
        %v1250 = vpop.permute.xlu0 %1249
        %1251 = vset.pattern.permute.xlu0 1
        %1252 = vperm.xlu0 %1251, %v1109
        %v1253 = vpop.permute.xlu0 %1252
        %1254 = vset.pattern.permute.xlu0 1
        %1255 = vperm.xlu0 %1254, %v1110
        %v1256 = vpop.permute.xlu0 %1255
        %1257 = vset.pattern.permute.xlu0 1
        %1258 = vperm.xlu0 %1257, %v1111
        %v1259 = vpop.permute.xlu0 %1258
        %1260 = vset.pattern.permute.xlu0 1
        %1261 = vperm.xlu0 %1260, %v1112
        %v1262 = vpop.permute.xlu0 %1261
        %1263 = vset.pattern.permute.xlu0 1
        %1264 = vperm.xlu0 %1263, %v1113
        %v1265 = vpop.permute.xlu0 %1264
        %1266 = vset.pattern.permute.xlu0 1
        %1267 = vperm.xlu0 %1266, %v1114
        %v1268 = vpop.permute.xlu0 %1267
        %vm1269 = vcmp.eq.s32.totalorder %v1223, %v1116
        %vm1270 = vcmp.eq.s32.totalorder %v1226, %v1116
        %vm1271 = vcmp.eq.s32.totalorder %v1229, %v1116
        %vm1272 = vcmp.eq.s32.totalorder %v1232, %v1116
        %vm1273 = vcmp.eq.s32.totalorder %v1235, %v1116
        %vm1274 = vcmp.eq.s32.totalorder %v1238, %v1116
        %vm1275 = vcmp.eq.s32.totalorder %v1241, %v1116
        %vm1276 = vcmp.eq.s32.totalorder %v1244, %v1116
        %vm1277 = vcmp.eq.s32.totalorder %v1247, %v1116
        %vm1278 = vcmp.eq.s32.totalorder %v1250, %v1116
        %vm1279 = vcmp.eq.s32.totalorder %v1253, %v1116
        %vm1280 = vcmp.eq.s32.totalorder %v1256, %v1116
        %vm1281 = vcmp.eq.s32.totalorder %v1259, %v1116
        %vm1282 = vcmp.eq.s32.totalorder %v1262, %v1116
        %vm1283 = vcmp.eq.s32.totalorder %v1265, %v1116
        %vm1284 = vcmp.eq.s32.totalorder %v1268, %v1116
        %v1285 = vsel %vm1269, 1, 0
        %v1286 = vsel %vm1270, 1, 0
        %v1287 = vsel %vm1271, 1, 0
        %v1288 = vsel %vm1272, 1, 0
        %v1289 = vsel %vm1273, 1, 0
        %v1290 = vsel %vm1274, 1, 0
        %v1291 = vsel %vm1275, 1, 0
        %v1292 = vsel %vm1276, 1, 0
        %v1293 = vsel %vm1277, 1, 0
        %v1294 = vsel %vm1278, 1, 0
        %v1295 = vsel %vm1279, 1, 0
        %v1296 = vsel %vm1280, 1, 0
        %v1297 = vsel %vm1281, 1, 0
        %v1298 = vsel %vm1282, 1, 0
        %v1299 = vsel %vm1283, 1, 0
        %v1300 = vsel %vm1284, 1, 0
        %v1301 = vcvt.s32.f32 %v1285
        %v1302 = vcvt.s32.f32 %v1286
        %v1303 = vcvt.s32.f32 %v1287
        %v1304 = vcvt.s32.f32 %v1288
        %v1305 = vcvt.s32.f32 %v1289
        %v1306 = vcvt.s32.f32 %v1290
        %v1307 = vcvt.s32.f32 %v1291
        %v1308 = vcvt.s32.f32 %v1292
        %v1309 = vcvt.s32.f32 %v1293
        %v1310 = vcvt.s32.f32 %v1294
        %v1311 = vcvt.s32.f32 %v1295
        %v1312 = vcvt.s32.f32 %v1296
        %v1313 = vcvt.s32.f32 %v1297
        %v1314 = vcvt.s32.f32 %v1298
        %v1315 = vcvt.s32.f32 %v1299
        %v1316 = vcvt.s32.f32 %v1300
        %v1317 = vpack.c.bf16 %v1302, %v1301
        %v1318 = vpack.c.bf16 %v1304, %v1303
        %v1319 = vpack.c.bf16 %v1306, %v1305
        %v1320 = vpack.c.bf16 %v1308, %v1307
        %v1321 = vpack.c.bf16 %v1310, %v1309
        %v1322 = vpack.c.bf16 %v1312, %v1311
        %v1323 = vpack.c.bf16 %v1314, %v1313
        %v1324 = vpack.c.bf16 %v1316, %v1315
        %v1325 = vld [vmem:[#allocation2] sm:$0xff]
        %v1326 = vld [vmem:[#allocation2 + $0x8] sm:$0xf]
        %v1327 = vld [vmem:[#allocation2 + $0xc] sm:$0xff]
        %v1328 = vld [vmem:[#allocation2 + $0x14] sm:$0xf]
        %v1329 = vld [vmem:[#allocation2 + $0x18] sm:$0xff]
        %v1330 = vld [vmem:[#allocation2 + $0x20] sm:$0xf]
        %v1331 = vld [vmem:[#allocation2 + $0x24] sm:$0xff]
        %v1332 = vld [vmem:[#allocation2 + $0x2c] sm:$0xf]
        %v1333 = vld [vmem:[#allocation2 + $0x30] sm:$0xff]
        %v1334 = vld [vmem:[#allocation2 + $0x38] sm:$0xf]
        %v1335 = vld [vmem:[#allocation2 + $0x3c] sm:$0xff]
        %v1336 = vld [vmem:[#allocation2 + $0x44] sm:$0xf]
        %v1337 = vld [vmem:[#allocation2 + $0x48] sm:$0xff]
        %v1338 = vld [vmem:[#allocation2 + $0x50] sm:$0xf]
        %v1339 = vld [vmem:[#allocation2 + $0x54] sm:$0xff]
        %v1340 = vld [vmem:[#allocation2 + $0x5c] sm:$0xf]
        %v1341 = vld [vmem:[#allocation2 + $0x60] sm:$0xff]
        %v1342 = vld [vmem:[#allocation2 + $0x68] sm:$0xf]
        %v1343 = vld [vmem:[#allocation2 + $0x6c] sm:$0xff]
        %v1344 = vld [vmem:[#allocation2 + $0x74] sm:$0xf]
        %v1345 = vld [vmem:[#allocation2 + $0x78] sm:$0xff]
        %v1346 = vld [vmem:[#allocation2 + $0x80] sm:$0xf]
        %v1347 = vld [vmem:[#allocation2 + $0x84] sm:$0xff]
        %v1348 = vld [vmem:[#allocation2 + $0x8c] sm:$0xf]
        %v1349 = vld [vmem:[#allocation2 + $0x90] sm:$0xff]
        %v1350 = vld [vmem:[#allocation2 + $0x98] sm:$0xf]
        %v1351 = vld [vmem:[#allocation2 + $0x9c] sm:$0xff]
        %v1352 = vld [vmem:[#allocation2 + $0xa4] sm:$0xf]
        %v1353 = vld [vmem:[#allocation2 + $0xa8] sm:$0xff]
        %v1354 = vld [vmem:[#allocation2 + $0xb0] sm:$0xf]
        %v1355 = vld [vmem:[#allocation2 + $0xb4] sm:$0xff]
        %v1356 = vld [vmem:[#allocation2 + $0xbc] sm:$0xf]
        %v1373 = vunpack.c.l.b16 %v1325
        %v1374 = vunpack.c.h.b16 %v1325
        %v1375 = vunpack.c.l.b16 %v1327
        %v1376 = vunpack.c.h.b16 %v1327
        %v1377 = vunpack.c.l.b16 %v1329
        %v1378 = vunpack.c.h.b16 %v1329
        %v1379 = vunpack.c.l.b16 %v1331
        %v1380 = vunpack.c.h.b16 %v1331
        %v1381 = vunpack.c.l.b16 %v1333
        %v1382 = vunpack.c.h.b16 %v1333
        %v1383 = vunpack.c.l.b16 %v1335
        %v1384 = vunpack.c.h.b16 %v1335
        %v1385 = vunpack.c.l.b16 %v1337
        %v1386 = vunpack.c.h.b16 %v1337
        %v1387 = vunpack.c.l.b16 %v1339
        %v1388 = vunpack.c.h.b16 %v1339
        %v1389 = vunpack.c.l.b16 %v1341
        %v1390 = vunpack.c.h.b16 %v1341
        %v1391 = vunpack.c.l.b16 %v1343
        %v1392 = vunpack.c.h.b16 %v1343
        %v1393 = vunpack.c.l.b16 %v1345
        %v1394 = vunpack.c.h.b16 %v1345
        %v1395 = vunpack.c.l.b16 %v1347
        %v1396 = vunpack.c.h.b16 %v1347
        %v1397 = vunpack.c.l.b16 %v1349
        %v1398 = vunpack.c.h.b16 %v1349
        %v1399 = vunpack.c.l.b16 %v1351
        %v1400 = vunpack.c.h.b16 %v1351
        %v1401 = vunpack.c.l.b16 %v1353
        %v1402 = vunpack.c.h.b16 %v1353
        %v1403 = vunpack.c.l.b16 %v1355
        %v1404 = vunpack.c.h.b16 %v1355
        %v1405 = vpack.c.b16 %v1375, %v1373
        %v1406 = vpack.c.b16 %v1376, %v1374
        %v1407 = vpack.c.b16 %v1379, %v1377
        %v1408 = vpack.c.b16 %v1380, %v1378
        %v1409 = vpack.c.b16 %v1383, %v1381
        %v1410 = vpack.c.b16 %v1384, %v1382
        %v1411 = vpack.c.b16 %v1387, %v1385
        %v1412 = vpack.c.b16 %v1388, %v1386
        %v1413 = vpack.c.b16 %v1391, %v1389
        %v1414 = vpack.c.b16 %v1392, %v1390
        %v1415 = vpack.c.b16 %v1395, %v1393
        %v1416 = vpack.c.b16 %v1396, %v1394
        %v1417 = vpack.c.b16 %v1399, %v1397
        %v1418 = vpack.c.b16 %v1400, %v1398
        %v1419 = vpack.c.b16 %v1403, %v1401
        %v1420 = vpack.c.b16 %v1404, %v1402
        %1437 = vmatprep.subr.bf16.mxu0 %v1420
        %1438 = vmatpush1.bf16.msra.mxu0 %v1419
        %1439 = vmatprep.subr.bf16.mxu0 %v1418
        %1440 = vmatpush1.bf16.msra.mxu0 %v1417
        %1441 = vmatprep.subr.bf16.mxu0 %v1416
        %1442 = vmatpush1.bf16.msra.mxu0 %v1415
        %1443 = vmatprep.subr.bf16.mxu0 %v1414
        %1444 = vmatpush1.bf16.msra.mxu0 %v1413
        %1445 = vmatprep.subr.bf16.mxu0 %v1412
        %1446 = vmatpush1.bf16.msra.mxu0 %v1411
        %1447 = vmatprep.subr.bf16.mxu0 %v1410
        %1448 = vmatpush1.bf16.msra.mxu0 %v1409
        %1449 = vmatprep.subr.bf16.mxu0 %v1408
        %1450 = vmatpush1.bf16.msra.mxu0 %v1407
        %1451 = vmatprep.subr.bf16.mxu0 %v1406
        %1452 = vmatpush1.bf16.msra.mxu0 %v1405
        %1453 = vmatprep.subr.bf16.mxu0 0
        %1454 = vmatpush2.bf16.msra.mxu0 0
        %1455 = vmatprep.subr.bf16.mxu0 0
        %1456 = vmatpush2.bf16.msra.mxu0 0
        %1457 = vmatprep.subr.bf16.mxu0 0
        %1458 = vmatpush2.bf16.msra.mxu0 0
        %1459 = vmatprep.subr.bf16.mxu0 0
        %1460 = vmatpush2.bf16.msra.mxu0 0
        %1461 = vmatprep.subr.bf16.mxu0 0
        %1462 = vmatpush2.bf16.msra.mxu0 0
        %1463 = vmatprep.subr.bf16.mxu0 0
        %1464 = vmatpush2.bf16.msra.mxu0 0
        %1465 = vmatprep.subr.bf16.mxu0 0
        %1466 = vmatpush2.bf16.msra.mxu0 0
        %1467 = vmatprep.subr.bf16.mxu0 0
        %1468 = vmatpush2.bf16.msra.mxu0 0
        %1469 = vmatprep.mubr.bf16.mxu0 0
        %1470 = vmatmul.mubr.bf16.gmra.mxu0 %v1213
        %v1471 = vpop.f32.mrf.mxu0
        %v1472 = vadd.f32 0.0, %v1471
        %v1473 = vpop.f32.mrf.mxu0
        %v1474 = vadd.f32 0.0, %v1473
        %v1475 = vpop.f32.mrf.mxu0
        %v1476 = vadd.f32 0.0, %v1475
        %v1477 = vpop.f32.mrf.mxu0
        %v1478 = vadd.f32 0.0, %v1477
        %1479 = vmatprep.mubr.bf16.mxu0 0
        %1480 = vmatmul.mubr.bf16.gmra.mxu0 %v1214
        %v1481 = vpop.f32.mrf.mxu0
        %v1482 = vadd.f32 0.0, %v1481
        %v1483 = vpop.f32.mrf.mxu0
        %v1484 = vadd.f32 0.0, %v1483
        %v1485 = vpop.f32.mrf.mxu0
        %v1486 = vadd.f32 0.0, %v1485
        %v1487 = vpop.f32.mrf.mxu0
        %v1488 = vadd.f32 0.0, %v1487
        %1489 = vmatprep.mubr.bf16.mxu0 0
        %1490 = vmatmul.mubr.bf16.gmra.mxu0 %v1215
        %v1491 = vpop.f32.mrf.mxu0
        %v1492 = vadd.f32 0.0, %v1491
        %v1493 = vpop.f32.mrf.mxu0
        %v1494 = vadd.f32 0.0, %v1493
        %v1495 = vpop.f32.mrf.mxu0
        %v1496 = vadd.f32 0.0, %v1495
        %v1497 = vpop.f32.mrf.mxu0
        %v1498 = vadd.f32 0.0, %v1497
        %1499 = vmatprep.mubr.bf16.mxu0 0
        %1500 = vmatmul.mubr.bf16.gmra.mxu0 %v1216
        %v1501 = vpop.f32.mrf.mxu0
        %v1502 = vadd.f32 0.0, %v1501
        %v1503 = vpop.f32.mrf.mxu0
        %v1504 = vadd.f32 0.0, %v1503
        %v1505 = vpop.f32.mrf.mxu0
        %v1506 = vadd.f32 0.0, %v1505
        %v1507 = vpop.f32.mrf.mxu0
        %v1508 = vadd.f32 0.0, %v1507
        %1509 = vmatprep.mubr.bf16.mxu0 0
        %1510 = vmatmul.mubr.bf16.gmra.mxu0 %v1217
        %v1511 = vpop.f32.mrf.mxu0
        %v1512 = vadd.f32 0.0, %v1511
        %v1513 = vpop.f32.mrf.mxu0
        %v1514 = vadd.f32 0.0, %v1513
        %v1515 = vpop.f32.mrf.mxu0
        %v1516 = vadd.f32 0.0, %v1515
        %v1517 = vpop.f32.mrf.mxu0
        %v1518 = vadd.f32 0.0, %v1517
        %1519 = vmatprep.mubr.bf16.mxu0 0
        %1520 = vmatmul.mubr.bf16.gmra.mxu0 %v1218
        %v1521 = vpop.f32.mrf.mxu0
        %v1522 = vadd.f32 0.0, %v1521
        %v1523 = vpop.f32.mrf.mxu0
        %v1524 = vadd.f32 0.0, %v1523
        %v1525 = vpop.f32.mrf.mxu0
        %v1526 = vadd.f32 0.0, %v1525
        %v1527 = vpop.f32.mrf.mxu0
        %v1528 = vadd.f32 0.0, %v1527
        %1529 = vmatprep.mubr.bf16.mxu0 0
        %1530 = vmatmul.mubr.bf16.gmra.mxu0 %v1219
        %v1531 = vpop.f32.mrf.mxu0
        %v1532 = vadd.f32 0.0, %v1531
        %v1533 = vpop.f32.mrf.mxu0
        %v1534 = vadd.f32 0.0, %v1533
        %v1535 = vpop.f32.mrf.mxu0
        %v1536 = vadd.f32 0.0, %v1535
        %v1537 = vpop.f32.mrf.mxu0
        %v1538 = vadd.f32 0.0, %v1537
        %1539 = vmatprep.mubr.bf16.mxu0 0
        %1540 = vmatmul.mubr.bf16.gmra.mxu0 %v1220
        %v1541 = vpop.f32.mrf.mxu0
        %v1542 = vadd.f32 0.0, %v1541
        %v1543 = vpop.f32.mrf.mxu0
        %v1544 = vadd.f32 0.0, %v1543
        %v1545 = vpop.f32.mrf.mxu0
        %v1546 = vadd.f32 0.0, %v1545
        %v1547 = vpop.f32.mrf.mxu0
        %v1548 = vadd.f32 0.0, %v1547
        %1549 = vdwg.mxu0
        %v1566 = vunpack.c.l.b16 %v1326
        %v1567 = vunpack.c.l.b16 %v1328
        %v1568 = vunpack.c.l.b16 %v1330
        %v1569 = vunpack.c.l.b16 %v1332
        %v1570 = vunpack.c.l.b16 %v1334
        %v1571 = vunpack.c.l.b16 %v1336
        %v1572 = vunpack.c.l.b16 %v1338
        %v1573 = vunpack.c.l.b16 %v1340
        %v1574 = vunpack.c.l.b16 %v1342
        %v1575 = vunpack.c.l.b16 %v1344
        %v1576 = vunpack.c.l.b16 %v1346
        %v1577 = vunpack.c.l.b16 %v1348
        %v1578 = vunpack.c.l.b16 %v1350
        %v1579 = vunpack.c.l.b16 %v1352
        %v1580 = vunpack.c.l.b16 %v1354
        %v1581 = vunpack.c.l.b16 %v1356
        %v1582 = vpack.c.b16 %v1567, %v1566
        %v1583 = vpack.c.b16 %v1569, %v1568
        %v1584 = vpack.c.b16 %v1571, %v1570
        %v1585 = vpack.c.b16 %v1573, %v1572
        %v1586 = vpack.c.b16 %v1575, %v1574
        %v1587 = vpack.c.b16 %v1577, %v1576
        %v1588 = vpack.c.b16 %v1579, %v1578
        %v1589 = vpack.c.b16 %v1581, %v1580
        %1598 = vmatprep.subr.bf16.mxu0 0
        %1599 = vmatpush1.bf16.msra.mxu0 %v1589
        %1600 = vmatprep.subr.bf16.mxu0 0
        %1601 = vmatpush1.bf16.msra.mxu0 %v1588
        %1602 = vmatprep.subr.bf16.mxu0 0
        %1603 = vmatpush1.bf16.msra.mxu0 %v1587
        %1604 = vmatprep.subr.bf16.mxu0 0
        %1605 = vmatpush1.bf16.msra.mxu0 %v1586
        %1606 = vmatprep.subr.bf16.mxu0 0
        %1607 = vmatpush1.bf16.msra.mxu0 %v1585
        %1608 = vmatprep.subr.bf16.mxu0 0
        %1609 = vmatpush1.bf16.msra.mxu0 %v1584
        %1610 = vmatprep.subr.bf16.mxu0 0
        %1611 = vmatpush1.bf16.msra.mxu0 %v1583
        %1612 = vmatprep.subr.bf16.mxu0 0
        %1613 = vmatpush1.bf16.msra.mxu0 %v1582
        %1614 = vmatprep.subr.bf16.mxu0 0
        %1615 = vmatpush2.bf16.msra.mxu0 0
        %1616 = vmatprep.subr.bf16.mxu0 0
        %1617 = vmatpush2.bf16.msra.mxu0 0
        %1618 = vmatprep.subr.bf16.mxu0 0
        %1619 = vmatpush2.bf16.msra.mxu0 0
        %1620 = vmatprep.subr.bf16.mxu0 0
        %1621 = vmatpush2.bf16.msra.mxu0 0
        %1622 = vmatprep.subr.bf16.mxu0 0
        %1623 = vmatpush2.bf16.msra.mxu0 0
        %1624 = vmatprep.subr.bf16.mxu0 0
        %1625 = vmatpush2.bf16.msra.mxu0 0
        %1626 = vmatprep.subr.bf16.mxu0 0
        %1627 = vmatpush2.bf16.msra.mxu0 0
        %1628 = vmatprep.subr.bf16.mxu0 0
        %1629 = vmatpush2.bf16.msra.mxu0 0
        %1630 = vmatprep.mubr.bf16.mxu0 0
        %1631 = vmatmul.mubr.bf16.gmra.mxu0 %v1317
        %v1632 = vpop.f32.mrf.mxu0
        %v1633 = vadd.f32 0.0, %v1632
        %v1634 = vpop.f32.mrf.mxu0
        %v1635 = vpop.f32.mrf.mxu0
        %v1636 = vadd.f32 0.0, %v1635
        %v1637 = vpop.f32.mrf.mxu0
        %1638 = vmatprep.mubr.bf16.mxu0 0
        %1639 = vmatmul.mubr.bf16.gmra.mxu0 %v1318
        %v1640 = vpop.f32.mrf.mxu0
        %v1641 = vadd.f32 0.0, %v1640
        %v1642 = vpop.f32.mrf.mxu0
        %v1643 = vpop.f32.mrf.mxu0
        %v1644 = vadd.f32 0.0, %v1643
        %v1645 = vpop.f32.mrf.mxu0
        %1646 = vmatprep.mubr.bf16.mxu0 0
        %1647 = vmatmul.mubr.bf16.gmra.mxu0 %v1319
        %v1648 = vpop.f32.mrf.mxu0
        %v1649 = vadd.f32 0.0, %v1648
        %v1650 = vpop.f32.mrf.mxu0
        %v1651 = vpop.f32.mrf.mxu0
        %v1652 = vadd.f32 0.0, %v1651
        %v1653 = vpop.f32.mrf.mxu0
        %1654 = vmatprep.mubr.bf16.mxu0 0
        %1655 = vmatmul.mubr.bf16.gmra.mxu0 %v1320
        %v1656 = vpop.f32.mrf.mxu0
        %v1657 = vadd.f32 0.0, %v1656
        %v1658 = vpop.f32.mrf.mxu0
        %v1659 = vpop.f32.mrf.mxu0
        %v1660 = vadd.f32 0.0, %v1659
        %v1661 = vpop.f32.mrf.mxu0
        %1662 = vmatprep.mubr.bf16.mxu0 0
        %1663 = vmatmul.mubr.bf16.gmra.mxu0 %v1321
        %v1664 = vpop.f32.mrf.mxu0
        %v1665 = vadd.f32 0.0, %v1664
        %v1666 = vpop.f32.mrf.mxu0
        %v1667 = vpop.f32.mrf.mxu0
        %v1668 = vadd.f32 0.0, %v1667
        %v1669 = vpop.f32.mrf.mxu0
        %1670 = vmatprep.mubr.bf16.mxu0 0
        %1671 = vmatmul.mubr.bf16.gmra.mxu0 %v1322
        %v1672 = vpop.f32.mrf.mxu0
        %v1673 = vadd.f32 0.0, %v1672
        %v1674 = vpop.f32.mrf.mxu0
        %v1675 = vpop.f32.mrf.mxu0
        %v1676 = vadd.f32 0.0, %v1675
        %v1677 = vpop.f32.mrf.mxu0
        %1678 = vmatprep.mubr.bf16.mxu0 0
        %1679 = vmatmul.mubr.bf16.gmra.mxu0 %v1323
        %v1680 = vpop.f32.mrf.mxu0
        %v1681 = vadd.f32 0.0, %v1680
        %v1682 = vpop.f32.mrf.mxu0
        %v1683 = vpop.f32.mrf.mxu0
        %v1684 = vadd.f32 0.0, %v1683
        %v1685 = vpop.f32.mrf.mxu0
        %1686 = vmatprep.mubr.bf16.mxu0 0
        %1687 = vmatmul.mubr.bf16.gmra.mxu0 %v1324
        %v1688 = vpop.f32.mrf.mxu0
        %v1689 = vadd.f32 0.0, %v1688
        %v1690 = vpop.f32.mrf.mxu0
        %v1691 = vpop.f32.mrf.mxu0
        %v1692 = vadd.f32 0.0, %v1691
        %v1693 = vpop.f32.mrf.mxu0
        %1694 = vdwg.mxu0
        %v1695 = vld [vmem:[#allocation9] sm:$0xff]
        %v1696 = vld [vmem:[#allocation9 + $0x8] sm:$0xff]
        %v1697 = vld [vmem:[#allocation9 + $0x10] sm:$0xff]
        %v1698 = vld [vmem:[#allocation9 + $0x18] sm:$0xff]
        %v1699 = vld [vmem:[#allocation9 + $0x20] sm:$0xff]
        %v1700 = vld [vmem:[#allocation9 + $0x28] sm:$0xff]
        %v1701 = vld [vmem:[#allocation9 + $0x30] sm:$0xff]
        %v1702 = vld [vmem:[#allocation9 + $0x38] sm:$0xff]
        %v1703 = vld [vmem:[#allocation9 + $0x40] sm:$0xff]
        %v1704 = vld [vmem:[#allocation9 + $0x48] sm:$0xff]
        %v1705 = vld [vmem:[#allocation9 + $0x50] sm:$0xff]
        %v1706 = vld [vmem:[#allocation9 + $0x58] sm:$0xff]
        %v1707 = vld [vmem:[#allocation9 + $0x60] sm:$0xff]
        %v1708 = vld [vmem:[#allocation9 + $0x68] sm:$0xff]
        %v1709 = vld [vmem:[#allocation9 + $0x70] sm:$0xff]
        %v1710 = vld [vmem:[#allocation9 + $0x78] sm:$0xff]
        %v1711 = vld [vmem:[%s7] sm:$0x1]
        %v1713 = vlaneseq
        %v1714 = vshrl.u32 %v1713, 7
        %v1715 = vsub.s32 0, %v1714
        %v1716 = vrot.slane %v1711, %v1715
        %1718 = vmatprep.subr.mxu0 0.0
        %1719 = vmatpush1.msra.mxu0 %v1710
        %1720 = vmatprep.subr.mxu0 0.0
        %1721 = vmatpush1.msra.mxu0 %v1709
        %1722 = vmatprep.subr.mxu0 0.0
        %1723 = vmatpush1.msra.mxu0 %v1708
        %1724 = vmatprep.subr.mxu0 0.0
        %1725 = vmatpush1.msra.mxu0 %v1707
        %1726 = vmatprep.subr.mxu0 0.0
        %1727 = vmatpush1.msra.mxu0 %v1706
        %1728 = vmatprep.subr.mxu0 0.0
        %1729 = vmatpush1.msra.mxu0 %v1705
        %1730 = vmatprep.subr.mxu0 0.0
        %1731 = vmatpush1.msra.mxu0 %v1704
        %1732 = vmatprep.subr.mxu0 0.0
        %1733 = vmatpush1.msra.mxu0 %v1703
        %1734 = vmatprep.subr.mxu0 0.0
        %1735 = vmatpush1.msra.mxu0 %v1702
        %1736 = vmatprep.subr.mxu0 0.0
        %1737 = vmatpush1.msra.mxu0 %v1701
        %1738 = vmatprep.subr.mxu0 0.0
        %1739 = vmatpush1.msra.mxu0 %v1700
        %1740 = vmatprep.subr.mxu0 0.0
        %1741 = vmatpush1.msra.mxu0 %v1699
        %1742 = vmatprep.subr.mxu0 0.0
        %1743 = vmatpush1.msra.mxu0 %v1698
        %1744 = vmatprep.subr.mxu0 0.0
        %1745 = vmatpush1.msra.mxu0 %v1697
        %1746 = vmatprep.subr.mxu0 0.0
        %1747 = vmatpush1.msra.mxu0 %v1696
        %1748 = vmatprep.subr.mxu0 0.0
        %1749 = vmatpush1.msra.mxu0 %v1695
        %1750 = vmatprep.subr.mxu0 0.0
        %1751 = vmatpush2.msra.mxu0 0.0
        %1752 = vmatprep.subr.mxu0 0.0
        %1753 = vmatpush2.msra.mxu0 0.0
        %1754 = vmatprep.subr.mxu0 0.0
        %1755 = vmatpush2.msra.mxu0 0.0
        %1756 = vmatprep.subr.mxu0 0.0
        %1757 = vmatpush2.msra.mxu0 0.0
        %1758 = vmatprep.subr.mxu0 0.0
        %1759 = vmatpush2.msra.mxu0 0.0
        %1760 = vmatprep.subr.mxu0 0.0
        %1761 = vmatpush2.msra.mxu0 0.0
        %1762 = vmatprep.subr.mxu0 0.0
        %1763 = vmatpush2.msra.mxu0 0.0
        %1764 = vmatprep.subr.mxu0 0.0
        %1765 = vmatpush2.msra.mxu0 0.0
        %1766 = vmatprep.subr.mxu0 0.0
        %1767 = vmatpush2.msra.mxu0 0.0
        %1768 = vmatprep.subr.mxu0 0.0
        %1769 = vmatpush2.msra.mxu0 0.0
        %1770 = vmatprep.subr.mxu0 0.0
        %1771 = vmatpush2.msra.mxu0 0.0
        %1772 = vmatprep.subr.mxu0 0.0
        %1773 = vmatpush2.msra.mxu0 0.0
        %1774 = vmatprep.subr.mxu0 0.0
        %1775 = vmatpush2.msra.mxu0 0.0
        %1776 = vmatprep.subr.mxu0 0.0
        %1777 = vmatpush2.msra.mxu0 0.0
        %1778 = vmatprep.subr.mxu0 0.0
        %1779 = vmatpush2.msra.mxu0 0.0
        %1780 = vmatprep.subr.mxu0 0.0
        %1781 = vmatpush2.msra.mxu0 0.0
        %1782 = vmatprep.mubr.f32.mxu0 0.0
        %1783 = vmatmul.mubr.f32.gmra.mxu0 %v1083
        %v1784 = vpop.f32.mrf.mxu0
        %v1785 = vadd.f32 %v1716, %v1784
        %v1786 = vpop.f32.mrf.mxu0
        %1787 = vmatprep.mubr.f32.mxu0 0.0
        %1788 = vmatmul.mubr.f32.gmra.mxu0 %v1084
        %v1789 = vpop.f32.mrf.mxu0
        %v1790 = vadd.f32 %v1716, %v1789
        %v1791 = vpop.f32.mrf.mxu0
        %1792 = vmatprep.mubr.f32.mxu0 0.0
        %1793 = vmatmul.mubr.f32.gmra.mxu0 %v1085
        %v1794 = vpop.f32.mrf.mxu0
        %v1795 = vadd.f32 %v1716, %v1794
        %v1796 = vpop.f32.mrf.mxu0
        %1797 = vmatprep.mubr.f32.mxu0 0.0
        %1798 = vmatmul.mubr.f32.gmra.mxu0 %v1086
        %v1799 = vpop.f32.mrf.mxu0
        %v1800 = vadd.f32 %v1716, %v1799
        %v1801 = vpop.f32.mrf.mxu0
        %1802 = vmatprep.mubr.f32.mxu0 0.0
        %1803 = vmatmul.mubr.f32.gmra.mxu0 %v1087
        %v1804 = vpop.f32.mrf.mxu0
        %v1805 = vadd.f32 %v1716, %v1804
        %v1806 = vpop.f32.mrf.mxu0
        %1807 = vmatprep.mubr.f32.mxu0 0.0
        %1808 = vmatmul.mubr.f32.gmra.mxu0 %v1088
        %v1809 = vpop.f32.mrf.mxu0
        %v1810 = vadd.f32 %v1716, %v1809
        %v1811 = vpop.f32.mrf.mxu0
        %1812 = vmatprep.mubr.f32.mxu0 0.0
        %1813 = vmatmul.mubr.f32.gmra.mxu0 %v1089
        %v1814 = vpop.f32.mrf.mxu0
        %v1815 = vadd.f32 %v1716, %v1814
        %v1816 = vpop.f32.mrf.mxu0
        %1817 = vmatprep.mubr.f32.mxu0 0.0
        %1818 = vmatmul.mubr.f32.gmra.mxu0 %v1090
        %v1819 = vpop.f32.mrf.mxu0
        %v1820 = vadd.f32 %v1716, %v1819
        %v1821 = vpop.f32.mrf.mxu0
        %1822 = vmatprep.mubr.f32.mxu0 0.0
        %1823 = vmatmul.mubr.f32.gmra.mxu0 %v1091
        %v1824 = vpop.f32.mrf.mxu0
        %v1825 = vadd.f32 %v1716, %v1824
        %v1826 = vpop.f32.mrf.mxu0
        %1827 = vmatprep.mubr.f32.mxu0 0.0
        %1828 = vmatmul.mubr.f32.gmra.mxu0 %v1092
        %v1829 = vpop.f32.mrf.mxu0
        %v1830 = vadd.f32 %v1716, %v1829
        %v1831 = vpop.f32.mrf.mxu0
        %1832 = vmatprep.mubr.f32.mxu0 0.0
        %1833 = vmatmul.mubr.f32.gmra.mxu0 %v1093
        %v1834 = vpop.f32.mrf.mxu0
        %v1835 = vadd.f32 %v1716, %v1834
        %v1836 = vpop.f32.mrf.mxu0
        %1837 = vmatprep.mubr.f32.mxu0 0.0
        %1838 = vmatmul.mubr.f32.gmra.mxu0 %v1094
        %v1839 = vpop.f32.mrf.mxu0
        %v1840 = vadd.f32 %v1716, %v1839
        %v1841 = vpop.f32.mrf.mxu0
        %1842 = vmatprep.mubr.f32.mxu0 0.0
        %1843 = vmatmul.mubr.f32.gmra.mxu0 %v1095
        %v1844 = vpop.f32.mrf.mxu0
        %v1845 = vadd.f32 %v1716, %v1844
        %v1846 = vpop.f32.mrf.mxu0
        %1847 = vmatprep.mubr.f32.mxu0 0.0
        %1848 = vmatmul.mubr.f32.gmra.mxu0 %v1096
        %v1849 = vpop.f32.mrf.mxu0
        %v1850 = vadd.f32 %v1716, %v1849
        %v1851 = vpop.f32.mrf.mxu0
        %1852 = vmatprep.mubr.f32.mxu0 0.0
        %1853 = vmatmul.mubr.f32.gmra.mxu0 %v1097
        %v1854 = vpop.f32.mrf.mxu0
        %v1855 = vadd.f32 %v1716, %v1854
        %v1856 = vpop.f32.mrf.mxu0
        %1857 = vmatprep.mubr.f32.mxu0 0.0
        %1858 = vmatmul.mubr.f32.gmra.mxu0 %v1098
        %v1859 = vpop.f32.mrf.mxu0
        %v1860 = vadd.f32 %v1716, %v1859
        %v1861 = vpop.f32.mrf.mxu0
        %1862 = vdwg.mxu0
        %v1863 = vadd.f32 %v1472, %v1633
        %v1864 = vadd.f32 %v1476, %v1636
        %v1865 = vadd.f32 %v1482, %v1641
        %v1866 = vadd.f32 %v1486, %v1644
        %v1867 = vadd.f32 %v1492, %v1649
        %v1868 = vadd.f32 %v1496, %v1652
        %v1869 = vadd.f32 %v1502, %v1657
        %v1870 = vadd.f32 %v1506, %v1660
        %v1871 = vadd.f32 %v1512, %v1665
        %v1872 = vadd.f32 %v1516, %v1668
        %v1873 = vadd.f32 %v1522, %v1673
        %v1874 = vadd.f32 %v1526, %v1676
        %v1875 = vadd.f32 %v1532, %v1681
        %v1876 = vadd.f32 %v1536, %v1684
        %v1877 = vadd.f32 %v1542, %v1689
        %v1878 = vadd.f32 %v1546, %v1692
        %v1879 = vadd.f32 %v1863, %v1785
        %v1880 = vadd.f32 %v1864, %v1790
        %v1881 = vadd.f32 %v1865, %v1795
        %v1882 = vadd.f32 %v1866, %v1800
        %v1883 = vadd.f32 %v1867, %v1805
        %v1884 = vadd.f32 %v1868, %v1810
        %v1885 = vadd.f32 %v1869, %v1815
        %v1886 = vadd.f32 %v1870, %v1820
        %v1887 = vadd.f32 %v1871, %v1825
        %v1888 = vadd.f32 %v1872, %v1830
        %v1889 = vadd.f32 %v1873, %v1835
        %v1890 = vadd.f32 %v1874, %v1840
        %v1891 = vadd.f32 %v1875, %v1845
        %v1892 = vadd.f32 %v1876, %v1850
        %v1893 = vadd.f32 %v1877, %v1855
        %v1894 = vadd.f32 %v1878, %v1860
        %v1895 = vxor.u32 %v1879, 2147483648
        %v1896 = vxor.u32 %v1880, 2147483648
        %v1897 = vxor.u32 %v1881, 2147483648
        %v1898 = vxor.u32 %v1882, 2147483648
        %v1899 = vxor.u32 %v1883, 2147483648
        %v1900 = vxor.u32 %v1884, 2147483648
        %v1901 = vxor.u32 %v1885, 2147483648
        %v1902 = vxor.u32 %v1886, 2147483648
        %v1903 = vxor.u32 %v1887, 2147483648
        %v1904 = vxor.u32 %v1888, 2147483648
        %v1905 = vxor.u32 %v1889, 2147483648
        %v1906 = vxor.u32 %v1890, 2147483648
        %v1907 = vxor.u32 %v1891, 2147483648
        %v1908 = vxor.u32 %v1892, 2147483648
        %v1909 = vxor.u32 %v1893, 2147483648
        %v1910 = vxor.u32 %v1894, 2147483648
        %v1911 = vmul.f32 %v1895, 1.442695
        %v1912 = vpow.pop %v1911
        %v1913 = vmul.f32 %v1896, 1.442695
        %v1914 = vpow.pop %v1913
        %v1915 = vmul.f32 %v1897, 1.442695
        %v1916 = vpow.pop %v1915
        %v1917 = vmul.f32 %v1898, 1.442695
        %v1918 = vpow.pop %v1917
        %v1919 = vmul.f32 %v1899, 1.442695
        %v1920 = vpow.pop %v1919
        %v1921 = vmul.f32 %v1900, 1.442695
        %v1922 = vpow.pop %v1921
        %v1923 = vmul.f32 %v1901, 1.442695
        %v1924 = vpow.pop %v1923
        %v1925 = vmul.f32 %v1902, 1.442695
        %v1926 = vpow.pop %v1925
        %v1927 = vmul.f32 %v1903, 1.442695
        %v1928 = vpow.pop %v1927
        %v1929 = vmul.f32 %v1904, 1.442695
        %v1930 = vpow.pop %v1929
        %v1931 = vmul.f32 %v1905, 1.442695
        %v1932 = vpow.pop %v1931
        %v1933 = vmul.f32 %v1906, 1.442695
        %v1934 = vpow.pop %v1933
        %v1935 = vmul.f32 %v1907, 1.442695
        %v1936 = vpow.pop %v1935
        %v1937 = vmul.f32 %v1908, 1.442695
        %v1938 = vpow.pop %v1937
        %v1939 = vmul.f32 %v1909, 1.442695
        %v1940 = vpow.pop %v1939
        %v1941 = vmul.f32 %v1910, 1.442695
        %v1942 = vpow.pop %v1941
        %v1943 = vadd.f32 %v1912, 1.0
        %v1944 = vadd.f32 %v1914, 1.0
        %v1945 = vadd.f32 %v1916, 1.0
        %v1946 = vadd.f32 %v1918, 1.0
        %v1947 = vadd.f32 %v1920, 1.0
        %v1948 = vadd.f32 %v1922, 1.0
        %v1949 = vadd.f32 %v1924, 1.0
        %v1950 = vadd.f32 %v1926, 1.0
        %v1951 = vadd.f32 %v1928, 1.0
        %v1952 = vadd.f32 %v1930, 1.0
        %v1953 = vadd.f32 %v1932, 1.0
        %v1954 = vadd.f32 %v1934, 1.0
        %v1955 = vadd.f32 %v1936, 1.0
        %v1956 = vadd.f32 %v1938, 1.0
        %v1957 = vadd.f32 %v1940, 1.0
        %v1958 = vadd.f32 %v1942, 1.0
        %v1959 = vrcp.pop %v1943
        %v1960 = vmul.f32 1.0, %v1959
        %v1961 = vrcp.pop %v1944
        %v1962 = vmul.f32 1.0, %v1961
        %v1963 = vrcp.pop %v1945
        %v1964 = vmul.f32 1.0, %v1963
        %v1965 = vrcp.pop %v1946
        %v1966 = vmul.f32 1.0, %v1965
        %v1967 = vrcp.pop %v1947
        %v1968 = vmul.f32 1.0, %v1967
        %v1969 = vrcp.pop %v1948
        %v1970 = vmul.f32 1.0, %v1969
        %v1971 = vrcp.pop %v1949
        %v1972 = vmul.f32 1.0, %v1971
        %v1973 = vrcp.pop %v1950
        %v1974 = vmul.f32 1.0, %v1973
        %v1975 = vrcp.pop %v1951
        %v1976 = vmul.f32 1.0, %v1975
        %v1977 = vrcp.pop %v1952
        %v1978 = vmul.f32 1.0, %v1977
        %v1979 = vrcp.pop %v1953
        %v1980 = vmul.f32 1.0, %v1979
        %v1981 = vrcp.pop %v1954
        %v1982 = vmul.f32 1.0, %v1981
        %v1983 = vrcp.pop %v1955
        %v1984 = vmul.f32 1.0, %v1983
        %v1985 = vrcp.pop %v1956
        %v1986 = vmul.f32 1.0, %v1985
        %v1987 = vrcp.pop %v1957
        %v1988 = vmul.f32 1.0, %v1987
        %v1989 = vrcp.pop %v1958
        %v1990 = vmul.f32 1.0, %v1989
        %v1991 = vmul.f32 %v1960, %v1474
        %v1992 = vmul.f32 %v1962, %v1478
        %v1993 = vmul.f32 %v1964, %v1484
        %v1994 = vmul.f32 %v1966, %v1488
        %v1995 = vmul.f32 %v1968, %v1494
        %v1996 = vmul.f32 %v1970, %v1498
        %v1997 = vmul.f32 %v1972, %v1504
        %v1998 = vmul.f32 %v1974, %v1508
        %v1999 = vmul.f32 %v1976, %v1514
        %v2000 = vmul.f32 %v1978, %v1518
        %v2001 = vmul.f32 %v1980, %v1524
        %v2002 = vmul.f32 %v1982, %v1528
        %v2003 = vmul.f32 %v1984, %v1534
        %v2004 = vmul.f32 %v1986, %v1538
        %v2005 = vmul.f32 %v1988, %v1544
        %v2006 = vmul.f32 %v1990, %v1548
        %v2007 = vlaneseq
        %v2008 = vshrl.u32 %v2007, 7
        %v2009 = vadd.s32 %v2008, 8
        %v2010 = vadd.s32 %v2008, 16
        %v2011 = vadd.s32 %v2008, 24
        %v2012 = vadd.s32 %v2008, 32
        %v2013 = vadd.s32 %v2008, 40
        %v2014 = vadd.s32 %v2008, 48
        %v2015 = vadd.s32 %v2008, 56
        %v2016 = vadd.s32 %v2008, 64
        %v2017 = vadd.s32 %v2008, 72
        %v2018 = vadd.s32 %v2008, 80
        %v2019 = vadd.s32 %v2008, 88
        %v2020 = vadd.s32 %v2008, 96
        %v2021 = vadd.s32 %v2008, 104
        %v2022 = vadd.s32 %v2008, 112
        %v2023 = vadd.s32 %v2008, 120
        %v2024 = vld [vmem:[%s465] sm:$0x1]
        %v2025 = vlaneseq
        %v2026 = vshrl.u32 %v2025, 7
        %v2027 = vsub.s32 0, %v2026
        %v2028 = vrot.slane %v2024, %v2027
        %vm2029 = vcmp.eq.s32.totalorder %v2028, %v2008
        %vm2030 = vcmp.eq.s32.totalorder %v2028, %v2009
        %vm2031 = vcmp.eq.s32.totalorder %v2028, %v2010
        %vm2032 = vcmp.eq.s32.totalorder %v2028, %v2011
        %vm2033 = vcmp.eq.s32.totalorder %v2028, %v2012
        %vm2034 = vcmp.eq.s32.totalorder %v2028, %v2013
        %vm2035 = vcmp.eq.s32.totalorder %v2028, %v2014
        %vm2036 = vcmp.eq.s32.totalorder %v2028, %v2015
        %vm2037 = vcmp.eq.s32.totalorder %v2028, %v2016
        %vm2038 = vcmp.eq.s32.totalorder %v2028, %v2017
        %vm2039 = vcmp.eq.s32.totalorder %v2028, %v2018
        %vm2040 = vcmp.eq.s32.totalorder %v2028, %v2019
        %vm2041 = vcmp.eq.s32.totalorder %v2028, %v2020
        %vm2042 = vcmp.eq.s32.totalorder %v2028, %v2021
        %vm2043 = vcmp.eq.s32.totalorder %v2028, %v2022
        %vm2044 = vcmp.eq.s32.totalorder %v2028, %v2023
        %v2045 = vsel %vm2029, 1, 0
        %v2046 = vsel %vm2030, 1, 0
        %v2047 = vsel %vm2031, 1, 0
        %v2048 = vsel %vm2032, 1, 0
        %v2049 = vsel %vm2033, 1, 0
        %v2050 = vsel %vm2034, 1, 0
        %v2051 = vsel %vm2035, 1, 0
        %v2052 = vsel %vm2036, 1, 0
        %v2053 = vsel %vm2037, 1, 0
        %v2054 = vsel %vm2038, 1, 0
        %v2055 = vsel %vm2039, 1, 0
        %v2056 = vsel %vm2040, 1, 0
        %v2057 = vsel %vm2041, 1, 0
        %v2058 = vsel %vm2042, 1, 0
        %v2059 = vsel %vm2043, 1, 0
        %v2060 = vsel %vm2044, 1, 0
        %v2061 = vcvt.s32.f32 %v2045
        %v2062 = vcvt.s32.f32 %v2046
        %v2063 = vcvt.s32.f32 %v2047
        %v2064 = vcvt.s32.f32 %v2048
        %v2065 = vcvt.s32.f32 %v2049
        %v2066 = vcvt.s32.f32 %v2050
        %v2067 = vcvt.s32.f32 %v2051
        %v2068 = vcvt.s32.f32 %v2052
        %v2069 = vcvt.s32.f32 %v2053
        %v2070 = vcvt.s32.f32 %v2054
        %v2071 = vcvt.s32.f32 %v2055
        %v2072 = vcvt.s32.f32 %v2056
        %v2073 = vcvt.s32.f32 %v2057
        %v2074 = vcvt.s32.f32 %v2058
        %v2075 = vcvt.s32.f32 %v2059
        %v2076 = vcvt.s32.f32 %v2060
        %v2077 = vpack.c.bf16 %v2062, %v2061
        %v2078 = vpack.c.bf16 %v2064, %v2063
        %v2079 = vpack.c.bf16 %v2066, %v2065
        %v2080 = vpack.c.bf16 %v2068, %v2067
        %v2081 = vpack.c.bf16 %v2070, %v2069
        %v2082 = vpack.c.bf16 %v2072, %v2071
        %v2083 = vpack.c.bf16 %v2074, %v2073
        %v2084 = vpack.c.bf16 %v2076, %v2075
        %v2085 = vpack.c.bf16 %v1992, %v1991
        %v2086 = vpack.c.bf16 %v1962, %v1960
        %v2087 = vpack.c.bf16 %v1994, %v1993
        %v2088 = vpack.c.bf16 %v1966, %v1964
        %v2089 = vpack.c.bf16 %v1996, %v1995
        %v2090 = vpack.c.bf16 %v1970, %v1968
        %v2091 = vpack.c.bf16 %v1998, %v1997
        %v2092 = vpack.c.bf16 %v1974, %v1972
        %v2093 = vpack.c.bf16 %v2000, %v1999
        %v2094 = vpack.c.bf16 %v1978, %v1976
        %v2095 = vpack.c.bf16 %v2002, %v2001
        %v2096 = vpack.c.bf16 %v1982, %v1980
        %v2097 = vpack.c.bf16 %v2004, %v2003
        %v2098 = vpack.c.bf16 %v1986, %v1984
        %v2099 = vpack.c.bf16 %v2006, %v2005
        %v2100 = vpack.c.bf16 %v1990, %v1988
        %v2101 = vld [vmem:[#allocation3] sm:$0xff]
        %v2102 = vld [vmem:[#allocation3 + $0x8] sm:$0xff]
        %v2103 = vld [vmem:[#allocation3 + $0x10] sm:$0xff]
        %v2104 = vld [vmem:[#allocation3 + $0x18] sm:$0xff]
        %v2105 = vld [vmem:[#allocation3 + $0x20] sm:$0xff]
        %v2106 = vld [vmem:[#allocation3 + $0x28] sm:$0xff]
        %v2107 = vld [vmem:[#allocation3 + $0x30] sm:$0xff]
        %v2108 = vld [vmem:[#allocation3 + $0x38] sm:$0xff]
        %v2109 = vld [vmem:[#allocation3 + $0x40] sm:$0xff]
        %v2110 = vld [vmem:[#allocation3 + $0x48] sm:$0xff]
        %v2111 = vld [vmem:[#allocation3 + $0x50] sm:$0xff]
        %v2112 = vld [vmem:[#allocation3 + $0x58] sm:$0xff]
        %v2113 = vld [vmem:[#allocation3 + $0x60] sm:$0xff]
        %v2114 = vld [vmem:[#allocation3 + $0x68] sm:$0xff]
        %v2115 = vld [vmem:[#allocation3 + $0x70] sm:$0xff]
        %v2116 = vld [vmem:[#allocation3 + $0x78] sm:$0xff]
        %v2117 = vld [vmem:[#allocation3 + $0x80] sm:$0xff]
        %v2118 = vld [vmem:[#allocation3 + $0x88] sm:$0xff]
        %v2119 = vld [vmem:[#allocation3 + $0x90] sm:$0xff]
        %v2120 = vld [vmem:[#allocation3 + $0x98] sm:$0xff]
        %v2121 = vld [vmem:[#allocation3 + $0xa0] sm:$0xff]
        %v2122 = vld [vmem:[#allocation3 + $0xa8] sm:$0xff]
        %v2123 = vld [vmem:[#allocation3 + $0xb0] sm:$0xff]
        %v2124 = vld [vmem:[#allocation3 + $0xb8] sm:$0xff]
        %v2125 = vld [vmem:[#allocation3 + $0xc0] sm:$0xff]
        %v2126 = vld [vmem:[#allocation3 + $0xc8] sm:$0xff]
        %v2127 = vld [vmem:[#allocation3 + $0xd0] sm:$0xff]
        %v2128 = vld [vmem:[#allocation3 + $0xd8] sm:$0xff]
        %v2129 = vld [vmem:[#allocation3 + $0xe0] sm:$0xff]
        %v2130 = vld [vmem:[#allocation3 + $0xe8] sm:$0xff]
        %v2131 = vld [vmem:[#allocation3 + $0xf0] sm:$0xff]
        %v2132 = vld [vmem:[#allocation3 + $0xf8] sm:$0xff]
        %2133 = vmatprep.subr.bf16.mxu0 %v2100
        %2134 = vmatpush1.bf16.msra.mxu0 %v2099
        %2135 = vmatprep.subr.bf16.mxu0 %v2098
        %2136 = vmatpush1.bf16.msra.mxu0 %v2097
        %2137 = vmatprep.subr.bf16.mxu0 %v2096
        %2138 = vmatpush1.bf16.msra.mxu0 %v2095
        %2139 = vmatprep.subr.bf16.mxu0 %v2094
        %2140 = vmatpush1.bf16.msra.mxu0 %v2093
        %2141 = vmatprep.subr.bf16.mxu0 %v2092
        %2142 = vmatpush1.bf16.msra.mxu0 %v2091
        %2143 = vmatprep.subr.bf16.mxu0 %v2090
        %2144 = vmatpush1.bf16.msra.mxu0 %v2089
        %2145 = vmatprep.subr.bf16.mxu0 %v2088
        %2146 = vmatpush1.bf16.msra.mxu0 %v2087
        %2147 = vmatprep.subr.bf16.mxu0 %v2086
        %2148 = vmatpush1.bf16.msra.mxu0 %v2085
        %2149 = vmatprep.subr.bf16.mxu0 0
        %2150 = vmatpush2.bf16.msra.mxu0 0
        %2151 = vmatprep.subr.bf16.mxu0 0
        %2152 = vmatpush2.bf16.msra.mxu0 0
        %2153 = vmatprep.subr.bf16.mxu0 0
        %2154 = vmatpush2.bf16.msra.mxu0 0
        %2155 = vmatprep.subr.bf16.mxu0 0
        %2156 = vmatpush2.bf16.msra.mxu0 0
        %2157 = vmatprep.subr.bf16.mxu0 0
        %2158 = vmatpush2.bf16.msra.mxu0 0
        %2159 = vmatprep.subr.bf16.mxu0 0
        %2160 = vmatpush2.bf16.msra.mxu0 0
        %2161 = vmatprep.subr.bf16.mxu0 0
        %2162 = vmatpush2.bf16.msra.mxu0 0
        %2163 = vmatprep.subr.bf16.mxu0 0
        %2164 = vmatpush2.bf16.msra.mxu0 0
        %2165 = vmatprep.mubr.bf16.mxu0 0
        %2166 = vmatmul.mubr.bf16.gmra.mxu0 %v2077
        %v2167 = vpop.f32.mrf.mxu0
        %v2168 = vadd.f32 0.0, %v2167
        %v2169 = vpop.f32.mrf.mxu0
        %v2170 = vadd.f32 0.0, %v2169
        %v2171 = vpop.f32.mrf.mxu0
        %v2172 = vadd.f32 0.0, %v2171
        %v2173 = vpop.f32.mrf.mxu0
        %v2174 = vadd.f32 0.0, %v2173
        %2175 = vmatprep.mubr.bf16.mxu0 0
        %2176 = vmatmul.mubr.bf16.gmra.mxu0 %v2078
        %v2177 = vpop.f32.mrf.mxu0
        %v2178 = vadd.f32 0.0, %v2177
        %v2179 = vpop.f32.mrf.mxu0
        %v2180 = vadd.f32 0.0, %v2179
        %v2181 = vpop.f32.mrf.mxu0
        %v2182 = vadd.f32 0.0, %v2181
        %v2183 = vpop.f32.mrf.mxu0
        %v2184 = vadd.f32 0.0, %v2183
        %2185 = vmatprep.mubr.bf16.mxu0 0
        %2186 = vmatmul.mubr.bf16.gmra.mxu0 %v2079
        %v2187 = vpop.f32.mrf.mxu0
        %v2188 = vadd.f32 0.0, %v2187
        %v2189 = vpop.f32.mrf.mxu0
        %v2190 = vadd.f32 0.0, %v2189
        %v2191 = vpop.f32.mrf.mxu0
        %v2192 = vadd.f32 0.0, %v2191
        %v2193 = vpop.f32.mrf.mxu0
        %v2194 = vadd.f32 0.0, %v2193
        %2195 = vmatprep.mubr.bf16.mxu0 0
        %2196 = vmatmul.mubr.bf16.gmra.mxu0 %v2080
        %v2197 = vpop.f32.mrf.mxu0
        %v2198 = vadd.f32 0.0, %v2197
        %v2199 = vpop.f32.mrf.mxu0
        %v2200 = vadd.f32 0.0, %v2199
        %v2201 = vpop.f32.mrf.mxu0
        %v2202 = vadd.f32 0.0, %v2201
        %v2203 = vpop.f32.mrf.mxu0
        %v2204 = vadd.f32 0.0, %v2203
        %2205 = vmatprep.mubr.bf16.mxu0 0
        %2206 = vmatmul.mubr.bf16.gmra.mxu0 %v2081
        %v2207 = vpop.f32.mrf.mxu0
        %v2208 = vadd.f32 0.0, %v2207
        %v2209 = vpop.f32.mrf.mxu0
        %v2210 = vadd.f32 0.0, %v2209
        %v2211 = vpop.f32.mrf.mxu0
        %v2212 = vadd.f32 0.0, %v2211
        %v2213 = vpop.f32.mrf.mxu0
        %v2214 = vadd.f32 0.0, %v2213
        %2215 = vmatprep.mubr.bf16.mxu0 0
        %2216 = vmatmul.mubr.bf16.gmra.mxu0 %v2082
        %v2217 = vpop.f32.mrf.mxu0
        %v2218 = vadd.f32 0.0, %v2217
        %v2219 = vpop.f32.mrf.mxu0
        %v2220 = vadd.f32 0.0, %v2219
        %v2221 = vpop.f32.mrf.mxu0
        %v2222 = vadd.f32 0.0, %v2221
        %v2223 = vpop.f32.mrf.mxu0
        %v2224 = vadd.f32 0.0, %v2223
        %2225 = vmatprep.mubr.bf16.mxu0 0
        %2226 = vmatmul.mubr.bf16.gmra.mxu0 %v2083
        %v2227 = vpop.f32.mrf.mxu0
        %v2228 = vadd.f32 0.0, %v2227
        %v2229 = vpop.f32.mrf.mxu0
        %v2230 = vadd.f32 0.0, %v2229
        %v2231 = vpop.f32.mrf.mxu0
        %v2232 = vadd.f32 0.0, %v2231
        %v2233 = vpop.f32.mrf.mxu0
        %v2234 = vadd.f32 0.0, %v2233
        %2235 = vmatprep.mubr.bf16.mxu0 0
        %2236 = vmatmul.mubr.bf16.gmra.mxu0 %v2084
        %v2237 = vpop.f32.mrf.mxu0
        %v2238 = vadd.f32 0.0, %v2237
        %v2239 = vpop.f32.mrf.mxu0
        %v2240 = vadd.f32 0.0, %v2239
        %v2241 = vpop.f32.mrf.mxu0
        %v2242 = vadd.f32 0.0, %v2241
        %v2243 = vpop.f32.mrf.mxu0
        %v2244 = vadd.f32 0.0, %v2243
        %2245 = vdwg.mxu0
        %v2246 = vadd.f32 %v2101, %v2168
        %v2247 = vadd.f32 %v2102, %v2170
        %v2248 = vadd.f32 %v2103, %v2172
        %v2249 = vadd.f32 %v2104, %v2174
        %v2250 = vadd.f32 %v2105, %v2178
        %v2251 = vadd.f32 %v2106, %v2180
        %v2252 = vadd.f32 %v2107, %v2182
        %v2253 = vadd.f32 %v2108, %v2184
        %v2254 = vadd.f32 %v2109, %v2188
        %v2255 = vadd.f32 %v2110, %v2190
        %v2256 = vadd.f32 %v2111, %v2192
        %v2257 = vadd.f32 %v2112, %v2194
        %v2258 = vadd.f32 %v2113, %v2198
        %v2259 = vadd.f32 %v2114, %v2200
        %v2260 = vadd.f32 %v2115, %v2202
        %v2261 = vadd.f32 %v2116, %v2204
        %v2262 = vadd.f32 %v2117, %v2208
        %v2263 = vadd.f32 %v2118, %v2210
        %v2264 = vadd.f32 %v2119, %v2212
        %v2265 = vadd.f32 %v2120, %v2214
        %v2266 = vadd.f32 %v2121, %v2218
        %v2267 = vadd.f32 %v2122, %v2220
        %v2268 = vadd.f32 %v2123, %v2222
        %v2269 = vadd.f32 %v2124, %v2224
        %v2270 = vadd.f32 %v2125, %v2228
        %v2271 = vadd.f32 %v2126, %v2230
        %v2272 = vadd.f32 %v2127, %v2232
        %v2273 = vadd.f32 %v2128, %v2234
        %v2274 = vadd.f32 %v2129, %v2238
        %v2275 = vadd.f32 %v2130, %v2240
        %v2276 = vadd.f32 %v2131, %v2242
        %v2277 = vadd.f32 %v2132, %v2244
        %2278 = vst [vmem:[#allocation3] sm:$0xff] %v2246
        %2279 = vst [vmem:[#allocation3 + $0x8] sm:$0xff] %v2247
        %2280 = vst [vmem:[#allocation3 + $0x10] sm:$0xff] %v2248
        %2281 = vst [vmem:[#allocation3 + $0x18] sm:$0xff] %v2249
        %2282 = vst [vmem:[#allocation3 + $0x20] sm:$0xff] %v2250
        %2283 = vst [vmem:[#allocation3 + $0x28] sm:$0xff] %v2251
        %2284 = vst [vmem:[#allocation3 + $0x30] sm:$0xff] %v2252
        %2285 = vst [vmem:[#allocation3 + $0x38] sm:$0xff] %v2253
        %2286 = vst [vmem:[#allocation3 + $0x40] sm:$0xff] %v2254
        %2287 = vst [vmem:[#allocation3 + $0x48] sm:$0xff] %v2255
        %2288 = vst [vmem:[#allocation3 + $0x50] sm:$0xff] %v2256
        %2289 = vst [vmem:[#allocation3 + $0x58] sm:$0xff] %v2257
        %2290 = vst [vmem:[#allocation3 + $0x60] sm:$0xff] %v2258
        %2291 = vst [vmem:[#allocation3 + $0x68] sm:$0xff] %v2259
        %2292 = vst [vmem:[#allocation3 + $0x70] sm:$0xff] %v2260
        %2293 = vst [vmem:[#allocation3 + $0x78] sm:$0xff] %v2261
        %2294 = vst [vmem:[#allocation3 + $0x80] sm:$0xff] %v2262
        %2295 = vst [vmem:[#allocation3 + $0x88] sm:$0xff] %v2263
        %2296 = vst [vmem:[#allocation3 + $0x90] sm:$0xff] %v2264
        %2297 = vst [vmem:[#allocation3 + $0x98] sm:$0xff] %v2265
        %2298 = vst [vmem:[#allocation3 + $0xa0] sm:$0xff] %v2266
        %2299 = vst [vmem:[#allocation3 + $0xa8] sm:$0xff] %v2267
        %2300 = vst [vmem:[#allocation3 + $0xb0] sm:$0xff] %v2268
        %2301 = vst [vmem:[#allocation3 + $0xb8] sm:$0xff] %v2269
        %2302 = vst [vmem:[#allocation3 + $0xc0] sm:$0xff] %v2270
        %2303 = vst [vmem:[#allocation3 + $0xc8] sm:$0xff] %v2271
        %2304 = vst [vmem:[#allocation3 + $0xd0] sm:$0xff] %v2272
        %2305 = vst [vmem:[#allocation3 + $0xd8] sm:$0xff] %v2273
        %2306 = vst [vmem:[#allocation3 + $0xe0] sm:$0xff] %v2274
        %2307 = vst [vmem:[#allocation3 + $0xe8] sm:$0xff] %v2275
        %2308 = vst [vmem:[#allocation3 + $0xf0] sm:$0xff] %v2276
        %2309 = vst [vmem:[#allocation3 + $0xf8] sm:$0xff] %v2277
        %v2310 = vld [vmem:[%s9] sm:$0x1]
        %v2311 = vlaneseq
        %v2312 = vshrl.u32 %v2311, 7
        %v2313 = vsub.s32 0, %v2312
        %v2314 = vrot.slane %v2310, %v2313
        %v2315 = vmul.f32 %v1879, %v2314
        %v2316 = vmul.f32 %v1880, %v2314
        %v2317 = vmul.f32 %v1881, %v2314
        %v2318 = vmul.f32 %v1882, %v2314
        %v2319 = vmul.f32 %v1883, %v2314
        %v2320 = vmul.f32 %v1884, %v2314
        %v2321 = vmul.f32 %v1885, %v2314
        %v2322 = vmul.f32 %v1886, %v2314
        %v2323 = vmul.f32 %v1887, %v2314
        %v2324 = vmul.f32 %v1888, %v2314
        %v2325 = vmul.f32 %v1889, %v2314
        %v2326 = vmul.f32 %v1890, %v2314
        %v2327 = vmul.f32 %v1891, %v2314
        %v2328 = vmul.f32 %v1892, %v2314
        %v2329 = vmul.f32 %v1893, %v2314
        %v2330 = vmul.f32 %v1894, %v2314
        %v2331 = vld [vmem:[%s9 + $0x1] sm:$0x1]
        %v2332 = vlaneseq
        %v2333 = vshrl.u32 %v2332, 7
        %v2334 = vsub.s32 0, %v2333
        %v2335 = vrot.slane %v2331, %v2334
        %v2336 = vadd.f32 %v2315, %v2335
        %v2337 = vadd.f32 %v2316, %v2335
        %v2338 = vadd.f32 %v2317, %v2335
        %v2339 = vadd.f32 %v2318, %v2335
        %v2340 = vadd.f32 %v2319, %v2335
        %v2341 = vadd.f32 %v2320, %v2335
        %v2342 = vadd.f32 %v2321, %v2335
        %v2343 = vadd.f32 %v2322, %v2335
        %v2344 = vadd.f32 %v2323, %v2335
        %v2345 = vadd.f32 %v2324, %v2335
        %v2346 = vadd.f32 %v2325, %v2335
        %v2347 = vadd.f32 %v2326, %v2335
        %v2348 = vadd.f32 %v2327, %v2335
        %v2349 = vadd.f32 %v2328, %v2335
        %v2350 = vadd.f32 %v2329, %v2335
        %v2351 = vadd.f32 %v2330, %v2335
        %v2352 = vxor.u32 %v2336, 2147483648
        %v2353 = vxor.u32 %v2337, 2147483648
        %v2354 = vxor.u32 %v2338, 2147483648
        %v2355 = vxor.u32 %v2339, 2147483648
        %v2356 = vxor.u32 %v2340, 2147483648
        %v2357 = vxor.u32 %v2341, 2147483648
        %v2358 = vxor.u32 %v2342, 2147483648
        %v2359 = vxor.u32 %v2343, 2147483648
        %v2360 = vxor.u32 %v2344, 2147483648
        %v2361 = vxor.u32 %v2345, 2147483648
        %v2362 = vxor.u32 %v2346, 2147483648
        %v2363 = vxor.u32 %v2347, 2147483648
        %v2364 = vxor.u32 %v2348, 2147483648
        %v2365 = vxor.u32 %v2349, 2147483648
        %v2366 = vxor.u32 %v2350, 2147483648
        %v2367 = vxor.u32 %v2351, 2147483648
        %v2368 = vmul.f32 %v2352, 1.442695
        %v2369 = vpow.pop %v2368
        %v2370 = vmul.f32 %v2353, 1.442695
        %v2371 = vpow.pop %v2370
        %v2372 = vmul.f32 %v2354, 1.442695
        %v2373 = vpow.pop %v2372
        %v2374 = vmul.f32 %v2355, 1.442695
        %v2375 = vpow.pop %v2374
        %v2376 = vmul.f32 %v2356, 1.442695
        %v2377 = vpow.pop %v2376
        %v2378 = vmul.f32 %v2357, 1.442695
        %v2379 = vpow.pop %v2378
        %v2380 = vmul.f32 %v2358, 1.442695
        %v2381 = vpow.pop %v2380
        %v2382 = vmul.f32 %v2359, 1.442695
        %v2383 = vpow.pop %v2382
        %v2384 = vmul.f32 %v2360, 1.442695
        %v2385 = vpow.pop %v2384
        %v2386 = vmul.f32 %v2361, 1.442695
        %v2387 = vpow.pop %v2386
        %v2388 = vmul.f32 %v2362, 1.442695
        %v2389 = vpow.pop %v2388
        %v2390 = vmul.f32 %v2363, 1.442695
        %v2391 = vpow.pop %v2390
        %v2392 = vmul.f32 %v2364, 1.442695
        %v2393 = vpow.pop %v2392
        %v2394 = vmul.f32 %v2365, 1.442695
        %v2395 = vpow.pop %v2394
        %v2396 = vmul.f32 %v2366, 1.442695
        %v2397 = vpow.pop %v2396
        %v2398 = vmul.f32 %v2367, 1.442695
        %v2399 = vpow.pop %v2398
        %v2400 = vadd.f32 %v2369, 1.0
        %v2401 = vadd.f32 %v2371, 1.0
        %v2402 = vadd.f32 %v2373, 1.0
        %v2403 = vadd.f32 %v2375, 1.0
        %v2404 = vadd.f32 %v2377, 1.0
        %v2405 = vadd.f32 %v2379, 1.0
        %v2406 = vadd.f32 %v2381, 1.0
        %v2407 = vadd.f32 %v2383, 1.0
        %v2408 = vadd.f32 %v2385, 1.0
        %v2409 = vadd.f32 %v2387, 1.0
        %v2410 = vadd.f32 %v2389, 1.0
        %v2411 = vadd.f32 %v2391, 1.0
        %v2412 = vadd.f32 %v2393, 1.0
        %v2413 = vadd.f32 %v2395, 1.0
        %v2414 = vadd.f32 %v2397, 1.0
        %v2415 = vadd.f32 %v2399, 1.0
        %v2416 = vrcp.pop %v2400
        %v2417 = vmul.f32 1.0, %v2416
        %v2418 = vrcp.pop %v2401
        %v2419 = vmul.f32 1.0, %v2418
        %v2420 = vrcp.pop %v2402
        %v2421 = vmul.f32 1.0, %v2420
        %v2422 = vrcp.pop %v2403
        %v2423 = vmul.f32 1.0, %v2422
        %v2424 = vrcp.pop %v2404
        %v2425 = vmul.f32 1.0, %v2424
        %v2426 = vrcp.pop %v2405
        %v2427 = vmul.f32 1.0, %v2426
        %v2428 = vrcp.pop %v2406
        %v2429 = vmul.f32 1.0, %v2428
        %v2430 = vrcp.pop %v2407
        %v2431 = vmul.f32 1.0, %v2430
        %v2432 = vrcp.pop %v2408
        %v2433 = vmul.f32 1.0, %v2432
        %v2434 = vrcp.pop %v2409
        %v2435 = vmul.f32 1.0, %v2434
        %v2436 = vrcp.pop %v2410
        %v2437 = vmul.f32 1.0, %v2436
        %v2438 = vrcp.pop %v2411
        %v2439 = vmul.f32 1.0, %v2438
        %v2440 = vrcp.pop %v2412
        %v2441 = vmul.f32 1.0, %v2440
        %v2442 = vrcp.pop %v2413
        %v2443 = vmul.f32 1.0, %v2442
        %v2444 = vrcp.pop %v2414
        %v2445 = vmul.f32 1.0, %v2444
        %v2446 = vrcp.pop %v2415
        %v2447 = vmul.f32 1.0, %v2446
        %v2448 = vmul.f32 %v2336, %v2417
        %v2449 = vmul.f32 %v2337, %v2419
        %v2450 = vmul.f32 %v2338, %v2421
        %v2451 = vmul.f32 %v2339, %v2423
        %v2452 = vmul.f32 %v2340, %v2425
        %v2453 = vmul.f32 %v2341, %v2427
        %v2454 = vmul.f32 %v2342, %v2429
        %v2455 = vmul.f32 %v2343, %v2431
        %v2456 = vmul.f32 %v2344, %v2433
        %v2457 = vmul.f32 %v2345, %v2435
        %v2458 = vmul.f32 %v2346, %v2437
        %v2459 = vmul.f32 %v2347, %v2439
        %v2460 = vmul.f32 %v2348, %v2441
        %v2461 = vmul.f32 %v2349, %v2443
        %v2462 = vmul.f32 %v2350, %v2445
        %v2463 = vmul.f32 %v2351, %v2447
        %v2464 = vadd.f32 %v1083, %v2448
        %v2465 = vadd.f32 %v1084, %v2449
        %v2466 = vadd.f32 %v1085, %v2450
        %v2467 = vadd.f32 %v1086, %v2451
        %v2468 = vadd.f32 %v1087, %v2452
        %v2469 = vadd.f32 %v1088, %v2453
        %v2470 = vadd.f32 %v1089, %v2454
        %v2471 = vadd.f32 %v1090, %v2455
        %v2472 = vadd.f32 %v1091, %v2456
        %v2473 = vadd.f32 %v1092, %v2457
        %v2474 = vadd.f32 %v1093, %v2458
        %v2475 = vadd.f32 %v1094, %v2459
        %v2476 = vadd.f32 %v1095, %v2460
        %v2477 = vadd.f32 %v1096, %v2461
        %v2478 = vadd.f32 %v1097, %v2462
        %v2479 = vadd.f32 %v1098, %v2463
        %2480 = vst [vmem:[%s450] sm:$0xff] %v2464
        %2481 = vst [vmem:[%s450 + $0x8] sm:$0xff] %v2465
        %2482 = vst [vmem:[%s450 + $0x10] sm:$0xff] %v2466
        %2483 = vst [vmem:[%s450 + $0x18] sm:$0xff] %v2467
        %2484 = vst [vmem:[%s450 + $0x20] sm:$0xff] %v2468
        %2485 = vst [vmem:[%s450 + $0x28] sm:$0xff] %v2469
        %2486 = vst [vmem:[%s450 + $0x30] sm:$0xff] %v2470
        %2487 = vst [vmem:[%s450 + $0x38] sm:$0xff] %v2471
        %2488 = vst [vmem:[%s450 + $0x40] sm:$0xff] %v2472
        %2489 = vst [vmem:[%s450 + $0x48] sm:$0xff] %v2473
        %2490 = vst [vmem:[%s450 + $0x50] sm:$0xff] %v2474
        %2491 = vst [vmem:[%s450 + $0x58] sm:$0xff] %v2475
        %2492 = vst [vmem:[%s450 + $0x60] sm:$0xff] %v2476
        %2493 = vst [vmem:[%s450 + $0x68] sm:$0xff] %v2477
        %2494 = vst [vmem:[%s450 + $0x70] sm:$0xff] %v2478
        %2495 = vst [vmem:[%s450 + $0x78] sm:$0xff] %v2479
        %p2496 = scmp.eq.s32.totalorder %s29, 2
        // Predicated region
        $region77: #{tpu_custom_call.1} parent=59 // pred_check
          %p2497 = pneg %p2496
        $region78: #{tpu_custom_call.1} parent=59 // pred_check_branch
          %2499 = sbr.rel (%p2497) target = $region80
        $region79: #{tpu_custom_call.1} parent=59 // pred_region
          %v2500 = vld [vmem:[#allocation3] sm:$0xff]
          %v2501 = vld [vmem:[#allocation3 + $0x8] sm:$0xff]
          %v2502 = vld [vmem:[#allocation3 + $0x10] sm:$0xff]
          %v2503 = vld [vmem:[#allocation3 + $0x18] sm:$0xff]
          %v2504 = vld [vmem:[#allocation3 + $0x20] sm:$0xff]
          %v2505 = vld [vmem:[#allocation3 + $0x28] sm:$0xff]
          %v2506 = vld [vmem:[#allocation3 + $0x30] sm:$0xff]
          %v2507 = vld [vmem:[#allocation3 + $0x38] sm:$0xff]
          %v2508 = vld [vmem:[#allocation3 + $0x40] sm:$0xff]
          %v2509 = vld [vmem:[#allocation3 + $0x48] sm:$0xff]
          %v2510 = vld [vmem:[#allocation3 + $0x50] sm:$0xff]
          %v2511 = vld [vmem:[#allocation3 + $0x58] sm:$0xff]
          %v2512 = vld [vmem:[#allocation3 + $0x60] sm:$0xff]
          %v2513 = vld [vmem:[#allocation3 + $0x68] sm:$0xff]
          %v2514 = vld [vmem:[#allocation3 + $0x70] sm:$0xff]
          %v2515 = vld [vmem:[#allocation3 + $0x78] sm:$0xff]
          %v2516 = vld [vmem:[#allocation3 + $0x80] sm:$0xff]
          %v2517 = vld [vmem:[#allocation3 + $0x88] sm:$0xff]
          %v2518 = vld [vmem:[#allocation3 + $0x90] sm:$0xff]
          %v2519 = vld [vmem:[#allocation3 + $0x98] sm:$0xff]
          %v2520 = vld [vmem:[#allocation3 + $0xa0] sm:$0xff]
          %v2521 = vld [vmem:[#allocation3 + $0xa8] sm:$0xff]
          %v2522 = vld [vmem:[#allocation3 + $0xb0] sm:$0xff]
          %v2523 = vld [vmem:[#allocation3 + $0xb8] sm:$0xff]
          %v2524 = vld [vmem:[#allocation3 + $0xc0] sm:$0xff]
          %v2525 = vld [vmem:[#allocation3 + $0xc8] sm:$0xff]
          %v2526 = vld [vmem:[#allocation3 + $0xd0] sm:$0xff]
          %v2527 = vld [vmem:[#allocation3 + $0xd8] sm:$0xff]
          %v2528 = vld [vmem:[#allocation3 + $0xe0] sm:$0xff]
          %v2529 = vld [vmem:[#allocation3 + $0xe8] sm:$0xff]
          %v2530 = vld [vmem:[#allocation3 + $0xf0] sm:$0xff]
          %v2531 = vld [vmem:[#allocation3 + $0xf8] sm:$0xff]
          %v2532 = vld [vmem:[#allocation4] sm:$0xff]
          %v2533 = vld [vmem:[#allocation4 + $0x8] sm:$0xff]
          %v2534 = vld [vmem:[#allocation4 + $0x10] sm:$0xff]
          %v2535 = vld [vmem:[#allocation4 + $0x18] sm:$0xff]
          %v2536 = vld [vmem:[#allocation4 + $0x20] sm:$0xff]
          %v2537 = vld [vmem:[#allocation4 + $0x28] sm:$0xff]
          %v2538 = vld [vmem:[#allocation4 + $0x30] sm:$0xff]
          %v2539 = vld [vmem:[#allocation4 + $0x38] sm:$0xff]
          %v2540 = vld [vmem:[#allocation4 + $0x40] sm:$0xff]
          %v2541 = vld [vmem:[#allocation4 + $0x48] sm:$0xff]
          %v2542 = vld [vmem:[#allocation4 + $0x50] sm:$0xff]
          %v2543 = vld [vmem:[#allocation4 + $0x58] sm:$0xff]
          %v2544 = vld [vmem:[#allocation4 + $0x60] sm:$0xff]
          %v2545 = vld [vmem:[#allocation4 + $0x68] sm:$0xff]
          %v2546 = vld [vmem:[#allocation4 + $0x70] sm:$0xff]
          %v2547 = vld [vmem:[#allocation4 + $0x78] sm:$0xff]
          %v2548 = vld [vmem:[#allocation7 + $0x18] sm:$0xff]
          %v2549 = vld [vmem:[#allocation7 + $0x38] sm:$0xff]
          %v2550 = vld [vmem:[#allocation7 + $0x58] sm:$0xff]
          %v2551 = vld [vmem:[#allocation7 + $0x78] sm:$0xff]
          %v2552 = vld [vmem:[#allocation7 + $0x98] sm:$0xff]
          %v2553 = vld [vmem:[#allocation7 + $0xb8] sm:$0xff]
          %v2554 = vld [vmem:[#allocation7 + $0xd8] sm:$0xff]
          %v2555 = vld [vmem:[#allocation7 + $0xf8] sm:$0xff]
          %v2556 = vld [vmem:[#allocation7 + $0x118] sm:$0xff]
          %v2557 = vld [vmem:[#allocation7 + $0x138] sm:$0xff]
          %v2558 = vld [vmem:[#allocation7 + $0x158] sm:$0xff]
          %v2559 = vld [vmem:[#allocation7 + $0x178] sm:$0xff]
          %v2560 = vld [vmem:[#allocation7 + $0x198] sm:$0xff]
          %v2561 = vld [vmem:[#allocation7 + $0x1b8] sm:$0xff]
          %v2562 = vld [vmem:[#allocation7 + $0x1d8] sm:$0xff]
          %v2563 = vld [vmem:[#allocation7 + $0x1f8] sm:$0xff]
          %v2564 = vld [vmem:[%s5 + $0x3] sm:$0x1]
          %v2566 = vlaneseq
          %v2567 = vshrl.u32 %v2566, 7
          %v2568 = vsub.s32 0, %v2567
          %v2569 = vrot.slane %v2564, %v2568
          %2571 = vmatprep.subr.mxu0 0.0
          %2572 = vmatpush1.msra.mxu0 %v2563
          %2573 = vmatprep.subr.mxu0 0.0
          %2574 = vmatpush1.msra.mxu0 %v2562
          %2575 = vmatprep.subr.mxu0 0.0
          %2576 = vmatpush1.msra.mxu0 %v2561
          %2577 = vmatprep.subr.mxu0 0.0
          %2578 = vmatpush1.msra.mxu0 %v2560
          %2579 = vmatprep.subr.mxu0 0.0
          %2580 = vmatpush1.msra.mxu0 %v2559
          %2581 = vmatprep.subr.mxu0 0.0
          %2582 = vmatpush1.msra.mxu0 %v2558
          %2583 = vmatprep.subr.mxu0 0.0
          %2584 = vmatpush1.msra.mxu0 %v2557
          %2585 = vmatprep.subr.mxu0 0.0
          %2586 = vmatpush1.msra.mxu0 %v2556
          %2587 = vmatprep.subr.mxu0 0.0
          %2588 = vmatpush1.msra.mxu0 %v2555
          %2589 = vmatprep.subr.mxu0 0.0
          %2590 = vmatpush1.msra.mxu0 %v2554
          %2591 = vmatprep.subr.mxu0 0.0
          %2592 = vmatpush1.msra.mxu0 %v2553
          %2593 = vmatprep.subr.mxu0 0.0
          %2594 = vmatpush1.msra.mxu0 %v2552
          %2595 = vmatprep.subr.mxu0 0.0
          %2596 = vmatpush1.msra.mxu0 %v2551
          %2597 = vmatprep.subr.mxu0 0.0
          %2598 = vmatpush1.msra.mxu0 %v2550
          %2599 = vmatprep.subr.mxu0 0.0
          %2600 = vmatpush1.msra.mxu0 %v2549
          %2601 = vmatprep.subr.mxu0 0.0
          %2602 = vmatpush1.msra.mxu0 %v2548
          %2603 = vmatprep.subr.mxu0 0.0
          %2604 = vmatpush2.msra.mxu0 0.0
          %2605 = vmatprep.subr.mxu0 0.0
          %2606 = vmatpush2.msra.mxu0 0.0
          %2607 = vmatprep.subr.mxu0 0.0
          %2608 = vmatpush2.msra.mxu0 0.0
          %2609 = vmatprep.subr.mxu0 0.0
          %2610 = vmatpush2.msra.mxu0 0.0
          %2611 = vmatprep.subr.mxu0 0.0
          %2612 = vmatpush2.msra.mxu0 0.0
          %2613 = vmatprep.subr.mxu0 0.0
          %2614 = vmatpush2.msra.mxu0 0.0
          %2615 = vmatprep.subr.mxu0 0.0
          %2616 = vmatpush2.msra.mxu0 0.0
          %2617 = vmatprep.subr.mxu0 0.0
          %2618 = vmatpush2.msra.mxu0 0.0
          %2619 = vmatprep.subr.mxu0 0.0
          %2620 = vmatpush2.msra.mxu0 0.0
          %2621 = vmatprep.subr.mxu0 0.0
          %2622 = vmatpush2.msra.mxu0 0.0
          %2623 = vmatprep.subr.mxu0 0.0
          %2624 = vmatpush2.msra.mxu0 0.0
          %2625 = vmatprep.subr.mxu0 0.0
          %2626 = vmatpush2.msra.mxu0 0.0
          %2627 = vmatprep.subr.mxu0 0.0
          %2628 = vmatpush2.msra.mxu0 0.0
          %2629 = vmatprep.subr.mxu0 0.0
          %2630 = vmatpush2.msra.mxu0 0.0
          %2631 = vmatprep.subr.mxu0 0.0
          %2632 = vmatpush2.msra.mxu0 0.0
          %2633 = vmatprep.subr.mxu0 0.0
          %2634 = vmatpush2.msra.mxu0 0.0
          %2635 = vmatprep.mubr.f32.mxu0 0.0
          %2636 = vmatmul.mubr.f32.gmra.mxu0 %v2532
          %v2637 = vpop.f32.mrf.mxu0
          %v2638 = vadd.f32 %v2569, %v2637
          %v2639 = vpop.f32.mrf.mxu0
          %2640 = vmatprep.mubr.f32.mxu0 0.0
          %2641 = vmatmul.mubr.f32.gmra.mxu0 %v2533
          %v2642 = vpop.f32.mrf.mxu0
          %v2643 = vadd.f32 %v2569, %v2642
          %v2644 = vpop.f32.mrf.mxu0
          %2645 = vmatprep.mubr.f32.mxu0 0.0
          %2646 = vmatmul.mubr.f32.gmra.mxu0 %v2534
          %v2647 = vpop.f32.mrf.mxu0
          %v2648 = vadd.f32 %v2569, %v2647
          %v2649 = vpop.f32.mrf.mxu0
          %2650 = vmatprep.mubr.f32.mxu0 0.0
          %2651 = vmatmul.mubr.f32.gmra.mxu0 %v2535
          %v2652 = vpop.f32.mrf.mxu0
          %v2653 = vadd.f32 %v2569, %v2652
          %v2654 = vpop.f32.mrf.mxu0
          %2655 = vmatprep.mubr.f32.mxu0 0.0
          %2656 = vmatmul.mubr.f32.gmra.mxu0 %v2536
          %v2657 = vpop.f32.mrf.mxu0
          %v2658 = vadd.f32 %v2569, %v2657
          %v2659 = vpop.f32.mrf.mxu0
          %2660 = vmatprep.mubr.f32.mxu0 0.0
          %2661 = vmatmul.mubr.f32.gmra.mxu0 %v2537
          %v2662 = vpop.f32.mrf.mxu0
          %v2663 = vadd.f32 %v2569, %v2662
          %v2664 = vpop.f32.mrf.mxu0
          %2665 = vmatprep.mubr.f32.mxu0 0.0
          %2666 = vmatmul.mubr.f32.gmra.mxu0 %v2538
          %v2667 = vpop.f32.mrf.mxu0
          %v2668 = vadd.f32 %v2569, %v2667
          %v2669 = vpop.f32.mrf.mxu0
          %2670 = vmatprep.mubr.f32.mxu0 0.0
          %2671 = vmatmul.mubr.f32.gmra.mxu0 %v2539
          %v2672 = vpop.f32.mrf.mxu0
          %v2673 = vadd.f32 %v2569, %v2672
          %v2674 = vpop.f32.mrf.mxu0
          %2675 = vmatprep.mubr.f32.mxu0 0.0
          %2676 = vmatmul.mubr.f32.gmra.mxu0 %v2540
          %v2677 = vpop.f32.mrf.mxu0
          %v2678 = vadd.f32 %v2569, %v2677
          %v2679 = vpop.f32.mrf.mxu0
          %2680 = vmatprep.mubr.f32.mxu0 0.0
          %2681 = vmatmul.mubr.f32.gmra.mxu0 %v2541
          %v2682 = vpop.f32.mrf.mxu0
          %v2683 = vadd.f32 %v2569, %v2682
          %v2684 = vpop.f32.mrf.mxu0
          %2685 = vmatprep.mubr.f32.mxu0 0.0
          %2686 = vmatmul.mubr.f32.gmra.mxu0 %v2542
          %v2687 = vpop.f32.mrf.mxu0
          %v2688 = vadd.f32 %v2569, %v2687
          %v2689 = vpop.f32.mrf.mxu0
          %2690 = vmatprep.mubr.f32.mxu0 0.0
          %2691 = vmatmul.mubr.f32.gmra.mxu0 %v2543
          %v2692 = vpop.f32.mrf.mxu0
          %v2693 = vadd.f32 %v2569, %v2692
          %v2694 = vpop.f32.mrf.mxu0
          %2695 = vmatprep.mubr.f32.mxu0 0.0
          %2696 = vmatmul.mubr.f32.gmra.mxu0 %v2544
          %v2697 = vpop.f32.mrf.mxu0
          %v2698 = vadd.f32 %v2569, %v2697
          %v2699 = vpop.f32.mrf.mxu0
          %2700 = vmatprep.mubr.f32.mxu0 0.0
          %2701 = vmatmul.mubr.f32.gmra.mxu0 %v2545
          %v2702 = vpop.f32.mrf.mxu0
          %v2703 = vadd.f32 %v2569, %v2702
          %v2704 = vpop.f32.mrf.mxu0
          %2705 = vmatprep.mubr.f32.mxu0 0.0
          %2706 = vmatmul.mubr.f32.gmra.mxu0 %v2546
          %v2707 = vpop.f32.mrf.mxu0
          %v2708 = vadd.f32 %v2569, %v2707
          %v2709 = vpop.f32.mrf.mxu0
          %2710 = vmatprep.mubr.f32.mxu0 0.0
          %2711 = vmatmul.mubr.f32.gmra.mxu0 %v2547
          %v2712 = vpop.f32.mrf.mxu0
          %v2713 = vadd.f32 %v2569, %v2712
          %v2714 = vpop.f32.mrf.mxu0
          %2715 = vdwg.mxu0
          %v2716 = vadd.f32 %v2501, 1e-06
          %v2717 = vadd.f32 %v2503, 1e-06
          %v2718 = vadd.f32 %v2505, 1e-06
          %v2719 = vadd.f32 %v2507, 1e-06
          %v2720 = vadd.f32 %v2509, 1e-06
          %v2721 = vadd.f32 %v2511, 1e-06
          %v2722 = vadd.f32 %v2513, 1e-06
          %v2723 = vadd.f32 %v2515, 1e-06
          %v2724 = vadd.f32 %v2517, 1e-06
          %v2725 = vadd.f32 %v2519, 1e-06
          %v2726 = vadd.f32 %v2521, 1e-06
          %v2727 = vadd.f32 %v2523, 1e-06
          %v2728 = vadd.f32 %v2525, 1e-06
          %v2729 = vadd.f32 %v2527, 1e-06
          %v2730 = vadd.f32 %v2529, 1e-06
          %v2731 = vadd.f32 %v2531, 1e-06
          %v2732 = vrcp.pop %v2716
          %v2733 = vrcp.pop %v2717
          %v2734 = vrcp.pop %v2718
          %v2735 = vrcp.pop %v2719
          %v2736 = vrcp.pop %v2720
          %v2737 = vrcp.pop %v2721
          %v2738 = vrcp.pop %v2722
          %v2739 = vrcp.pop %v2723
          %v2740 = vrcp.pop %v2724
          %v2741 = vrcp.pop %v2725
          %v2742 = vrcp.pop %v2726
          %v2743 = vrcp.pop %v2727
          %v2744 = vrcp.pop %v2728
          %v2745 = vrcp.pop %v2729
          %v2746 = vrcp.pop %v2730
          %v2747 = vrcp.pop %v2731
          %v2748 = vmul.f32 %v2500, %v2732
          %v2749 = vmul.f32 %v2502, %v2733
          %v2750 = vmul.f32 %v2504, %v2734
          %v2751 = vmul.f32 %v2506, %v2735
          %v2752 = vmul.f32 %v2508, %v2736
          %v2753 = vmul.f32 %v2510, %v2737
          %v2754 = vmul.f32 %v2512, %v2738
          %v2755 = vmul.f32 %v2514, %v2739
          %v2756 = vmul.f32 %v2516, %v2740
          %v2757 = vmul.f32 %v2518, %v2741
          %v2758 = vmul.f32 %v2520, %v2742
          %v2759 = vmul.f32 %v2522, %v2743
          %v2760 = vmul.f32 %v2524, %v2744
          %v2761 = vmul.f32 %v2526, %v2745
          %v2762 = vmul.f32 %v2528, %v2746
          %v2763 = vmul.f32 %v2530, %v2747
          %v2764 = vadd.f32 %v2638, %v2748
          %v2765 = vadd.f32 %v2643, %v2749
          %v2766 = vadd.f32 %v2648, %v2750
          %v2767 = vadd.f32 %v2653, %v2751
          %v2768 = vadd.f32 %v2658, %v2752
          %v2769 = vadd.f32 %v2663, %v2753
          %v2770 = vadd.f32 %v2668, %v2754
          %v2771 = vadd.f32 %v2673, %v2755
          %v2772 = vadd.f32 %v2678, %v2756
          %v2773 = vadd.f32 %v2683, %v2757
          %v2774 = vadd.f32 %v2688, %v2758
          %v2775 = vadd.f32 %v2693, %v2759
          %v2776 = vadd.f32 %v2698, %v2760
          %v2777 = vadd.f32 %v2703, %v2761
          %v2778 = vadd.f32 %v2708, %v2762
          %v2779 = vadd.f32 %v2713, %v2763
          %v2780 = vld [vmem:[%s8] sm:$0x1]
          %v2781 = vlaneseq
          %v2782 = vshrl.u32 %v2781, 7
          %v2783 = vsub.s32 0, %v2782
          %v2784 = vrot.slane %v2780, %v2783
          %v2785 = vmul.f32 %v2764, %v2784
          %v2786 = vmul.f32 %v2765, %v2784
          %v2787 = vmul.f32 %v2766, %v2784
          %v2788 = vmul.f32 %v2767, %v2784
          %v2789 = vmul.f32 %v2768, %v2784
          %v2790 = vmul.f32 %v2769, %v2784
          %v2791 = vmul.f32 %v2770, %v2784
          %v2792 = vmul.f32 %v2771, %v2784
          %v2793 = vmul.f32 %v2772, %v2784
          %v2794 = vmul.f32 %v2773, %v2784
          %v2795 = vmul.f32 %v2774, %v2784
          %v2796 = vmul.f32 %v2775, %v2784
          %v2797 = vmul.f32 %v2776, %v2784
          %v2798 = vmul.f32 %v2777, %v2784
          %v2799 = vmul.f32 %v2778, %v2784
          %v2800 = vmul.f32 %v2779, %v2784
          %v2801 = vld [vmem:[%s8 + $0x1] sm:$0x1]
          %v2802 = vlaneseq
          %v2803 = vshrl.u32 %v2802, 7
          %v2804 = vsub.s32 0, %v2803
          %v2805 = vrot.slane %v2801, %v2804
          %v2806 = vadd.f32 %v2785, %v2805
          %v2807 = vadd.f32 %v2786, %v2805
          %v2808 = vadd.f32 %v2787, %v2805
          %v2809 = vadd.f32 %v2788, %v2805
          %v2810 = vadd.f32 %v2789, %v2805
          %v2811 = vadd.f32 %v2790, %v2805
          %v2812 = vadd.f32 %v2791, %v2805
          %v2813 = vadd.f32 %v2792, %v2805
          %v2814 = vadd.f32 %v2793, %v2805
          %v2815 = vadd.f32 %v2794, %v2805
          %v2816 = vadd.f32 %v2795, %v2805
          %v2817 = vadd.f32 %v2796, %v2805
          %v2818 = vadd.f32 %v2797, %v2805
          %v2819 = vadd.f32 %v2798, %v2805
          %v2820 = vadd.f32 %v2799, %v2805
          %v2821 = vadd.f32 %v2800, %v2805
          %v2822 = vxor.u32 %v2806, 2147483648
          %v2823 = vxor.u32 %v2807, 2147483648
          %v2824 = vxor.u32 %v2808, 2147483648
          %v2825 = vxor.u32 %v2809, 2147483648
          %v2826 = vxor.u32 %v2810, 2147483648
          %v2827 = vxor.u32 %v2811, 2147483648
          %v2828 = vxor.u32 %v2812, 2147483648
          %v2829 = vxor.u32 %v2813, 2147483648
          %v2830 = vxor.u32 %v2814, 2147483648
          %v2831 = vxor.u32 %v2815, 2147483648
          %v2832 = vxor.u32 %v2816, 2147483648
          %v2833 = vxor.u32 %v2817, 2147483648
          %v2834 = vxor.u32 %v2818, 2147483648
          %v2835 = vxor.u32 %v2819, 2147483648
          %v2836 = vxor.u32 %v2820, 2147483648
          %v2837 = vxor.u32 %v2821, 2147483648
          %v2838 = vmul.f32 %v2822, 1.442695
          %v2839 = vpow.pop %v2838
          %v2840 = vmul.f32 %v2823, 1.442695
          %v2841 = vpow.pop %v2840
          %v2842 = vmul.f32 %v2824, 1.442695
          %v2843 = vpow.pop %v2842
          %v2844 = vmul.f32 %v2825, 1.442695
          %v2845 = vpow.pop %v2844
          %v2846 = vmul.f32 %v2826, 1.442695
          %v2847 = vpow.pop %v2846
          %v2848 = vmul.f32 %v2827, 1.442695
          %v2849 = vpow.pop %v2848
          %v2850 = vmul.f32 %v2828, 1.442695
          %v2851 = vpow.pop %v2850
          %v2852 = vmul.f32 %v2829, 1.442695
          %v2853 = vpow.pop %v2852
          %v2854 = vmul.f32 %v2830, 1.442695
          %v2855 = vpow.pop %v2854
          %v2856 = vmul.f32 %v2831, 1.442695
          %v2857 = vpow.pop %v2856
          %v2858 = vmul.f32 %v2832, 1.442695
          %v2859 = vpow.pop %v2858
          %v2860 = vmul.f32 %v2833, 1.442695
          %v2861 = vpow.pop %v2860
          %v2862 = vmul.f32 %v2834, 1.442695
          %v2863 = vpow.pop %v2862
          %v2864 = vmul.f32 %v2835, 1.442695
          %v2865 = vpow.pop %v2864
          %v2866 = vmul.f32 %v2836, 1.442695
          %v2867 = vpow.pop %v2866
          %v2868 = vmul.f32 %v2837, 1.442695
          %v2869 = vpow.pop %v2868
          %v2870 = vadd.f32 %v2839, 1.0
          %v2871 = vadd.f32 %v2841, 1.0
          %v2872 = vadd.f32 %v2843, 1.0
          %v2873 = vadd.f32 %v2845, 1.0
          %v2874 = vadd.f32 %v2847, 1.0
          %v2875 = vadd.f32 %v2849, 1.0
          %v2876 = vadd.f32 %v2851, 1.0
          %v2877 = vadd.f32 %v2853, 1.0
          %v2878 = vadd.f32 %v2855, 1.0
          %v2879 = vadd.f32 %v2857, 1.0
          %v2880 = vadd.f32 %v2859, 1.0
          %v2881 = vadd.f32 %v2861, 1.0
          %v2882 = vadd.f32 %v2863, 1.0
          %v2883 = vadd.f32 %v2865, 1.0
          %v2884 = vadd.f32 %v2867, 1.0
          %v2885 = vadd.f32 %v2869, 1.0
          %v2886 = vrcp.pop %v2870
          %v2887 = vmul.f32 1.0, %v2886
          %v2888 = vrcp.pop %v2871
          %v2889 = vmul.f32 1.0, %v2888
          %v2890 = vrcp.pop %v2872
          %v2891 = vmul.f32 1.0, %v2890
          %v2892 = vrcp.pop %v2873
          %v2893 = vmul.f32 1.0, %v2892
          %v2894 = vrcp.pop %v2874
          %v2895 = vmul.f32 1.0, %v2894
          %v2896 = vrcp.pop %v2875
          %v2897 = vmul.f32 1.0, %v2896
          %v2898 = vrcp.pop %v2876
          %v2899 = vmul.f32 1.0, %v2898
          %v2900 = vrcp.pop %v2877
          %v2901 = vmul.f32 1.0, %v2900
          %v2902 = vrcp.pop %v2878
          %v2903 = vmul.f32 1.0, %v2902
          %v2904 = vrcp.pop %v2879
          %v2905 = vmul.f32 1.0, %v2904
          %v2906 = vrcp.pop %v2880
          %v2907 = vmul.f32 1.0, %v2906
          %v2908 = vrcp.pop %v2881
          %v2909 = vmul.f32 1.0, %v2908
          %v2910 = vrcp.pop %v2882
          %v2911 = vmul.f32 1.0, %v2910
          %v2912 = vrcp.pop %v2883
          %v2913 = vmul.f32 1.0, %v2912
          %v2914 = vrcp.pop %v2884
          %v2915 = vmul.f32 1.0, %v2914
          %v2916 = vrcp.pop %v2885
          %v2917 = vmul.f32 1.0, %v2916
          %v2918 = vmul.f32 %v2806, %v2887
          %v2919 = vmul.f32 %v2807, %v2889
          %v2920 = vmul.f32 %v2808, %v2891
          %v2921 = vmul.f32 %v2809, %v2893
          %v2922 = vmul.f32 %v2810, %v2895
          %v2923 = vmul.f32 %v2811, %v2897
          %v2924 = vmul.f32 %v2812, %v2899
          %v2925 = vmul.f32 %v2813, %v2901
          %v2926 = vmul.f32 %v2814, %v2903
          %v2927 = vmul.f32 %v2815, %v2905
          %v2928 = vmul.f32 %v2816, %v2907
          %v2929 = vmul.f32 %v2817, %v2909
          %v2930 = vmul.f32 %v2818, %v2911
          %v2931 = vmul.f32 %v2819, %v2913
          %v2932 = vmul.f32 %v2820, %v2915
          %v2933 = vmul.f32 %v2821, %v2917
          %v2934 = vadd.f32 %v2532, %v2918
          %v2935 = vadd.f32 %v2533, %v2919
          %v2936 = vadd.f32 %v2534, %v2920
          %v2937 = vadd.f32 %v2535, %v2921
          %v2938 = vadd.f32 %v2536, %v2922
          %v2939 = vadd.f32 %v2537, %v2923
          %v2940 = vadd.f32 %v2538, %v2924
          %v2941 = vadd.f32 %v2539, %v2925
          %v2942 = vadd.f32 %v2540, %v2926
          %v2943 = vadd.f32 %v2541, %v2927
          %v2944 = vadd.f32 %v2542, %v2928
          %v2945 = vadd.f32 %v2543, %v2929
          %v2946 = vadd.f32 %v2544, %v2930
          %v2947 = vadd.f32 %v2545, %v2931
          %v2948 = vadd.f32 %v2546, %v2932
          %v2949 = vadd.f32 %v2547, %v2933
          %2950 = vst [vmem:[#allocation10] sm:$0xff] %v2934
          %2951 = vst [vmem:[#allocation10 + $0x8] sm:$0xff] %v2935
          %2952 = vst [vmem:[#allocation10 + $0x10] sm:$0xff] %v2936
          %2953 = vst [vmem:[#allocation10 + $0x18] sm:$0xff] %v2937
          %2954 = vst [vmem:[#allocation10 + $0x20] sm:$0xff] %v2938
          %2955 = vst [vmem:[#allocation10 + $0x28] sm:$0xff] %v2939
          %2956 = vst [vmem:[#allocation10 + $0x30] sm:$0xff] %v2940
          %2957 = vst [vmem:[#allocation10 + $0x38] sm:$0xff] %v2941
          %2958 = vst [vmem:[#allocation10 + $0x40] sm:$0xff] %v2942
          %2959 = vst [vmem:[#allocation10 + $0x48] sm:$0xff] %v2943
          %2960 = vst [vmem:[#allocation10 + $0x50] sm:$0xff] %v2944
          %2961 = vst [vmem:[#allocation10 + $0x58] sm:$0xff] %v2945
          %2962 = vst [vmem:[#allocation10 + $0x60] sm:$0xff] %v2946
          %2963 = vst [vmem:[#allocation10 + $0x68] sm:$0xff] %v2947
          %2964 = vst [vmem:[#allocation10 + $0x70] sm:$0xff] %v2948
          %2965 = vst [vmem:[#allocation10 + $0x78] sm:$0xff] %v2949
        $region80: #{tpu_custom_call.1} parent=59 // pred_fallthru
          _
        %s2966 = sand.u32 %s283, 1
        %s2967 = scalar_lea.sflag [#allocation12], %s2966
        %s2968 = sand.u32 %s283, 1
        %s2969 = smul.addr %s2968, 128
        %s2970 = scalar_lea.vmem [#allocation11], %s2969
        // Predicated region
        $region81: #{tpu_custom_call.1} parent=59 // pred_check
          %p2971 = pneg %p267
        $region82: #{tpu_custom_call.1} parent=59 // pred_check_branch
          %2973 = sbr.rel (%p2971) target = $region84
        $region83: #{tpu_custom_call.1} parent=59 // pred_region
          %s2975 = ssub.s32 2048, 2048
          %2976 = vsyncadd [#allocation6], %s2975
          %s2977 = sshll.u32 [#allocation10], 4
          %s2978 = int_to_ptr.vmem [resolvable:$true] %s2977
          %2983 = dma.vmem_to_hbm [thread:$0]  %s2978, 2048, %s10, [#allocation6], 128, 128, 8
        $region84: #{tpu_custom_call.1} parent=59 // pred_fallthru
          _
        // Predicated region
        $region85: #{tpu_custom_call.1} parent=59 // pred_check
          %p2984 = pneg %p293
        $region86: #{tpu_custom_call.1} parent=59 // pred_check_branch
          %2986 = sbr.rel (%p2984) target = $region88
        $region87: #{tpu_custom_call.1} parent=59 // pred_region
          %s2987 = smul.u32 16, %s29
          %s2989 = ssub.s32 2048, 2048
          %2990 = vsyncadd %s2967, %s2989
          %s2991 = smul.addr %s2987, 128
          %s2992 = scalar_lea.hbm %s11, %s2991
          %s2993 = sshll.u32 %s2970, 4
          %s2994 = int_to_ptr.vmem [resolvable:$true] %s2993
          %2999 = dma.vmem_to_hbm [thread:$0]  %s2994, 2048, %s2992, %s2967, 128, 128, 8
        $region88: #{tpu_custom_call.1} parent=59 // pred_fallthru
          _
        // Predicated region
        $region89: #{tpu_custom_call.1} parent=59 // pred_check
          %p3000 = pneg %p267
        $region90: #{tpu_custom_call.1} parent=59 // pred_check_branch
          %3002 = sbr.rel (%p3000) target = $region92
        $region91: #{tpu_custom_call.1} parent=59 // pred_region
          %3003 = dma.done [#allocation6], 2048
        $region92: #{tpu_custom_call.1} parent=59 // pred_fallthru
          _
      $region60: #{tpu_custom_call.1} parent=5 // pred_fallthru
        _
      %p3004 = scmp.le.s32.totalorder 2, %s24
      // Predicated region
      $region93: #{tpu_custom_call.1} parent=5 // pred_check
        %p3005 = pneg %p3004
      $region94: #{tpu_custom_call.1} parent=5 // pred_check_branch
        %3007 = sbr.rel (%p3005) target = $region96
      $region95: #{tpu_custom_call.1} parent=5 // pred_region
        %s3008 = ssub.s32 %s24, 2
        // Predicated region
        $region97: #{tpu_custom_call.1} parent=95 // pred_check
          %p3009 = pneg %p299
        $region98: #{tpu_custom_call.1} parent=95 // pred_check_branch
          %3011 = sbr.rel (%p3009) target = $region100
        $region99: #{tpu_custom_call.1} parent=95 // pred_region
          %s3012 = sand.u32 %s284, 1
          %s3013 = scalar_lea.sflag [#allocation12], %s3012
          %s3014 = sand.u32 %s284, 1
          %s3015 = smul.addr %s3014, 128
          %s3016 = scalar_lea.vmem [#allocation11], %s3015
          %3017 = dma.done %s3013, 2048
        $region100: #{tpu_custom_call.1} parent=95 // pred_fallthru
          _
      $region96: #{tpu_custom_call.1} parent=5 // pred_fallthru
        _
    $region6: #{tpu_custom_call.1} parent=1 // loop_footer
      %s28 = sadd.s32 1, %s24
    $region7: #{tpu_custom_call.1} parent=1 // loop_footer_branch
      %23 = sbr.rel target = $region3
    $region8: #{tpu_custom_call.1} parent=1 // loop_exit
      _
    %3018 = vsyncpa [#allocation5], 1
    %s3019 = scalar_lea.sflag [#allocation5], 1
    %3020 = vsyncpa %s3019, 1
    %3021 = vsyncpa [#allocation8], 1
    %3022 = vsyncpa [#allocation6], 1
    %s3023 = scalar_lea.sflag [#allocation6], 1
    %3024 = vsyncpa %s3023, 1
    %3025 = vsyncpa [#allocation12], 1
    %s3026 = scalar_lea.sflag [#allocation12], 1
    %3027 = vsyncpa %s3026, 1

</llo_original>
